<compile_context>
chip_gen: v7x
topology: tpu7x:2x2x1
jax: 0.10.0
libtpu: 0.0.40
codegen_flags: <defaults>
</compile_context>

<pallas_src>
import functools
import math

import jax
import jax.numpy as jnp
from jax.experimental import pallas as pl
from jax.experimental.pallas import tpu as pltpu

# ---------------- model config (scaled-down, TPU-friendly) ----------------
VOCAB = 100
HIDDEN = 128
N_LAYERS = 4
N_HEADS = 4
INTERMEDIATE = 512
MAX_POS = 64
N_LABELS = 12          # len(LABELS)
LN_EPS = 1e-12


# ---------------- in-kernel helpers ----------------
def _layernorm(x, g, b, eps):
    """LayerNorm over the feature axis, f32 math; g/b are (1, H)."""
    mean = jnp.mean(x, axis=-1, keepdims=True)
    c = x - mean
    var = jnp.mean(c * c, axis=-1, keepdims=True)
    return (c * jax.lax.rsqrt(var + eps)) * g + b


# ---------------- the single fused kernel (whole network, no grid) ----------------
def _bert_fused_kernel(
    x0_ref, bias_ref, eg_ref, eb_ref,
    wqkv_ref, bqkv_ref, wo_ref, bo_ref, l1g_ref, l1b_ref,
    wi_ref, bi_ref, wo2_ref, bo2_ref, l2g_ref, l2b_ref,
    pw_ref, pb_ref, cw_ref, cb_ref,
    logits_ref, ctx_ref,
    *, n_layers, n_heads, hidden, batch, seq, eps):
    M = batch * seq
    dh = hidden // n_heads
    scale = 1.0 / math.sqrt(dh)

    # ---- embedding LayerNorm (no residual); activation x stays a live f32 value all the way ----
    x = _layernorm(x0_ref[...].astype(jnp.float32), eg_ref[...], eb_ref[...], eps)
    bias_big = bias_ref[...]                                   # (n_heads*M, M) additive mask, head-tiled

    for l in range(n_layers):                                  # static unroll; weights are VMEM-resident
        # ---- self-attention ----
        qkv = jnp.dot(x.astype(jnp.bfloat16), wqkv_ref[l],
                      preferred_element_type=jnp.float32) + bqkv_ref[l]          # (M, 3H) f32

        # all-head scores stacked on the sublane axis -> ONE softmax stream
        s_heads = []
        for h in range(n_heads):
            qh = qkv[:, h * dh:(h + 1) * dh]
            kh = qkv[:, hidden + h * dh: hidden + (h + 1) * dh]
            s_heads.append(jax.lax.dot_general(qh, kh, (((1,), (1,)), ((), ())),
                                               preferred_element_type=jnp.float32))
        s = jnp.concatenate(s_heads, axis=0) * scale + bias_big                  # (n_heads*M, M)
        s = s - jnp.max(s, axis=-1, keepdims=True)
        p = jnp.exp(s)
        p = p * pl.reciprocal(jnp.sum(p, axis=-1, keepdims=True), approx=True)   # EUP, not VALU divide

        # per-head context written into a lane-dense (M, H) tile, then ONE full-K output projection
        for h in range(n_heads):
            vh = qkv[:, 2 * hidden + h * dh: 2 * hidden + (h + 1) * dh]
            ph = p[h * M:(h + 1) * M, :]
            ctx_ref[:, h * dh:(h + 1) * dh] = jnp.dot(ph, vh,
                                                      preferred_element_type=jnp.float32)
        attn = jnp.dot(ctx_ref[...].astype(jnp.bfloat16), wo_ref[l],
                       preferred_element_type=jnp.float32) + bo_ref[l]
        x = _layernorm(attn + x, l1g_ref[l], l1b_ref[l], eps)                    # residual + LN1 fused

        # ---- FFN ----
        inter = jnp.dot(x.astype(jnp.bfloat16), wi_ref[l],
                        preferred_element_type=jnp.float32) + bi_ref[l]
        # TODO(synk): HF BERT uses exact erf-GELU; tanh approximation used here for TPU portability.
        inter = jax.nn.gelu(inter, approximate=True)
        ffn = jnp.dot(inter.astype(jnp.bfloat16), wo2_ref[l],
                      preferred_element_type=jnp.float32) + bo2_ref[l]
        x = _layernorm(ffn + x, l2g_ref[l], l2b_ref[l], eps)                     # residual + LN2 fused

    # ---- pooler (Linear -> tanh), Dropout(0.3)==identity at inference, Linear + ReLU ----
    # Computed on all rows (tiny), CLS rows selected with static slice stores (no one-hot matmul).
    pooled = jnp.tanh(jnp.dot(x.astype(jnp.bfloat16), pw_ref[...],
                              preferred_element_type=jnp.float32) + pb_ref[...])
    logits = jnp.dot(pooled.astype(jnp.bfloat16), cw_ref[...],
                     preferred_element_type=jnp.float32) + cb_ref[...]
    logits = jnp.maximum(logits, 0.0)
    for b in range(batch):
        logits_ref[b:b + 1, :] = logits[b * seq:b * seq + 1, :].astype(logits_ref.dtype)


# ---------------- deterministic parameter init (stacked per-layer, MXU weights in bf16) ----------------
def init_params(key):
    ks = jax.random.split(key, 12)

    def n(k, shape):
        return jax.random.normal(k, shape, jnp.float32) * 0.02

    wq = n(ks[3], (N_LAYERS, HIDDEN, HIDDEN))
    wk = n(ks[4], (N_LAYERS, HIDDEN, HIDDEN))
    wv = n(ks[5], (N_LAYERS, HIDDEN, HIDDEN))

    return {
        "word_emb": n(ks[0], (VOCAB, HIDDEN)),
        "pos_emb": n(ks[1], (MAX_POS, HIDDEN)),
        "type_emb": n(ks[2], (2, HIDDEN)),
        "emb_ln_g": jnp.ones((1, HIDDEN), jnp.float32),
        "emb_ln_b": jnp.zeros((1, HIDDEN), jnp.float32),
        # fused QKV projection; 1/sqrt(dh) is applied to the f32 scores in-kernel (no weight folding)
        "wqkv": jnp.concatenate([wq, wk, wv], axis=-1).astype(jnp.bfloat16),
        "bqkv": jnp.zeros((N_LAYERS, 1, 3 * HIDDEN), jnp.float32),
        "wo": n(ks[6], (N_LAYERS, HIDDEN, HIDDEN)).astype(jnp.bfloat16),
        "bo": jnp.zeros((N_LAYERS, 1, HIDDEN), jnp.float32),
        "ln1_g": jnp.ones((N_LAYERS, 1, HIDDEN), jnp.float32),
        "ln1_b": jnp.zeros((N_LAYERS, 1, HIDDEN), jnp.float32),
        "wi": n(ks[7], (N_LAYERS, HIDDEN, INTERMEDIATE)).astype(jnp.bfloat16),
        "bi": jnp.zeros((N_LAYERS, 1, INTERMEDIATE), jnp.float32),
        "wo2": n(ks[8], (N_LAYERS, INTERMEDIATE, HIDDEN)).astype(jnp.bfloat16),
        "bo2": jnp.zeros((N_LAYERS, 1, HIDDEN), jnp.float32),
        "ln2_g": jnp.ones((N_LAYERS, 1, HIDDEN), jnp.float32),
        "ln2_b": jnp.zeros((N_LAYERS, 1, HIDDEN), jnp.float32),
        "pool_w": n(ks[9], (HIDDEN, HIDDEN)).astype(jnp.bfloat16),
        "pool_b": jnp.zeros((1, HIDDEN), jnp.float32),
        "cls_w": n(ks[10], (HIDDEN, N_LABELS)).astype(jnp.bfloat16),
        "cls_b": jnp.zeros((1, N_LABELS), jnp.float32),
    }


# ---------------- forward pass: gather glue in JAX, everything else in one pallas_call ----------------
def bert_classifier_forward(params, input_ids, attention_mask):
    B, S = input_ids.shape
    M = B * S
    H = HIDDEN

    # Embeddings (gather is JAX glue — no Pallas benefit) summed pre-LN.
    # token_type_ids are all-zero (HF default when the wrapper never passes them).
    x0 = (params["word_emb"][input_ids]
          + params["pos_emb"][:S][None, :, :]
          + params["type_emb"][0][None, None, :]).reshape(M, H)

    # Additive attention bias (M, M): block-diagonal over batches + HF-style key padding
    # ((1 - mask) * -10000); exp(-10000 + O(1)) underflows to 0 in f32, numerically identical to
    # per-batch attention with the (B, 1, S) mask.  Tiled per head along the sublane axis so the
    # kernel runs a single (n_heads*M, M) softmax stream.
    # TODO(synk): O(M^2) bias; restructure to per-batch (S, S) blocking + a parallel batch grid axis
    # before growing B*S (also the lever to engage v7x's second TensorCore / fill the MXU M dim).
    batch_id = jnp.repeat(jnp.arange(B, dtype=jnp.int32), S)
    key_ok = attention_mask.reshape(-1) > 0
    attn_bias = jnp.where((batch_id[:, None] == batch_id[None, :]) & key_ok[None, :],
                          0.0, -10000.0).astype(jnp.float32)
    attn_bias = jnp.tile(attn_bias, (N_HEADS, 1))                     # (n_heads*M, M)

    kernel = functools.partial(
        _bert_fused_kernel, n_layers=N_LAYERS, n_heads=N_HEADS,
        hidden=H, batch=B, seq=S, eps=LN_EPS)

    return pl.pallas_call(
        kernel,
        out_shape=jax.ShapeDtypeStruct((B, N_LABELS), jnp.float32),
        scratch_shapes=[pltpu.VMEM((M, H), jnp.float32)],             # lane-dense merged-head context
        compiler_params=pltpu.CompilerParams(
            vmem_limit_bytes=32 * 1024 * 1024),                       # safe on v5e/v6e/v7x
    )(x0, attn_bias,
      params["emb_ln_g"], params["emb_ln_b"],
      params["wqkv"], params["bqkv"], params["wo"], params["bo"],
      params["ln1_g"], params["ln1_b"],
      params["wi"], params["bi"], params["wo2"], params["bo2"],
      params["ln2_g"], params["ln2_b"],
      params["pool_w"], params["pool_b"], params["cls_w"], params["cls_b"])


if __name__ == "__main__":
    key = jax.random.PRNGKey(0)
    pkey, ikey = jax.random.split(key)
    params = init_params(pkey)

    B, S = 2, 16
    input_ids = jax.random.randint(ikey, (B, S), 0, VOCAB, dtype=jnp.int32)
    attention_mask = jnp.ones((B, S), dtype=jnp.int32).at[1, 12:].set(0)  # pad tail of example 1

    fwd = jax.jit(bert_classifier_forward)
    out = fwd(params, input_ids, attention_mask)
    out = jax.block_until_ready(out)
    assert out.shape == (B, N_LABELS)
    assert bool(jnp.all(out >= 0.0))  # ReLU output is non-negative
    print("KERNEL_OK")
</pallas_src>

<mosaic_0001>
module attributes {stable_mosaic.version = 11 : i64} {
  func.func @_bert_fused_kernel(%arg0: memref<32x128xf32, #tpu.memory_space<vmem>>, %arg1: memref<128x32xf32, #tpu.memory_space<vmem>>, %arg2: memref<1x128xf32, #tpu.memory_space<vmem>>, %arg3: memref<1x128xf32, #tpu.memory_space<vmem>>, %arg4: memref<4x128x384xbf16, #tpu.memory_space<vmem>>, %arg5: memref<4x1x384xf32, #tpu.memory_space<vmem>>, %arg6: memref<4x128x128xbf16, #tpu.memory_space<vmem>>, %arg7: memref<4x1x128xf32, #tpu.memory_space<vmem>>, %arg8: memref<4x1x128xf32, #tpu.memory_space<vmem>>, %arg9: memref<4x1x128xf32, #tpu.memory_space<vmem>>, %arg10: memref<4x128x512xbf16, #tpu.memory_space<vmem>>, %arg11: memref<4x1x512xf32, #tpu.memory_space<vmem>>, %arg12: memref<4x512x128xbf16, #tpu.memory_space<vmem>>, %arg13: memref<4x1x128xf32, #tpu.memory_space<vmem>>, %arg14: memref<4x1x128xf32, #tpu.memory_space<vmem>>, %arg15: memref<4x1x128xf32, #tpu.memory_space<vmem>>, %arg16: memref<128x128xbf16, #tpu.memory_space<vmem>>, %arg17: memref<1x128xf32, #tpu.memory_space<vmem>>, %arg18: memref<128x12xbf16, #tpu.memory_space<vmem>>, %arg19: memref<1x12xf32, #tpu.memory_space<vmem>>, %arg20: memref<2x12xf32, #tpu.memory_space<vmem>>, %arg21: memref<32x128xf32, #tpu.memory_space<vmem>>) attributes {dimension_semantics = [], scalar_prefetch = 0 : i64, scratch_operands = 1 : i64, tpu.core_type = #tpu.core_type<tc>} {
    %c0 = arith.constant 0 : index
    %c0_0 = arith.constant 0 : index
    %0 = vector.load %arg0[%c0, %c0_0] : memref<32x128xf32, #tpu.memory_space<vmem>>, vector<32x128xf32>
    %c0_1 = arith.constant 0 : index
    %c0_2 = arith.constant 0 : index
    %1 = vector.load %arg2[%c0_1, %c0_2] : memref<1x128xf32, #tpu.memory_space<vmem>>, vector<1x128xf32>
    %c0_3 = arith.constant 0 : index
    %c0_4 = arith.constant 0 : index
    %2 = vector.load %arg3[%c0_3, %c0_4] : memref<1x128xf32, #tpu.memory_space<vmem>>, vector<1x128xf32>
    %cst = arith.constant dense<0.000000e+00> : vector<32xf32>
    %3 = vector.multi_reduction <add>, %0, %cst [1] : vector<32x128xf32> to vector<32xf32>
    %4 = vector.shape_cast %3 : vector<32xf32> to vector<32x1xf32>
    %cst_5 = arith.constant 1.280000e+02 : f32
    %5 = vector.broadcast %cst_5 : f32 to vector<32x1xf32>
    %6 = arith.divf %4, %5 : vector<32x1xf32>
    %7 = vector.broadcast %6 : vector<32x1xf32> to vector<32x128xf32>
    %8 = arith.subf %0, %7 : vector<32x128xf32>
    %9 = arith.mulf %8, %8 : vector<32x128xf32>
    %cst_6 = arith.constant dense<0.000000e+00> : vector<32xf32>
    %10 = vector.multi_reduction <add>, %9, %cst_6 [1] : vector<32x128xf32> to vector<32xf32>
    %11 = vector.shape_cast %10 : vector<32xf32> to vector<32x1xf32>
    %cst_7 = arith.constant 1.280000e+02 : f32
    %12 = vector.broadcast %cst_7 : f32 to vector<32x1xf32>
    %13 = arith.divf %11, %12 : vector<32x1xf32>
    %cst_8 = arith.constant 9.99999996E-13 : f32
    %14 = vector.broadcast %cst_8 : f32 to vector<32x1xf32>
    %15 = arith.addf %13, %14 : vector<32x1xf32>
    %16 = math.rsqrt %15 : vector<32x1xf32>
    %17 = vector.broadcast %16 : vector<32x1xf32> to vector<32x128xf32>
    %18 = arith.mulf %8, %17 : vector<32x128xf32>
    %19 = vector.broadcast %1 : vector<1x128xf32> to vector<32x128xf32>
    %20 = arith.mulf %18, %19 : vector<32x128xf32>
    %21 = vector.broadcast %2 : vector<1x128xf32> to vector<32x128xf32>
    %22 = arith.addf %20, %21 : vector<32x128xf32>
    %c0_9 = arith.constant 0 : index
    %c0_10 = arith.constant 0 : index
    %23 = vector.load %arg1[%c0_9, %c0_10] : memref<128x32xf32, #tpu.memory_space<vmem>>, vector<128x32xf32>
    %24 = arith.truncf %22 : vector<32x128xf32> to vector<32x128xbf16>
    %c0_11 = arith.constant 0 : index
    %c0_12 = arith.constant 0 : index
    %c0_13 = arith.constant 0 : index
    %25 = vector.load %arg4[%c0_11, %c0_12, %c0_13] : memref<4x128x384xbf16, #tpu.memory_space<vmem>>, vector<1x128x384xbf16>
    %26 = vector.shape_cast %25 : vector<1x128x384xbf16> to vector<128x384xbf16>
    %cst_14 = arith.constant dense<0.000000e+00> : vector<32x384xf32>
    %27 = tpu.matmul %24, %26, %cst_14 {dimension_numbers = #tpu.dot_dimension_numbers<[1], [0], [0], [1], [0, 0, 1, 1], [], []>} : vector<32x128xbf16>, vector<128x384xbf16>, vector<32x384xf32> -> vector<32x384xf32>
    %c0_15 = arith.constant 0 : index
    %c0_16 = arith.constant 0 : index
    %c0_17 = arith.constant 0 : index
    %28 = vector.load %arg5[%c0_15, %c0_16, %c0_17] : memref<4x1x384xf32, #tpu.memory_space<vmem>>, vector<1x1x384xf32>
    %29 = vector.shape_cast %28 : vector<1x1x384xf32> to vector<1x384xf32>
    %30 = vector.broadcast %29 : vector<1x384xf32> to vector<32x384xf32>
    %31 = arith.addf %27, %30 : vector<32x384xf32>
    %32 = vector.extract_strided_slice %31 {offsets = [0, 0], sizes = [32, 32], strides = [1, 1]} : vector<32x384xf32> to vector<32x32xf32>
    %33 = vector.extract_strided_slice %31 {offsets = [0, 128], sizes = [32, 32], strides = [1, 1]} : vector<32x384xf32> to vector<32x32xf32>
    %cst_18 = arith.constant dense<0.000000e+00> : vector<32x32xf32>
    %34 = tpu.matmul %32, %33, %cst_18 {dimension_numbers = #tpu.dot_dimension_numbers<[1], [1], [0], [0], [0, 0, 1, 0], [], []>} : vector<32x32xf32>, vector<32x32xf32>, vector<32x32xf32> -> vector<32x32xf32>
    %35 = vector.extract_strided_slice %31 {offsets = [0, 32], sizes = [32, 32], strides = [1, 1]} : vector<32x384xf32> to vector<32x32xf32>
    %36 = vector.extract_strided_slice %31 {offsets = [0, 160], sizes = [32, 32], strides = [1, 1]} : vector<32x384xf32> to vector<32x32xf32>
    %cst_19 = arith.constant dense<0.000000e+00> : vector<32x32xf32>
    %37 = tpu.matmul %35, %36, %cst_19 {dimension_numbers = #tpu.dot_dimension_numbers<[1], [1], [0], [0], [0, 0, 1, 0], [], []>} : vector<32x32xf32>, vector<32x32xf32>, vector<32x32xf32> -> vector<32x32xf32>
    %38 = vector.extract_strided_slice %31 {offsets = [0, 64], sizes = [32, 32], strides = [1, 1]} : vector<32x384xf32> to vector<32x32xf32>
    %39 = vector.extract_strided_slice %31 {offsets = [0, 192], sizes = [32, 32], strides = [1, 1]} : vector<32x384xf32> to vector<32x32xf32>
    %cst_20 = arith.constant dense<0.000000e+00> : vector<32x32xf32>
    %40 = tpu.matmul %38, %39, %cst_20 {dimension_numbers = #tpu.dot_dimension_numbers<[1], [1], [0], [0], [0, 0, 1, 0], [], []>} : vector<32x32xf32>, vector<32x32xf32>, vector<32x32xf32> -> vector<32x32xf32>
    %41 = vector.extract_strided_slice %31 {offsets = [0, 96], sizes = [32, 32], strides = [1, 1]} : vector<32x384xf32> to vector<32x32xf32>
    %42 = vector.extract_strided_slice %31 {offsets = [0, 224], sizes = [32, 32], strides = [1, 1]} : vector<32x384xf32> to vector<32x32xf32>
    %cst_21 = arith.constant dense<0.000000e+00> : vector<32x32xf32>
    %43 = tpu.matmul %41, %42, %cst_21 {dimension_numbers = #tpu.dot_dimension_numbers<[1], [1], [0], [0], [0, 0, 1, 0], [], []>} : vector<32x32xf32>, vector<32x32xf32>, vector<32x32xf32> -> vector<32x32xf32>
    %44 = tpu.concatenate %34, %37, %40, %43 in 0 : vector<32x32xf32>, vector<32x32xf32>, vector<32x32xf32>, vector<32x32xf32> -> vector<128x32xf32>
    %cst_22 = arith.constant 0.176776692 : f32
    %45 = vector.broadcast %cst_22 : f32 to vector<128x32xf32>
    %46 = arith.mulf %44, %45 : vector<128x32xf32>
    %47 = arith.addf %46, %23 : vector<128x32xf32>
    %cst_23 = arith.constant dense<0xFF800000> : vector<128xf32>
    %48 = vector.multi_reduction <maximumf>, %47, %cst_23 [1] : vector<128x32xf32> to vector<128xf32>
    %49 = vector.shape_cast %48 : vector<128xf32> to vector<128x1xf32>
    %50 = vector.broadcast %49 : vector<128x1xf32> to vector<128x32xf32>
    %51 = arith.subf %47, %50 : vector<128x32xf32>
    %52 = math.exp %51 : vector<128x32xf32>
    %cst_24 = arith.constant dense<0.000000e+00> : vector<128xf32>
    %53 = vector.multi_reduction <add>, %52, %cst_24 [1] : vector<128x32xf32> to vector<128xf32>
    %54 = vector.shape_cast %53 : vector<128xf32> to vector<128x1xf32>
    %55 = tpu.reciprocal %54 {approx = true} : vector<128x1xf32> -> vector<128x1xf32>
    %56 = vector.broadcast %55 : vector<128x1xf32> to vector<128x32xf32>
    %57 = arith.mulf %52, %56 : vector<128x32xf32>
    %58 = vector.extract_strided_slice %31 {offsets = [0, 256], sizes = [32, 32], strides = [1, 1]} : vector<32x384xf32> to vector<32x32xf32>
    %59 = vector.extract_strided_slice %57 {offsets = [0, 0], sizes = [32, 32], strides = [1, 1]} : vector<128x32xf32> to vector<32x32xf32>
    %cst_25 = arith.constant dense<0.000000e+00> : vector<32x32xf32>
    %60 = tpu.matmul %59, %58, %cst_25 {dimension_numbers = #tpu.dot_dimension_numbers<[1], [0], [0], [1], [0, 0, 1, 1], [], []>} : vector<32x32xf32>, vector<32x32xf32>, vector<32x32xf32> -> vector<32x32xf32>
    %c0_26 = arith.constant 0 : index
    %c0_27 = arith.constant 0 : index
    %61 = vector.load %arg21[%c0_26, %c0_27] : memref<32x128xf32, #tpu.memory_space<vmem>>, vector<32x32xf32>
    tpu.vector_store %arg21[%c0_26, %c0_27], %60 {strides = array<i32>} : memref<32x128xf32, #tpu.memory_space<vmem>>, vector<32x32xf32>,
    %62 = vector.extract_strided_slice %31 {offsets = [0, 288], sizes = [32, 32], strides = [1, 1]} : vector<32x384xf32> to vector<32x32xf32>
    %63 = vector.extract_strided_slice %57 {offsets = [32, 0], sizes = [32, 32], strides = [1, 1]} : vector<128x32xf32> to vector<32x32xf32>
    %cst_28 = arith.constant dense<0.000000e+00> : vector<32x32xf32>
    %64 = tpu.matmul %63, %62, %cst_28 {dimension_numbers = #tpu.dot_dimension_numbers<[1], [0], [0], [1], [0, 0, 1, 1], [], []>} : vector<32x32xf32>, vector<32x32xf32>, vector<32x32xf32> -> vector<32x32xf32>
    %c0_29 = arith.constant 0 : index
    %c32 = arith.constant 32 : index
    %65 = vector.load %arg21[%c0_29, %c32] : memref<32x128xf32, #tpu.memory_space<vmem>>, vector<32x32xf32>
    tpu.vector_store %arg21[%c0_29, %c32], %64 {strides = array<i32>} : memref<32x128xf32, #tpu.memory_space<vmem>>, vector<32x32xf32>,
    %66 = vector.extract_strided_slice %31 {offsets = [0, 320], sizes = [32, 32], strides = [1, 1]} : vector<32x384xf32> to vector<32x32xf32>
    %67 = vector.extract_strided_slice %57 {offsets = [64, 0], sizes = [32, 32], strides = [1, 1]} : vector<128x32xf32> to vector<32x32xf32>
    %cst_30 = arith.constant dense<0.000000e+00> : vector<32x32xf32>
    %68 = tpu.matmul %67, %66, %cst_30 {dimension_numbers = #tpu.dot_dimension_numbers<[1], [0], [0], [1], [0, 0, 1, 1], [], []>} : vector<32x32xf32>, vector<32x32xf32>, vector<32x32xf32> -> vector<32x32xf32>
    %c0_31 = arith.constant 0 : index
    %c64 = arith.constant 64 : index
    %69 = vector.load %arg21[%c0_31, %c64] : memref<32x128xf32, #tpu.memory_space<vmem>>, vector<32x32xf32>
    tpu.vector_store %arg21[%c0_31, %c64], %68 {strides = array<i32>} : memref<32x128xf32, #tpu.memory_space<vmem>>, vector<32x32xf32>,
    %70 = vector.extract_strided_slice %31 {offsets = [0, 352], sizes = [32, 32], strides = [1, 1]} : vector<32x384xf32> to vector<32x32xf32>
    %71 = vector.extract_strided_slice %57 {offsets = [96, 0], sizes = [32, 32], strides = [1, 1]} : vector<128x32xf32> to vector<32x32xf32>
    %cst_32 = arith.constant dense<0.000000e+00> : vector<32x32xf32>
    %72 = tpu.matmul %71, %70, %cst_32 {dimension_numbers = #tpu.dot_dimension_numbers<[1], [0], [0], [1], [0, 0, 1, 1], [], []>} : vector<32x32xf32>, vector<32x32xf32>, vector<32x32xf32> -> vector<32x32xf32>
    %c0_33 = arith.constant 0 : index
    %c96 = arith.constant 96 : index
    %73 = vector.load %arg21[%c0_33, %c96] : memref<32x128xf32, #tpu.memory_space<vmem>>, vector<32x32xf32>
    tpu.vector_store %arg21[%c0_33, %c96], %72 {strides = array<i32>} : memref<32x128xf32, #tpu.memory_space<vmem>>, vector<32x32xf32>,
    %c0_34 = arith.constant 0 : index
    %c0_35 = arith.constant 0 : index
    %74 = vector.load %arg21[%c0_34, %c0_35] : memref<32x128xf32, #tpu.memory_space<vmem>>, vector<32x128xf32>
    %75 = arith.truncf %74 : vector<32x128xf32> to vector<32x128xbf16>
    %c0_36 = arith.constant 0 : index
    %c0_37 = arith.constant 0 : index
    %c0_38 = arith.constant 0 : index
    %76 = vector.load %arg6[%c0_36, %c0_37, %c0_38] : memref<4x128x128xbf16, #tpu.memory_space<vmem>>, vector<1x128x128xbf16>
    %77 = vector.shape_cast %76 : vector<1x128x128xbf16> to vector<128x128xbf16>
    %cst_39 = arith.constant dense<0.000000e+00> : vector<32x128xf32>
    %78 = tpu.matmul %75, %77, %cst_39 {dimension_numbers = #tpu.dot_dimension_numbers<[1], [0], [0], [1], [0, 0, 1, 1], [], []>} : vector<32x128xbf16>, vector<128x128xbf16>, vector<32x128xf32> -> vector<32x128xf32>
    %c0_40 = arith.constant 0 : index
    %c0_41 = arith.constant 0 : index
    %c0_42 = arith.constant 0 : index
    %79 = vector.load %arg7[%c0_40, %c0_41, %c0_42] : memref<4x1x128xf32, #tpu.memory_space<vmem>>, vector<1x1x128xf32>
    %80 = vector.shape_cast %79 : vector<1x1x128xf32> to vector<1x128xf32>
    %81 = vector.broadcast %80 : vector<1x128xf32> to vector<32x128xf32>
    %82 = arith.addf %78, %81 : vector<32x128xf32>
    %83 = arith.addf %82, %22 : vector<32x128xf32>
    %c0_43 = arith.constant 0 : index
    %c0_44 = arith.constant 0 : index
    %c0_45 = arith.constant 0 : index
    %84 = vector.load %arg8[%c0_43, %c0_44, %c0_45] : memref<4x1x128xf32, #tpu.memory_space<vmem>>, vector<1x1x128xf32>
    %85 = vector.shape_cast %84 : vector<1x1x128xf32> to vector<1x128xf32>
    %c0_46 = arith.constant 0 : index
    %c0_47 = arith.constant 0 : index
    %c0_48 = arith.constant 0 : index
    %86 = vector.load %arg9[%c0_46, %c0_47, %c0_48] : memref<4x1x128xf32, #tpu.memory_space<vmem>>, vector<1x1x128xf32>
    %87 = vector.shape_cast %86 : vector<1x1x128xf32> to vector<1x128xf32>
    %cst_49 = arith.constant dense<0.000000e+00> : vector<32xf32>
    %88 = vector.multi_reduction <add>, %83, %cst_49 [1] : vector<32x128xf32> to vector<32xf32>
    %89 = vector.shape_cast %88 : vector<32xf32> to vector<32x1xf32>
    %cst_50 = arith.constant 1.280000e+02 : f32
    %90 = vector.broadcast %cst_50 : f32 to vector<32x1xf32>
    %91 = arith.divf %89, %90 : vector<32x1xf32>
    %92 = vector.broadcast %91 : vector<32x1xf32> to vector<32x128xf32>
    %93 = arith.subf %83, %92 : vector<32x128xf32>
    %94 = arith.mulf %93, %93 : vector<32x128xf32>
    %cst_51 = arith.constant dense<0.000000e+00> : vector<32xf32>
    %95 = vector.multi_reduction <add>, %94, %cst_51 [1] : vector<32x128xf32> to vector<32xf32>
    %96 = vector.shape_cast %95 : vector<32xf32> to vector<32x1xf32>
    %cst_52 = arith.constant 1.280000e+02 : f32
    %97 = vector.broadcast %cst_52 : f32 to vector<32x1xf32>
    %98 = arith.divf %96, %97 : vector<32x1xf32>
    %cst_53 = arith.constant 9.99999996E-13 : f32
    %99 = vector.broadcast %cst_53 : f32 to vector<32x1xf32>
    %100 = arith.addf %98, %99 : vector<32x1xf32>
    %101 = math.rsqrt %100 : vector<32x1xf32>
    %102 = vector.broadcast %101 : vector<32x1xf32> to vector<32x128xf32>
    %103 = arith.mulf %93, %102 : vector<32x128xf32>
    %104 = vector.broadcast %85 : vector<1x128xf32> to vector<32x128xf32>
    %105 = arith.mulf %103, %104 : vector<32x128xf32>
    %106 = vector.broadcast %87 : vector<1x128xf32> to vector<32x128xf32>
    %107 = arith.addf %105, %106 : vector<32x128xf32>
    %108 = arith.truncf %107 : vector<32x128xf32> to vector<32x128xbf16>
    %c0_54 = arith.constant 0 : index
    %c0_55 = arith.constant 0 : index
    %c0_56 = arith.constant 0 : index
    %109 = vector.load %arg10[%c0_54, %c0_55, %c0_56] : memref<4x128x512xbf16, #tpu.memory_space<vmem>>, vector<1x128x512xbf16>
    %110 = vector.shape_cast %109 : vector<1x128x512xbf16> to vector<128x512xbf16>
    %cst_57 = arith.constant dense<0.000000e+00> : vector<32x512xf32>
    %111 = tpu.matmul %108, %110, %cst_57 {dimension_numbers = #tpu.dot_dimension_numbers<[1], [0], [0], [1], [0, 0, 1, 1], [], []>} : vector<32x128xbf16>, vector<128x512xbf16>, vector<32x512xf32> -> vector<32x512xf32>
    %c0_58 = arith.constant 0 : index
    %c0_59 = arith.constant 0 : index
    %c0_60 = arith.constant 0 : index
    %112 = vector.load %arg11[%c0_58, %c0_59, %c0_60] : memref<4x1x512xf32, #tpu.memory_space<vmem>>, vector<1x1x512xf32>
    %113 = vector.shape_cast %112 : vector<1x1x512xf32> to vector<1x512xf32>
    %114 = vector.broadcast %113 : vector<1x512xf32> to vector<32x512xf32>
    %115 = arith.addf %111, %114 : vector<32x512xf32>
    %116 = arith.mulf %115, %115 : vector<32x512xf32>
    %117 = arith.mulf %115, %116 : vector<32x512xf32>
    %cst_61 = arith.constant 4.471500e-02 : f32
    %118 = vector.broadcast %cst_61 : f32 to vector<32x512xf32>
    %119 = arith.mulf %118, %117 : vector<32x512xf32>
    %120 = arith.addf %115, %119 : vector<32x512xf32>
    %cst_62 = arith.constant 0.797884583 : f32
    %121 = vector.broadcast %cst_62 : f32 to vector<32x512xf32>
    %122 = arith.mulf %121, %120 : vector<32x512xf32>
    %123 = math.tanh %122 : vector<32x512xf32>
    %cst_63 = arith.constant 1.000000e+00 : f32
    %124 = vector.broadcast %cst_63 : f32 to vector<32x512xf32>
    %125 = arith.addf %124, %123 : vector<32x512xf32>
    %cst_64 = arith.constant 5.000000e-01 : f32
    %126 = vector.broadcast %cst_64 : f32 to vector<32x512xf32>
    %127 = arith.mulf %126, %125 : vector<32x512xf32>
    %128 = arith.mulf %115, %127 : vector<32x512xf32>
    %129 = arith.truncf %128 : vector<32x512xf32> to vector<32x512xbf16>
    %c0_65 = arith.constant 0 : index
    %c0_66 = arith.constant 0 : index
    %c0_67 = arith.constant 0 : index
    %130 = vector.load %arg12[%c0_65, %c0_66, %c0_67] : memref<4x512x128xbf16, #tpu.memory_space<vmem>>, vector<1x512x128xbf16>
    %131 = vector.shape_cast %130 : vector<1x512x128xbf16> to vector<512x128xbf16>
    %cst_68 = arith.constant dense<0.000000e+00> : vector<32x128xf32>
    %132 = tpu.matmul %129, %131, %cst_68 {dimension_numbers = #tpu.dot_dimension_numbers<[1], [0], [0], [1], [0, 0, 1, 1], [], []>} : vector<32x512xbf16>, vector<512x128xbf16>, vector<32x128xf32> -> vector<32x128xf32>
    %c0_69 = arith.constant 0 : index
    %c0_70 = arith.constant 0 : index
    %c0_71 = arith.constant 0 : index
    %133 = vector.load %arg13[%c0_69, %c0_70, %c0_71] : memref<4x1x128xf32, #tpu.memory_space<vmem>>, vector<1x1x128xf32>
    %134 = vector.shape_cast %133 : vector<1x1x128xf32> to vector<1x128xf32>
    %135 = vector.broadcast %134 : vector<1x128xf32> to vector<32x128xf32>
    %136 = arith.addf %132, %135 : vector<32x128xf32>
    %137 = arith.addf %136, %107 : vector<32x128xf32>
    %c0_72 = arith.constant 0 : index
    %c0_73 = arith.constant 0 : index
    %c0_74 = arith.constant 0 : index
    %138 = vector.load %arg14[%c0_72, %c0_73, %c0_74] : memref<4x1x128xf32, #tpu.memory_space<vmem>>, vector<1x1x128xf32>
    %139 = vector.shape_cast %138 : vector<1x1x128xf32> to vector<1x128xf32>
    %c0_75 = arith.constant 0 : index
    %c0_76 = arith.constant 0 : index
    %c0_77 = arith.constant 0 : index
    %140 = vector.load %arg15[%c0_75, %c0_76, %c0_77] : memref<4x1x128xf32, #tpu.memory_space<vmem>>, vector<1x1x128xf32>
    %141 = vector.shape_cast %140 : vector<1x1x128xf32> to vector<1x128xf32>
    %cst_78 = arith.constant dense<0.000000e+00> : vector<32xf32>
    %142 = vector.multi_reduction <add>, %137, %cst_78 [1] : vector<32x128xf32> to vector<32xf32>
    %143 = vector.shape_cast %142 : vector<32xf32> to vector<32x1xf32>
    %cst_79 = arith.constant 1.280000e+02 : f32
    %144 = vector.broadcast %cst_79 : f32 to vector<32x1xf32>
    %145 = arith.divf %143, %144 : vector<32x1xf32>
    %146 = vector.broadcast %145 : vector<32x1xf32> to vector<32x128xf32>
    %147 = arith.subf %137, %146 : vector<32x128xf32>
    %148 = arith.mulf %147, %147 : vector<32x128xf32>
    %cst_80 = arith.constant dense<0.000000e+00> : vector<32xf32>
    %149 = vector.multi_reduction <add>, %148, %cst_80 [1] : vector<32x128xf32> to vector<32xf32>
    %150 = vector.shape_cast %149 : vector<32xf32> to vector<32x1xf32>
    %cst_81 = arith.constant 1.280000e+02 : f32
    %151 = vector.broadcast %cst_81 : f32 to vector<32x1xf32>
    %152 = arith.divf %150, %151 : vector<32x1xf32>
    %cst_82 = arith.constant 9.99999996E-13 : f32
    %153 = vector.broadcast %cst_82 : f32 to vector<32x1xf32>
    %154 = arith.addf %152, %153 : vector<32x1xf32>
    %155 = math.rsqrt %154 : vector<32x1xf32>
    %156 = vector.broadcast %155 : vector<32x1xf32> to vector<32x128xf32>
    %157 = arith.mulf %147, %156 : vector<32x128xf32>
    %158 = vector.broadcast %139 : vector<1x128xf32> to vector<32x128xf32>
    %159 = arith.mulf %157, %158 : vector<32x128xf32>
    %160 = vector.broadcast %141 : vector<1x128xf32> to vector<32x128xf32>
    %161 = arith.addf %159, %160 : vector<32x128xf32>
    %162 = arith.truncf %161 : vector<32x128xf32> to vector<32x128xbf16>
    %c1 = arith.constant 1 : index
    %c0_83 = arith.constant 0 : index
    %c0_84 = arith.constant 0 : index
    %163 = vector.load %arg4[%c1, %c0_83, %c0_84] : memref<4x128x384xbf16, #tpu.memory_space<vmem>>, vector<1x128x384xbf16>
    %164 = vector.shape_cast %163 : vector<1x128x384xbf16> to vector<128x384xbf16>
    %cst_85 = arith.constant dense<0.000000e+00> : vector<32x384xf32>
    %165 = tpu.matmul %162, %164, %cst_85 {dimension_numbers = #tpu.dot_dimension_numbers<[1], [0], [0], [1], [0, 0, 1, 1], [], []>} : vector<32x128xbf16>, vector<128x384xbf16>, vector<32x384xf32> -> vector<32x384xf32>
    %c1_86 = arith.constant 1 : index
    %c0_87 = arith.constant 0 : index
    %c0_88 = arith.constant 0 : index
    %166 = vector.load %arg5[%c1_86, %c0_87, %c0_88] : memref<4x1x384xf32, #tpu.memory_space<vmem>>, vector<1x1x384xf32>
    %167 = vector.shape_cast %166 : vector<1x1x384xf32> to vector<1x384xf32>
    %168 = vector.broadcast %167 : vector<1x384xf32> to vector<32x384xf32>
    %169 = arith.addf %165, %168 : vector<32x384xf32>
    %170 = vector.extract_strided_slice %169 {offsets = [0, 0], sizes = [32, 32], strides = [1, 1]} : vector<32x384xf32> to vector<32x32xf32>
    %171 = vector.extract_strided_slice %169 {offsets = [0, 128], sizes = [32, 32], strides = [1, 1]} : vector<32x384xf32> to vector<32x32xf32>
    %cst_89 = arith.constant dense<0.000000e+00> : vector<32x32xf32>
    %172 = tpu.matmul %170, %171, %cst_89 {dimension_numbers = #tpu.dot_dimension_numbers<[1], [1], [0], [0], [0, 0, 1, 0], [], []>} : vector<32x32xf32>, vector<32x32xf32>, vector<32x32xf32> -> vector<32x32xf32>
    %173 = vector.extract_strided_slice %169 {offsets = [0, 32], sizes = [32, 32], strides = [1, 1]} : vector<32x384xf32> to vector<32x32xf32>
    %174 = vector.extract_strided_slice %169 {offsets = [0, 160], sizes = [32, 32], strides = [1, 1]} : vector<32x384xf32> to vector<32x32xf32>
    %cst_90 = arith.constant dense<0.000000e+00> : vector<32x32xf32>
    %175 = tpu.matmul %173, %174, %cst_90 {dimension_numbers = #tpu.dot_dimension_numbers<[1], [1], [0], [0], [0, 0, 1, 0], [], []>} : vector<32x32xf32>, vector<32x32xf32>, vector<32x32xf32> -> vector<32x32xf32>
    %176 = vector.extract_strided_slice %169 {offsets = [0, 64], sizes = [32, 32], strides = [1, 1]} : vector<32x384xf32> to vector<32x32xf32>
    %177 = vector.extract_strided_slice %169 {offsets = [0, 192], sizes = [32, 32], strides = [1, 1]} : vector<32x384xf32> to vector<32x32xf32>
    %cst_91 = arith.constant dense<0.000000e+00> : vector<32x32xf32>
    %178 = tpu.matmul %176, %177, %cst_91 {dimension_numbers = #tpu.dot_dimension_numbers<[1], [1], [0], [0], [0, 0, 1, 0], [], []>} : vector<32x32xf32>, vector<32x32xf32>, vector<32x32xf32> -> vector<32x32xf32>
    %179 = vector.extract_strided_slice %169 {offsets = [0, 96], sizes = [32, 32], strides = [1, 1]} : vector<32x384xf32> to vector<32x32xf32>
    %180 = vector.extract_strided_slice %169 {offsets = [0, 224], sizes = [32, 32], strides = [1, 1]} : vector<32x384xf32> to vector<32x32xf32>
    %cst_92 = arith.constant dense<0.000000e+00> : vector<32x32xf32>
    %181 = tpu.matmul %179, %180, %cst_92 {dimension_numbers = #tpu.dot_dimension_numbers<[1], [1], [0], [0], [0, 0, 1, 0], [], []>} : vector<32x32xf32>, vector<32x32xf32>, vector<32x32xf32> -> vector<32x32xf32>
    %182 = tpu.concatenate %172, %175, %178, %181 in 0 : vector<32x32xf32>, vector<32x32xf32>, vector<32x32xf32>, vector<32x32xf32> -> vector<128x32xf32>
    %cst_93 = arith.constant 0.176776692 : f32
    %183 = vector.broadcast %cst_93 : f32 to vector<128x32xf32>
    %184 = arith.mulf %182, %183 : vector<128x32xf32>
    %185 = arith.addf %184, %23 : vector<128x32xf32>
    %cst_94 = arith.constant dense<0xFF800000> : vector<128xf32>
    %186 = vector.multi_reduction <maximumf>, %185, %cst_94 [1] : vector<128x32xf32> to vector<128xf32>
    %187 = vector.shape_cast %186 : vector<128xf32> to vector<128x1xf32>
    %188 = vector.broadcast %187 : vector<128x1xf32> to vector<128x32xf32>
    %189 = arith.subf %185, %188 : vector<128x32xf32>
    %190 = math.exp %189 : vector<128x32xf32>
    %cst_95 = arith.constant dense<0.000000e+00> : vector<128xf32>
    %191 = vector.multi_reduction <add>, %190, %cst_95 [1] : vector<128x32xf32> to vector<128xf32>
    %192 = vector.shape_cast %191 : vector<128xf32> to vector<128x1xf32>
    %193 = tpu.reciprocal %192 {approx = true} : vector<128x1xf32> -> vector<128x1xf32>
    %194 = vector.broadcast %193 : vector<128x1xf32> to vector<128x32xf32>
    %195 = arith.mulf %190, %194 : vector<128x32xf32>
    %196 = vector.extract_strided_slice %169 {offsets = [0, 256], sizes = [32, 32], strides = [1, 1]} : vector<32x384xf32> to vector<32x32xf32>
    %197 = vector.extract_strided_slice %195 {offsets = [0, 0], sizes = [32, 32], strides = [1, 1]} : vector<128x32xf32> to vector<32x32xf32>
    %cst_96 = arith.constant dense<0.000000e+00> : vector<32x32xf32>
    %198 = tpu.matmul %197, %196, %cst_96 {dimension_numbers = #tpu.dot_dimension_numbers<[1], [0], [0], [1], [0, 0, 1, 1], [], []>} : vector<32x32xf32>, vector<32x32xf32>, vector<32x32xf32> -> vector<32x32xf32>
    %c0_97 = arith.constant 0 : index
    %c0_98 = arith.constant 0 : index
    %199 = vector.load %arg21[%c0_97, %c0_98] : memref<32x128xf32, #tpu.memory_space<vmem>>, vector<32x32xf32>
    tpu.vector_store %arg21[%c0_97, %c0_98], %198 {strides = array<i32>} : memref<32x128xf32, #tpu.memory_space<vmem>>, vector<32x32xf32>,
    %200 = vector.extract_strided_slice %169 {offsets = [0, 288], sizes = [32, 32], strides = [1, 1]} : vector<32x384xf32> to vector<32x32xf32>
    %201 = vector.extract_strided_slice %195 {offsets = [32, 0], sizes = [32, 32], strides = [1, 1]} : vector<128x32xf32> to vector<32x32xf32>
    %cst_99 = arith.constant dense<0.000000e+00> : vector<32x32xf32>
    %202 = tpu.matmul %201, %200, %cst_99 {dimension_numbers = #tpu.dot_dimension_numbers<[1], [0], [0], [1], [0, 0, 1, 1], [], []>} : vector<32x32xf32>, vector<32x32xf32>, vector<32x32xf32> -> vector<32x32xf32>
    %c0_100 = arith.constant 0 : index
    %c32_101 = arith.constant 32 : index
    %203 = vector.load %arg21[%c0_100, %c32_101] : memref<32x128xf32, #tpu.memory_space<vmem>>, vector<32x32xf32>
    tpu.vector_store %arg21[%c0_100, %c32_101], %202 {strides = array<i32>} : memref<32x128xf32, #tpu.memory_space<vmem>>, vector<32x32xf32>,
    %204 = vector.extract_strided_slice %169 {offsets = [0, 320], sizes = [32, 32], strides = [1, 1]} : vector<32x384xf32> to vector<32x32xf32>
    %205 = vector.extract_strided_slice %195 {offsets = [64, 0], sizes = [32, 32], strides = [1, 1]} : vector<128x32xf32> to vector<32x32xf32>
    %cst_102 = arith.constant dense<0.000000e+00> : vector<32x32xf32>
    %206 = tpu.matmul %205, %204, %cst_102 {dimension_numbers = #tpu.dot_dimension_numbers<[1], [0], [0], [1], [0, 0, 1, 1], [], []>} : vector<32x32xf32>, vector<32x32xf32>, vector<32x32xf32> -> vector<32x32xf32>
    %c0_103 = arith.constant 0 : index
    %c64_104 = arith.constant 64 : index
    %207 = vector.load %arg21[%c0_103, %c64_104] : memref<32x128xf32, #tpu.memory_space<vmem>>, vector<32x32xf32>
    tpu.vector_store %arg21[%c0_103, %c64_104], %206 {strides = array<i32>} : memref<32x128xf32, #tpu.memory_space<vmem>>, vector<32x32xf32>,
    %208 = vector.extract_strided_slice %169 {offsets = [0, 352], sizes = [32, 32], strides = [1, 1]} : vector<32x384xf32> to vector<32x32xf32>
    %209 = vector.extract_strided_slice %195 {offsets = [96, 0], sizes = [32, 32], strides = [1, 1]} : vector<128x32xf32> to vector<32x32xf32>
    %cst_105 = arith.constant dense<0.000000e+00> : vector<32x32xf32>
    %210 = tpu.matmul %209, %208, %cst_105 {dimension_numbers = #tpu.dot_dimension_numbers<[1], [0], [0], [1], [0, 0, 1, 1], [], []>} : vector<32x32xf32>, vector<32x32xf32>, vector<32x32xf32> -> vector<32x32xf32>
    %c0_106 = arith.constant 0 : index
    %c96_107 = arith.constant 96 : index
    %211 = vector.load %arg21[%c0_106, %c96_107] : memref<32x128xf32, #tpu.memory_space<vmem>>, vector<32x32xf32>
    tpu.vector_store %arg21[%c0_106, %c96_107], %210 {strides = array<i32>} : memref<32x128xf32, #tpu.memory_space<vmem>>, vector<32x32xf32>,
    %c0_108 = arith.constant 0 : index
    %c0_109 = arith.constant 0 : index
    %212 = vector.load %arg21[%c0_108, %c0_109] : memref<32x128xf32, #tpu.memory_space<vmem>>, vector<32x128xf32>
    %213 = arith.truncf %212 : vector<32x128xf32> to vector<32x128xbf16>
    %c1_110 = arith.constant 1 : index
    %c0_111 = arith.constant 0 : index
    %c0_112 = arith.constant 0 : index
    %214 = vector.load %arg6[%c1_110, %c0_111, %c0_112] : memref<4x128x128xbf16, #tpu.memory_space<vmem>>, vector<1x128x128xbf16>
    %215 = vector.shape_cast %214 : vector<1x128x128xbf16> to vector<128x128xbf16>
    %cst_113 = arith.constant dense<0.000000e+00> : vector<32x128xf32>
    %216 = tpu.matmul %213, %215, %cst_113 {dimension_numbers = #tpu.dot_dimension_numbers<[1], [0], [0], [1], [0, 0, 1, 1], [], []>} : vector<32x128xbf16>, vector<128x128xbf16>, vector<32x128xf32> -> vector<32x128xf32>
    %c1_114 = arith.constant 1 : index
    %c0_115 = arith.constant 0 : index
    %c0_116 = arith.constant 0 : index
    %217 = vector.load %arg7[%c1_114, %c0_115, %c0_116] : memref<4x1x128xf32, #tpu.memory_space<vmem>>, vector<1x1x128xf32>
    %218 = vector.shape_cast %217 : vector<1x1x128xf32> to vector<1x128xf32>
    %219 = vector.broadcast %218 : vector<1x128xf32> to vector<32x128xf32>
    %220 = arith.addf %216, %219 : vector<32x128xf32>
    %221 = arith.addf %220, %161 : vector<32x128xf32>
    %c1_117 = arith.constant 1 : index
    %c0_118 = arith.constant 0 : index
    %c0_119 = arith.constant 0 : index
    %222 = vector.load %arg8[%c1_117, %c0_118, %c0_119] : memref<4x1x128xf32, #tpu.memory_space<vmem>>, vector<1x1x128xf32>
    %223 = vector.shape_cast %222 : vector<1x1x128xf32> to vector<1x128xf32>
    %c1_120 = arith.constant 1 : index
    %c0_121 = arith.constant 0 : index
    %c0_122 = arith.constant 0 : index
    %224 = vector.load %arg9[%c1_120, %c0_121, %c0_122] : memref<4x1x128xf32, #tpu.memory_space<vmem>>, vector<1x1x128xf32>
    %225 = vector.shape_cast %224 : vector<1x1x128xf32> to vector<1x128xf32>
    %cst_123 = arith.constant dense<0.000000e+00> : vector<32xf32>
    %226 = vector.multi_reduction <add>, %221, %cst_123 [1] : vector<32x128xf32> to vector<32xf32>
    %227 = vector.shape_cast %226 : vector<32xf32> to vector<32x1xf32>
    %cst_124 = arith.constant 1.280000e+02 : f32
    %228 = vector.broadcast %cst_124 : f32 to vector<32x1xf32>
    %229 = arith.divf %227, %228 : vector<32x1xf32>
    %230 = vector.broadcast %229 : vector<32x1xf32> to vector<32x128xf32>
    %231 = arith.subf %221, %230 : vector<32x128xf32>
    %232 = arith.mulf %231, %231 : vector<32x128xf32>
    %cst_125 = arith.constant dense<0.000000e+00> : vector<32xf32>
    %233 = vector.multi_reduction <add>, %232, %cst_125 [1] : vector<32x128xf32> to vector<32xf32>
    %234 = vector.shape_cast %233 : vector<32xf32> to vector<32x1xf32>
    %cst_126 = arith.constant 1.280000e+02 : f32
    %235 = vector.broadcast %cst_126 : f32 to vector<32x1xf32>
    %236 = arith.divf %234, %235 : vector<32x1xf32>
    %cst_127 = arith.constant 9.99999996E-13 : f32
    %237 = vector.broadcast %cst_127 : f32 to vector<32x1xf32>
    %238 = arith.addf %236, %237 : vector<32x1xf32>
    %239 = math.rsqrt %238 : vector<32x1xf32>
    %240 = vector.broadcast %239 : vector<32x1xf32> to vector<32x128xf32>
    %241 = arith.mulf %231, %240 : vector<32x128xf32>
    %242 = vector.broadcast %223 : vector<1x128xf32> to vector<32x128xf32>
    %243 = arith.mulf %241, %242 : vector<32x128xf32>
    %244 = vector.broadcast %225 : vector<1x128xf32> to vector<32x128xf32>
    %245 = arith.addf %243, %244 : vector<32x128xf32>
    %246 = arith.truncf %245 : vector<32x128xf32> to vector<32x128xbf16>
    %c1_128 = arith.constant 1 : index
    %c0_129 = arith.constant 0 : index
    %c0_130 = arith.constant 0 : index
    %247 = vector.load %arg10[%c1_128, %c0_129, %c0_130] : memref<4x128x512xbf16, #tpu.memory_space<vmem>>, vector<1x128x512xbf16>
    %248 = vector.shape_cast %247 : vector<1x128x512xbf16> to vector<128x512xbf16>
    %cst_131 = arith.constant dense<0.000000e+00> : vector<32x512xf32>
    %249 = tpu.matmul %246, %248, %cst_131 {dimension_numbers = #tpu.dot_dimension_numbers<[1], [0], [0], [1], [0, 0, 1, 1], [], []>} : vector<32x128xbf16>, vector<128x512xbf16>, vector<32x512xf32> -> vector<32x512xf32>
    %c1_132 = arith.constant 1 : index
    %c0_133 = arith.constant 0 : index
    %c0_134 = arith.constant 0 : index
    %250 = vector.load %arg11[%c1_132, %c0_133, %c0_134] : memref<4x1x512xf32, #tpu.memory_space<vmem>>, vector<1x1x512xf32>
    %251 = vector.shape_cast %250 : vector<1x1x512xf32> to vector<1x512xf32>
    %252 = vector.broadcast %251 : vector<1x512xf32> to vector<32x512xf32>
    %253 = arith.addf %249, %252 : vector<32x512xf32>
    %254 = arith.mulf %253, %253 : vector<32x512xf32>
    %255 = arith.mulf %253, %254 : vector<32x512xf32>
    %cst_135 = arith.constant 4.471500e-02 : f32
    %256 = vector.broadcast %cst_135 : f32 to vector<32x512xf32>
    %257 = arith.mulf %256, %255 : vector<32x512xf32>
    %258 = arith.addf %253, %257 : vector<32x512xf32>
    %cst_136 = arith.constant 0.797884583 : f32
    %259 = vector.broadcast %cst_136 : f32 to vector<32x512xf32>
    %260 = arith.mulf %259, %258 : vector<32x512xf32>
    %261 = math.tanh %260 : vector<32x512xf32>
    %cst_137 = arith.constant 1.000000e+00 : f32
    %262 = vector.broadcast %cst_137 : f32 to vector<32x512xf32>
    %263 = arith.addf %262, %261 : vector<32x512xf32>
    %cst_138 = arith.constant 5.000000e-01 : f32
    %264 = vector.broadcast %cst_138 : f32 to vector<32x512xf32>
    %265 = arith.mulf %264, %263 : vector<32x512xf32>
    %266 = arith.mulf %253, %265 : vector<32x512xf32>
    %267 = arith.truncf %266 : vector<32x512xf32> to vector<32x512xbf16>
    %c1_139 = arith.constant 1 : index
    %c0_140 = arith.constant 0 : index
    %c0_141 = arith.constant 0 : index
    %268 = vector.load %arg12[%c1_139, %c0_140, %c0_141] : memref<4x512x128xbf16, #tpu.memory_space<vmem>>, vector<1x512x128xbf16>
    %269 = vector.shape_cast %268 : vector<1x512x128xbf16> to vector<512x128xbf16>
    %cst_142 = arith.constant dense<0.000000e+00> : vector<32x128xf32>
    %270 = tpu.matmul %267, %269, %cst_142 {dimension_numbers = #tpu.dot_dimension_numbers<[1], [0], [0], [1], [0, 0, 1, 1], [], []>} : vector<32x512xbf16>, vector<512x128xbf16>, vector<32x128xf32> -> vector<32x128xf32>
    %c1_143 = arith.constant 1 : index
    %c0_144 = arith.constant 0 : index
    %c0_145 = arith.constant 0 : index
    %271 = vector.load %arg13[%c1_143, %c0_144, %c0_145] : memref<4x1x128xf32, #tpu.memory_space<vmem>>, vector<1x1x128xf32>
    %272 = vector.shape_cast %271 : vector<1x1x128xf32> to vector<1x128xf32>
    %273 = vector.broadcast %272 : vector<1x128xf32> to vector<32x128xf32>
    %274 = arith.addf %270, %273 : vector<32x128xf32>
    %275 = arith.addf %274, %245 : vector<32x128xf32>
    %c1_146 = arith.constant 1 : index
    %c0_147 = arith.constant 0 : index
    %c0_148 = arith.constant 0 : index
    %276 = vector.load %arg14[%c1_146, %c0_147, %c0_148] : memref<4x1x128xf32, #tpu.memory_space<vmem>>, vector<1x1x128xf32>
    %277 = vector.shape_cast %276 : vector<1x1x128xf32> to vector<1x128xf32>
    %c1_149 = arith.constant 1 : index
    %c0_150 = arith.constant 0 : index
    %c0_151 = arith.constant 0 : index
    %278 = vector.load %arg15[%c1_149, %c0_150, %c0_151] : memref<4x1x128xf32, #tpu.memory_space<vmem>>, vector<1x1x128xf32>
    %279 = vector.shape_cast %278 : vector<1x1x128xf32> to vector<1x128xf32>
    %cst_152 = arith.constant dense<0.000000e+00> : vector<32xf32>
    %280 = vector.multi_reduction <add>, %275, %cst_152 [1] : vector<32x128xf32> to vector<32xf32>
    %281 = vector.shape_cast %280 : vector<32xf32> to vector<32x1xf32>
    %cst_153 = arith.constant 1.280000e+02 : f32
    %282 = vector.broadcast %cst_153 : f32 to vector<32x1xf32>
    %283 = arith.divf %281, %282 : vector<32x1xf32>
    %284 = vector.broadcast %283 : vector<32x1xf32> to vector<32x128xf32>
    %285 = arith.subf %275, %284 : vector<32x128xf32>
    %286 = arith.mulf %285, %285 : vector<32x128xf32>
    %cst_154 = arith.constant dense<0.000000e+00> : vector<32xf32>
    %287 = vector.multi_reduction <add>, %286, %cst_154 [1] : vector<32x128xf32> to vector<32xf32>
    %288 = vector.shape_cast %287 : vector<32xf32> to vector<32x1xf32>
    %cst_155 = arith.constant 1.280000e+02 : f32
    %289 = vector.broadcast %cst_155 : f32 to vector<32x1xf32>
    %290 = arith.divf %288, %289 : vector<32x1xf32>
    %cst_156 = arith.constant 9.99999996E-13 : f32
    %291 = vector.broadcast %cst_156 : f32 to vector<32x1xf32>
    %292 = arith.addf %290, %291 : vector<32x1xf32>
    %293 = math.rsqrt %292 : vector<32x1xf32>
    %294 = vector.broadcast %293 : vector<32x1xf32> to vector<32x128xf32>
    %295 = arith.mulf %285, %294 : vector<32x128xf32>
    %296 = vector.broadcast %277 : vector<1x128xf32> to vector<32x128xf32>
    %297 = arith.mulf %295, %296 : vector<32x128xf32>
    %298 = vector.broadcast %279 : vector<1x128xf32> to vector<32x128xf32>
    %299 = arith.addf %297, %298 : vector<32x128xf32>
    %300 = arith.truncf %299 : vector<32x128xf32> to vector<32x128xbf16>
    %c2 = arith.constant 2 : index
    %c0_157 = arith.constant 0 : index
    %c0_158 = arith.constant 0 : index
    %301 = vector.load %arg4[%c2, %c0_157, %c0_158] : memref<4x128x384xbf16, #tpu.memory_space<vmem>>, vector<1x128x384xbf16>
    %302 = vector.shape_cast %301 : vector<1x128x384xbf16> to vector<128x384xbf16>
    %cst_159 = arith.constant dense<0.000000e+00> : vector<32x384xf32>
    %303 = tpu.matmul %300, %302, %cst_159 {dimension_numbers = #tpu.dot_dimension_numbers<[1], [0], [0], [1], [0, 0, 1, 1], [], []>} : vector<32x128xbf16>, vector<128x384xbf16>, vector<32x384xf32> -> vector<32x384xf32>
    %c2_160 = arith.constant 2 : index
    %c0_161 = arith.constant 0 : index
    %c0_162 = arith.constant 0 : index
    %304 = vector.load %arg5[%c2_160, %c0_161, %c0_162] : memref<4x1x384xf32, #tpu.memory_space<vmem>>, vector<1x1x384xf32>
    %305 = vector.shape_cast %304 : vector<1x1x384xf32> to vector<1x384xf32>
    %306 = vector.broadcast %305 : vector<1x384xf32> to vector<32x384xf32>
    %307 = arith.addf %303, %306 : vector<32x384xf32>
    %308 = vector.extract_strided_slice %307 {offsets = [0, 0], sizes = [32, 32], strides = [1, 1]} : vector<32x384xf32> to vector<32x32xf32>
    %309 = vector.extract_strided_slice %307 {offsets = [0, 128], sizes = [32, 32], strides = [1, 1]} : vector<32x384xf32> to vector<32x32xf32>
    %cst_163 = arith.constant dense<0.000000e+00> : vector<32x32xf32>
    %310 = tpu.matmul %308, %309, %cst_163 {dimension_numbers = #tpu.dot_dimension_numbers<[1], [1], [0], [0], [0, 0, 1, 0], [], []>} : vector<32x32xf32>, vector<32x32xf32>, vector<32x32xf32> -> vector<32x32xf32>
    %311 = vector.extract_strided_slice %307 {offsets = [0, 32], sizes = [32, 32], strides = [1, 1]} : vector<32x384xf32> to vector<32x32xf32>
    %312 = vector.extract_strided_slice %307 {offsets = [0, 160], sizes = [32, 32], strides = [1, 1]} : vector<32x384xf32> to vector<32x32xf32>
    %cst_164 = arith.constant dense<0.000000e+00> : vector<32x32xf32>
    %313 = tpu.matmul %311, %312, %cst_164 {dimension_numbers = #tpu.dot_dimension_numbers<[1], [1], [0], [0], [0, 0, 1, 0], [], []>} : vector<32x32xf32>, vector<32x32xf32>, vector<32x32xf32> -> vector<32x32xf32>
    %314 = vector.extract_strided_slice %307 {offsets = [0, 64], sizes = [32, 32], strides = [1, 1]} : vector<32x384xf32> to vector<32x32xf32>
    %315 = vector.extract_strided_slice %307 {offsets = [0, 192], sizes = [32, 32], strides = [1, 1]} : vector<32x384xf32> to vector<32x32xf32>
    %cst_165 = arith.constant dense<0.000000e+00> : vector<32x32xf32>
    %316 = tpu.matmul %314, %315, %cst_165 {dimension_numbers = #tpu.dot_dimension_numbers<[1], [1], [0], [0], [0, 0, 1, 0], [], []>} : vector<32x32xf32>, vector<32x32xf32>, vector<32x32xf32> -> vector<32x32xf32>
    %317 = vector.extract_strided_slice %307 {offsets = [0, 96], sizes = [32, 32], strides = [1, 1]} : vector<32x384xf32> to vector<32x32xf32>
    %318 = vector.extract_strided_slice %307 {offsets = [0, 224], sizes = [32, 32], strides = [1, 1]} : vector<32x384xf32> to vector<32x32xf32>
    %cst_166 = arith.constant dense<0.000000e+00> : vector<32x32xf32>
    %319 = tpu.matmul %317, %318, %cst_166 {dimension_numbers = #tpu.dot_dimension_numbers<[1], [1], [0], [0], [0, 0, 1, 0], [], []>} : vector<32x32xf32>, vector<32x32xf32>, vector<32x32xf32> -> vector<32x32xf32>
    %320 = tpu.concatenate %310, %313, %316, %319 in 0 : vector<32x32xf32>, vector<32x32xf32>, vector<32x32xf32>, vector<32x32xf32> -> vector<128x32xf32>
    %cst_167 = arith.constant 0.176776692 : f32
    %321 = vector.broadcast %cst_167 : f32 to vector<128x32xf32>
    %322 = arith.mulf %320, %321 : vector<128x32xf32>
    %323 = arith.addf %322, %23 : vector<128x32xf32>
    %cst_168 = arith.constant dense<0xFF800000> : vector<128xf32>
    %324 = vector.multi_reduction <maximumf>, %323, %cst_168 [1] : vector<128x32xf32> to vector<128xf32>
    %325 = vector.shape_cast %324 : vector<128xf32> to vector<128x1xf32>
    %326 = vector.broadcast %325 : vector<128x1xf32> to vector<128x32xf32>
    %327 = arith.subf %323, %326 : vector<128x32xf32>
    %328 = math.exp %327 : vector<128x32xf32>
    %cst_169 = arith.constant dense<0.000000e+00> : vector<128xf32>
    %329 = vector.multi_reduction <add>, %328, %cst_169 [1] : vector<128x32xf32> to vector<128xf32>
    %330 = vector.shape_cast %329 : vector<128xf32> to vector<128x1xf32>
    %331 = tpu.reciprocal %330 {approx = true} : vector<128x1xf32> -> vector<128x1xf32>
    %332 = vector.broadcast %331 : vector<128x1xf32> to vector<128x32xf32>
    %333 = arith.mulf %328, %332 : vector<128x32xf32>
    %334 = vector.extract_strided_slice %307 {offsets = [0, 256], sizes = [32, 32], strides = [1, 1]} : vector<32x384xf32> to vector<32x32xf32>
    %335 = vector.extract_strided_slice %333 {offsets = [0, 0], sizes = [32, 32], strides = [1, 1]} : vector<128x32xf32> to vector<32x32xf32>
    %cst_170 = arith.constant dense<0.000000e+00> : vector<32x32xf32>
    %336 = tpu.matmul %335, %334, %cst_170 {dimension_numbers = #tpu.dot_dimension_numbers<[1], [0], [0], [1], [0, 0, 1, 1], [], []>} : vector<32x32xf32>, vector<32x32xf32>, vector<32x32xf32> -> vector<32x32xf32>
    %c0_171 = arith.constant 0 : index
    %c0_172 = arith.constant 0 : index
    %337 = vector.load %arg21[%c0_171, %c0_172] : memref<32x128xf32, #tpu.memory_space<vmem>>, vector<32x32xf32>
    tpu.vector_store %arg21[%c0_171, %c0_172], %336 {strides = array<i32>} : memref<32x128xf32, #tpu.memory_space<vmem>>, vector<32x32xf32>,
    %338 = vector.extract_strided_slice %307 {offsets = [0, 288], sizes = [32, 32], strides = [1, 1]} : vector<32x384xf32> to vector<32x32xf32>
    %339 = vector.extract_strided_slice %333 {offsets = [32, 0], sizes = [32, 32], strides = [1, 1]} : vector<128x32xf32> to vector<32x32xf32>
    %cst_173 = arith.constant dense<0.000000e+00> : vector<32x32xf32>
    %340 = tpu.matmul %339, %338, %cst_173 {dimension_numbers = #tpu.dot_dimension_numbers<[1], [0], [0], [1], [0, 0, 1, 1], [], []>} : vector<32x32xf32>, vector<32x32xf32>, vector<32x32xf32> -> vector<32x32xf32>
    %c0_174 = arith.constant 0 : index
    %c32_175 = arith.constant 32 : index
    %341 = vector.load %arg21[%c0_174, %c32_175] : memref<32x128xf32, #tpu.memory_space<vmem>>, vector<32x32xf32>
    tpu.vector_store %arg21[%c0_174, %c32_175], %340 {strides = array<i32>} : memref<32x128xf32, #tpu.memory_space<vmem>>, vector<32x32xf32>,
    %342 = vector.extract_strided_slice %307 {offsets = [0, 320], sizes = [32, 32], strides = [1, 1]} : vector<32x384xf32> to vector<32x32xf32>
    %343 = vector.extract_strided_slice %333 {offsets = [64, 0], sizes = [32, 32], strides = [1, 1]} : vector<128x32xf32> to vector<32x32xf32>
    %cst_176 = arith.constant dense<0.000000e+00> : vector<32x32xf32>
    %344 = tpu.matmul %343, %342, %cst_176 {dimension_numbers = #tpu.dot_dimension_numbers<[1], [0], [0], [1], [0, 0, 1, 1], [], []>} : vector<32x32xf32>, vector<32x32xf32>, vector<32x32xf32> -> vector<32x32xf32>
    %c0_177 = arith.constant 0 : index
    %c64_178 = arith.constant 64 : index
    %345 = vector.load %arg21[%c0_177, %c64_178] : memref<32x128xf32, #tpu.memory_space<vmem>>, vector<32x32xf32>
    tpu.vector_store %arg21[%c0_177, %c64_178], %344 {strides = array<i32>} : memref<32x128xf32, #tpu.memory_space<vmem>>, vector<32x32xf32>,
    %346 = vector.extract_strided_slice %307 {offsets = [0, 352], sizes = [32, 32], strides = [1, 1]} : vector<32x384xf32> to vector<32x32xf32>
    %347 = vector.extract_strided_slice %333 {offsets = [96, 0], sizes = [32, 32], strides = [1, 1]} : vector<128x32xf32> to vector<32x32xf32>
    %cst_179 = arith.constant dense<0.000000e+00> : vector<32x32xf32>
    %348 = tpu.matmul %347, %346, %cst_179 {dimension_numbers = #tpu.dot_dimension_numbers<[1], [0], [0], [1], [0, 0, 1, 1], [], []>} : vector<32x32xf32>, vector<32x32xf32>, vector<32x32xf32> -> vector<32x32xf32>
    %c0_180 = arith.constant 0 : index
    %c96_181 = arith.constant 96 : index
    %349 = vector.load %arg21[%c0_180, %c96_181] : memref<32x128xf32, #tpu.memory_space<vmem>>, vector<32x32xf32>
    tpu.vector_store %arg21[%c0_180, %c96_181], %348 {strides = array<i32>} : memref<32x128xf32, #tpu.memory_space<vmem>>, vector<32x32xf32>,
    %c0_182 = arith.constant 0 : index
    %c0_183 = arith.constant 0 : index
    %350 = vector.load %arg21[%c0_182, %c0_183] : memref<32x128xf32, #tpu.memory_space<vmem>>, vector<32x128xf32>
    %351 = arith.truncf %350 : vector<32x128xf32> to vector<32x128xbf16>
    %c2_184 = arith.constant 2 : index
    %c0_185 = arith.constant 0 : index
    %c0_186 = arith.constant 0 : index
    %352 = vector.load %arg6[%c2_184, %c0_185, %c0_186] : memref<4x128x128xbf16, #tpu.memory_space<vmem>>, vector<1x128x128xbf16>
    %353 = vector.shape_cast %352 : vector<1x128x128xbf16> to vector<128x128xbf16>
    %cst_187 = arith.constant dense<0.000000e+00> : vector<32x128xf32>
    %354 = tpu.matmul %351, %353, %cst_187 {dimension_numbers = #tpu.dot_dimension_numbers<[1], [0], [0], [1], [0, 0, 1, 1], [], []>} : vector<32x128xbf16>, vector<128x128xbf16>, vector<32x128xf32> -> vector<32x128xf32>
    %c2_188 = arith.constant 2 : index
    %c0_189 = arith.constant 0 : index
    %c0_190 = arith.constant 0 : index
    %355 = vector.load %arg7[%c2_188, %c0_189, %c0_190] : memref<4x1x128xf32, #tpu.memory_space<vmem>>, vector<1x1x128xf32>
    %356 = vector.shape_cast %355 : vector<1x1x128xf32> to vector<1x128xf32>
    %357 = vector.broadcast %356 : vector<1x128xf32> to vector<32x128xf32>
    %358 = arith.addf %354, %357 : vector<32x128xf32>
    %359 = arith.addf %358, %299 : vector<32x128xf32>
    %c2_191 = arith.constant 2 : index
    %c0_192 = arith.constant 0 : index
    %c0_193 = arith.constant 0 : index
    %360 = vector.load %arg8[%c2_191, %c0_192, %c0_193] : memref<4x1x128xf32, #tpu.memory_space<vmem>>, vector<1x1x128xf32>
    %361 = vector.shape_cast %360 : vector<1x1x128xf32> to vector<1x128xf32>
    %c2_194 = arith.constant 2 : index
    %c0_195 = arith.constant 0 : index
    %c0_196 = arith.constant 0 : index
    %362 = vector.load %arg9[%c2_194, %c0_195, %c0_196] : memref<4x1x128xf32, #tpu.memory_space<vmem>>, vector<1x1x128xf32>
    %363 = vector.shape_cast %362 : vector<1x1x128xf32> to vector<1x128xf32>
    %cst_197 = arith.constant dense<0.000000e+00> : vector<32xf32>
    %364 = vector.multi_reduction <add>, %359, %cst_197 [1] : vector<32x128xf32> to vector<32xf32>
    %365 = vector.shape_cast %364 : vector<32xf32> to vector<32x1xf32>
    %cst_198 = arith.constant 1.280000e+02 : f32
    %366 = vector.broadcast %cst_198 : f32 to vector<32x1xf32>
    %367 = arith.divf %365, %366 : vector<32x1xf32>
    %368 = vector.broadcast %367 : vector<32x1xf32> to vector<32x128xf32>
    %369 = arith.subf %359, %368 : vector<32x128xf32>
    %370 = arith.mulf %369, %369 : vector<32x128xf32>
    %cst_199 = arith.constant dense<0.000000e+00> : vector<32xf32>
    %371 = vector.multi_reduction <add>, %370, %cst_199 [1] : vector<32x128xf32> to vector<32xf32>
    %372 = vector.shape_cast %371 : vector<32xf32> to vector<32x1xf32>
    %cst_200 = arith.constant 1.280000e+02 : f32
    %373 = vector.broadcast %cst_200 : f32 to vector<32x1xf32>
    %374 = arith.divf %372, %373 : vector<32x1xf32>
    %cst_201 = arith.constant 9.99999996E-13 : f32
    %375 = vector.broadcast %cst_201 : f32 to vector<32x1xf32>
    %376 = arith.addf %374, %375 : vector<32x1xf32>
    %377 = math.rsqrt %376 : vector<32x1xf32>
    %378 = vector.broadcast %377 : vector<32x1xf32> to vector<32x128xf32>
    %379 = arith.mulf %369, %378 : vector<32x128xf32>
    %380 = vector.broadcast %361 : vector<1x128xf32> to vector<32x128xf32>
    %381 = arith.mulf %379, %380 : vector<32x128xf32>
    %382 = vector.broadcast %363 : vector<1x128xf32> to vector<32x128xf32>
    %383 = arith.addf %381, %382 : vector<32x128xf32>
    %384 = arith.truncf %383 : vector<32x128xf32> to vector<32x128xbf16>
    %c2_202 = arith.constant 2 : index
    %c0_203 = arith.constant 0 : index
    %c0_204 = arith.constant 0 : index
    %385 = vector.load %arg10[%c2_202, %c0_203, %c0_204] : memref<4x128x512xbf16, #tpu.memory_space<vmem>>, vector<1x128x512xbf16>
    %386 = vector.shape_cast %385 : vector<1x128x512xbf16> to vector<128x512xbf16>
    %cst_205 = arith.constant dense<0.000000e+00> : vector<32x512xf32>
    %387 = tpu.matmul %384, %386, %cst_205 {dimension_numbers = #tpu.dot_dimension_numbers<[1], [0], [0], [1], [0, 0, 1, 1], [], []>} : vector<32x128xbf16>, vector<128x512xbf16>, vector<32x512xf32> -> vector<32x512xf32>
    %c2_206 = arith.constant 2 : index
    %c0_207 = arith.constant 0 : index
    %c0_208 = arith.constant 0 : index
    %388 = vector.load %arg11[%c2_206, %c0_207, %c0_208] : memref<4x1x512xf32, #tpu.memory_space<vmem>>, vector<1x1x512xf32>
    %389 = vector.shape_cast %388 : vector<1x1x512xf32> to vector<1x512xf32>
    %390 = vector.broadcast %389 : vector<1x512xf32> to vector<32x512xf32>
    %391 = arith.addf %387, %390 : vector<32x512xf32>
    %392 = arith.mulf %391, %391 : vector<32x512xf32>
    %393 = arith.mulf %391, %392 : vector<32x512xf32>
    %cst_209 = arith.constant 4.471500e-02 : f32
    %394 = vector.broadcast %cst_209 : f32 to vector<32x512xf32>
    %395 = arith.mulf %394, %393 : vector<32x512xf32>
    %396 = arith.addf %391, %395 : vector<32x512xf32>
    %cst_210 = arith.constant 0.797884583 : f32
    %397 = vector.broadcast %cst_210 : f32 to vector<32x512xf32>
    %398 = arith.mulf %397, %396 : vector<32x512xf32>
    %399 = math.tanh %398 : vector<32x512xf32>
    %cst_211 = arith.constant 1.000000e+00 : f32
    %400 = vector.broadcast %cst_211 : f32 to vector<32x512xf32>
    %401 = arith.addf %400, %399 : vector<32x512xf32>
    %cst_212 = arith.constant 5.000000e-01 : f32
    %402 = vector.broadcast %cst_212 : f32 to vector<32x512xf32>
    %403 = arith.mulf %402, %401 : vector<32x512xf32>
    %404 = arith.mulf %391, %403 : vector<32x512xf32>
    %405 = arith.truncf %404 : vector<32x512xf32> to vector<32x512xbf16>
    %c2_213 = arith.constant 2 : index
    %c0_214 = arith.constant 0 : index
    %c0_215 = arith.constant 0 : index
    %406 = vector.load %arg12[%c2_213, %c0_214, %c0_215] : memref<4x512x128xbf16, #tpu.memory_space<vmem>>, vector<1x512x128xbf16>
    %407 = vector.shape_cast %406 : vector<1x512x128xbf16> to vector<512x128xbf16>
    %cst_216 = arith.constant dense<0.000000e+00> : vector<32x128xf32>
    %408 = tpu.matmul %405, %407, %cst_216 {dimension_numbers = #tpu.dot_dimension_numbers<[1], [0], [0], [1], [0, 0, 1, 1], [], []>} : vector<32x512xbf16>, vector<512x128xbf16>, vector<32x128xf32> -> vector<32x128xf32>
    %c2_217 = arith.constant 2 : index
    %c0_218 = arith.constant 0 : index
    %c0_219 = arith.constant 0 : index
    %409 = vector.load %arg13[%c2_217, %c0_218, %c0_219] : memref<4x1x128xf32, #tpu.memory_space<vmem>>, vector<1x1x128xf32>
    %410 = vector.shape_cast %409 : vector<1x1x128xf32> to vector<1x128xf32>
    %411 = vector.broadcast %410 : vector<1x128xf32> to vector<32x128xf32>
    %412 = arith.addf %408, %411 : vector<32x128xf32>
    %413 = arith.addf %412, %383 : vector<32x128xf32>
    %c2_220 = arith.constant 2 : index
    %c0_221 = arith.constant 0 : index
    %c0_222 = arith.constant 0 : index
    %414 = vector.load %arg14[%c2_220, %c0_221, %c0_222] : memref<4x1x128xf32, #tpu.memory_space<vmem>>, vector<1x1x128xf32>
    %415 = vector.shape_cast %414 : vector<1x1x128xf32> to vector<1x128xf32>
    %c2_223 = arith.constant 2 : index
    %c0_224 = arith.constant 0 : index
    %c0_225 = arith.constant 0 : index
    %416 = vector.load %arg15[%c2_223, %c0_224, %c0_225] : memref<4x1x128xf32, #tpu.memory_space<vmem>>, vector<1x1x128xf32>
    %417 = vector.shape_cast %416 : vector<1x1x128xf32> to vector<1x128xf32>
    %cst_226 = arith.constant dense<0.000000e+00> : vector<32xf32>
    %418 = vector.multi_reduction <add>, %413, %cst_226 [1] : vector<32x128xf32> to vector<32xf32>
    %419 = vector.shape_cast %418 : vector<32xf32> to vector<32x1xf32>
    %cst_227 = arith.constant 1.280000e+02 : f32
    %420 = vector.broadcast %cst_227 : f32 to vector<32x1xf32>
    %421 = arith.divf %419, %420 : vector<32x1xf32>
    %422 = vector.broadcast %421 : vector<32x1xf32> to vector<32x128xf32>
    %423 = arith.subf %413, %422 : vector<32x128xf32>
    %424 = arith.mulf %423, %423 : vector<32x128xf32>
    %cst_228 = arith.constant dense<0.000000e+00> : vector<32xf32>
    %425 = vector.multi_reduction <add>, %424, %cst_228 [1] : vector<32x128xf32> to vector<32xf32>
    %426 = vector.shape_cast %425 : vector<32xf32> to vector<32x1xf32>
    %cst_229 = arith.constant 1.280000e+02 : f32
    %427 = vector.broadcast %cst_229 : f32 to vector<32x1xf32>
    %428 = arith.divf %426, %427 : vector<32x1xf32>
    %cst_230 = arith.constant 9.99999996E-13 : f32
    %429 = vector.broadcast %cst_230 : f32 to vector<32x1xf32>
    %430 = arith.addf %428, %429 : vector<32x1xf32>
    %431 = math.rsqrt %430 : vector<32x1xf32>
    %432 = vector.broadcast %431 : vector<32x1xf32> to vector<32x128xf32>
    %433 = arith.mulf %423, %432 : vector<32x128xf32>
    %434 = vector.broadcast %415 : vector<1x128xf32> to vector<32x128xf32>
    %435 = arith.mulf %433, %434 : vector<32x128xf32>
    %436 = vector.broadcast %417 : vector<1x128xf32> to vector<32x128xf32>
    %437 = arith.addf %435, %436 : vector<32x128xf32>
    %438 = arith.truncf %437 : vector<32x128xf32> to vector<32x128xbf16>
    %c3 = arith.constant 3 : index
    %c0_231 = arith.constant 0 : index
    %c0_232 = arith.constant 0 : index
    %439 = vector.load %arg4[%c3, %c0_231, %c0_232] : memref<4x128x384xbf16, #tpu.memory_space<vmem>>, vector<1x128x384xbf16>
    %440 = vector.shape_cast %439 : vector<1x128x384xbf16> to vector<128x384xbf16>
    %cst_233 = arith.constant dense<0.000000e+00> : vector<32x384xf32>
    %441 = tpu.matmul %438, %440, %cst_233 {dimension_numbers = #tpu.dot_dimension_numbers<[1], [0], [0], [1], [0, 0, 1, 1], [], []>} : vector<32x128xbf16>, vector<128x384xbf16>, vector<32x384xf32> -> vector<32x384xf32>
    %c3_234 = arith.constant 3 : index
    %c0_235 = arith.constant 0 : index
    %c0_236 = arith.constant 0 : index
    %442 = vector.load %arg5[%c3_234, %c0_235, %c0_236] : memref<4x1x384xf32, #tpu.memory_space<vmem>>, vector<1x1x384xf32>
    %443 = vector.shape_cast %442 : vector<1x1x384xf32> to vector<1x384xf32>
    %444 = vector.broadcast %443 : vector<1x384xf32> to vector<32x384xf32>
    %445 = arith.addf %441, %444 : vector<32x384xf32>
    %446 = vector.extract_strided_slice %445 {offsets = [0, 0], sizes = [32, 32], strides = [1, 1]} : vector<32x384xf32> to vector<32x32xf32>
    %447 = vector.extract_strided_slice %445 {offsets = [0, 128], sizes = [32, 32], strides = [1, 1]} : vector<32x384xf32> to vector<32x32xf32>
    %cst_237 = arith.constant dense<0.000000e+00> : vector<32x32xf32>
    %448 = tpu.matmul %446, %447, %cst_237 {dimension_numbers = #tpu.dot_dimension_numbers<[1], [1], [0], [0], [0, 0, 1, 0], [], []>} : vector<32x32xf32>, vector<32x32xf32>, vector<32x32xf32> -> vector<32x32xf32>
    %449 = vector.extract_strided_slice %445 {offsets = [0, 32], sizes = [32, 32], strides = [1, 1]} : vector<32x384xf32> to vector<32x32xf32>
    %450 = vector.extract_strided_slice %445 {offsets = [0, 160], sizes = [32, 32], strides = [1, 1]} : vector<32x384xf32> to vector<32x32xf32>
    %cst_238 = arith.constant dense<0.000000e+00> : vector<32x32xf32>
    %451 = tpu.matmul %449, %450, %cst_238 {dimension_numbers = #tpu.dot_dimension_numbers<[1], [1], [0], [0], [0, 0, 1, 0], [], []>} : vector<32x32xf32>, vector<32x32xf32>, vector<32x32xf32> -> vector<32x32xf32>
    %452 = vector.extract_strided_slice %445 {offsets = [0, 64], sizes = [32, 32], strides = [1, 1]} : vector<32x384xf32> to vector<32x32xf32>
    %453 = vector.extract_strided_slice %445 {offsets = [0, 192], sizes = [32, 32], strides = [1, 1]} : vector<32x384xf32> to vector<32x32xf32>
    %cst_239 = arith.constant dense<0.000000e+00> : vector<32x32xf32>
    %454 = tpu.matmul %452, %453, %cst_239 {dimension_numbers = #tpu.dot_dimension_numbers<[1], [1], [0], [0], [0, 0, 1, 0], [], []>} : vector<32x32xf32>, vector<32x32xf32>, vector<32x32xf32> -> vector<32x32xf32>
    %455 = vector.extract_strided_slice %445 {offsets = [0, 96], sizes = [32, 32], strides = [1, 1]} : vector<32x384xf32> to vector<32x32xf32>
    %456 = vector.extract_strided_slice %445 {offsets = [0, 224], sizes = [32, 32], strides = [1, 1]} : vector<32x384xf32> to vector<32x32xf32>
    %cst_240 = arith.constant dense<0.000000e+00> : vector<32x32xf32>
    %457 = tpu.matmul %455, %456, %cst_240 {dimension_numbers = #tpu.dot_dimension_numbers<[1], [1], [0], [0], [0, 0, 1, 0], [], []>} : vector<32x32xf32>, vector<32x32xf32>, vector<32x32xf32> -> vector<32x32xf32>
    %458 = tpu.concatenate %448, %451, %454, %457 in 0 : vector<32x32xf32>, vector<32x32xf32>, vector<32x32xf32>, vector<32x32xf32> -> vector<128x32xf32>
    %cst_241 = arith.constant 0.176776692 : f32
    %459 = vector.broadcast %cst_241 : f32 to vector<128x32xf32>
    %460 = arith.mulf %458, %459 : vector<128x32xf32>
    %461 = arith.addf %460, %23 : vector<128x32xf32>
    %cst_242 = arith.constant dense<0xFF800000> : vector<128xf32>
    %462 = vector.multi_reduction <maximumf>, %461, %cst_242 [1] : vector<128x32xf32> to vector<128xf32>
    %463 = vector.shape_cast %462 : vector<128xf32> to vector<128x1xf32>
    %464 = vector.broadcast %463 : vector<128x1xf32> to vector<128x32xf32>
    %465 = arith.subf %461, %464 : vector<128x32xf32>
    %466 = math.exp %465 : vector<128x32xf32>
    %cst_243 = arith.constant dense<0.000000e+00> : vector<128xf32>
    %467 = vector.multi_reduction <add>, %466, %cst_243 [1] : vector<128x32xf32> to vector<128xf32>
    %468 = vector.shape_cast %467 : vector<128xf32> to vector<128x1xf32>
    %469 = tpu.reciprocal %468 {approx = true} : vector<128x1xf32> -> vector<128x1xf32>
    %470 = vector.broadcast %469 : vector<128x1xf32> to vector<128x32xf32>
    %471 = arith.mulf %466, %470 : vector<128x32xf32>
    %472 = vector.extract_strided_slice %445 {offsets = [0, 256], sizes = [32, 32], strides = [1, 1]} : vector<32x384xf32> to vector<32x32xf32>
    %473 = vector.extract_strided_slice %471 {offsets = [0, 0], sizes = [32, 32], strides = [1, 1]} : vector<128x32xf32> to vector<32x32xf32>
    %cst_244 = arith.constant dense<0.000000e+00> : vector<32x32xf32>
    %474 = tpu.matmul %473, %472, %cst_244 {dimension_numbers = #tpu.dot_dimension_numbers<[1], [0], [0], [1], [0, 0, 1, 1], [], []>} : vector<32x32xf32>, vector<32x32xf32>, vector<32x32xf32> -> vector<32x32xf32>
    %c0_245 = arith.constant 0 : index
    %c0_246 = arith.constant 0 : index
    %475 = vector.load %arg21[%c0_245, %c0_246] : memref<32x128xf32, #tpu.memory_space<vmem>>, vector<32x32xf32>
    tpu.vector_store %arg21[%c0_245, %c0_246], %474 {strides = array<i32>} : memref<32x128xf32, #tpu.memory_space<vmem>>, vector<32x32xf32>,
    %476 = vector.extract_strided_slice %445 {offsets = [0, 288], sizes = [32, 32], strides = [1, 1]} : vector<32x384xf32> to vector<32x32xf32>
    %477 = vector.extract_strided_slice %471 {offsets = [32, 0], sizes = [32, 32], strides = [1, 1]} : vector<128x32xf32> to vector<32x32xf32>
    %cst_247 = arith.constant dense<0.000000e+00> : vector<32x32xf32>
    %478 = tpu.matmul %477, %476, %cst_247 {dimension_numbers = #tpu.dot_dimension_numbers<[1], [0], [0], [1], [0, 0, 1, 1], [], []>} : vector<32x32xf32>, vector<32x32xf32>, vector<32x32xf32> -> vector<32x32xf32>
    %c0_248 = arith.constant 0 : index
    %c32_249 = arith.constant 32 : index
    %479 = vector.load %arg21[%c0_248, %c32_249] : memref<32x128xf32, #tpu.memory_space<vmem>>, vector<32x32xf32>
    tpu.vector_store %arg21[%c0_248, %c32_249], %478 {strides = array<i32>} : memref<32x128xf32, #tpu.memory_space<vmem>>, vector<32x32xf32>,
    %480 = vector.extract_strided_slice %445 {offsets = [0, 320], sizes = [32, 32], strides = [1, 1]} : vector<32x384xf32> to vector<32x32xf32>
    %481 = vector.extract_strided_slice %471 {offsets = [64, 0], sizes = [32, 32], strides = [1, 1]} : vector<128x32xf32> to vector<32x32xf32>
    %cst_250 = arith.constant dense<0.000000e+00> : vector<32x32xf32>
    %482 = tpu.matmul %481, %480, %cst_250 {dimension_numbers = #tpu.dot_dimension_numbers<[1], [0], [0], [1], [0, 0, 1, 1], [], []>} : vector<32x32xf32>, vector<32x32xf32>, vector<32x32xf32> -> vector<32x32xf32>
    %c0_251 = arith.constant 0 : index
    %c64_252 = arith.constant 64 : index
    %483 = vector.load %arg21[%c0_251, %c64_252] : memref<32x128xf32, #tpu.memory_space<vmem>>, vector<32x32xf32>
    tpu.vector_store %arg21[%c0_251, %c64_252], %482 {strides = array<i32>} : memref<32x128xf32, #tpu.memory_space<vmem>>, vector<32x32xf32>,
    %484 = vector.extract_strided_slice %445 {offsets = [0, 352], sizes = [32, 32], strides = [1, 1]} : vector<32x384xf32> to vector<32x32xf32>
    %485 = vector.extract_strided_slice %471 {offsets = [96, 0], sizes = [32, 32], strides = [1, 1]} : vector<128x32xf32> to vector<32x32xf32>
    %cst_253 = arith.constant dense<0.000000e+00> : vector<32x32xf32>
    %486 = tpu.matmul %485, %484, %cst_253 {dimension_numbers = #tpu.dot_dimension_numbers<[1], [0], [0], [1], [0, 0, 1, 1], [], []>} : vector<32x32xf32>, vector<32x32xf32>, vector<32x32xf32> -> vector<32x32xf32>
    %c0_254 = arith.constant 0 : index
    %c96_255 = arith.constant 96 : index
    %487 = vector.load %arg21[%c0_254, %c96_255] : memref<32x128xf32, #tpu.memory_space<vmem>>, vector<32x32xf32>
    tpu.vector_store %arg21[%c0_254, %c96_255], %486 {strides = array<i32>} : memref<32x128xf32, #tpu.memory_space<vmem>>, vector<32x32xf32>,
    %c0_256 = arith.constant 0 : index
    %c0_257 = arith.constant 0 : index
    %488 = vector.load %arg21[%c0_256, %c0_257] : memref<32x128xf32, #tpu.memory_space<vmem>>, vector<32x128xf32>
    %489 = arith.truncf %488 : vector<32x128xf32> to vector<32x128xbf16>
    %c3_258 = arith.constant 3 : index
    %c0_259 = arith.constant 0 : index
    %c0_260 = arith.constant 0 : index
    %490 = vector.load %arg6[%c3_258, %c0_259, %c0_260] : memref<4x128x128xbf16, #tpu.memory_space<vmem>>, vector<1x128x128xbf16>
    %491 = vector.shape_cast %490 : vector<1x128x128xbf16> to vector<128x128xbf16>
    %cst_261 = arith.constant dense<0.000000e+00> : vector<32x128xf32>
    %492 = tpu.matmul %489, %491, %cst_261 {dimension_numbers = #tpu.dot_dimension_numbers<[1], [0], [0], [1], [0, 0, 1, 1], [], []>} : vector<32x128xbf16>, vector<128x128xbf16>, vector<32x128xf32> -> vector<32x128xf32>
    %c3_262 = arith.constant 3 : index
    %c0_263 = arith.constant 0 : index
    %c0_264 = arith.constant 0 : index
    %493 = vector.load %arg7[%c3_262, %c0_263, %c0_264] : memref<4x1x128xf32, #tpu.memory_space<vmem>>, vector<1x1x128xf32>
    %494 = vector.shape_cast %493 : vector<1x1x128xf32> to vector<1x128xf32>
    %495 = vector.broadcast %494 : vector<1x128xf32> to vector<32x128xf32>
    %496 = arith.addf %492, %495 : vector<32x128xf32>
    %497 = arith.addf %496, %437 : vector<32x128xf32>
    %c3_265 = arith.constant 3 : index
    %c0_266 = arith.constant 0 : index
    %c0_267 = arith.constant 0 : index
    %498 = vector.load %arg8[%c3_265, %c0_266, %c0_267] : memref<4x1x128xf32, #tpu.memory_space<vmem>>, vector<1x1x128xf32>
    %499 = vector.shape_cast %498 : vector<1x1x128xf32> to vector<1x128xf32>
    %c3_268 = arith.constant 3 : index
    %c0_269 = arith.constant 0 : index
    %c0_270 = arith.constant 0 : index
    %500 = vector.load %arg9[%c3_268, %c0_269, %c0_270] : memref<4x1x128xf32, #tpu.memory_space<vmem>>, vector<1x1x128xf32>
    %501 = vector.shape_cast %500 : vector<1x1x128xf32> to vector<1x128xf32>
    %cst_271 = arith.constant dense<0.000000e+00> : vector<32xf32>
    %502 = vector.multi_reduction <add>, %497, %cst_271 [1] : vector<32x128xf32> to vector<32xf32>
    %503 = vector.shape_cast %502 : vector<32xf32> to vector<32x1xf32>
    %cst_272 = arith.constant 1.280000e+02 : f32
    %504 = vector.broadcast %cst_272 : f32 to vector<32x1xf32>
    %505 = arith.divf %503, %504 : vector<32x1xf32>
    %506 = vector.broadcast %505 : vector<32x1xf32> to vector<32x128xf32>
    %507 = arith.subf %497, %506 : vector<32x128xf32>
    %508 = arith.mulf %507, %507 : vector<32x128xf32>
    %cst_273 = arith.constant dense<0.000000e+00> : vector<32xf32>
    %509 = vector.multi_reduction <add>, %508, %cst_273 [1] : vector<32x128xf32> to vector<32xf32>
    %510 = vector.shape_cast %509 : vector<32xf32> to vector<32x1xf32>
    %cst_274 = arith.constant 1.280000e+02 : f32
    %511 = vector.broadcast %cst_274 : f32 to vector<32x1xf32>
    %512 = arith.divf %510, %511 : vector<32x1xf32>
    %cst_275 = arith.constant 9.99999996E-13 : f32
    %513 = vector.broadcast %cst_275 : f32 to vector<32x1xf32>
    %514 = arith.addf %512, %513 : vector<32x1xf32>
    %515 = math.rsqrt %514 : vector<32x1xf32>
    %516 = vector.broadcast %515 : vector<32x1xf32> to vector<32x128xf32>
    %517 = arith.mulf %507, %516 : vector<32x128xf32>
    %518 = vector.broadcast %499 : vector<1x128xf32> to vector<32x128xf32>
    %519 = arith.mulf %517, %518 : vector<32x128xf32>
    %520 = vector.broadcast %501 : vector<1x128xf32> to vector<32x128xf32>
    %521 = arith.addf %519, %520 : vector<32x128xf32>
    %522 = arith.truncf %521 : vector<32x128xf32> to vector<32x128xbf16>
    %c3_276 = arith.constant 3 : index
    %c0_277 = arith.constant 0 : index
    %c0_278 = arith.constant 0 : index
    %523 = vector.load %arg10[%c3_276, %c0_277, %c0_278] : memref<4x128x512xbf16, #tpu.memory_space<vmem>>, vector<1x128x512xbf16>
    %524 = vector.shape_cast %523 : vector<1x128x512xbf16> to vector<128x512xbf16>
    %cst_279 = arith.constant dense<0.000000e+00> : vector<32x512xf32>
    %525 = tpu.matmul %522, %524, %cst_279 {dimension_numbers = #tpu.dot_dimension_numbers<[1], [0], [0], [1], [0, 0, 1, 1], [], []>} : vector<32x128xbf16>, vector<128x512xbf16>, vector<32x512xf32> -> vector<32x512xf32>
    %c3_280 = arith.constant 3 : index
    %c0_281 = arith.constant 0 : index
    %c0_282 = arith.constant 0 : index
    %526 = vector.load %arg11[%c3_280, %c0_281, %c0_282] : memref<4x1x512xf32, #tpu.memory_space<vmem>>, vector<1x1x512xf32>
    %527 = vector.shape_cast %526 : vector<1x1x512xf32> to vector<1x512xf32>
    %528 = vector.broadcast %527 : vector<1x512xf32> to vector<32x512xf32>
    %529 = arith.addf %525, %528 : vector<32x512xf32>
    %530 = arith.mulf %529, %529 : vector<32x512xf32>
    %531 = arith.mulf %529, %530 : vector<32x512xf32>
    %cst_283 = arith.constant 4.471500e-02 : f32
    %532 = vector.broadcast %cst_283 : f32 to vector<32x512xf32>
    %533 = arith.mulf %532, %531 : vector<32x512xf32>
    %534 = arith.addf %529, %533 : vector<32x512xf32>
    %cst_284 = arith.constant 0.797884583 : f32
    %535 = vector.broadcast %cst_284 : f32 to vector<32x512xf32>
    %536 = arith.mulf %535, %534 : vector<32x512xf32>
    %537 = math.tanh %536 : vector<32x512xf32>
    %cst_285 = arith.constant 1.000000e+00 : f32
    %538 = vector.broadcast %cst_285 : f32 to vector<32x512xf32>
    %539 = arith.addf %538, %537 : vector<32x512xf32>
    %cst_286 = arith.constant 5.000000e-01 : f32
    %540 = vector.broadcast %cst_286 : f32 to vector<32x512xf32>
    %541 = arith.mulf %540, %539 : vector<32x512xf32>
    %542 = arith.mulf %529, %541 : vector<32x512xf32>
    %543 = arith.truncf %542 : vector<32x512xf32> to vector<32x512xbf16>
    %c3_287 = arith.constant 3 : index
    %c0_288 = arith.constant 0 : index
    %c0_289 = arith.constant 0 : index
    %544 = vector.load %arg12[%c3_287, %c0_288, %c0_289] : memref<4x512x128xbf16, #tpu.memory_space<vmem>>, vector<1x512x128xbf16>
    %545 = vector.shape_cast %544 : vector<1x512x128xbf16> to vector<512x128xbf16>
    %cst_290 = arith.constant dense<0.000000e+00> : vector<32x128xf32>
    %546 = tpu.matmul %543, %545, %cst_290 {dimension_numbers = #tpu.dot_dimension_numbers<[1], [0], [0], [1], [0, 0, 1, 1], [], []>} : vector<32x512xbf16>, vector<512x128xbf16>, vector<32x128xf32> -> vector<32x128xf32>
    %c3_291 = arith.constant 3 : index
    %c0_292 = arith.constant 0 : index
    %c0_293 = arith.constant 0 : index
    %547 = vector.load %arg13[%c3_291, %c0_292, %c0_293] : memref<4x1x128xf32, #tpu.memory_space<vmem>>, vector<1x1x128xf32>
    %548 = vector.shape_cast %547 : vector<1x1x128xf32> to vector<1x128xf32>
    %549 = vector.broadcast %548 : vector<1x128xf32> to vector<32x128xf32>
    %550 = arith.addf %546, %549 : vector<32x128xf32>
    %551 = arith.addf %550, %521 : vector<32x128xf32>
    %c3_294 = arith.constant 3 : index
    %c0_295 = arith.constant 0 : index
    %c0_296 = arith.constant 0 : index
    %552 = vector.load %arg14[%c3_294, %c0_295, %c0_296] : memref<4x1x128xf32, #tpu.memory_space<vmem>>, vector<1x1x128xf32>
    %553 = vector.shape_cast %552 : vector<1x1x128xf32> to vector<1x128xf32>
    %c3_297 = arith.constant 3 : index
    %c0_298 = arith.constant 0 : index
    %c0_299 = arith.constant 0 : index
    %554 = vector.load %arg15[%c3_297, %c0_298, %c0_299] : memref<4x1x128xf32, #tpu.memory_space<vmem>>, vector<1x1x128xf32>
    %555 = vector.shape_cast %554 : vector<1x1x128xf32> to vector<1x128xf32>
    %cst_300 = arith.constant dense<0.000000e+00> : vector<32xf32>
    %556 = vector.multi_reduction <add>, %551, %cst_300 [1] : vector<32x128xf32> to vector<32xf32>
    %557 = vector.shape_cast %556 : vector<32xf32> to vector<32x1xf32>
    %cst_301 = arith.constant 1.280000e+02 : f32
    %558 = vector.broadcast %cst_301 : f32 to vector<32x1xf32>
    %559 = arith.divf %557, %558 : vector<32x1xf32>
    %560 = vector.broadcast %559 : vector<32x1xf32> to vector<32x128xf32>
    %561 = arith.subf %551, %560 : vector<32x128xf32>
    %562 = arith.mulf %561, %561 : vector<32x128xf32>
    %cst_302 = arith.constant dense<0.000000e+00> : vector<32xf32>
    %563 = vector.multi_reduction <add>, %562, %cst_302 [1] : vector<32x128xf32> to vector<32xf32>
    %564 = vector.shape_cast %563 : vector<32xf32> to vector<32x1xf32>
    %cst_303 = arith.constant 1.280000e+02 : f32
    %565 = vector.broadcast %cst_303 : f32 to vector<32x1xf32>
    %566 = arith.divf %564, %565 : vector<32x1xf32>
    %cst_304 = arith.constant 9.99999996E-13 : f32
    %567 = vector.broadcast %cst_304 : f32 to vector<32x1xf32>
    %568 = arith.addf %566, %567 : vector<32x1xf32>
    %569 = math.rsqrt %568 : vector<32x1xf32>
    %570 = vector.broadcast %569 : vector<32x1xf32> to vector<32x128xf32>
    %571 = arith.mulf %561, %570 : vector<32x128xf32>
    %572 = vector.broadcast %553 : vector<1x128xf32> to vector<32x128xf32>
    %573 = arith.mulf %571, %572 : vector<32x128xf32>
    %574 = vector.broadcast %555 : vector<1x128xf32> to vector<32x128xf32>
    %575 = arith.addf %573, %574 : vector<32x128xf32>
    %576 = arith.truncf %575 : vector<32x128xf32> to vector<32x128xbf16>
    %c0_305 = arith.constant 0 : index
    %c0_306 = arith.constant 0 : index
    %577 = vector.load %arg16[%c0_305, %c0_306] : memref<128x128xbf16, #tpu.memory_space<vmem>>, vector<128x128xbf16>
    %cst_307 = arith.constant dense<0.000000e+00> : vector<32x128xf32>
    %578 = tpu.matmul %576, %577, %cst_307 {dimension_numbers = #tpu.dot_dimension_numbers<[1], [0], [0], [1], [0, 0, 1, 1], [], []>} : vector<32x128xbf16>, vector<128x128xbf16>, vector<32x128xf32> -> vector<32x128xf32>
    %c0_308 = arith.constant 0 : index
    %c0_309 = arith.constant 0 : index
    %579 = vector.load %arg17[%c0_308, %c0_309] : memref<1x128xf32, #tpu.memory_space<vmem>>, vector<1x128xf32>
    %580 = vector.broadcast %579 : vector<1x128xf32> to vector<32x128xf32>
    %581 = arith.addf %578, %580 : vector<32x128xf32>
    %582 = math.tanh %581 : vector<32x128xf32>
    %583 = arith.truncf %582 : vector<32x128xf32> to vector<32x128xbf16>
    %c0_310 = arith.constant 0 : index
    %c0_311 = arith.constant 0 : index
    %584 = vector.load %arg18[%c0_310, %c0_311] : memref<128x12xbf16, #tpu.memory_space<vmem>>, vector<128x12xbf16>
    %cst_312 = arith.constant dense<0.000000e+00> : vector<32x12xf32>
    %585 = tpu.matmul %583, %584, %cst_312 {dimension_numbers = #tpu.dot_dimension_numbers<[1], [0], [0], [1], [0, 0, 1, 1], [], []>} : vector<32x128xbf16>, vector<128x12xbf16>, vector<32x12xf32> -> vector<32x12xf32>
    %c0_313 = arith.constant 0 : index
    %c0_314 = arith.constant 0 : index
    %586 = vector.load %arg19[%c0_313, %c0_314] : memref<1x12xf32, #tpu.memory_space<vmem>>, vector<1x12xf32>
    %587 = vector.broadcast %586 : vector<1x12xf32> to vector<32x12xf32>
    %588 = arith.addf %585, %587 : vector<32x12xf32>
    %cst_315 = arith.constant 0.000000e+00 : f32
    %589 = vector.broadcast %cst_315 : f32 to vector<32x12xf32>
    %590 = arith.maximumf %588, %589 : vector<32x12xf32>
    %591 = vector.extract_strided_slice %590 {offsets = [0, 0], sizes = [1, 12], strides = [1, 1]} : vector<32x12xf32> to vector<1x12xf32>
    %c0_316 = arith.constant 0 : index
    %c0_317 = arith.constant 0 : index
    %592 = vector.load %arg20[%c0_316, %c0_317] : memref<2x12xf32, #tpu.memory_space<vmem>>, vector<1x12xf32>
    tpu.vector_store %arg20[%c0_316, %c0_317], %591 {strides = array<i32>} : memref<2x12xf32, #tpu.memory_space<vmem>>, vector<1x12xf32>,
    %593 = vector.extract_strided_slice %590 {offsets = [16, 0], sizes = [1, 12], strides = [1, 1]} : vector<32x12xf32> to vector<1x12xf32>
    %c1_318 = arith.constant 1 : index
    %c0_319 = arith.constant 0 : index
    %594 = vector.load %arg20[%c1_318, %c0_319] : memref<2x12xf32, #tpu.memory_space<vmem>>, vector<1x12xf32>
    tpu.vector_store %arg20[%c1_318, %c0_319], %593 {strides = array<i32>} : memref<2x12xf32, #tpu.memory_space<vmem>>, vector<1x12xf32>,
    return
  }
}

</mosaic_0001>

<llo_original>
// kernel: bert_classifier_forward.1
$region0: #{bert_classifier_forward.1}
  #allocation0 [shape = 'u32[]', space=smem, size = 0x4, offset = 0x4, fixed_abs, tag = 'smem constant byte address 0x4 - core index']
  #allocation1 [shape = 'u32[144,128]{1,0:T(1,128)}', space=vmem, size = 0x12000, scoped, tag = 'internal scratch']
  #allocation2 [shape = 'f32[32,128]{1,0:T(8,128)}', space=vmem, size = 0x4000, scoped, tag = 'scratch operand']
  %s0 = inlined_call_operand.vmem [shape: f32[32,128], index: 0, kind: input, shape index: {}]
  %s1 = inlined_call_operand.vmem [shape: f32[128,32], index: 1, kind: input, shape index: {}]
  %s2 = inlined_call_operand.hbm [shape: f32[1,128], index: 2, kind: input, shape index: {}]
  %s3 = inlined_call_operand.hbm [shape: f32[1,128], index: 3, kind: input, shape index: {}]
  %s4 = inlined_call_operand.vmem [shape: bf16[4,128,384], index: 4, kind: input, shape index: {}]
  %s5 = inlined_call_operand.vmem [shape: f32[4,1,384], index: 5, kind: input, shape index: {}]
  %s6 = inlined_call_operand.hbm [shape: bf16[4,128,128], index: 6, kind: input, shape index: {}]
  %s7 = inlined_call_operand.vmem [shape: f32[4,1,128], index: 7, kind: input, shape index: {}]
  %s8 = inlined_call_operand.hbm [shape: f32[4,1,128], index: 8, kind: input, shape index: {}]
  %s9 = inlined_call_operand.hbm [shape: f32[4,1,128], index: 9, kind: input, shape index: {}]
  %s10 = inlined_call_operand.hbm [shape: bf16[4,128,512], index: 10, kind: input, shape index: {}]
  %s11 = inlined_call_operand.vmem [shape: f32[4,1,512], index: 11, kind: input, shape index: {}]
  %s12 = inlined_call_operand.hbm [shape: bf16[4,512,128], index: 12, kind: input, shape index: {}]
  %s13 = inlined_call_operand.vmem [shape: f32[4,1,128], index: 13, kind: input, shape index: {}]
  %s14 = inlined_call_operand.hbm [shape: f32[4,1,128], index: 14, kind: input, shape index: {}]
  %s15 = inlined_call_operand.hbm [shape: f32[4,1,128], index: 15, kind: input, shape index: {}]
  %s16 = inlined_call_operand.hbm [shape: bf16[128,128], index: 16, kind: input, shape index: {}]
  %s17 = inlined_call_operand.hbm [shape: f32[1,128], index: 17, kind: input, shape index: {}]
  %s18 = inlined_call_operand.vmem [shape: bf16[128,12], index: 18, kind: input, shape index: {}]
  %s19 = inlined_call_operand.hbm [shape: f32[1,12], index: 19, kind: input, shape index: {}]
  %s20 = inlined_call_operand.hbm [shape: f32[2,12], index: 20, kind: output, shape index: {}]
  %s21 = sld [smem:[#allocation0]]
  $region138: #{bert_classifier_forward.1} parent=0
    _
  %s23 = ssub.s32 1, %s21
  %s24 = scalar_select 0, %s23, %s21
  $region1: #{bert_classifier_forward.1} parent=0
    #allocation3 [shape = 'u8[512]{0}', space=vmem, size = 0x400, scoped, tag = 'input window, operand 2, single buffered']
    #allocation4 [shape = 's32[1]{0}', space=sflag, size = 0x4, scoped, tag = 'scoped memory for bert_classifier_forward.1']
    #allocation5 [shape = 's32[1]{0}', space=sflag, size = 0x4, scoped, tag = 'scoped memory for bert_classifier_forward.1']
    #allocation6 [shape = 'u8[512]{0}', space=vmem, size = 0x400, scoped, tag = 'input window, operand 3, single buffered']
    #allocation7 [shape = 's32[1]{0}', space=sflag, size = 0x4, scoped, tag = 'scoped memory for bert_classifier_forward.1']
    #allocation8 [shape = 'u8[131072]{0}', space=vmem, size = 0x20000, scoped, tag = 'input window, operand 6, single buffered']
    #allocation9 [shape = 'u8[2048]{0}', space=vmem, size = 0x800, scoped, tag = 'input window, operand 8, single buffered']
    #allocation10 [shape = 's32[1]{0}', space=sflag, size = 0x4, scoped, tag = 'scoped memory for bert_classifier_forward.1']
    #allocation11 [shape = 'u8[2048]{0}', space=vmem, size = 0x800, scoped, tag = 'input window, operand 9, single buffered']
    #allocation12 [shape = 'u8[524288]{0}', space=vmem, size = 0x80000, scoped, tag = 'input window, operand 10, single buffered']
    #allocation13 [shape = 's32[1]{0}', space=sflag, size = 0x4, scoped, tag = 'scoped memory for bert_classifier_forward.1']
    #allocation14 [shape = 'u8[524288]{0}', space=vmem, size = 0x80000, scoped, tag = 'input window, operand 12, single buffered']
    #allocation15 [shape = 'u8[2048]{0}', space=vmem, size = 0x800, scoped, tag = 'input window, operand 14, single buffered']
    #allocation16 [shape = 's32[1]{0}', space=sflag, size = 0x4, scoped, tag = 'scoped memory for bert_classifier_forward.1']
    #allocation17 [shape = 'u8[2048]{0}', space=vmem, size = 0x800, scoped, tag = 'input window, operand 15, single buffered']
    #allocation18 [shape = 'u8[32768]{0}', space=vmem, size = 0x8000, scoped, tag = 'input window, operand 16, single buffered']
    #allocation19 [shape = 's32[1]{0}', space=sflag, size = 0x4, scoped, tag = 'scoped memory for bert_classifier_forward.1']
    #allocation20 [shape = 'u8[512]{0}', space=vmem, size = 0x400, scoped, tag = 'input window, operand 17, single buffered']
    #allocation21 [shape = 'u8[512]{0}', space=vmem, size = 0x400, scoped, tag = 'input window, operand 19, single buffered']
    #allocation22 [shape = 's32[1]{0}', space=sflag, size = 0x4, scoped, tag = 'scoped memory for bert_classifier_forward.1']
    #allocation23 [shape = 'u8[1024]{0}', space=vmem, size = 0x400, scoped, tag = 'output window, operand 0, single buffered']
    %25 = vsyncpa [#allocation4], 0
    %26 = vsyncpa [#allocation7], 0
    %27 = vsyncpa [#allocation10], 0
    %28 = vsyncpa [#allocation13], 0
    %29 = vsyncpa [#allocation16], 0
    %30 = vsyncpa [#allocation19], 0
    %31 = vsyncpa [#allocation22], 0
    %32 = vsyncpa [#allocation5], 0
    // Predicated region
    $region2: #{bert_classifier_forward.1} parent=1 // pred_check
      _
    $region3: #{bert_classifier_forward.1} parent=1 // pred_check_branch
      %34 = sbr.rel (0) target = $region5
    $region4: #{bert_classifier_forward.1} parent=1 // pred_region
      _
    $region5: #{bert_classifier_forward.1} parent=1 // pred_fallthru
      _
    // Predicated region
    $region6: #{bert_classifier_forward.1} parent=1 // pred_check
      _
    $region7: #{bert_classifier_forward.1} parent=1 // pred_check_branch
      %36 = sbr.rel (0) target = $region9
    $region8: #{bert_classifier_forward.1} parent=1 // pred_region
      _
    $region9: #{bert_classifier_forward.1} parent=1 // pred_fallthru
      _
    // Predicated region
    $region10: #{bert_classifier_forward.1} parent=1 // pred_check
      _
    $region11: #{bert_classifier_forward.1} parent=1 // pred_check_branch
      %38 = sbr.rel (0) target = $region13
    $region12: #{bert_classifier_forward.1} parent=1 // pred_region
      %s40 = ssub.s32 16, 16
      %41 = vsyncadd [#allocation4], %s40
      %s43 = sshll.u32 [#allocation3], 4
      %s44 = int_to_ptr.vmem [resolvable:$true] %s43
      %46 = dma.hbm_to_vmem [thread:$0]  %s2, 16, %s44, [#allocation4]
    $region13: #{bert_classifier_forward.1} parent=1 // pred_fallthru
      _
    // Predicated region
    $region14: #{bert_classifier_forward.1} parent=1 // pred_check
      _
    $region15: #{bert_classifier_forward.1} parent=1 // pred_check_branch
      %48 = sbr.rel (0) target = $region17
    $region16: #{bert_classifier_forward.1} parent=1 // pred_region
      %s50 = ssub.s32 16, 16
      %51 = vsyncadd [#allocation7], %s50
      %s53 = sshll.u32 [#allocation6], 4
      %s54 = int_to_ptr.vmem [resolvable:$true] %s53
      %56 = dma.hbm_to_vmem [thread:$0]  %s3, 16, %s54, [#allocation7]
    $region17: #{bert_classifier_forward.1} parent=1 // pred_fallthru
      _
    // Predicated region
    $region18: #{bert_classifier_forward.1} parent=1 // pred_check
      _
    $region19: #{bert_classifier_forward.1} parent=1 // pred_check_branch
      %58 = sbr.rel (0) target = $region21
    $region20: #{bert_classifier_forward.1} parent=1 // pred_region
      _
    $region21: #{bert_classifier_forward.1} parent=1 // pred_fallthru
      _
    // Predicated region
    $region22: #{bert_classifier_forward.1} parent=1 // pred_check
      _
    $region23: #{bert_classifier_forward.1} parent=1 // pred_check_branch
      %60 = sbr.rel (0) target = $region25
    $region24: #{bert_classifier_forward.1} parent=1 // pred_region
      _
    $region25: #{bert_classifier_forward.1} parent=1 // pred_fallthru
      _
    // Predicated region
    $region26: #{bert_classifier_forward.1} parent=1 // pred_check
      _
    $region27: #{bert_classifier_forward.1} parent=1 // pred_check_branch
      %62 = sbr.rel (0) target = $region29
    $region28: #{bert_classifier_forward.1} parent=1 // pred_region
      %s64 = ssub.s32 4096, 4096
      %65 = vsyncadd [#allocation7], %s64
      %s66 = sshll.u32 [#allocation8], 4
      %s67 = int_to_ptr.vmem [resolvable:$true] %s66
      %72 = dma.hbm_to_vmem [thread:$0]  %s6, 4096, %s67, [#allocation7], 64, 64, 4
    $region29: #{bert_classifier_forward.1} parent=1 // pred_fallthru
      _
    // Predicated region
    $region30: #{bert_classifier_forward.1} parent=1 // pred_check
      _
    $region31: #{bert_classifier_forward.1} parent=1 // pred_check_branch
      %74 = sbr.rel (0) target = $region33
    $region32: #{bert_classifier_forward.1} parent=1 // pred_region
      _
    $region33: #{bert_classifier_forward.1} parent=1 // pred_fallthru
      _
    // Predicated region
    $region34: #{bert_classifier_forward.1} parent=1 // pred_check
      _
    $region35: #{bert_classifier_forward.1} parent=1 // pred_check_branch
      %76 = sbr.rel (0) target = $region37
    $region36: #{bert_classifier_forward.1} parent=1 // pred_region
      %s78 = ssub.s32 64, 64
      %79 = vsyncadd [#allocation10], %s78
      %s80 = sshll.u32 [#allocation9], 4
      %s81 = int_to_ptr.vmem [resolvable:$true] %s80
      %86 = dma.hbm_to_vmem [thread:$0]  %s8, 64, %s81, [#allocation10], 16, 16, 1
    $region37: #{bert_classifier_forward.1} parent=1 // pred_fallthru
      _
    // Predicated region
    $region38: #{bert_classifier_forward.1} parent=1 // pred_check
      _
    $region39: #{bert_classifier_forward.1} parent=1 // pred_check_branch
      %88 = sbr.rel (0) target = $region41
    $region40: #{bert_classifier_forward.1} parent=1 // pred_region
      %s90 = ssub.s32 64, 64
      %91 = vsyncadd [#allocation10], %s90
      %s92 = sshll.u32 [#allocation11], 4
      %s93 = int_to_ptr.vmem [resolvable:$true] %s92
      %98 = dma.hbm_to_vmem [thread:$0]  %s9, 64, %s93, [#allocation10], 16, 16, 1
    $region41: #{bert_classifier_forward.1} parent=1 // pred_fallthru
      _
    // Predicated region
    $region42: #{bert_classifier_forward.1} parent=1 // pred_check
      _
    $region43: #{bert_classifier_forward.1} parent=1 // pred_check_branch
      %100 = sbr.rel (0) target = $region45
    $region44: #{bert_classifier_forward.1} parent=1 // pred_region
      %s102 = ssub.s32 16384, 16384
      %103 = vsyncadd [#allocation13], %s102
      %s104 = sshll.u32 [#allocation12], 4
      %s105 = int_to_ptr.vmem [resolvable:$true] %s104
      %110 = dma.hbm_to_vmem [thread:$0]  %s10, 16384, %s105, [#allocation13], 256, 256, 16
    $region45: #{bert_classifier_forward.1} parent=1 // pred_fallthru
      _
    // Predicated region
    $region46: #{bert_classifier_forward.1} parent=1 // pred_check
      _
    $region47: #{bert_classifier_forward.1} parent=1 // pred_check_branch
      %112 = sbr.rel (0) target = $region49
    $region48: #{bert_classifier_forward.1} parent=1 // pred_region
      _
    $region49: #{bert_classifier_forward.1} parent=1 // pred_fallthru
      _
    // Predicated region
    $region50: #{bert_classifier_forward.1} parent=1 // pred_check
      _
    $region51: #{bert_classifier_forward.1} parent=1 // pred_check_branch
      %114 = sbr.rel (0) target = $region53
    $region52: #{bert_classifier_forward.1} parent=1 // pred_region
      %s116 = ssub.s32 16384, 16384
      %117 = vsyncadd [#allocation13], %s116
      %s118 = sshll.u32 [#allocation14], 4
      %s119 = int_to_ptr.vmem [resolvable:$true] %s118
      %124 = dma.hbm_to_vmem [thread:$0]  %s12, 16384, %s119, [#allocation13], 64, 64, 4
    $region53: #{bert_classifier_forward.1} parent=1 // pred_fallthru
      _
    // Predicated region
    $region54: #{bert_classifier_forward.1} parent=1 // pred_check
      _
    $region55: #{bert_classifier_forward.1} parent=1 // pred_check_branch
      %126 = sbr.rel (0) target = $region57
    $region56: #{bert_classifier_forward.1} parent=1 // pred_region
      _
    $region57: #{bert_classifier_forward.1} parent=1 // pred_fallthru
      _
    // Predicated region
    $region58: #{bert_classifier_forward.1} parent=1 // pred_check
      _
    $region59: #{bert_classifier_forward.1} parent=1 // pred_check_branch
      %128 = sbr.rel (0) target = $region61
    $region60: #{bert_classifier_forward.1} parent=1 // pred_region
      %s130 = ssub.s32 64, 64
      %131 = vsyncadd [#allocation16], %s130
      %s132 = sshll.u32 [#allocation15], 4
      %s133 = int_to_ptr.vmem [resolvable:$true] %s132
      %138 = dma.hbm_to_vmem [thread:$0]  %s14, 64, %s133, [#allocation16], 16, 16, 1
    $region61: #{bert_classifier_forward.1} parent=1 // pred_fallthru
      _
    // Predicated region
    $region62: #{bert_classifier_forward.1} parent=1 // pred_check
      _
    $region63: #{bert_classifier_forward.1} parent=1 // pred_check_branch
      %140 = sbr.rel (0) target = $region65
    $region64: #{bert_classifier_forward.1} parent=1 // pred_region
      %s142 = ssub.s32 64, 64
      %143 = vsyncadd [#allocation16], %s142
      %s144 = sshll.u32 [#allocation17], 4
      %s145 = int_to_ptr.vmem [resolvable:$true] %s144
      %150 = dma.hbm_to_vmem [thread:$0]  %s15, 64, %s145, [#allocation16], 16, 16, 1
    $region65: #{bert_classifier_forward.1} parent=1 // pred_fallthru
      _
    // Predicated region
    $region66: #{bert_classifier_forward.1} parent=1 // pred_check
      _
    $region67: #{bert_classifier_forward.1} parent=1 // pred_check_branch
      %152 = sbr.rel (0) target = $region69
    $region68: #{bert_classifier_forward.1} parent=1 // pred_region
      %s154 = ssub.s32 1024, 1024
      %155 = vsyncadd [#allocation19], %s154
      %s156 = sshll.u32 [#allocation18], 4
      %s157 = int_to_ptr.vmem [resolvable:$true] %s156
      %162 = dma.hbm_to_vmem [thread:$0]  %s16, 1024, %s157, [#allocation19], 64, 64, 4
    $region69: #{bert_classifier_forward.1} parent=1 // pred_fallthru
      _
    // Predicated region
    $region70: #{bert_classifier_forward.1} parent=1 // pred_check
      _
    $region71: #{bert_classifier_forward.1} parent=1 // pred_check_branch
      %164 = sbr.rel (0) target = $region73
    $region72: #{bert_classifier_forward.1} parent=1 // pred_region
      %s166 = ssub.s32 16, 16
      %167 = vsyncadd [#allocation19], %s166
      %s169 = sshll.u32 [#allocation20], 4
      %s170 = int_to_ptr.vmem [resolvable:$true] %s169
      %172 = dma.hbm_to_vmem [thread:$0]  %s17, 16, %s170, [#allocation19]
    $region73: #{bert_classifier_forward.1} parent=1 // pred_fallthru
      _
    // Predicated region
    $region74: #{bert_classifier_forward.1} parent=1 // pred_check
      _
    $region75: #{bert_classifier_forward.1} parent=1 // pred_check_branch
      %174 = sbr.rel (0) target = $region77
    $region76: #{bert_classifier_forward.1} parent=1 // pred_region
      _
    $region77: #{bert_classifier_forward.1} parent=1 // pred_fallthru
      _
    // Predicated region
    $region78: #{bert_classifier_forward.1} parent=1 // pred_check
      _
    $region79: #{bert_classifier_forward.1} parent=1 // pred_check_branch
      %176 = sbr.rel (0) target = $region81
    $region80: #{bert_classifier_forward.1} parent=1 // pred_region
      %s178 = ssub.s32 16, 16
      %179 = vsyncadd [#allocation22], %s178
      %s181 = sshll.u32 [#allocation21], 4
      %s182 = int_to_ptr.vmem [resolvable:$true] %s181
      %184 = dma.hbm_to_vmem [thread:$0]  %s19, 16, %s182, [#allocation22]
    $region81: #{bert_classifier_forward.1} parent=1 // pred_fallthru
      _
    // Predicated region
    $region82: #{bert_classifier_forward.1} parent=1 // pred_check
      _
    $region83: #{bert_classifier_forward.1} parent=1 // pred_check_branch
      %186 = sbr.rel (0) target = $region85
    $region84: #{bert_classifier_forward.1} parent=1 // pred_region
      %187 = dma.done [#allocation4], 16
    $region85: #{bert_classifier_forward.1} parent=1 // pred_fallthru
      _
    // Predicated region
    $region86: #{bert_classifier_forward.1} parent=1 // pred_check
      _
    $region87: #{bert_classifier_forward.1} parent=1 // pred_check_branch
      %189 = sbr.rel (0) target = $region89
    $region88: #{bert_classifier_forward.1} parent=1 // pred_region
      %190 = dma.done [#allocation7], 16
    $region89: #{bert_classifier_forward.1} parent=1 // pred_fallthru
      _
    // Predicated region
    $region90: #{bert_classifier_forward.1} parent=1 // pred_check
      _
    $region91: #{bert_classifier_forward.1} parent=1 // pred_check_branch
      %192 = sbr.rel (0) target = $region93
    $region92: #{bert_classifier_forward.1} parent=1 // pred_region
      %193 = dma.done [#allocation7], 4096
    $region93: #{bert_classifier_forward.1} parent=1 // pred_fallthru
      _
    // Predicated region
    $region94: #{bert_classifier_forward.1} parent=1 // pred_check
      _
    $region95: #{bert_classifier_forward.1} parent=1 // pred_check_branch
      %195 = sbr.rel (0) target = $region97
    $region96: #{bert_classifier_forward.1} parent=1 // pred_region
      %196 = dma.done [#allocation10], 64
    $region97: #{bert_classifier_forward.1} parent=1 // pred_fallthru
      _
    // Predicated region
    $region98: #{bert_classifier_forward.1} parent=1 // pred_check
      _
    $region99: #{bert_classifier_forward.1} parent=1 // pred_check_branch
      %198 = sbr.rel (0) target = $region101
    $region100: #{bert_classifier_forward.1} parent=1 // pred_region
      %199 = dma.done [#allocation10], 64
    $region101: #{bert_classifier_forward.1} parent=1 // pred_fallthru
      _
    // Predicated region
    $region102: #{bert_classifier_forward.1} parent=1 // pred_check
      _
    $region103: #{bert_classifier_forward.1} parent=1 // pred_check_branch
      %201 = sbr.rel (0) target = $region105
    $region104: #{bert_classifier_forward.1} parent=1 // pred_region
      %202 = dma.done [#allocation13], 16384
    $region105: #{bert_classifier_forward.1} parent=1 // pred_fallthru
      _
    // Predicated region
    $region106: #{bert_classifier_forward.1} parent=1 // pred_check
      _
    $region107: #{bert_classifier_forward.1} parent=1 // pred_check_branch
      %204 = sbr.rel (0) target = $region109
    $region108: #{bert_classifier_forward.1} parent=1 // pred_region
      %205 = dma.done [#allocation13], 16384
    $region109: #{bert_classifier_forward.1} parent=1 // pred_fallthru
      _
    // Predicated region
    $region110: #{bert_classifier_forward.1} parent=1 // pred_check
      _
    $region111: #{bert_classifier_forward.1} parent=1 // pred_check_branch
      %207 = sbr.rel (0) target = $region113
    $region112: #{bert_classifier_forward.1} parent=1 // pred_region
      %208 = dma.done [#allocation16], 64
    $region113: #{bert_classifier_forward.1} parent=1 // pred_fallthru
      _
    // Predicated region
    $region114: #{bert_classifier_forward.1} parent=1 // pred_check
      _
    $region115: #{bert_classifier_forward.1} parent=1 // pred_check_branch
      %210 = sbr.rel (0) target = $region117
    $region116: #{bert_classifier_forward.1} parent=1 // pred_region
      %211 = dma.done [#allocation16], 64
    $region117: #{bert_classifier_forward.1} parent=1 // pred_fallthru
      _
    // Predicated region
    $region118: #{bert_classifier_forward.1} parent=1 // pred_check
      _
    $region119: #{bert_classifier_forward.1} parent=1 // pred_check_branch
      %213 = sbr.rel (0) target = $region121
    $region120: #{bert_classifier_forward.1} parent=1 // pred_region
      %214 = dma.done [#allocation19], 1024
    $region121: #{bert_classifier_forward.1} parent=1 // pred_fallthru
      _
    // Predicated region
    $region122: #{bert_classifier_forward.1} parent=1 // pred_check
      _
    $region123: #{bert_classifier_forward.1} parent=1 // pred_check_branch
      %216 = sbr.rel (0) target = $region125
    $region124: #{bert_classifier_forward.1} parent=1 // pred_region
      %217 = dma.done [#allocation19], 16
    $region125: #{bert_classifier_forward.1} parent=1 // pred_fallthru
      _
    // Predicated region
    $region126: #{bert_classifier_forward.1} parent=1 // pred_check
      _
    $region127: #{bert_classifier_forward.1} parent=1 // pred_check_branch
      %219 = sbr.rel (0) target = $region129
    $region128: #{bert_classifier_forward.1} parent=1 // pred_region
      %220 = dma.done [#allocation22], 16
    $region129: #{bert_classifier_forward.1} parent=1 // pred_fallthru
      _
    %v222 = vld [vmem:[%s0] sm:$0xff]
    %v223 = vld [vmem:[%s0 + $0x8] sm:$0xff]
    %v224 = vld [vmem:[%s0 + $0x10] sm:$0xff]
    %v225 = vld [vmem:[%s0 + $0x18] sm:$0xff]
    %v226 = vld [vmem:[#allocation3] sm:$0x1]
    %v227 = vld [vmem:[#allocation6] sm:$0x1]
    %228 = vadd.xlane.f32.xlu0 %v222
    %v229 = vpop.xlane.xlu0 %228
    %230 = vadd.xlane.f32.xlu0 %v223
    %v231 = vpop.xlane.xlu0 %230
    %232 = vadd.xlane.f32.xlu0 %v224
    %v233 = vpop.xlane.xlu0 %232
    %234 = vadd.xlane.f32.xlu0 %v225
    %v235 = vpop.xlane.xlu0 %234
    %v236 = vrcp.pop 128.0
    %v237 = vmul.f32 %v229, %v236
    %v238 = vmul.f32 %v231, %v236
    %v239 = vmul.f32 %v233, %v236
    %v240 = vmul.f32 %v235, %v236
    %v241 = vsub.f32 %v222, %v237
    %v242 = vsub.f32 %v223, %v238
    %v243 = vsub.f32 %v224, %v239
    %v244 = vsub.f32 %v225, %v240
    %v245 = vmul.f32 %v241, %v241
    %v246 = vmul.f32 %v242, %v242
    %v247 = vmul.f32 %v243, %v243
    %v248 = vmul.f32 %v244, %v244
    %249 = vadd.xlane.f32.xlu0 %v245
    %v250 = vpop.xlane.xlu0 %249
    %251 = vadd.xlane.f32.xlu0 %v246
    %v252 = vpop.xlane.xlu0 %251
    %253 = vadd.xlane.f32.xlu0 %v247
    %v254 = vpop.xlane.xlu0 %253
    %255 = vadd.xlane.f32.xlu0 %v248
    %v256 = vpop.xlane.xlu0 %255
    %v257 = vmul.f32 %v250, %v236
    %v258 = vmul.f32 %v252, %v236
    %v259 = vmul.f32 %v254, %v236
    %v260 = vmul.f32 %v256, %v236
    %v261 = vadd.f32 %v257, 1e-12
    %v262 = vadd.f32 %v258, 1e-12
    %v263 = vadd.f32 %v259, 1e-12
    %v264 = vadd.f32 %v260, 1e-12
    %v265 = vrsqrt.pop %v261
    %v266 = vrsqrt.pop %v262
    %v267 = vrsqrt.pop %v263
    %v268 = vrsqrt.pop %v264
    %v269 = vmul.f32 %v241, %v265
    %v270 = vmul.f32 %v242, %v266
    %v271 = vmul.f32 %v243, %v267
    %v272 = vmul.f32 %v244, %v268
    %v274 = vlaneseq
    %v275 = vshrl.u32 %v274, 7
    %v276 = vsub.s32 0, %v275
    %v277 = vrot.slane %v226, %v276
    %v279 = vmul.f32 %v269, %v277
    %v280 = vmul.f32 %v270, %v277
    %v281 = vmul.f32 %v271, %v277
    %v282 = vmul.f32 %v272, %v277
    %v284 = vlaneseq
    %v285 = vshrl.u32 %v284, 7
    %v286 = vsub.s32 0, %v285
    %v287 = vrot.slane %v227, %v286
    %v289 = vadd.f32 %v279, %v287
    %v290 = vadd.f32 %v280, %v287
    %v291 = vadd.f32 %v281, %v287
    %v292 = vadd.f32 %v282, %v287
    %v293 = vld [vmem:[%s1] sm:$0xff]
    %v294 = vld [vmem:[%s1 + $0x8] sm:$0xff]
    %v295 = vld [vmem:[%s1 + $0x10] sm:$0xff]
    %v296 = vld [vmem:[%s1 + $0x18] sm:$0xff]
    %v297 = vld [vmem:[%s1 + $0x20] sm:$0xff]
    %v298 = vld [vmem:[%s1 + $0x28] sm:$0xff]
    %v299 = vld [vmem:[%s1 + $0x30] sm:$0xff]
    %v300 = vld [vmem:[%s1 + $0x38] sm:$0xff]
    %v301 = vld [vmem:[%s1 + $0x40] sm:$0xff]
    %v302 = vld [vmem:[%s1 + $0x48] sm:$0xff]
    %v303 = vld [vmem:[%s1 + $0x50] sm:$0xff]
    %v304 = vld [vmem:[%s1 + $0x58] sm:$0xff]
    %v305 = vld [vmem:[%s1 + $0x60] sm:$0xff]
    %v306 = vld [vmem:[%s1 + $0x68] sm:$0xff]
    %v307 = vld [vmem:[%s1 + $0x70] sm:$0xff]
    %v308 = vld [vmem:[%s1 + $0x78] sm:$0xff]
    %v309 = vpack.c.bf16 %v290, %v289
    %v310 = vpack.c.bf16 %v292, %v291
    %v311 = vld [vmem:[%s4] sm:$0xff]
    %v312 = vld [vmem:[%s4 + $0x8] sm:$0xf]
    %v313 = vld [vmem:[%s4 + $0xc] sm:$0xff]
    %v314 = vld [vmem:[%s4 + $0x14] sm:$0xf]
    %v315 = vld [vmem:[%s4 + $0x18] sm:$0xff]
    %v316 = vld [vmem:[%s4 + $0x20] sm:$0xf]
    %v317 = vld [vmem:[%s4 + $0x24] sm:$0xff]
    %v318 = vld [vmem:[%s4 + $0x2c] sm:$0xf]
    %v319 = vld [vmem:[%s4 + $0x30] sm:$0xff]
    %v320 = vld [vmem:[%s4 + $0x38] sm:$0xf]
    %v321 = vld [vmem:[%s4 + $0x3c] sm:$0xff]
    %v322 = vld [vmem:[%s4 + $0x44] sm:$0xf]
    %v323 = vld [vmem:[%s4 + $0x48] sm:$0xff]
    %v324 = vld [vmem:[%s4 + $0x50] sm:$0xf]
    %v325 = vld [vmem:[%s4 + $0x54] sm:$0xff]
    %v326 = vld [vmem:[%s4 + $0x5c] sm:$0xf]
    %v327 = vld [vmem:[%s4 + $0x60] sm:$0xff]
    %v328 = vld [vmem:[%s4 + $0x68] sm:$0xf]
    %v329 = vld [vmem:[%s4 + $0x6c] sm:$0xff]
    %v330 = vld [vmem:[%s4 + $0x74] sm:$0xf]
    %v331 = vld [vmem:[%s4 + $0x78] sm:$0xff]
    %v332 = vld [vmem:[%s4 + $0x80] sm:$0xf]
    %v333 = vld [vmem:[%s4 + $0x84] sm:$0xff]
    %v334 = vld [vmem:[%s4 + $0x8c] sm:$0xf]
    %v335 = vld [vmem:[%s4 + $0x90] sm:$0xff]
    %v336 = vld [vmem:[%s4 + $0x98] sm:$0xf]
    %v337 = vld [vmem:[%s4 + $0x9c] sm:$0xff]
    %v338 = vld [vmem:[%s4 + $0xa4] sm:$0xf]
    %v339 = vld [vmem:[%s4 + $0xa8] sm:$0xff]
    %v340 = vld [vmem:[%s4 + $0xb0] sm:$0xf]
    %v341 = vld [vmem:[%s4 + $0xb4] sm:$0xff]
    %v342 = vld [vmem:[%s4 + $0xbc] sm:$0xf]
    %v343 = vld [vmem:[%s5] sm:$0x7]
    %v345 = vlaneseq
    %v346 = vshrl.u32 %v345, 7
    %v347 = vsub.s32 0, %v346
    %v348 = vrot.slane %v343, %v347
    %v349 = vlaneseq
    %v350 = vshrl.u32 %v349, 7
    %v351 = vsub.s32 1, %v350
    %v352 = vrot.slane %v343, %v351
    %v353 = vlaneseq
    %v354 = vshrl.u32 %v353, 7
    %v355 = vsub.s32 2, %v354
    %v356 = vrot.slane %v343, %v355
    %v392 = vunpack.c.l.b16 %v311
    %v393 = vunpack.c.h.b16 %v311
    %v394 = vunpack.c.l.b16 %v312
    %v395 = vunpack.c.l.b16 %v313
    %v396 = vunpack.c.h.b16 %v313
    %v397 = vunpack.c.l.b16 %v314
    %v398 = vunpack.c.l.b16 %v315
    %v399 = vunpack.c.h.b16 %v315
    %v400 = vunpack.c.l.b16 %v316
    %v401 = vunpack.c.l.b16 %v317
    %v402 = vunpack.c.h.b16 %v317
    %v403 = vunpack.c.l.b16 %v318
    %v404 = vunpack.c.l.b16 %v319
    %v405 = vunpack.c.h.b16 %v319
    %v406 = vunpack.c.l.b16 %v320
    %v407 = vunpack.c.l.b16 %v321
    %v408 = vunpack.c.h.b16 %v321
    %v409 = vunpack.c.l.b16 %v322
    %v410 = vunpack.c.l.b16 %v323
    %v411 = vunpack.c.h.b16 %v323
    %v412 = vunpack.c.l.b16 %v324
    %v413 = vunpack.c.l.b16 %v325
    %v414 = vunpack.c.h.b16 %v325
    %v415 = vunpack.c.l.b16 %v326
    %v416 = vunpack.c.l.b16 %v327
    %v417 = vunpack.c.h.b16 %v327
    %v418 = vunpack.c.l.b16 %v328
    %v419 = vunpack.c.l.b16 %v329
    %v420 = vunpack.c.h.b16 %v329
    %v421 = vunpack.c.l.b16 %v330
    %v422 = vunpack.c.l.b16 %v331
    %v423 = vunpack.c.h.b16 %v331
    %v424 = vunpack.c.l.b16 %v332
    %v425 = vunpack.c.l.b16 %v333
    %v426 = vunpack.c.h.b16 %v333
    %v427 = vunpack.c.l.b16 %v334
    %v428 = vunpack.c.l.b16 %v335
    %v429 = vunpack.c.h.b16 %v335
    %v430 = vunpack.c.l.b16 %v336
    %v431 = vunpack.c.l.b16 %v337
    %v432 = vunpack.c.h.b16 %v337
    %v433 = vunpack.c.l.b16 %v338
    %v434 = vunpack.c.l.b16 %v339
    %v435 = vunpack.c.h.b16 %v339
    %v436 = vunpack.c.l.b16 %v340
    %v437 = vunpack.c.l.b16 %v341
    %v438 = vunpack.c.h.b16 %v341
    %v439 = vunpack.c.l.b16 %v342
    %v440 = vpack.c.b16 %v395, %v392
    %v441 = vpack.c.b16 %v396, %v393
    %v442 = vpack.c.b16 %v397, %v394
    %v443 = vpack.c.b16 %v401, %v398
    %v444 = vpack.c.b16 %v402, %v399
    %v445 = vpack.c.b16 %v403, %v400
    %v446 = vpack.c.b16 %v407, %v404
    %v447 = vpack.c.b16 %v408, %v405
    %v448 = vpack.c.b16 %v409, %v406
    %v449 = vpack.c.b16 %v413, %v410
    %v450 = vpack.c.b16 %v414, %v411
    %v451 = vpack.c.b16 %v415, %v412
    %v452 = vpack.c.b16 %v419, %v416
    %v453 = vpack.c.b16 %v420, %v417
    %v454 = vpack.c.b16 %v421, %v418
    %v455 = vpack.c.b16 %v425, %v422
    %v456 = vpack.c.b16 %v426, %v423
    %v457 = vpack.c.b16 %v427, %v424
    %v458 = vpack.c.b16 %v431, %v428
    %v459 = vpack.c.b16 %v432, %v429
    %v460 = vpack.c.b16 %v433, %v430
    %v461 = vpack.c.b16 %v437, %v434
    %v462 = vpack.c.b16 %v438, %v435
    %v463 = vpack.c.b16 %v439, %v436
    %488 = vmatprep.subr.bf16.mxu0 %v441
    %489 = vmatpush1.bf16.msra.mxu0 %v440
    %490 = vmatprep.subr.bf16.mxu0 %v444
    %491 = vmatpush1.bf16.msra.mxu0 %v443
    %492 = vmatprep.subr.bf16.mxu0 %v447
    %493 = vmatpush1.bf16.msra.mxu0 %v446
    %494 = vmatprep.subr.bf16.mxu0 %v450
    %495 = vmatpush1.bf16.msra.mxu0 %v449
    %496 = vmatprep.subr.bf16.mxu0 %v453
    %497 = vmatpush1.bf16.msra.mxu0 %v452
    %498 = vmatprep.subr.bf16.mxu0 %v456
    %499 = vmatpush1.bf16.msra.mxu0 %v455
    %500 = vmatprep.subr.bf16.mxu0 %v459
    %501 = vmatpush1.bf16.msra.mxu0 %v458
    %502 = vmatprep.subr.bf16.mxu0 %v462
    %503 = vmatpush1.bf16.msra.mxu0 %v461
    %504 = vmatprep.subr.bf16.mxu0 0
    %505 = vmatpush1.bf16.msra.mxu0 0
    %506 = vmatprep.subr.bf16.mxu0 0
    %507 = vmatpush1.bf16.msra.mxu0 0
    %508 = vmatprep.subr.bf16.mxu0 0
    %509 = vmatpush1.bf16.msra.mxu0 0
    %510 = vmatprep.subr.bf16.mxu0 0
    %511 = vmatpush1.bf16.msra.mxu0 0
    %512 = vmatprep.subr.bf16.mxu0 0
    %513 = vmatpush1.bf16.msra.mxu0 0
    %514 = vmatprep.subr.bf16.mxu0 0
    %515 = vmatpush1.bf16.msra.mxu0 0
    %516 = vmatprep.subr.bf16.mxu0 0
    %517 = vmatpush1.bf16.msra.mxu0 0
    %518 = vmatprep.subr.bf16.mxu0 0
    %519 = vmatpush1.bf16.msra.mxu0 0
    %520 = vmatprep.mubr.bf16.mxu0 0
    %521 = vmatmul.mubr.bf16.gmra.mrb[0].mxu0 %v309
    %v522 = vpop.f32.mrb[0].mxu0
    %v523 = vadd.f32 %v348, %v522
    %v524 = vpop.f32.mrb[0].mxu0
    %v525 = vadd.f32 %v352, %v524
    %v526 = vpop.f32.mrb[0].mxu0
    %v527 = vadd.f32 %v348, %v526
    %v528 = vpop.f32.mrb[0].mxu0
    %v529 = vadd.f32 %v352, %v528
    %530 = vmatprep.mubr.bf16.mxu0 0
    %531 = vmatmul.mubr.bf16.gmra.mrb[0].mxu0 %v310
    %v532 = vpop.f32.mrb[0].mxu0
    %v533 = vadd.f32 %v348, %v532
    %v534 = vpop.f32.mrb[0].mxu0
    %v535 = vadd.f32 %v352, %v534
    %v536 = vpop.f32.mrb[0].mxu0
    %v537 = vadd.f32 %v348, %v536
    %v538 = vpop.f32.mrb[0].mxu0
    %v539 = vadd.f32 %v352, %v538
    %540 = vdwg.mxu0
    %541 = vmatprep.subr.bf16.mxu0 0
    %542 = vmatpush1.bf16.msra.mxu0 %v442
    %543 = vmatprep.subr.bf16.mxu0 0
    %544 = vmatpush1.bf16.msra.mxu0 %v445
    %545 = vmatprep.subr.bf16.mxu0 0
    %546 = vmatpush1.bf16.msra.mxu0 %v448
    %547 = vmatprep.subr.bf16.mxu0 0
    %548 = vmatpush1.bf16.msra.mxu0 %v451
    %549 = vmatprep.subr.bf16.mxu0 0
    %550 = vmatpush1.bf16.msra.mxu0 %v454
    %551 = vmatprep.subr.bf16.mxu0 0
    %552 = vmatpush1.bf16.msra.mxu0 %v457
    %553 = vmatprep.subr.bf16.mxu0 0
    %554 = vmatpush1.bf16.msra.mxu0 %v460
    %555 = vmatprep.subr.bf16.mxu0 0
    %556 = vmatpush1.bf16.msra.mxu0 %v463
    %557 = vmatprep.subr.bf16.mxu0 0
    %558 = vmatpush1.bf16.msra.mxu0 0
    %559 = vmatprep.subr.bf16.mxu0 0
    %560 = vmatpush1.bf16.msra.mxu0 0
    %561 = vmatprep.subr.bf16.mxu0 0
    %562 = vmatpush1.bf16.msra.mxu0 0
    %563 = vmatprep.subr.bf16.mxu0 0
    %564 = vmatpush1.bf16.msra.mxu0 0
    %565 = vmatprep.subr.bf16.mxu0 0
    %566 = vmatpush1.bf16.msra.mxu0 0
    %567 = vmatprep.subr.bf16.mxu0 0
    %568 = vmatpush1.bf16.msra.mxu0 0
    %569 = vmatprep.subr.bf16.mxu0 0
    %570 = vmatpush1.bf16.msra.mxu0 0
    %571 = vmatprep.subr.bf16.mxu0 0
    %572 = vmatpush1.bf16.msra.mxu0 0
    %573 = vmatprep.mubr.bf16.mxu0 0
    %574 = vmatmul.mubr.bf16.gmra.mrb[0].mxu0 %v309
    %v575 = vpop.f32.mrb[0].mxu0
    %v576 = vadd.f32 %v356, %v575
    %v577 = vpop.f32.mrb[0].mxu0
    %v578 = vpop.f32.mrb[0].mxu0
    %v579 = vadd.f32 %v356, %v578
    %v580 = vpop.f32.mrb[0].mxu0
    %581 = vmatprep.mubr.bf16.mxu0 0
    %582 = vmatmul.mubr.bf16.gmra.mrb[0].mxu0 %v310
    %v583 = vpop.f32.mrb[0].mxu0
    %v584 = vadd.f32 %v356, %v583
    %v585 = vpop.f32.mrb[0].mxu0
    %v586 = vpop.f32.mrb[0].mxu0
    %v587 = vadd.f32 %v356, %v586
    %v588 = vpop.f32.mrb[0].mxu0
    %589 = vdwg.mxu0
    %vm590 = vcmask 261120
    %v592 = vsel %vm590, %v523, 0
    %v595 = vsel %vm590, %v527, 0
    %v598 = vsel %vm590, %v533, 0
    %v601 = vsel %vm590, %v537, 0
    %v604 = vsel %vm590, %v525, 0
    %v607 = vsel %vm590, %v529, 0
    %v610 = vsel %vm590, %v535, 0
    %v613 = vsel %vm590, %v539, 0
    %615 = vmatprep.subr.mxu0 0.0
    %616 = vmatpush1.xpose.msra.mxu0 %v604
    %617 = vmatprep.subr.mxu0 0.0
    %618 = vmatpush1.xpose.msra.mxu0 %v607
    %619 = vmatprep.subr.mxu0 0.0
    %620 = vmatpush1.xpose.msra.mxu0 %v610
    %621 = vmatprep.subr.mxu0 0.0
    %622 = vmatpush1.xpose.msra.mxu0 %v613
    %623 = vmatprep.subr.mxu0 0.0
    %624 = vmatpush1.xpose.msra.mxu0 0.0
    %625 = vmatprep.subr.mxu0 0.0
    %626 = vmatpush1.xpose.msra.mxu0 0.0
    %627 = vmatprep.subr.mxu0 0.0
    %628 = vmatpush1.xpose.msra.mxu0 0.0
    %629 = vmatprep.subr.mxu0 0.0
    %630 = vmatpush1.xpose.msra.mxu0 0.0
    %631 = vmatprep.subr.mxu0 0.0
    %632 = vmatpush1.xpose.msra.mxu0 0.0
    %633 = vmatprep.subr.mxu0 0.0
    %634 = vmatpush1.xpose.msra.mxu0 0.0
    %635 = vmatprep.subr.mxu0 0.0
    %636 = vmatpush1.xpose.msra.mxu0 0.0
    %637 = vmatprep.subr.mxu0 0.0
    %638 = vmatpush1.xpose.msra.mxu0 0.0
    %639 = vmatprep.subr.mxu0 0.0
    %640 = vmatpush1.xpose.msra.mxu0 0.0
    %641 = vmatprep.subr.mxu0 0.0
    %642 = vmatpush1.xpose.msra.mxu0 0.0
    %643 = vmatprep.subr.mxu0 0.0
    %644 = vmatpush1.xpose.msra.mxu0 0.0
    %645 = vmatprep.subr.mxu0 0.0
    %646 = vmatpush1.xpose.msra.mxu0 0.0
    %647 = vmatprep.subr.mxu0 0.0
    %648 = vmatpush1.xpose.msra.mxu0 0.0
    %649 = vmatprep.subr.mxu0 0.0
    %650 = vmatpush1.xpose.msra.mxu0 0.0
    %651 = vmatprep.subr.mxu0 0.0
    %652 = vmatpush1.xpose.msra.mxu0 0.0
    %653 = vmatprep.subr.mxu0 0.0
    %654 = vmatpush1.xpose.msra.mxu0 0.0
    %655 = vmatprep.subr.mxu0 0.0
    %656 = vmatpush1.xpose.msra.mxu0 0.0
    %657 = vmatprep.subr.mxu0 0.0
    %658 = vmatpush1.xpose.msra.mxu0 0.0
    %659 = vmatprep.subr.mxu0 0.0
    %660 = vmatpush1.xpose.msra.mxu0 0.0
    %661 = vmatprep.subr.mxu0 0.0
    %662 = vmatpush1.xpose.msra.mxu0 0.0
    %663 = vmatprep.subr.mxu0 0.0
    %664 = vmatpush1.xpose.msra.mxu0 0.0
    %665 = vmatprep.subr.mxu0 0.0
    %666 = vmatpush1.xpose.msra.mxu0 0.0
    %667 = vmatprep.subr.mxu0 0.0
    %668 = vmatpush1.xpose.msra.mxu0 0.0
    %669 = vmatprep.subr.mxu0 0.0
    %670 = vmatpush1.xpose.msra.mxu0 0.0
    %671 = vmatprep.subr.mxu0 0.0
    %672 = vmatpush1.xpose.msra.mxu0 0.0
    %673 = vmatprep.subr.mxu0 0.0
    %674 = vmatpush1.xpose.msra.mxu0 0.0
    %675 = vmatprep.subr.mxu0 0.0
    %676 = vmatpush1.xpose.msra.mxu0 0.0
    %677 = vmatprep.subr.mxu0 0.0
    %678 = vmatpush1.xpose.msra.mxu0 0.0
    %679 = vmatprep.mubr.f32.mxu0 0.0
    %680 = vmatmul.mubr.f32.gmra.mrb[0].mxu0 %v592
    %v681 = vpop.f32.mrb[0].mxu0
    %v682 = vadd.f32 0.0, %v681
    %v683 = vpop.f32.mrb[0].mxu0
    %684 = vmatprep.mubr.f32.mxu0 0.0
    %685 = vmatmul.mubr.f32.gmra.mrb[0].mxu0 %v595
    %v686 = vpop.f32.mrb[0].mxu0
    %v687 = vadd.f32 0.0, %v686
    %v688 = vpop.f32.mrb[0].mxu0
    %689 = vmatprep.mubr.f32.mxu0 0.0
    %690 = vmatmul.mubr.f32.gmra.mrb[0].mxu0 %v598
    %v691 = vpop.f32.mrb[0].mxu0
    %v692 = vadd.f32 0.0, %v691
    %v693 = vpop.f32.mrb[0].mxu0
    %694 = vmatprep.mubr.f32.mxu0 0.0
    %695 = vmatmul.mubr.f32.gmra.mrb[0].mxu0 %v601
    %v696 = vpop.f32.mrb[0].mxu0
    %v697 = vadd.f32 0.0, %v696
    %v698 = vpop.f32.mrb[0].mxu0
    %699 = vdwg.mxu0
    %700 = vrot.lane.b32.xlu0 %v523, 96
    %v701 = vpop.permute.xlu0 %700
    %702 = vrot.lane.b32.xlu0 %v527, 96
    %v703 = vpop.permute.xlu0 %702
    %704 = vrot.lane.b32.xlu0 %v533, 96
    %v705 = vpop.permute.xlu0 %704
    %706 = vrot.lane.b32.xlu0 %v537, 96
    %v707 = vpop.permute.xlu0 %706
    %708 = vrot.lane.b32.xlu0 %v525, 96
    %v709 = vpop.permute.xlu0 %708
    %710 = vrot.lane.b32.xlu0 %v529, 96
    %v711 = vpop.permute.xlu0 %710
    %712 = vrot.lane.b32.xlu0 %v535, 96
    %v713 = vpop.permute.xlu0 %712
    %714 = vrot.lane.b32.xlu0 %v539, 96
    %v715 = vpop.permute.xlu0 %714
    %v716 = vsel %vm590, %v701, 0
    %v718 = vsel %vm590, %v703, 0
    %v720 = vsel %vm590, %v705, 0
    %v722 = vsel %vm590, %v707, 0
    %v724 = vsel %vm590, %v709, 0
    %v726 = vsel %vm590, %v711, 0
    %v728 = vsel %vm590, %v713, 0
    %v730 = vsel %vm590, %v715, 0
    %732 = vmatprep.subr.mxu0 0.0
    %733 = vmatpush1.xpose.msra.mxu0 %v724
    %734 = vmatprep.subr.mxu0 0.0
    %735 = vmatpush1.xpose.msra.mxu0 %v726
    %736 = vmatprep.subr.mxu0 0.0
    %737 = vmatpush1.xpose.msra.mxu0 %v728
    %738 = vmatprep.subr.mxu0 0.0
    %739 = vmatpush1.xpose.msra.mxu0 %v730
    %740 = vmatprep.subr.mxu0 0.0
    %741 = vmatpush1.xpose.msra.mxu0 0.0
    %742 = vmatprep.subr.mxu0 0.0
    %743 = vmatpush1.xpose.msra.mxu0 0.0
    %744 = vmatprep.subr.mxu0 0.0
    %745 = vmatpush1.xpose.msra.mxu0 0.0
    %746 = vmatprep.subr.mxu0 0.0
    %747 = vmatpush1.xpose.msra.mxu0 0.0
    %748 = vmatprep.subr.mxu0 0.0
    %749 = vmatpush1.xpose.msra.mxu0 0.0
    %750 = vmatprep.subr.mxu0 0.0
    %751 = vmatpush1.xpose.msra.mxu0 0.0
    %752 = vmatprep.subr.mxu0 0.0
    %753 = vmatpush1.xpose.msra.mxu0 0.0
    %754 = vmatprep.subr.mxu0 0.0
    %755 = vmatpush1.xpose.msra.mxu0 0.0
    %756 = vmatprep.subr.mxu0 0.0
    %757 = vmatpush1.xpose.msra.mxu0 0.0
    %758 = vmatprep.subr.mxu0 0.0
    %759 = vmatpush1.xpose.msra.mxu0 0.0
    %760 = vmatprep.subr.mxu0 0.0
    %761 = vmatpush1.xpose.msra.mxu0 0.0
    %762 = vmatprep.subr.mxu0 0.0
    %763 = vmatpush1.xpose.msra.mxu0 0.0
    %764 = vmatprep.subr.mxu0 0.0
    %765 = vmatpush1.xpose.msra.mxu0 0.0
    %766 = vmatprep.subr.mxu0 0.0
    %767 = vmatpush1.xpose.msra.mxu0 0.0
    %768 = vmatprep.subr.mxu0 0.0
    %769 = vmatpush1.xpose.msra.mxu0 0.0
    %770 = vmatprep.subr.mxu0 0.0
    %771 = vmatpush1.xpose.msra.mxu0 0.0
    %772 = vmatprep.subr.mxu0 0.0
    %773 = vmatpush1.xpose.msra.mxu0 0.0
    %774 = vmatprep.subr.mxu0 0.0
    %775 = vmatpush1.xpose.msra.mxu0 0.0
    %776 = vmatprep.subr.mxu0 0.0
    %777 = vmatpush1.xpose.msra.mxu0 0.0
    %778 = vmatprep.subr.mxu0 0.0
    %779 = vmatpush1.xpose.msra.mxu0 0.0
    %780 = vmatprep.subr.mxu0 0.0
    %781 = vmatpush1.xpose.msra.mxu0 0.0
    %782 = vmatprep.subr.mxu0 0.0
    %783 = vmatpush1.xpose.msra.mxu0 0.0
    %784 = vmatprep.subr.mxu0 0.0
    %785 = vmatpush1.xpose.msra.mxu0 0.0
    %786 = vmatprep.subr.mxu0 0.0
    %787 = vmatpush1.xpose.msra.mxu0 0.0
    %788 = vmatprep.subr.mxu0 0.0
    %789 = vmatpush1.xpose.msra.mxu0 0.0
    %790 = vmatprep.subr.mxu0 0.0
    %791 = vmatpush1.xpose.msra.mxu0 0.0
    %792 = vmatprep.subr.mxu0 0.0
    %793 = vmatpush1.xpose.msra.mxu0 0.0
    %794 = vmatprep.subr.mxu0 0.0
    %795 = vmatpush1.xpose.msra.mxu0 0.0
    %796 = vmatprep.mubr.f32.mxu0 0.0
    %797 = vmatmul.mubr.f32.gmra.mrb[0].mxu0 %v716
    %v798 = vpop.f32.mrb[0].mxu0
    %v799 = vadd.f32 0.0, %v798
    %v800 = vpop.f32.mrb[0].mxu0
    %801 = vmatprep.mubr.f32.mxu0 0.0
    %802 = vmatmul.mubr.f32.gmra.mrb[0].mxu0 %v718
    %v803 = vpop.f32.mrb[0].mxu0
    %v804 = vadd.f32 0.0, %v803
    %v805 = vpop.f32.mrb[0].mxu0
    %806 = vmatprep.mubr.f32.mxu0 0.0
    %807 = vmatmul.mubr.f32.gmra.mrb[0].mxu0 %v720
    %v808 = vpop.f32.mrb[0].mxu0
    %v809 = vadd.f32 0.0, %v808
    %v810 = vpop.f32.mrb[0].mxu0
    %811 = vmatprep.mubr.f32.mxu0 0.0
    %812 = vmatmul.mubr.f32.gmra.mrb[0].mxu0 %v722
    %v813 = vpop.f32.mrb[0].mxu0
    %v814 = vadd.f32 0.0, %v813
    %v815 = vpop.f32.mrb[0].mxu0
    %816 = vdwg.mxu0
    %817 = vrot.lane.b32.xlu0 %v523, 64
    %v818 = vpop.permute.xlu0 %817
    %819 = vrot.lane.b32.xlu0 %v527, 64
    %v820 = vpop.permute.xlu0 %819
    %821 = vrot.lane.b32.xlu0 %v533, 64
    %v822 = vpop.permute.xlu0 %821
    %823 = vrot.lane.b32.xlu0 %v537, 64
    %v824 = vpop.permute.xlu0 %823
    %825 = vrot.lane.b32.xlu0 %v525, 64
    %v826 = vpop.permute.xlu0 %825
    %827 = vrot.lane.b32.xlu0 %v529, 64
    %v828 = vpop.permute.xlu0 %827
    %829 = vrot.lane.b32.xlu0 %v535, 64
    %v830 = vpop.permute.xlu0 %829
    %831 = vrot.lane.b32.xlu0 %v539, 64
    %v832 = vpop.permute.xlu0 %831
    %v833 = vsel %vm590, %v818, 0
    %v835 = vsel %vm590, %v820, 0
    %v837 = vsel %vm590, %v822, 0
    %v839 = vsel %vm590, %v824, 0
    %v841 = vsel %vm590, %v826, 0
    %v843 = vsel %vm590, %v828, 0
    %v845 = vsel %vm590, %v830, 0
    %v847 = vsel %vm590, %v832, 0
    %849 = vmatprep.subr.mxu0 0.0
    %850 = vmatpush1.xpose.msra.mxu0 %v841
    %851 = vmatprep.subr.mxu0 0.0
    %852 = vmatpush1.xpose.msra.mxu0 %v843
    %853 = vmatprep.subr.mxu0 0.0
    %854 = vmatpush1.xpose.msra.mxu0 %v845
    %855 = vmatprep.subr.mxu0 0.0
    %856 = vmatpush1.xpose.msra.mxu0 %v847
    %857 = vmatprep.subr.mxu0 0.0
    %858 = vmatpush1.xpose.msra.mxu0 0.0
    %859 = vmatprep.subr.mxu0 0.0
    %860 = vmatpush1.xpose.msra.mxu0 0.0
    %861 = vmatprep.subr.mxu0 0.0
    %862 = vmatpush1.xpose.msra.mxu0 0.0
    %863 = vmatprep.subr.mxu0 0.0
    %864 = vmatpush1.xpose.msra.mxu0 0.0
    %865 = vmatprep.subr.mxu0 0.0
    %866 = vmatpush1.xpose.msra.mxu0 0.0
    %867 = vmatprep.subr.mxu0 0.0
    %868 = vmatpush1.xpose.msra.mxu0 0.0
    %869 = vmatprep.subr.mxu0 0.0
    %870 = vmatpush1.xpose.msra.mxu0 0.0
    %871 = vmatprep.subr.mxu0 0.0
    %872 = vmatpush1.xpose.msra.mxu0 0.0
    %873 = vmatprep.subr.mxu0 0.0
    %874 = vmatpush1.xpose.msra.mxu0 0.0
    %875 = vmatprep.subr.mxu0 0.0
    %876 = vmatpush1.xpose.msra.mxu0 0.0
    %877 = vmatprep.subr.mxu0 0.0
    %878 = vmatpush1.xpose.msra.mxu0 0.0
    %879 = vmatprep.subr.mxu0 0.0
    %880 = vmatpush1.xpose.msra.mxu0 0.0
    %881 = vmatprep.subr.mxu0 0.0
    %882 = vmatpush1.xpose.msra.mxu0 0.0
    %883 = vmatprep.subr.mxu0 0.0
    %884 = vmatpush1.xpose.msra.mxu0 0.0
    %885 = vmatprep.subr.mxu0 0.0
    %886 = vmatpush1.xpose.msra.mxu0 0.0
    %887 = vmatprep.subr.mxu0 0.0
    %888 = vmatpush1.xpose.msra.mxu0 0.0
    %889 = vmatprep.subr.mxu0 0.0
    %890 = vmatpush1.xpose.msra.mxu0 0.0
    %891 = vmatprep.subr.mxu0 0.0
    %892 = vmatpush1.xpose.msra.mxu0 0.0
    %893 = vmatprep.subr.mxu0 0.0
    %894 = vmatpush1.xpose.msra.mxu0 0.0
    %895 = vmatprep.subr.mxu0 0.0
    %896 = vmatpush1.xpose.msra.mxu0 0.0
    %897 = vmatprep.subr.mxu0 0.0
    %898 = vmatpush1.xpose.msra.mxu0 0.0
    %899 = vmatprep.subr.mxu0 0.0
    %900 = vmatpush1.xpose.msra.mxu0 0.0
    %901 = vmatprep.subr.mxu0 0.0
    %902 = vmatpush1.xpose.msra.mxu0 0.0
    %903 = vmatprep.subr.mxu0 0.0
    %904 = vmatpush1.xpose.msra.mxu0 0.0
    %905 = vmatprep.subr.mxu0 0.0
    %906 = vmatpush1.xpose.msra.mxu0 0.0
    %907 = vmatprep.subr.mxu0 0.0
    %908 = vmatpush1.xpose.msra.mxu0 0.0
    %909 = vmatprep.subr.mxu0 0.0
    %910 = vmatpush1.xpose.msra.mxu0 0.0
    %911 = vmatprep.subr.mxu0 0.0
    %912 = vmatpush1.xpose.msra.mxu0 0.0
    %913 = vmatprep.mubr.f32.mxu0 0.0
    %914 = vmatmul.mubr.f32.gmra.mrb[0].mxu0 %v833
    %v915 = vpop.f32.mrb[0].mxu0
    %v916 = vadd.f32 0.0, %v915
    %v917 = vpop.f32.mrb[0].mxu0
    %918 = vmatprep.mubr.f32.mxu0 0.0
    %919 = vmatmul.mubr.f32.gmra.mrb[0].mxu0 %v835
    %v920 = vpop.f32.mrb[0].mxu0
    %v921 = vadd.f32 0.0, %v920
    %v922 = vpop.f32.mrb[0].mxu0
    %923 = vmatprep.mubr.f32.mxu0 0.0
    %924 = vmatmul.mubr.f32.gmra.mrb[0].mxu0 %v837
    %v925 = vpop.f32.mrb[0].mxu0
    %v926 = vadd.f32 0.0, %v925
    %v927 = vpop.f32.mrb[0].mxu0
    %928 = vmatprep.mubr.f32.mxu0 0.0
    %929 = vmatmul.mubr.f32.gmra.mrb[0].mxu0 %v839
    %v930 = vpop.f32.mrb[0].mxu0
    %v931 = vadd.f32 0.0, %v930
    %v932 = vpop.f32.mrb[0].mxu0
    %933 = vdwg.mxu0
    %934 = vrot.lane.b32.xlu0 %v523, 32
    %v935 = vpop.permute.xlu0 %934
    %936 = vrot.lane.b32.xlu0 %v527, 32
    %v937 = vpop.permute.xlu0 %936
    %938 = vrot.lane.b32.xlu0 %v533, 32
    %v939 = vpop.permute.xlu0 %938
    %940 = vrot.lane.b32.xlu0 %v537, 32
    %v941 = vpop.permute.xlu0 %940
    %942 = vrot.lane.b32.xlu0 %v525, 32
    %v943 = vpop.permute.xlu0 %942
    %944 = vrot.lane.b32.xlu0 %v529, 32
    %v945 = vpop.permute.xlu0 %944
    %946 = vrot.lane.b32.xlu0 %v535, 32
    %v947 = vpop.permute.xlu0 %946
    %948 = vrot.lane.b32.xlu0 %v539, 32
    %v949 = vpop.permute.xlu0 %948
    %v950 = vsel %vm590, %v935, 0
    %v952 = vsel %vm590, %v937, 0
    %v954 = vsel %vm590, %v939, 0
    %v956 = vsel %vm590, %v941, 0
    %v958 = vsel %vm590, %v943, 0
    %v960 = vsel %vm590, %v945, 0
    %v962 = vsel %vm590, %v947, 0
    %v964 = vsel %vm590, %v949, 0
    %966 = vmatprep.subr.mxu0 0.0
    %967 = vmatpush1.xpose.msra.mxu0 %v958
    %968 = vmatprep.subr.mxu0 0.0
    %969 = vmatpush1.xpose.msra.mxu0 %v960
    %970 = vmatprep.subr.mxu0 0.0
    %971 = vmatpush1.xpose.msra.mxu0 %v962
    %972 = vmatprep.subr.mxu0 0.0
    %973 = vmatpush1.xpose.msra.mxu0 %v964
    %974 = vmatprep.subr.mxu0 0.0
    %975 = vmatpush1.xpose.msra.mxu0 0.0
    %976 = vmatprep.subr.mxu0 0.0
    %977 = vmatpush1.xpose.msra.mxu0 0.0
    %978 = vmatprep.subr.mxu0 0.0
    %979 = vmatpush1.xpose.msra.mxu0 0.0
    %980 = vmatprep.subr.mxu0 0.0
    %981 = vmatpush1.xpose.msra.mxu0 0.0
    %982 = vmatprep.subr.mxu0 0.0
    %983 = vmatpush1.xpose.msra.mxu0 0.0
    %984 = vmatprep.subr.mxu0 0.0
    %985 = vmatpush1.xpose.msra.mxu0 0.0
    %986 = vmatprep.subr.mxu0 0.0
    %987 = vmatpush1.xpose.msra.mxu0 0.0
    %988 = vmatprep.subr.mxu0 0.0
    %989 = vmatpush1.xpose.msra.mxu0 0.0
    %990 = vmatprep.subr.mxu0 0.0
    %991 = vmatpush1.xpose.msra.mxu0 0.0
    %992 = vmatprep.subr.mxu0 0.0
    %993 = vmatpush1.xpose.msra.mxu0 0.0
    %994 = vmatprep.subr.mxu0 0.0
    %995 = vmatpush1.xpose.msra.mxu0 0.0
    %996 = vmatprep.subr.mxu0 0.0
    %997 = vmatpush1.xpose.msra.mxu0 0.0
    %998 = vmatprep.subr.mxu0 0.0
    %999 = vmatpush1.xpose.msra.mxu0 0.0
    %1000 = vmatprep.subr.mxu0 0.0
    %1001 = vmatpush1.xpose.msra.mxu0 0.0
    %1002 = vmatprep.subr.mxu0 0.0
    %1003 = vmatpush1.xpose.msra.mxu0 0.0
    %1004 = vmatprep.subr.mxu0 0.0
    %1005 = vmatpush1.xpose.msra.mxu0 0.0
    %1006 = vmatprep.subr.mxu0 0.0
    %1007 = vmatpush1.xpose.msra.mxu0 0.0
    %1008 = vmatprep.subr.mxu0 0.0
    %1009 = vmatpush1.xpose.msra.mxu0 0.0
    %1010 = vmatprep.subr.mxu0 0.0
    %1011 = vmatpush1.xpose.msra.mxu0 0.0
    %1012 = vmatprep.subr.mxu0 0.0
    %1013 = vmatpush1.xpose.msra.mxu0 0.0
    %1014 = vmatprep.subr.mxu0 0.0
    %1015 = vmatpush1.xpose.msra.mxu0 0.0
    %1016 = vmatprep.subr.mxu0 0.0
    %1017 = vmatpush1.xpose.msra.mxu0 0.0
    %1018 = vmatprep.subr.mxu0 0.0
    %1019 = vmatpush1.xpose.msra.mxu0 0.0
    %1020 = vmatprep.subr.mxu0 0.0
    %1021 = vmatpush1.xpose.msra.mxu0 0.0
    %1022 = vmatprep.subr.mxu0 0.0
    %1023 = vmatpush1.xpose.msra.mxu0 0.0
    %1024 = vmatprep.subr.mxu0 0.0
    %1025 = vmatpush1.xpose.msra.mxu0 0.0
    %1026 = vmatprep.subr.mxu0 0.0
    %1027 = vmatpush1.xpose.msra.mxu0 0.0
    %1028 = vmatprep.subr.mxu0 0.0
    %1029 = vmatpush1.xpose.msra.mxu0 0.0
    %1030 = vmatprep.mubr.f32.mxu0 0.0
    %1031 = vmatmul.mubr.f32.gmra.mrb[0].mxu0 %v950
    %v1032 = vpop.f32.mrb[0].mxu0
    %v1033 = vadd.f32 0.0, %v1032
    %v1034 = vpop.f32.mrb[0].mxu0
    %1035 = vmatprep.mubr.f32.mxu0 0.0
    %1036 = vmatmul.mubr.f32.gmra.mrb[0].mxu0 %v952
    %v1037 = vpop.f32.mrb[0].mxu0
    %v1038 = vadd.f32 0.0, %v1037
    %v1039 = vpop.f32.mrb[0].mxu0
    %1040 = vmatprep.mubr.f32.mxu0 0.0
    %1041 = vmatmul.mubr.f32.gmra.mrb[0].mxu0 %v954
    %v1042 = vpop.f32.mrb[0].mxu0
    %v1043 = vadd.f32 0.0, %v1042
    %v1044 = vpop.f32.mrb[0].mxu0
    %1045 = vmatprep.mubr.f32.mxu0 0.0
    %1046 = vmatmul.mubr.f32.gmra.mrb[0].mxu0 %v956
    %v1047 = vpop.f32.mrb[0].mxu0
    %v1048 = vadd.f32 0.0, %v1047
    %v1049 = vpop.f32.mrb[0].mxu0
    %1050 = vdwg.mxu0
    %v1051 = vmul.f32 %v682, 0.17677669
    %v1052 = vmul.f32 %v687, 0.17677669
    %v1053 = vmul.f32 %v692, 0.17677669
    %v1054 = vmul.f32 %v697, 0.17677669
    %v1055 = vmul.f32 %v799, 0.17677669
    %v1056 = vmul.f32 %v804, 0.17677669
    %v1057 = vmul.f32 %v809, 0.17677669
    %v1058 = vmul.f32 %v814, 0.17677669
    %v1059 = vmul.f32 %v916, 0.17677669
    %v1060 = vmul.f32 %v921, 0.17677669
    %v1061 = vmul.f32 %v926, 0.17677669
    %v1062 = vmul.f32 %v931, 0.17677669
    %v1063 = vmul.f32 %v1033, 0.17677669
    %v1064 = vmul.f32 %v1038, 0.17677669
    %v1065 = vmul.f32 %v1043, 0.17677669
    %v1066 = vmul.f32 %v1048, 0.17677669
    %v1067 = vadd.f32 %v1051, %v293
    %v1068 = vadd.f32 %v1052, %v294
    %v1069 = vadd.f32 %v1053, %v295
    %v1070 = vadd.f32 %v1054, %v296
    %v1071 = vadd.f32 %v1055, %v297
    %v1072 = vadd.f32 %v1056, %v298
    %v1073 = vadd.f32 %v1057, %v299
    %v1074 = vadd.f32 %v1058, %v300
    %v1075 = vadd.f32 %v1059, %v301
    %v1076 = vadd.f32 %v1060, %v302
    %v1077 = vadd.f32 %v1061, %v303
    %v1078 = vadd.f32 %v1062, %v304
    %v1079 = vadd.f32 %v1063, %v305
    %v1080 = vadd.f32 %v1064, %v306
    %v1081 = vadd.f32 %v1065, %v307
    %v1082 = vadd.f32 %v1066, %v308
    %v1083 = vsel %vm590, %v1067, -inf
    %1084 = vmax.xlane.f32.xlu0 %v1083
    %v1085 = vpop.xlane.xlu0 %1084
    %v1086 = vsel %vm590, %v1068, -inf
    %1087 = vmax.xlane.f32.xlu0 %v1086
    %v1088 = vpop.xlane.xlu0 %1087
    %v1089 = vsel %vm590, %v1069, -inf
    %1090 = vmax.xlane.f32.xlu0 %v1089
    %v1091 = vpop.xlane.xlu0 %1090
    %v1092 = vsel %vm590, %v1070, -inf
    %1093 = vmax.xlane.f32.xlu0 %v1092
    %v1094 = vpop.xlane.xlu0 %1093
    %v1095 = vsel %vm590, %v1071, -inf
    %1096 = vmax.xlane.f32.xlu0 %v1095
    %v1097 = vpop.xlane.xlu0 %1096
    %v1098 = vsel %vm590, %v1072, -inf
    %1099 = vmax.xlane.f32.xlu0 %v1098
    %v1100 = vpop.xlane.xlu0 %1099
    %v1101 = vsel %vm590, %v1073, -inf
    %1102 = vmax.xlane.f32.xlu0 %v1101
    %v1103 = vpop.xlane.xlu0 %1102
    %v1104 = vsel %vm590, %v1074, -inf
    %1105 = vmax.xlane.f32.xlu0 %v1104
    %v1106 = vpop.xlane.xlu0 %1105
    %v1107 = vsel %vm590, %v1075, -inf
    %1108 = vmax.xlane.f32.xlu0 %v1107
    %v1109 = vpop.xlane.xlu0 %1108
    %v1110 = vsel %vm590, %v1076, -inf
    %1111 = vmax.xlane.f32.xlu0 %v1110
    %v1112 = vpop.xlane.xlu0 %1111
    %v1113 = vsel %vm590, %v1077, -inf
    %1114 = vmax.xlane.f32.xlu0 %v1113
    %v1115 = vpop.xlane.xlu0 %1114
    %v1116 = vsel %vm590, %v1078, -inf
    %1117 = vmax.xlane.f32.xlu0 %v1116
    %v1118 = vpop.xlane.xlu0 %1117
    %v1119 = vsel %vm590, %v1079, -inf
    %1120 = vmax.xlane.f32.xlu0 %v1119
    %v1121 = vpop.xlane.xlu0 %1120
    %v1122 = vsel %vm590, %v1080, -inf
    %1123 = vmax.xlane.f32.xlu0 %v1122
    %v1124 = vpop.xlane.xlu0 %1123
    %v1125 = vsel %vm590, %v1081, -inf
    %1126 = vmax.xlane.f32.xlu0 %v1125
    %v1127 = vpop.xlane.xlu0 %1126
    %v1128 = vsel %vm590, %v1082, -inf
    %1129 = vmax.xlane.f32.xlu0 %v1128
    %v1130 = vpop.xlane.xlu0 %1129
    %v1131 = vsub.f32 %v1067, %v1085
    %v1132 = vsub.f32 %v1068, %v1088
    %v1133 = vsub.f32 %v1069, %v1091
    %v1134 = vsub.f32 %v1070, %v1094
    %v1135 = vsub.f32 %v1071, %v1097
    %v1136 = vsub.f32 %v1072, %v1100
    %v1137 = vsub.f32 %v1073, %v1103
    %v1138 = vsub.f32 %v1074, %v1106
    %v1139 = vsub.f32 %v1075, %v1109
    %v1140 = vsub.f32 %v1076, %v1112
    %v1141 = vsub.f32 %v1077, %v1115
    %v1142 = vsub.f32 %v1078, %v1118
    %v1143 = vsub.f32 %v1079, %v1121
    %v1144 = vsub.f32 %v1080, %v1124
    %v1145 = vsub.f32 %v1081, %v1127
    %v1146 = vsub.f32 %v1082, %v1130
    %v1147 = vmul.f32 %v1131, 1.442695
    %v1148 = vpow.pop %v1147
    %v1149 = vmul.f32 %v1132, 1.442695
    %v1150 = vpow.pop %v1149
    %v1151 = vmul.f32 %v1133, 1.442695
    %v1152 = vpow.pop %v1151
    %v1153 = vmul.f32 %v1134, 1.442695
    %v1154 = vpow.pop %v1153
    %v1155 = vmul.f32 %v1135, 1.442695
    %v1156 = vpow.pop %v1155
    %v1157 = vmul.f32 %v1136, 1.442695
    %v1158 = vpow.pop %v1157
    %v1159 = vmul.f32 %v1137, 1.442695
    %v1160 = vpow.pop %v1159
    %v1161 = vmul.f32 %v1138, 1.442695
    %v1162 = vpow.pop %v1161
    %v1163 = vmul.f32 %v1139, 1.442695
    %v1164 = vpow.pop %v1163
    %v1165 = vmul.f32 %v1140, 1.442695
    %v1166 = vpow.pop %v1165
    %v1167 = vmul.f32 %v1141, 1.442695
    %v1168 = vpow.pop %v1167
    %v1169 = vmul.f32 %v1142, 1.442695
    %v1170 = vpow.pop %v1169
    %v1171 = vmul.f32 %v1143, 1.442695
    %v1172 = vpow.pop %v1171
    %v1173 = vmul.f32 %v1144, 1.442695
    %v1174 = vpow.pop %v1173
    %v1175 = vmul.f32 %v1145, 1.442695
    %v1176 = vpow.pop %v1175
    %v1177 = vmul.f32 %v1146, 1.442695
    %v1178 = vpow.pop %v1177
    %v1179 = vsel %vm590, %v1148, 0.0
    %1180 = vadd.xlane.f32.xlu0 %v1179
    %v1181 = vpop.xlane.xlu0 %1180
    %v1182 = vsel %vm590, %v1150, 0.0
    %1183 = vadd.xlane.f32.xlu0 %v1182
    %v1184 = vpop.xlane.xlu0 %1183
    %v1185 = vsel %vm590, %v1152, 0.0
    %1186 = vadd.xlane.f32.xlu0 %v1185
    %v1187 = vpop.xlane.xlu0 %1186
    %v1188 = vsel %vm590, %v1154, 0.0
    %1189 = vadd.xlane.f32.xlu0 %v1188
    %v1190 = vpop.xlane.xlu0 %1189
    %v1191 = vsel %vm590, %v1156, 0.0
    %1192 = vadd.xlane.f32.xlu0 %v1191
    %v1193 = vpop.xlane.xlu0 %1192
    %v1194 = vsel %vm590, %v1158, 0.0
    %1195 = vadd.xlane.f32.xlu0 %v1194
    %v1196 = vpop.xlane.xlu0 %1195
    %v1197 = vsel %vm590, %v1160, 0.0
    %1198 = vadd.xlane.f32.xlu0 %v1197
    %v1199 = vpop.xlane.xlu0 %1198
    %v1200 = vsel %vm590, %v1162, 0.0
    %1201 = vadd.xlane.f32.xlu0 %v1200
    %v1202 = vpop.xlane.xlu0 %1201
    %v1203 = vsel %vm590, %v1164, 0.0
    %1204 = vadd.xlane.f32.xlu0 %v1203
    %v1205 = vpop.xlane.xlu0 %1204
    %v1206 = vsel %vm590, %v1166, 0.0
    %1207 = vadd.xlane.f32.xlu0 %v1206
    %v1208 = vpop.xlane.xlu0 %1207
    %v1209 = vsel %vm590, %v1168, 0.0
    %1210 = vadd.xlane.f32.xlu0 %v1209
    %v1211 = vpop.xlane.xlu0 %1210
    %v1212 = vsel %vm590, %v1170, 0.0
    %1213 = vadd.xlane.f32.xlu0 %v1212
    %v1214 = vpop.xlane.xlu0 %1213
    %v1215 = vsel %vm590, %v1172, 0.0
    %1216 = vadd.xlane.f32.xlu0 %v1215
    %v1217 = vpop.xlane.xlu0 %1216
    %v1218 = vsel %vm590, %v1174, 0.0
    %1219 = vadd.xlane.f32.xlu0 %v1218
    %v1220 = vpop.xlane.xlu0 %1219
    %v1221 = vsel %vm590, %v1176, 0.0
    %1222 = vadd.xlane.f32.xlu0 %v1221
    %v1223 = vpop.xlane.xlu0 %1222
    %v1224 = vsel %vm590, %v1178, 0.0
    %1225 = vadd.xlane.f32.xlu0 %v1224
    %v1226 = vpop.xlane.xlu0 %1225
    %v1227 = vrcp.pop %v1181
    %v1228 = vrcp.pop %v1184
    %v1229 = vrcp.pop %v1187
    %v1230 = vrcp.pop %v1190
    %v1231 = vrcp.pop %v1193
    %v1232 = vrcp.pop %v1196
    %v1233 = vrcp.pop %v1199
    %v1234 = vrcp.pop %v1202
    %v1235 = vrcp.pop %v1205
    %v1236 = vrcp.pop %v1208
    %v1237 = vrcp.pop %v1211
    %v1238 = vrcp.pop %v1214
    %v1239 = vrcp.pop %v1217
    %v1240 = vrcp.pop %v1220
    %v1241 = vrcp.pop %v1223
    %v1242 = vrcp.pop %v1226
    %v1243 = vmul.f32 %v1148, %v1227
    %v1244 = vmul.f32 %v1150, %v1228
    %v1245 = vmul.f32 %v1152, %v1229
    %v1246 = vmul.f32 %v1154, %v1230
    %v1247 = vmul.f32 %v1156, %v1231
    %v1248 = vmul.f32 %v1158, %v1232
    %v1249 = vmul.f32 %v1160, %v1233
    %v1250 = vmul.f32 %v1162, %v1234
    %v1251 = vmul.f32 %v1164, %v1235
    %v1252 = vmul.f32 %v1166, %v1236
    %v1253 = vmul.f32 %v1168, %v1237
    %v1254 = vmul.f32 %v1170, %v1238
    %v1255 = vmul.f32 %v1172, %v1239
    %v1256 = vmul.f32 %v1174, %v1240
    %v1257 = vmul.f32 %v1176, %v1241
    %v1258 = vmul.f32 %v1178, %v1242
    %v1260 = vsel %vm590, %v1243, 0
    %v1263 = vsel %vm590, %v1244, 0
    %v1266 = vsel %vm590, %v1245, 0
    %v1269 = vsel %vm590, %v1246, 0
    %1271 = vmatprep.subr.mxu0 0.0
    %1272 = vmatpush1.msra.mxu0 %v576
    %1273 = vmatprep.subr.mxu0 0.0
    %1274 = vmatpush1.msra.mxu0 %v579
    %1275 = vmatprep.subr.mxu0 0.0
    %1276 = vmatpush1.msra.mxu0 %v584
    %1277 = vmatprep.subr.mxu0 0.0
    %1278 = vmatpush1.msra.mxu0 %v587
    %1279 = vmatprep.subr.mxu0 0.0
    %1280 = vmatpush1.msra.mxu0 0.0
    %1281 = vmatprep.subr.mxu0 0.0
    %1282 = vmatpush1.msra.mxu0 0.0
    %1283 = vmatprep.subr.mxu0 0.0
    %1284 = vmatpush1.msra.mxu0 0.0
    %1285 = vmatprep.subr.mxu0 0.0
    %1286 = vmatpush1.msra.mxu0 0.0
    %1287 = vmatprep.subr.mxu0 0.0
    %1288 = vmatpush1.msra.mxu0 0.0
    %1289 = vmatprep.subr.mxu0 0.0
    %1290 = vmatpush1.msra.mxu0 0.0
    %1291 = vmatprep.subr.mxu0 0.0
    %1292 = vmatpush1.msra.mxu0 0.0
    %1293 = vmatprep.subr.mxu0 0.0
    %1294 = vmatpush1.msra.mxu0 0.0
    %1295 = vmatprep.subr.mxu0 0.0
    %1296 = vmatpush1.msra.mxu0 0.0
    %1297 = vmatprep.subr.mxu0 0.0
    %1298 = vmatpush1.msra.mxu0 0.0
    %1299 = vmatprep.subr.mxu0 0.0
    %1300 = vmatpush1.msra.mxu0 0.0
    %1301 = vmatprep.subr.mxu0 0.0
    %1302 = vmatpush1.msra.mxu0 0.0
    %1303 = vmatprep.subr.mxu0 0.0
    %1304 = vmatpush1.msra.mxu0 0.0
    %1305 = vmatprep.subr.mxu0 0.0
    %1306 = vmatpush1.msra.mxu0 0.0
    %1307 = vmatprep.subr.mxu0 0.0
    %1308 = vmatpush1.msra.mxu0 0.0
    %1309 = vmatprep.subr.mxu0 0.0
    %1310 = vmatpush1.msra.mxu0 0.0
    %1311 = vmatprep.subr.mxu0 0.0
    %1312 = vmatpush1.msra.mxu0 0.0
    %1313 = vmatprep.subr.mxu0 0.0
    %1314 = vmatpush1.msra.mxu0 0.0
    %1315 = vmatprep.subr.mxu0 0.0
    %1316 = vmatpush1.msra.mxu0 0.0
    %1317 = vmatprep.subr.mxu0 0.0
    %1318 = vmatpush1.msra.mxu0 0.0
    %1319 = vmatprep.subr.mxu0 0.0
    %1320 = vmatpush1.msra.mxu0 0.0
    %1321 = vmatprep.subr.mxu0 0.0
    %1322 = vmatpush1.msra.mxu0 0.0
    %1323 = vmatprep.subr.mxu0 0.0
    %1324 = vmatpush1.msra.mxu0 0.0
    %1325 = vmatprep.subr.mxu0 0.0
    %1326 = vmatpush1.msra.mxu0 0.0
    %1327 = vmatprep.subr.mxu0 0.0
    %1328 = vmatpush1.msra.mxu0 0.0
    %1329 = vmatprep.subr.mxu0 0.0
    %1330 = vmatpush1.msra.mxu0 0.0
    %1331 = vmatprep.subr.mxu0 0.0
    %1332 = vmatpush1.msra.mxu0 0.0
    %1333 = vmatprep.subr.mxu0 0.0
    %1334 = vmatpush1.msra.mxu0 0.0
    %1335 = vmatprep.mubr.f32.mxu0 0.0
    %1336 = vmatmul.mubr.f32.gmra.mrb[0].mxu0 %v1260
    %v1337 = vpop.f32.mrb[0].mxu0
    %v1338 = vadd.f32 0.0, %v1337
    %v1339 = vpop.f32.mrb[0].mxu0
    %1340 = vmatprep.mubr.f32.mxu0 0.0
    %1341 = vmatmul.mubr.f32.gmra.mrb[0].mxu0 %v1263
    %v1342 = vpop.f32.mrb[0].mxu0
    %v1343 = vadd.f32 0.0, %v1342
    %v1344 = vpop.f32.mrb[0].mxu0
    %1345 = vmatprep.mubr.f32.mxu0 0.0
    %1346 = vmatmul.mubr.f32.gmra.mrb[0].mxu0 %v1266
    %v1347 = vpop.f32.mrb[0].mxu0
    %v1348 = vadd.f32 0.0, %v1347
    %v1349 = vpop.f32.mrb[0].mxu0
    %1350 = vmatprep.mubr.f32.mxu0 0.0
    %1351 = vmatmul.mubr.f32.gmra.mrb[0].mxu0 %v1269
    %v1352 = vpop.f32.mrb[0].mxu0
    %v1353 = vadd.f32 0.0, %v1352
    %v1354 = vpop.f32.mrb[0].mxu0
    %1355 = vdwg.mxu0
    %1356 = vst.msk [vmem:[#allocation2] sm:$0xff] %vm590, %v1338
    %1357 = vst.msk [vmem:[#allocation2 + $0x8] sm:$0xff] %vm590, %v1343
    %1358 = vst.msk [vmem:[#allocation2 + $0x10] sm:$0xff] %vm590, %v1348
    %1359 = vst.msk [vmem:[#allocation2 + $0x18] sm:$0xff] %vm590, %v1353
    %1364 = vrot.lane.b32.xlu0 %v576, 96
    %v1365 = vpop.permute.xlu0 %1364
    %1366 = vrot.lane.b32.xlu0 %v579, 96
    %v1367 = vpop.permute.xlu0 %1366
    %1368 = vrot.lane.b32.xlu0 %v584, 96
    %v1369 = vpop.permute.xlu0 %1368
    %1370 = vrot.lane.b32.xlu0 %v587, 96
    %v1371 = vpop.permute.xlu0 %1370
    %v1377 = vsel %vm590, %v1247, 0
    %v1380 = vsel %vm590, %v1248, 0
    %v1383 = vsel %vm590, %v1249, 0
    %v1386 = vsel %vm590, %v1250, 0
    %1388 = vmatprep.subr.mxu0 0.0
    %1389 = vmatpush1.msra.mxu0 %v1365
    %1390 = vmatprep.subr.mxu0 0.0
    %1391 = vmatpush1.msra.mxu0 %v1367
    %1392 = vmatprep.subr.mxu0 0.0
    %1393 = vmatpush1.msra.mxu0 %v1369
    %1394 = vmatprep.subr.mxu0 0.0
    %1395 = vmatpush1.msra.mxu0 %v1371
    %1396 = vmatprep.subr.mxu0 0.0
    %1397 = vmatpush1.msra.mxu0 0.0
    %1398 = vmatprep.subr.mxu0 0.0
    %1399 = vmatpush1.msra.mxu0 0.0
    %1400 = vmatprep.subr.mxu0 0.0
    %1401 = vmatpush1.msra.mxu0 0.0
    %1402 = vmatprep.subr.mxu0 0.0
    %1403 = vmatpush1.msra.mxu0 0.0
    %1404 = vmatprep.subr.mxu0 0.0
    %1405 = vmatpush1.msra.mxu0 0.0
    %1406 = vmatprep.subr.mxu0 0.0
    %1407 = vmatpush1.msra.mxu0 0.0
    %1408 = vmatprep.subr.mxu0 0.0
    %1409 = vmatpush1.msra.mxu0 0.0
    %1410 = vmatprep.subr.mxu0 0.0
    %1411 = vmatpush1.msra.mxu0 0.0
    %1412 = vmatprep.subr.mxu0 0.0
    %1413 = vmatpush1.msra.mxu0 0.0
    %1414 = vmatprep.subr.mxu0 0.0
    %1415 = vmatpush1.msra.mxu0 0.0
    %1416 = vmatprep.subr.mxu0 0.0
    %1417 = vmatpush1.msra.mxu0 0.0
    %1418 = vmatprep.subr.mxu0 0.0
    %1419 = vmatpush1.msra.mxu0 0.0
    %1420 = vmatprep.subr.mxu0 0.0
    %1421 = vmatpush1.msra.mxu0 0.0
    %1422 = vmatprep.subr.mxu0 0.0
    %1423 = vmatpush1.msra.mxu0 0.0
    %1424 = vmatprep.subr.mxu0 0.0
    %1425 = vmatpush1.msra.mxu0 0.0
    %1426 = vmatprep.subr.mxu0 0.0
    %1427 = vmatpush1.msra.mxu0 0.0
    %1428 = vmatprep.subr.mxu0 0.0
    %1429 = vmatpush1.msra.mxu0 0.0
    %1430 = vmatprep.subr.mxu0 0.0
    %1431 = vmatpush1.msra.mxu0 0.0
    %1432 = vmatprep.subr.mxu0 0.0
    %1433 = vmatpush1.msra.mxu0 0.0
    %1434 = vmatprep.subr.mxu0 0.0
    %1435 = vmatpush1.msra.mxu0 0.0
    %1436 = vmatprep.subr.mxu0 0.0
    %1437 = vmatpush1.msra.mxu0 0.0
    %1438 = vmatprep.subr.mxu0 0.0
    %1439 = vmatpush1.msra.mxu0 0.0
    %1440 = vmatprep.subr.mxu0 0.0
    %1441 = vmatpush1.msra.mxu0 0.0
    %1442 = vmatprep.subr.mxu0 0.0
    %1443 = vmatpush1.msra.mxu0 0.0
    %1444 = vmatprep.subr.mxu0 0.0
    %1445 = vmatpush1.msra.mxu0 0.0
    %1446 = vmatprep.subr.mxu0 0.0
    %1447 = vmatpush1.msra.mxu0 0.0
    %1448 = vmatprep.subr.mxu0 0.0
    %1449 = vmatpush1.msra.mxu0 0.0
    %1450 = vmatprep.subr.mxu0 0.0
    %1451 = vmatpush1.msra.mxu0 0.0
    %1452 = vmatprep.mubr.f32.mxu0 0.0
    %1453 = vmatmul.mubr.f32.gmra.mrb[0].mxu0 %v1377
    %v1454 = vpop.f32.mrb[0].mxu0
    %v1455 = vadd.f32 0.0, %v1454
    %v1456 = vpop.f32.mrb[0].mxu0
    %1457 = vmatprep.mubr.f32.mxu0 0.0
    %1458 = vmatmul.mubr.f32.gmra.mrb[0].mxu0 %v1380
    %v1459 = vpop.f32.mrb[0].mxu0
    %v1460 = vadd.f32 0.0, %v1459
    %v1461 = vpop.f32.mrb[0].mxu0
    %1462 = vmatprep.mubr.f32.mxu0 0.0
    %1463 = vmatmul.mubr.f32.gmra.mrb[0].mxu0 %v1383
    %v1464 = vpop.f32.mrb[0].mxu0
    %v1465 = vadd.f32 0.0, %v1464
    %v1466 = vpop.f32.mrb[0].mxu0
    %1467 = vmatprep.mubr.f32.mxu0 0.0
    %1468 = vmatmul.mubr.f32.gmra.mrb[0].mxu0 %v1386
    %v1469 = vpop.f32.mrb[0].mxu0
    %v1470 = vadd.f32 0.0, %v1469
    %v1471 = vpop.f32.mrb[0].mxu0
    %1472 = vdwg.mxu0
    %1477 = vrot.lane.b32.xlu0 %v1455, 32
    %v1478 = vpop.permute.xlu0 %1477
    %1479 = vrot.lane.b32.xlu0 %v1460, 32
    %v1480 = vpop.permute.xlu0 %1479
    %1481 = vrot.lane.b32.xlu0 %v1465, 32
    %v1482 = vpop.permute.xlu0 %1481
    %1483 = vrot.lane.b32.xlu0 %v1470, 32
    %v1484 = vpop.permute.xlu0 %1483
    %vm1489 = vcmask 523520
    %1490 = vst.msk [vmem:[#allocation2] sm:$0xff] %vm1489, %v1478
    %1491 = vst.msk [vmem:[#allocation2 + $0x8] sm:$0xff] %vm1489, %v1480
    %1492 = vst.msk [vmem:[#allocation2 + $0x10] sm:$0xff] %vm1489, %v1482
    %1493 = vst.msk [vmem:[#allocation2 + $0x18] sm:$0xff] %vm1489, %v1484
    %1494 = vrot.lane.b32.xlu0 %v576, 64
    %v1495 = vpop.permute.xlu0 %1494
    %1496 = vrot.lane.b32.xlu0 %v579, 64
    %v1497 = vpop.permute.xlu0 %1496
    %1498 = vrot.lane.b32.xlu0 %v584, 64
    %v1499 = vpop.permute.xlu0 %1498
    %1500 = vrot.lane.b32.xlu0 %v587, 64
    %v1501 = vpop.permute.xlu0 %1500
    %v1507 = vsel %vm590, %v1251, 0
    %v1510 = vsel %vm590, %v1252, 0
    %v1513 = vsel %vm590, %v1253, 0
    %v1516 = vsel %vm590, %v1254, 0
    %1518 = vmatprep.subr.mxu0 0.0
    %1519 = vmatpush1.msra.mxu0 %v1495
    %1520 = vmatprep.subr.mxu0 0.0
    %1521 = vmatpush1.msra.mxu0 %v1497
    %1522 = vmatprep.subr.mxu0 0.0
    %1523 = vmatpush1.msra.mxu0 %v1499
    %1524 = vmatprep.subr.mxu0 0.0
    %1525 = vmatpush1.msra.mxu0 %v1501
    %1526 = vmatprep.subr.mxu0 0.0
    %1527 = vmatpush1.msra.mxu0 0.0
    %1528 = vmatprep.subr.mxu0 0.0
    %1529 = vmatpush1.msra.mxu0 0.0
    %1530 = vmatprep.subr.mxu0 0.0
    %1531 = vmatpush1.msra.mxu0 0.0
    %1532 = vmatprep.subr.mxu0 0.0
    %1533 = vmatpush1.msra.mxu0 0.0
    %1534 = vmatprep.subr.mxu0 0.0
    %1535 = vmatpush1.msra.mxu0 0.0
    %1536 = vmatprep.subr.mxu0 0.0
    %1537 = vmatpush1.msra.mxu0 0.0
    %1538 = vmatprep.subr.mxu0 0.0
    %1539 = vmatpush1.msra.mxu0 0.0
    %1540 = vmatprep.subr.mxu0 0.0
    %1541 = vmatpush1.msra.mxu0 0.0
    %1542 = vmatprep.subr.mxu0 0.0
    %1543 = vmatpush1.msra.mxu0 0.0
    %1544 = vmatprep.subr.mxu0 0.0
    %1545 = vmatpush1.msra.mxu0 0.0
    %1546 = vmatprep.subr.mxu0 0.0
    %1547 = vmatpush1.msra.mxu0 0.0
    %1548 = vmatprep.subr.mxu0 0.0
    %1549 = vmatpush1.msra.mxu0 0.0
    %1550 = vmatprep.subr.mxu0 0.0
    %1551 = vmatpush1.msra.mxu0 0.0
    %1552 = vmatprep.subr.mxu0 0.0
    %1553 = vmatpush1.msra.mxu0 0.0
    %1554 = vmatprep.subr.mxu0 0.0
    %1555 = vmatpush1.msra.mxu0 0.0
    %1556 = vmatprep.subr.mxu0 0.0
    %1557 = vmatpush1.msra.mxu0 0.0
    %1558 = vmatprep.subr.mxu0 0.0
    %1559 = vmatpush1.msra.mxu0 0.0
    %1560 = vmatprep.subr.mxu0 0.0
    %1561 = vmatpush1.msra.mxu0 0.0
    %1562 = vmatprep.subr.mxu0 0.0
    %1563 = vmatpush1.msra.mxu0 0.0
    %1564 = vmatprep.subr.mxu0 0.0
    %1565 = vmatpush1.msra.mxu0 0.0
    %1566 = vmatprep.subr.mxu0 0.0
    %1567 = vmatpush1.msra.mxu0 0.0
    %1568 = vmatprep.subr.mxu0 0.0
    %1569 = vmatpush1.msra.mxu0 0.0
    %1570 = vmatprep.subr.mxu0 0.0
    %1571 = vmatpush1.msra.mxu0 0.0
    %1572 = vmatprep.subr.mxu0 0.0
    %1573 = vmatpush1.msra.mxu0 0.0
    %1574 = vmatprep.subr.mxu0 0.0
    %1575 = vmatpush1.msra.mxu0 0.0
    %1576 = vmatprep.subr.mxu0 0.0
    %1577 = vmatpush1.msra.mxu0 0.0
    %1578 = vmatprep.subr.mxu0 0.0
    %1579 = vmatpush1.msra.mxu0 0.0
    %1580 = vmatprep.subr.mxu0 0.0
    %1581 = vmatpush1.msra.mxu0 0.0
    %1582 = vmatprep.mubr.f32.mxu0 0.0
    %1583 = vmatmul.mubr.f32.gmra.mrb[0].mxu0 %v1507
    %v1584 = vpop.f32.mrb[0].mxu0
    %v1585 = vadd.f32 0.0, %v1584
    %v1586 = vpop.f32.mrb[0].mxu0
    %1587 = vmatprep.mubr.f32.mxu0 0.0
    %1588 = vmatmul.mubr.f32.gmra.mrb[0].mxu0 %v1510
    %v1589 = vpop.f32.mrb[0].mxu0
    %v1590 = vadd.f32 0.0, %v1589
    %v1591 = vpop.f32.mrb[0].mxu0
    %1592 = vmatprep.mubr.f32.mxu0 0.0
    %1593 = vmatmul.mubr.f32.gmra.mrb[0].mxu0 %v1513
    %v1594 = vpop.f32.mrb[0].mxu0
    %v1595 = vadd.f32 0.0, %v1594
    %v1596 = vpop.f32.mrb[0].mxu0
    %1597 = vmatprep.mubr.f32.mxu0 0.0
    %1598 = vmatmul.mubr.f32.gmra.mrb[0].mxu0 %v1516
    %v1599 = vpop.f32.mrb[0].mxu0
    %v1600 = vadd.f32 0.0, %v1599
    %v1601 = vpop.f32.mrb[0].mxu0
    %1602 = vdwg.mxu0
    %1607 = vrot.lane.b32.xlu0 %v1585, 64
    %v1608 = vpop.permute.xlu0 %1607
    %1609 = vrot.lane.b32.xlu0 %v1590, 64
    %v1610 = vpop.permute.xlu0 %1609
    %1611 = vrot.lane.b32.xlu0 %v1595, 64
    %v1612 = vpop.permute.xlu0 %1611
    %1613 = vrot.lane.b32.xlu0 %v1600, 64
    %v1614 = vpop.permute.xlu0 %1613
    %vm1619 = vcmask 785920
    %1620 = vst.msk [vmem:[#allocation2] sm:$0xff] %vm1619, %v1608
    %1621 = vst.msk [vmem:[#allocation2 + $0x8] sm:$0xff] %vm1619, %v1610
    %1622 = vst.msk [vmem:[#allocation2 + $0x10] sm:$0xff] %vm1619, %v1612
    %1623 = vst.msk [vmem:[#allocation2 + $0x18] sm:$0xff] %vm1619, %v1614
    %1624 = vrot.lane.b32.xlu0 %v576, 32
    %v1625 = vpop.permute.xlu0 %1624
    %1626 = vrot.lane.b32.xlu0 %v579, 32
    %v1627 = vpop.permute.xlu0 %1626
    %1628 = vrot.lane.b32.xlu0 %v584, 32
    %v1629 = vpop.permute.xlu0 %1628
    %1630 = vrot.lane.b32.xlu0 %v587, 32
    %v1631 = vpop.permute.xlu0 %1630
    %v1637 = vsel %vm590, %v1255, 0
    %v1640 = vsel %vm590, %v1256, 0
    %v1643 = vsel %vm590, %v1257, 0
    %v1646 = vsel %vm590, %v1258, 0
    %1648 = vmatprep.subr.mxu0 0.0
    %1649 = vmatpush1.msra.mxu0 %v1625
    %1650 = vmatprep.subr.mxu0 0.0
    %1651 = vmatpush1.msra.mxu0 %v1627
    %1652 = vmatprep.subr.mxu0 0.0
    %1653 = vmatpush1.msra.mxu0 %v1629
    %1654 = vmatprep.subr.mxu0 0.0
    %1655 = vmatpush1.msra.mxu0 %v1631
    %1656 = vmatprep.subr.mxu0 0.0
    %1657 = vmatpush1.msra.mxu0 0.0
    %1658 = vmatprep.subr.mxu0 0.0
    %1659 = vmatpush1.msra.mxu0 0.0
    %1660 = vmatprep.subr.mxu0 0.0
    %1661 = vmatpush1.msra.mxu0 0.0
    %1662 = vmatprep.subr.mxu0 0.0
    %1663 = vmatpush1.msra.mxu0 0.0
    %1664 = vmatprep.subr.mxu0 0.0
    %1665 = vmatpush1.msra.mxu0 0.0
    %1666 = vmatprep.subr.mxu0 0.0
    %1667 = vmatpush1.msra.mxu0 0.0
    %1668 = vmatprep.subr.mxu0 0.0
    %1669 = vmatpush1.msra.mxu0 0.0
    %1670 = vmatprep.subr.mxu0 0.0
    %1671 = vmatpush1.msra.mxu0 0.0
    %1672 = vmatprep.subr.mxu0 0.0
    %1673 = vmatpush1.msra.mxu0 0.0
    %1674 = vmatprep.subr.mxu0 0.0
    %1675 = vmatpush1.msra.mxu0 0.0
    %1676 = vmatprep.subr.mxu0 0.0
    %1677 = vmatpush1.msra.mxu0 0.0
    %1678 = vmatprep.subr.mxu0 0.0
    %1679 = vmatpush1.msra.mxu0 0.0
    %1680 = vmatprep.subr.mxu0 0.0
    %1681 = vmatpush1.msra.mxu0 0.0
    %1682 = vmatprep.subr.mxu0 0.0
    %1683 = vmatpush1.msra.mxu0 0.0
    %1684 = vmatprep.subr.mxu0 0.0
    %1685 = vmatpush1.msra.mxu0 0.0
    %1686 = vmatprep.subr.mxu0 0.0
    %1687 = vmatpush1.msra.mxu0 0.0
    %1688 = vmatprep.subr.mxu0 0.0
    %1689 = vmatpush1.msra.mxu0 0.0
    %1690 = vmatprep.subr.mxu0 0.0
    %1691 = vmatpush1.msra.mxu0 0.0
    %1692 = vmatprep.subr.mxu0 0.0
    %1693 = vmatpush1.msra.mxu0 0.0
    %1694 = vmatprep.subr.mxu0 0.0
    %1695 = vmatpush1.msra.mxu0 0.0
    %1696 = vmatprep.subr.mxu0 0.0
    %1697 = vmatpush1.msra.mxu0 0.0
    %1698 = vmatprep.subr.mxu0 0.0
    %1699 = vmatpush1.msra.mxu0 0.0
    %1700 = vmatprep.subr.mxu0 0.0
    %1701 = vmatpush1.msra.mxu0 0.0
    %1702 = vmatprep.subr.mxu0 0.0
    %1703 = vmatpush1.msra.mxu0 0.0
    %1704 = vmatprep.subr.mxu0 0.0
    %1705 = vmatpush1.msra.mxu0 0.0
    %1706 = vmatprep.subr.mxu0 0.0
    %1707 = vmatpush1.msra.mxu0 0.0
    %1708 = vmatprep.subr.mxu0 0.0
    %1709 = vmatpush1.msra.mxu0 0.0
    %1710 = vmatprep.subr.mxu0 0.0
    %1711 = vmatpush1.msra.mxu0 0.0
    %1712 = vmatprep.mubr.f32.mxu0 0.0
    %1713 = vmatmul.mubr.f32.gmra.mrb[0].mxu0 %v1637
    %v1714 = vpop.f32.mrb[0].mxu0
    %v1715 = vadd.f32 0.0, %v1714
    %v1716 = vpop.f32.mrb[0].mxu0
    %1717 = vmatprep.mubr.f32.mxu0 0.0
    %1718 = vmatmul.mubr.f32.gmra.mrb[0].mxu0 %v1640
    %v1719 = vpop.f32.mrb[0].mxu0
    %v1720 = vadd.f32 0.0, %v1719
    %v1721 = vpop.f32.mrb[0].mxu0
    %1722 = vmatprep.mubr.f32.mxu0 0.0
    %1723 = vmatmul.mubr.f32.gmra.mrb[0].mxu0 %v1643
    %v1724 = vpop.f32.mrb[0].mxu0
    %v1725 = vadd.f32 0.0, %v1724
    %v1726 = vpop.f32.mrb[0].mxu0
    %1727 = vmatprep.mubr.f32.mxu0 0.0
    %1728 = vmatmul.mubr.f32.gmra.mrb[0].mxu0 %v1646
    %v1729 = vpop.f32.mrb[0].mxu0
    %v1730 = vadd.f32 0.0, %v1729
    %v1731 = vpop.f32.mrb[0].mxu0
    %1732 = vdwg.mxu0
    %1737 = vrot.lane.b32.xlu0 %v1715, 96
    %v1738 = vpop.permute.xlu0 %1737
    %1739 = vrot.lane.b32.xlu0 %v1720, 96
    %v1740 = vpop.permute.xlu0 %1739
    %1741 = vrot.lane.b32.xlu0 %v1725, 96
    %v1742 = vpop.permute.xlu0 %1741
    %1743 = vrot.lane.b32.xlu0 %v1730, 96
    %v1744 = vpop.permute.xlu0 %1743
    %vm1749 = vcmask 1048320
    %1750 = vst.msk [vmem:[#allocation2] sm:$0xff] %vm1749, %v1738
    %1751 = vst.msk [vmem:[#allocation2 + $0x8] sm:$0xff] %vm1749, %v1740
    %1752 = vst.msk [vmem:[#allocation2 + $0x10] sm:$0xff] %vm1749, %v1742
    %1753 = vst.msk [vmem:[#allocation2 + $0x18] sm:$0xff] %vm1749, %v1744
    %v1754 = vld [vmem:[#allocation2] sm:$0xff]
    %v1755 = vld [vmem:[#allocation2 + $0x8] sm:$0xff]
    %v1756 = vld [vmem:[#allocation2 + $0x10] sm:$0xff]
    %v1757 = vld [vmem:[#allocation2 + $0x18] sm:$0xff]
    %v1758 = vpack.c.bf16 %v1755, %v1754
    %v1759 = vpack.c.bf16 %v1757, %v1756
    %v1760 = vld [vmem:[#allocation8] sm:$0xf]
    %v1761 = vld [vmem:[#allocation8 + $0x4] sm:$0xf]
    %v1762 = vld [vmem:[#allocation8 + $0x8] sm:$0xf]
    %v1763 = vld [vmem:[#allocation8 + $0xc] sm:$0xf]
    %v1764 = vld [vmem:[#allocation8 + $0x10] sm:$0xf]
    %v1765 = vld [vmem:[#allocation8 + $0x14] sm:$0xf]
    %v1766 = vld [vmem:[#allocation8 + $0x18] sm:$0xf]
    %v1767 = vld [vmem:[#allocation8 + $0x1c] sm:$0xf]
    %v1768 = vld [vmem:[#allocation8 + $0x20] sm:$0xf]
    %v1769 = vld [vmem:[#allocation8 + $0x24] sm:$0xf]
    %v1770 = vld [vmem:[#allocation8 + $0x28] sm:$0xf]
    %v1771 = vld [vmem:[#allocation8 + $0x2c] sm:$0xf]
    %v1772 = vld [vmem:[#allocation8 + $0x30] sm:$0xf]
    %v1773 = vld [vmem:[#allocation8 + $0x34] sm:$0xf]
    %v1774 = vld [vmem:[#allocation8 + $0x38] sm:$0xf]
    %v1775 = vld [vmem:[#allocation8 + $0x3c] sm:$0xf]
    %v1776 = vld [vmem:[%s7] sm:$0x1]
    %v1778 = vlaneseq
    %v1779 = vshrl.u32 %v1778, 7
    %v1780 = vsub.s32 0, %v1779
    %v1781 = vrot.slane %v1776, %v1780
    %v1799 = vunpack.c.l.b16 %v1760
    %v1800 = vunpack.c.l.b16 %v1761
    %v1801 = vunpack.c.l.b16 %v1762
    %v1802 = vunpack.c.l.b16 %v1763
    %v1803 = vunpack.c.l.b16 %v1764
    %v1804 = vunpack.c.l.b16 %v1765
    %v1805 = vunpack.c.l.b16 %v1766
    %v1806 = vunpack.c.l.b16 %v1767
    %v1807 = vunpack.c.l.b16 %v1768
    %v1808 = vunpack.c.l.b16 %v1769
    %v1809 = vunpack.c.l.b16 %v1770
    %v1810 = vunpack.c.l.b16 %v1771
    %v1811 = vunpack.c.l.b16 %v1772
    %v1812 = vunpack.c.l.b16 %v1773
    %v1813 = vunpack.c.l.b16 %v1774
    %v1814 = vunpack.c.l.b16 %v1775
    %v1815 = vpack.c.b16 %v1800, %v1799
    %v1816 = vpack.c.b16 %v1802, %v1801
    %v1817 = vpack.c.b16 %v1804, %v1803
    %v1818 = vpack.c.b16 %v1806, %v1805
    %v1819 = vpack.c.b16 %v1808, %v1807
    %v1820 = vpack.c.b16 %v1810, %v1809
    %v1821 = vpack.c.b16 %v1812, %v1811
    %v1822 = vpack.c.b16 %v1814, %v1813
    %1831 = vmatprep.subr.bf16.mxu0 0
    %1832 = vmatpush1.bf16.msra.mxu0 %v1815
    %1833 = vmatprep.subr.bf16.mxu0 0
    %1834 = vmatpush1.bf16.msra.mxu0 %v1816
    %1835 = vmatprep.subr.bf16.mxu0 0
    %1836 = vmatpush1.bf16.msra.mxu0 %v1817
    %1837 = vmatprep.subr.bf16.mxu0 0
    %1838 = vmatpush1.bf16.msra.mxu0 %v1818
    %1839 = vmatprep.subr.bf16.mxu0 0
    %1840 = vmatpush1.bf16.msra.mxu0 %v1819
    %1841 = vmatprep.subr.bf16.mxu0 0
    %1842 = vmatpush1.bf16.msra.mxu0 %v1820
    %1843 = vmatprep.subr.bf16.mxu0 0
    %1844 = vmatpush1.bf16.msra.mxu0 %v1821
    %1845 = vmatprep.subr.bf16.mxu0 0
    %1846 = vmatpush1.bf16.msra.mxu0 %v1822
    %1847 = vmatprep.subr.bf16.mxu0 0
    %1848 = vmatpush1.bf16.msra.mxu0 0
    %1849 = vmatprep.subr.bf16.mxu0 0
    %1850 = vmatpush1.bf16.msra.mxu0 0
    %1851 = vmatprep.subr.bf16.mxu0 0
    %1852 = vmatpush1.bf16.msra.mxu0 0
    %1853 = vmatprep.subr.bf16.mxu0 0
    %1854 = vmatpush1.bf16.msra.mxu0 0
    %1855 = vmatprep.subr.bf16.mxu0 0
    %1856 = vmatpush1.bf16.msra.mxu0 0
    %1857 = vmatprep.subr.bf16.mxu0 0
    %1858 = vmatpush1.bf16.msra.mxu0 0
    %1859 = vmatprep.subr.bf16.mxu0 0
    %1860 = vmatpush1.bf16.msra.mxu0 0
    %1861 = vmatprep.subr.bf16.mxu0 0
    %1862 = vmatpush1.bf16.msra.mxu0 0
    %1863 = vmatprep.mubr.bf16.mxu0 0
    %1864 = vmatmul.mubr.bf16.gmra.mrb[0].mxu0 %v1758
    %v1865 = vpop.f32.mrb[0].mxu0
    %v1866 = vadd.f32 %v1781, %v1865
    %v1867 = vpop.f32.mrb[0].mxu0
    %v1868 = vpop.f32.mrb[0].mxu0
    %v1869 = vadd.f32 %v1781, %v1868
    %v1870 = vpop.f32.mrb[0].mxu0
    %1871 = vmatprep.mubr.bf16.mxu0 0
    %1872 = vmatmul.mubr.bf16.gmra.mrb[0].mxu0 %v1759
    %v1873 = vpop.f32.mrb[0].mxu0
    %v1874 = vadd.f32 %v1781, %v1873
    %v1875 = vpop.f32.mrb[0].mxu0
    %v1876 = vpop.f32.mrb[0].mxu0
    %v1877 = vadd.f32 %v1781, %v1876
    %v1878 = vpop.f32.mrb[0].mxu0
    %1879 = vdwg.mxu0
    %v1880 = vadd.f32 %v1866, %v289
    %v1881 = vadd.f32 %v1869, %v290
    %v1882 = vadd.f32 %v1874, %v291
    %v1883 = vadd.f32 %v1877, %v292
    %v1884 = vld [vmem:[#allocation9] sm:$0x1]
    %v1885 = vld [vmem:[#allocation11] sm:$0x1]
    %1886 = vadd.xlane.f32.xlu0 %v1880
    %v1887 = vpop.xlane.xlu0 %1886
    %1888 = vadd.xlane.f32.xlu0 %v1881
    %v1889 = vpop.xlane.xlu0 %1888
    %1890 = vadd.xlane.f32.xlu0 %v1882
    %v1891 = vpop.xlane.xlu0 %1890
    %1892 = vadd.xlane.f32.xlu0 %v1883
    %v1893 = vpop.xlane.xlu0 %1892
    %v1894 = vmul.f32 %v1887, %v236
    %v1895 = vmul.f32 %v1889, %v236
    %v1896 = vmul.f32 %v1891, %v236
    %v1897 = vmul.f32 %v1893, %v236
    %v1898 = vsub.f32 %v1880, %v1894
    %v1899 = vsub.f32 %v1881, %v1895
    %v1900 = vsub.f32 %v1882, %v1896
    %v1901 = vsub.f32 %v1883, %v1897
    %v1902 = vmul.f32 %v1898, %v1898
    %v1903 = vmul.f32 %v1899, %v1899
    %v1904 = vmul.f32 %v1900, %v1900
    %v1905 = vmul.f32 %v1901, %v1901
    %1906 = vadd.xlane.f32.xlu0 %v1902
    %v1907 = vpop.xlane.xlu0 %1906
    %1908 = vadd.xlane.f32.xlu0 %v1903
    %v1909 = vpop.xlane.xlu0 %1908
    %1910 = vadd.xlane.f32.xlu0 %v1904
    %v1911 = vpop.xlane.xlu0 %1910
    %1912 = vadd.xlane.f32.xlu0 %v1905
    %v1913 = vpop.xlane.xlu0 %1912
    %v1914 = vmul.f32 %v1907, %v236
    %v1915 = vmul.f32 %v1909, %v236
    %v1916 = vmul.f32 %v1911, %v236
    %v1917 = vmul.f32 %v1913, %v236
    %v1918 = vadd.f32 %v1914, 1e-12
    %v1919 = vadd.f32 %v1915, 1e-12
    %v1920 = vadd.f32 %v1916, 1e-12
    %v1921 = vadd.f32 %v1917, 1e-12
    %v1922 = vrsqrt.pop %v1918
    %v1923 = vrsqrt.pop %v1919
    %v1924 = vrsqrt.pop %v1920
    %v1925 = vrsqrt.pop %v1921
    %v1926 = vmul.f32 %v1898, %v1922
    %v1927 = vmul.f32 %v1899, %v1923
    %v1928 = vmul.f32 %v1900, %v1924
    %v1929 = vmul.f32 %v1901, %v1925
    %v1931 = vlaneseq
    %v1932 = vshrl.u32 %v1931, 7
    %v1933 = vsub.s32 0, %v1932
    %v1934 = vrot.slane %v1884, %v1933
    %v1936 = vmul.f32 %v1926, %v1934
    %v1937 = vmul.f32 %v1927, %v1934
    %v1938 = vmul.f32 %v1928, %v1934
    %v1939 = vmul.f32 %v1929, %v1934
    %v1941 = vlaneseq
    %v1942 = vshrl.u32 %v1941, 7
    %v1943 = vsub.s32 0, %v1942
    %v1944 = vrot.slane %v1885, %v1943
    %v1946 = vadd.f32 %v1936, %v1944
    %v1947 = vadd.f32 %v1937, %v1944
    %v1948 = vadd.f32 %v1938, %v1944
    %v1949 = vadd.f32 %v1939, %v1944
    %v1950 = vpack.c.bf16 %v1947, %v1946
    %v1951 = vpack.c.bf16 %v1949, %v1948
    %v1952 = vld [vmem:[#allocation12] sm:$0xff]
    %v1953 = vld [vmem:[#allocation12 + $0x8] sm:$0xff]
    %v1954 = vld [vmem:[#allocation12 + $0x10] sm:$0xff]
    %v1955 = vld [vmem:[#allocation12 + $0x18] sm:$0xff]
    %v1956 = vld [vmem:[#allocation12 + $0x20] sm:$0xff]
    %v1957 = vld [vmem:[#allocation12 + $0x28] sm:$0xff]
    %v1958 = vld [vmem:[#allocation12 + $0x30] sm:$0xff]
    %v1959 = vld [vmem:[#allocation12 + $0x38] sm:$0xff]
    %v1960 = vld [vmem:[#allocation12 + $0x40] sm:$0xff]
    %v1961 = vld [vmem:[#allocation12 + $0x48] sm:$0xff]
    %v1962 = vld [vmem:[#allocation12 + $0x50] sm:$0xff]
    %v1963 = vld [vmem:[#allocation12 + $0x58] sm:$0xff]
    %v1964 = vld [vmem:[#allocation12 + $0x60] sm:$0xff]
    %v1965 = vld [vmem:[#allocation12 + $0x68] sm:$0xff]
    %v1966 = vld [vmem:[#allocation12 + $0x70] sm:$0xff]
    %v1967 = vld [vmem:[#allocation12 + $0x78] sm:$0xff]
    %v1968 = vld [vmem:[#allocation12 + $0x80] sm:$0xff]
    %v1969 = vld [vmem:[#allocation12 + $0x88] sm:$0xff]
    %v1970 = vld [vmem:[#allocation12 + $0x90] sm:$0xff]
    %v1971 = vld [vmem:[#allocation12 + $0x98] sm:$0xff]
    %v1972 = vld [vmem:[#allocation12 + $0xa0] sm:$0xff]
    %v1973 = vld [vmem:[#allocation12 + $0xa8] sm:$0xff]
    %v1974 = vld [vmem:[#allocation12 + $0xb0] sm:$0xff]
    %v1975 = vld [vmem:[#allocation12 + $0xb8] sm:$0xff]
    %v1976 = vld [vmem:[#allocation12 + $0xc0] sm:$0xff]
    %v1977 = vld [vmem:[#allocation12 + $0xc8] sm:$0xff]
    %v1978 = vld [vmem:[#allocation12 + $0xd0] sm:$0xff]
    %v1979 = vld [vmem:[#allocation12 + $0xd8] sm:$0xff]
    %v1980 = vld [vmem:[#allocation12 + $0xe0] sm:$0xff]
    %v1981 = vld [vmem:[#allocation12 + $0xe8] sm:$0xff]
    %v1982 = vld [vmem:[#allocation12 + $0xf0] sm:$0xff]
    %v1983 = vld [vmem:[#allocation12 + $0xf8] sm:$0xff]
    %v1984 = vld [vmem:[%s11] sm:$0xf]
    %v1986 = vlaneseq
    %v1987 = vshrl.u32 %v1986, 7
    %v1988 = vsub.s32 0, %v1987
    %v1989 = vrot.slane %v1984, %v1988
    %v1990 = vlaneseq
    %v1991 = vshrl.u32 %v1990, 7
    %v1992 = vsub.s32 1, %v1991
    %v1993 = vrot.slane %v1984, %v1992
    %v1994 = vlaneseq
    %v1995 = vshrl.u32 %v1994, 7
    %v1996 = vsub.s32 2, %v1995
    %v1997 = vrot.slane %v1984, %v1996
    %v1998 = vlaneseq
    %v1999 = vshrl.u32 %v1998, 7
    %v2000 = vsub.s32 3, %v1999
    %v2001 = vrot.slane %v1984, %v2000
    %v2038 = vunpack.c.l.b16 %v1952
    %v2039 = vunpack.c.h.b16 %v1952
    %v2040 = vunpack.c.l.b16 %v1953
    %v2041 = vunpack.c.h.b16 %v1953
    %v2042 = vunpack.c.l.b16 %v1954
    %v2043 = vunpack.c.h.b16 %v1954
    %v2044 = vunpack.c.l.b16 %v1955
    %v2045 = vunpack.c.h.b16 %v1955
    %v2046 = vunpack.c.l.b16 %v1956
    %v2047 = vunpack.c.h.b16 %v1956
    %v2048 = vunpack.c.l.b16 %v1957
    %v2049 = vunpack.c.h.b16 %v1957
    %v2050 = vunpack.c.l.b16 %v1958
    %v2051 = vunpack.c.h.b16 %v1958
    %v2052 = vunpack.c.l.b16 %v1959
    %v2053 = vunpack.c.h.b16 %v1959
    %v2054 = vunpack.c.l.b16 %v1960
    %v2055 = vunpack.c.h.b16 %v1960
    %v2056 = vunpack.c.l.b16 %v1961
    %v2057 = vunpack.c.h.b16 %v1961
    %v2058 = vunpack.c.l.b16 %v1962
    %v2059 = vunpack.c.h.b16 %v1962
    %v2060 = vunpack.c.l.b16 %v1963
    %v2061 = vunpack.c.h.b16 %v1963
    %v2062 = vunpack.c.l.b16 %v1964
    %v2063 = vunpack.c.h.b16 %v1964
    %v2064 = vunpack.c.l.b16 %v1965
    %v2065 = vunpack.c.h.b16 %v1965
    %v2066 = vunpack.c.l.b16 %v1966
    %v2067 = vunpack.c.h.b16 %v1966
    %v2068 = vunpack.c.l.b16 %v1967
    %v2069 = vunpack.c.h.b16 %v1967
    %v2070 = vunpack.c.l.b16 %v1968
    %v2071 = vunpack.c.h.b16 %v1968
    %v2072 = vunpack.c.l.b16 %v1969
    %v2073 = vunpack.c.h.b16 %v1969
    %v2074 = vunpack.c.l.b16 %v1970
    %v2075 = vunpack.c.h.b16 %v1970
    %v2076 = vunpack.c.l.b16 %v1971
    %v2077 = vunpack.c.h.b16 %v1971
    %v2078 = vunpack.c.l.b16 %v1972
    %v2079 = vunpack.c.h.b16 %v1972
    %v2080 = vunpack.c.l.b16 %v1973
    %v2081 = vunpack.c.h.b16 %v1973
    %v2082 = vunpack.c.l.b16 %v1974
    %v2083 = vunpack.c.h.b16 %v1974
    %v2084 = vunpack.c.l.b16 %v1975
    %v2085 = vunpack.c.h.b16 %v1975
    %v2086 = vunpack.c.l.b16 %v1976
    %v2087 = vunpack.c.h.b16 %v1976
    %v2088 = vunpack.c.l.b16 %v1977
    %v2089 = vunpack.c.h.b16 %v1977
    %v2090 = vunpack.c.l.b16 %v1978
    %v2091 = vunpack.c.h.b16 %v1978
    %v2092 = vunpack.c.l.b16 %v1979
    %v2093 = vunpack.c.h.b16 %v1979
    %v2094 = vunpack.c.l.b16 %v1980
    %v2095 = vunpack.c.h.b16 %v1980
    %v2096 = vunpack.c.l.b16 %v1981
    %v2097 = vunpack.c.h.b16 %v1981
    %v2098 = vunpack.c.l.b16 %v1982
    %v2099 = vunpack.c.h.b16 %v1982
    %v2100 = vunpack.c.l.b16 %v1983
    %v2101 = vunpack.c.h.b16 %v1983
    %v2102 = vpack.c.b16 %v2042, %v2038
    %v2103 = vpack.c.b16 %v2043, %v2039
    %v2104 = vpack.c.b16 %v2044, %v2040
    %v2105 = vpack.c.b16 %v2045, %v2041
    %v2106 = vpack.c.b16 %v2050, %v2046
    %v2107 = vpack.c.b16 %v2051, %v2047
    %v2108 = vpack.c.b16 %v2052, %v2048
    %v2109 = vpack.c.b16 %v2053, %v2049
    %v2110 = vpack.c.b16 %v2058, %v2054
    %v2111 = vpack.c.b16 %v2059, %v2055
    %v2112 = vpack.c.b16 %v2060, %v2056
    %v2113 = vpack.c.b16 %v2061, %v2057
    %v2114 = vpack.c.b16 %v2066, %v2062
    %v2115 = vpack.c.b16 %v2067, %v2063
    %v2116 = vpack.c.b16 %v2068, %v2064
    %v2117 = vpack.c.b16 %v2069, %v2065
    %v2118 = vpack.c.b16 %v2074, %v2070
    %v2119 = vpack.c.b16 %v2075, %v2071
    %v2120 = vpack.c.b16 %v2076, %v2072
    %v2121 = vpack.c.b16 %v2077, %v2073
    %v2122 = vpack.c.b16 %v2082, %v2078
    %v2123 = vpack.c.b16 %v2083, %v2079
    %v2124 = vpack.c.b16 %v2084, %v2080
    %v2125 = vpack.c.b16 %v2085, %v2081
    %v2126 = vpack.c.b16 %v2090, %v2086
    %v2127 = vpack.c.b16 %v2091, %v2087
    %v2128 = vpack.c.b16 %v2092, %v2088
    %v2129 = vpack.c.b16 %v2093, %v2089
    %v2130 = vpack.c.b16 %v2098, %v2094
    %v2131 = vpack.c.b16 %v2099, %v2095
    %v2132 = vpack.c.b16 %v2100, %v2096
    %v2133 = vpack.c.b16 %v2101, %v2097
    %2166 = vmatprep.subr.bf16.mxu0 %v2103
    %2167 = vmatpush1.bf16.msra.mxu0 %v2102
    %2168 = vmatprep.subr.bf16.mxu0 %v2107
    %2169 = vmatpush1.bf16.msra.mxu0 %v2106
    %2170 = vmatprep.subr.bf16.mxu0 %v2111
    %2171 = vmatpush1.bf16.msra.mxu0 %v2110
    %2172 = vmatprep.subr.bf16.mxu0 %v2115
    %2173 = vmatpush1.bf16.msra.mxu0 %v2114
    %2174 = vmatprep.subr.bf16.mxu0 %v2119
    %2175 = vmatpush1.bf16.msra.mxu0 %v2118
    %2176 = vmatprep.subr.bf16.mxu0 %v2123
    %2177 = vmatpush1.bf16.msra.mxu0 %v2122
    %2178 = vmatprep.subr.bf16.mxu0 %v2127
    %2179 = vmatpush1.bf16.msra.mxu0 %v2126
    %2180 = vmatprep.subr.bf16.mxu0 %v2131
    %2181 = vmatpush1.bf16.msra.mxu0 %v2130
    %2182 = vmatprep.subr.bf16.mxu0 0
    %2183 = vmatpush1.bf16.msra.mxu0 0
    %2184 = vmatprep.subr.bf16.mxu0 0
    %2185 = vmatpush1.bf16.msra.mxu0 0
    %2186 = vmatprep.subr.bf16.mxu0 0
    %2187 = vmatpush1.bf16.msra.mxu0 0
    %2188 = vmatprep.subr.bf16.mxu0 0
    %2189 = vmatpush1.bf16.msra.mxu0 0
    %2190 = vmatprep.subr.bf16.mxu0 0
    %2191 = vmatpush1.bf16.msra.mxu0 0
    %2192 = vmatprep.subr.bf16.mxu0 0
    %2193 = vmatpush1.bf16.msra.mxu0 0
    %2194 = vmatprep.subr.bf16.mxu0 0
    %2195 = vmatpush1.bf16.msra.mxu0 0
    %2196 = vmatprep.subr.bf16.mxu0 0
    %2197 = vmatpush1.bf16.msra.mxu0 0
    %2198 = vmatprep.mubr.bf16.mxu0 0
    %2199 = vmatmul.mubr.bf16.gmra.mrb[0].mxu0 %v1950
    %v2200 = vpop.f32.mrb[0].mxu0
    %v2201 = vadd.f32 %v1989, %v2200
    %v2202 = vpop.f32.mrb[0].mxu0
    %v2203 = vadd.f32 %v1993, %v2202
    %v2204 = vpop.f32.mrb[0].mxu0
    %v2205 = vadd.f32 %v1989, %v2204
    %v2206 = vpop.f32.mrb[0].mxu0
    %v2207 = vadd.f32 %v1993, %v2206
    %2208 = vmatprep.mubr.bf16.mxu0 0
    %2209 = vmatmul.mubr.bf16.gmra.mrb[0].mxu0 %v1951
    %v2210 = vpop.f32.mrb[0].mxu0
    %v2211 = vadd.f32 %v1989, %v2210
    %v2212 = vpop.f32.mrb[0].mxu0
    %v2213 = vadd.f32 %v1993, %v2212
    %v2214 = vpop.f32.mrb[0].mxu0
    %v2215 = vadd.f32 %v1989, %v2214
    %v2216 = vpop.f32.mrb[0].mxu0
    %v2217 = vadd.f32 %v1993, %v2216
    %2218 = vdwg.mxu0
    %2219 = vmatprep.subr.bf16.mxu0 %v2105
    %2220 = vmatpush1.bf16.msra.mxu0 %v2104
    %2221 = vmatprep.subr.bf16.mxu0 %v2109
    %2222 = vmatpush1.bf16.msra.mxu0 %v2108
    %2223 = vmatprep.subr.bf16.mxu0 %v2113
    %2224 = vmatpush1.bf16.msra.mxu0 %v2112
    %2225 = vmatprep.subr.bf16.mxu0 %v2117
    %2226 = vmatpush1.bf16.msra.mxu0 %v2116
    %2227 = vmatprep.subr.bf16.mxu0 %v2121
    %2228 = vmatpush1.bf16.msra.mxu0 %v2120
    %2229 = vmatprep.subr.bf16.mxu0 %v2125
    %2230 = vmatpush1.bf16.msra.mxu0 %v2124
    %2231 = vmatprep.subr.bf16.mxu0 %v2129
    %2232 = vmatpush1.bf16.msra.mxu0 %v2128
    %2233 = vmatprep.subr.bf16.mxu0 %v2133
    %2234 = vmatpush1.bf16.msra.mxu0 %v2132
    %2235 = vmatprep.subr.bf16.mxu0 0
    %2236 = vmatpush1.bf16.msra.mxu0 0
    %2237 = vmatprep.subr.bf16.mxu0 0
    %2238 = vmatpush1.bf16.msra.mxu0 0
    %2239 = vmatprep.subr.bf16.mxu0 0
    %2240 = vmatpush1.bf16.msra.mxu0 0
    %2241 = vmatprep.subr.bf16.mxu0 0
    %2242 = vmatpush1.bf16.msra.mxu0 0
    %2243 = vmatprep.subr.bf16.mxu0 0
    %2244 = vmatpush1.bf16.msra.mxu0 0
    %2245 = vmatprep.subr.bf16.mxu0 0
    %2246 = vmatpush1.bf16.msra.mxu0 0
    %2247 = vmatprep.subr.bf16.mxu0 0
    %2248 = vmatpush1.bf16.msra.mxu0 0
    %2249 = vmatprep.subr.bf16.mxu0 0
    %2250 = vmatpush1.bf16.msra.mxu0 0
    %2251 = vmatprep.mubr.bf16.mxu0 0
    %2252 = vmatmul.mubr.bf16.gmra.mrb[0].mxu0 %v1950
    %v2253 = vpop.f32.mrb[0].mxu0
    %v2254 = vadd.f32 %v1997, %v2253
    %v2255 = vpop.f32.mrb[0].mxu0
    %v2256 = vadd.f32 %v2001, %v2255
    %v2257 = vpop.f32.mrb[0].mxu0
    %v2258 = vadd.f32 %v1997, %v2257
    %v2259 = vpop.f32.mrb[0].mxu0
    %v2260 = vadd.f32 %v2001, %v2259
    %2261 = vmatprep.mubr.bf16.mxu0 0
    %2262 = vmatmul.mubr.bf16.gmra.mrb[0].mxu0 %v1951
    %v2263 = vpop.f32.mrb[0].mxu0
    %v2264 = vadd.f32 %v1997, %v2263
    %v2265 = vpop.f32.mrb[0].mxu0
    %v2266 = vadd.f32 %v2001, %v2265
    %v2267 = vpop.f32.mrb[0].mxu0
    %v2268 = vadd.f32 %v1997, %v2267
    %v2269 = vpop.f32.mrb[0].mxu0
    %v2270 = vadd.f32 %v2001, %v2269
    %2271 = vdwg.mxu0
    %v2272 = vmul.f32 %v2201, %v2201
    %v2273 = vmul.f32 %v2203, %v2203
    %v2274 = vmul.f32 %v2254, %v2254
    %v2275 = vmul.f32 %v2256, %v2256
    %v2276 = vmul.f32 %v2205, %v2205
    %v2277 = vmul.f32 %v2207, %v2207
    %v2278 = vmul.f32 %v2258, %v2258
    %v2279 = vmul.f32 %v2260, %v2260
    %v2280 = vmul.f32 %v2211, %v2211
    %v2281 = vmul.f32 %v2213, %v2213
    %v2282 = vmul.f32 %v2264, %v2264
    %v2283 = vmul.f32 %v2266, %v2266
    %v2284 = vmul.f32 %v2215, %v2215
    %v2285 = vmul.f32 %v2217, %v2217
    %v2286 = vmul.f32 %v2268, %v2268
    %v2287 = vmul.f32 %v2270, %v2270
    %v2288 = vmul.f32 %v2201, %v2272
    %v2289 = vmul.f32 %v2203, %v2273
    %v2290 = vmul.f32 %v2254, %v2274
    %v2291 = vmul.f32 %v2256, %v2275
    %v2292 = vmul.f32 %v2205, %v2276
    %v2293 = vmul.f32 %v2207, %v2277
    %v2294 = vmul.f32 %v2258, %v2278
    %v2295 = vmul.f32 %v2260, %v2279
    %v2296 = vmul.f32 %v2211, %v2280
    %v2297 = vmul.f32 %v2213, %v2281
    %v2298 = vmul.f32 %v2264, %v2282
    %v2299 = vmul.f32 %v2266, %v2283
    %v2300 = vmul.f32 %v2215, %v2284
    %v2301 = vmul.f32 %v2217, %v2285
    %v2302 = vmul.f32 %v2268, %v2286
    %v2303 = vmul.f32 %v2270, %v2287
    %v2304 = vmul.f32 %v2288, 0.044715
    %v2305 = vmul.f32 %v2289, 0.044715
    %v2306 = vmul.f32 %v2290, 0.044715
    %v2307 = vmul.f32 %v2291, 0.044715
    %v2308 = vmul.f32 %v2292, 0.044715
    %v2309 = vmul.f32 %v2293, 0.044715
    %v2310 = vmul.f32 %v2294, 0.044715
    %v2311 = vmul.f32 %v2295, 0.044715
    %v2312 = vmul.f32 %v2296, 0.044715
    %v2313 = vmul.f32 %v2297, 0.044715
    %v2314 = vmul.f32 %v2298, 0.044715
    %v2315 = vmul.f32 %v2299, 0.044715
    %v2316 = vmul.f32 %v2300, 0.044715
    %v2317 = vmul.f32 %v2301, 0.044715
    %v2318 = vmul.f32 %v2302, 0.044715
    %v2319 = vmul.f32 %v2303, 0.044715
    %v2320 = vadd.f32 %v2201, %v2304
    %v2321 = vadd.f32 %v2203, %v2305
    %v2322 = vadd.f32 %v2254, %v2306
    %v2323 = vadd.f32 %v2256, %v2307
    %v2324 = vadd.f32 %v2205, %v2308
    %v2325 = vadd.f32 %v2207, %v2309
    %v2326 = vadd.f32 %v2258, %v2310
    %v2327 = vadd.f32 %v2260, %v2311
    %v2328 = vadd.f32 %v2211, %v2312
    %v2329 = vadd.f32 %v2213, %v2313
    %v2330 = vadd.f32 %v2264, %v2314
    %v2331 = vadd.f32 %v2266, %v2315
    %v2332 = vadd.f32 %v2215, %v2316
    %v2333 = vadd.f32 %v2217, %v2317
    %v2334 = vadd.f32 %v2268, %v2318
    %v2335 = vadd.f32 %v2270, %v2319
    %v2336 = vmul.f32 %v2320, 0.7978846
    %v2337 = vmul.f32 %v2321, 0.7978846
    %v2338 = vmul.f32 %v2322, 0.7978846
    %v2339 = vmul.f32 %v2323, 0.7978846
    %v2340 = vmul.f32 %v2324, 0.7978846
    %v2341 = vmul.f32 %v2325, 0.7978846
    %v2342 = vmul.f32 %v2326, 0.7978846
    %v2343 = vmul.f32 %v2327, 0.7978846
    %v2344 = vmul.f32 %v2328, 0.7978846
    %v2345 = vmul.f32 %v2329, 0.7978846
    %v2346 = vmul.f32 %v2330, 0.7978846
    %v2347 = vmul.f32 %v2331, 0.7978846
    %v2348 = vmul.f32 %v2332, 0.7978846
    %v2349 = vmul.f32 %v2333, 0.7978846
    %v2350 = vmul.f32 %v2334, 0.7978846
    %v2351 = vmul.f32 %v2335, 0.7978846
    %v2352 = vtanh.pop %v2336
    %v2353 = vtanh.pop %v2337
    %v2354 = vtanh.pop %v2338
    %v2355 = vtanh.pop %v2339
    %v2356 = vtanh.pop %v2340
    %v2357 = vtanh.pop %v2341
    %v2358 = vtanh.pop %v2342
    %v2359 = vtanh.pop %v2343
    %v2360 = vtanh.pop %v2344
    %v2361 = vtanh.pop %v2345
    %v2362 = vtanh.pop %v2346
    %v2363 = vtanh.pop %v2347
    %v2364 = vtanh.pop %v2348
    %v2365 = vtanh.pop %v2349
    %v2366 = vtanh.pop %v2350
    %v2367 = vtanh.pop %v2351
    %v2368 = vadd.f32 %v2352, 1.0
    %v2369 = vadd.f32 %v2353, 1.0
    %v2370 = vadd.f32 %v2354, 1.0
    %v2371 = vadd.f32 %v2355, 1.0
    %v2372 = vadd.f32 %v2356, 1.0
    %v2373 = vadd.f32 %v2357, 1.0
    %v2374 = vadd.f32 %v2358, 1.0
    %v2375 = vadd.f32 %v2359, 1.0
    %v2376 = vadd.f32 %v2360, 1.0
    %v2377 = vadd.f32 %v2361, 1.0
    %v2378 = vadd.f32 %v2362, 1.0
    %v2379 = vadd.f32 %v2363, 1.0
    %v2380 = vadd.f32 %v2364, 1.0
    %v2381 = vadd.f32 %v2365, 1.0
    %v2382 = vadd.f32 %v2366, 1.0
    %v2383 = vadd.f32 %v2367, 1.0
    %v2384 = vmul.f32 %v2368, 0.5
    %v2385 = vmul.f32 %v2369, 0.5
    %v2386 = vmul.f32 %v2370, 0.5
    %v2387 = vmul.f32 %v2371, 0.5
    %v2388 = vmul.f32 %v2372, 0.5
    %v2389 = vmul.f32 %v2373, 0.5
    %v2390 = vmul.f32 %v2374, 0.5
    %v2391 = vmul.f32 %v2375, 0.5
    %v2392 = vmul.f32 %v2376, 0.5
    %v2393 = vmul.f32 %v2377, 0.5
    %v2394 = vmul.f32 %v2378, 0.5
    %v2395 = vmul.f32 %v2379, 0.5
    %v2396 = vmul.f32 %v2380, 0.5
    %v2397 = vmul.f32 %v2381, 0.5
    %v2398 = vmul.f32 %v2382, 0.5
    %v2399 = vmul.f32 %v2383, 0.5
    %v2400 = vmul.f32 %v2201, %v2384
    %v2401 = vmul.f32 %v2203, %v2385
    %v2402 = vmul.f32 %v2254, %v2386
    %v2403 = vmul.f32 %v2256, %v2387
    %v2404 = vmul.f32 %v2205, %v2388
    %v2405 = vmul.f32 %v2207, %v2389
    %v2406 = vmul.f32 %v2258, %v2390
    %v2407 = vmul.f32 %v2260, %v2391
    %v2408 = vmul.f32 %v2211, %v2392
    %v2409 = vmul.f32 %v2213, %v2393
    %v2410 = vmul.f32 %v2264, %v2394
    %v2411 = vmul.f32 %v2266, %v2395
    %v2412 = vmul.f32 %v2215, %v2396
    %v2413 = vmul.f32 %v2217, %v2397
    %v2414 = vmul.f32 %v2268, %v2398
    %v2415 = vmul.f32 %v2270, %v2399
    %v2416 = vpack.c.bf16 %v2404, %v2400
    %v2417 = vpack.c.bf16 %v2405, %v2401
    %v2418 = vpack.c.bf16 %v2406, %v2402
    %v2419 = vpack.c.bf16 %v2407, %v2403
    %v2420 = vpack.c.bf16 %v2412, %v2408
    %v2421 = vpack.c.bf16 %v2413, %v2409
    %v2422 = vpack.c.bf16 %v2414, %v2410
    %v2423 = vpack.c.bf16 %v2415, %v2411
    %v2424 = vld [vmem:[#allocation14] sm:$0xf]
    %v2425 = vld [vmem:[#allocation14 + $0x4] sm:$0xf]
    %v2426 = vld [vmem:[#allocation14 + $0x8] sm:$0xf]
    %v2427 = vld [vmem:[#allocation14 + $0xc] sm:$0xf]
    %v2428 = vld [vmem:[#allocation14 + $0x10] sm:$0xf]
    %v2429 = vld [vmem:[#allocation14 + $0x14] sm:$0xf]
    %v2430 = vld [vmem:[#allocation14 + $0x18] sm:$0xf]
    %v2431 = vld [vmem:[#allocation14 + $0x1c] sm:$0xf]
    %v2432 = vld [vmem:[#allocation14 + $0x20] sm:$0xf]
    %v2433 = vld [vmem:[#allocation14 + $0x24] sm:$0xf]
    %v2434 = vld [vmem:[#allocation14 + $0x28] sm:$0xf]
    %v2435 = vld [vmem:[#allocation14 + $0x2c] sm:$0xf]
    %v2436 = vld [vmem:[#allocation14 + $0x30] sm:$0xf]
    %v2437 = vld [vmem:[#allocation14 + $0x34] sm:$0xf]
    %v2438 = vld [vmem:[#allocation14 + $0x38] sm:$0xf]
    %v2439 = vld [vmem:[#allocation14 + $0x3c] sm:$0xf]
    %v2440 = vld [vmem:[#allocation14 + $0x40] sm:$0xf]
    %v2441 = vld [vmem:[#allocation14 + $0x44] sm:$0xf]
    %v2442 = vld [vmem:[#allocation14 + $0x48] sm:$0xf]
    %v2443 = vld [vmem:[#allocation14 + $0x4c] sm:$0xf]
    %v2444 = vld [vmem:[#allocation14 + $0x50] sm:$0xf]
    %v2445 = vld [vmem:[#allocation14 + $0x54] sm:$0xf]
    %v2446 = vld [vmem:[#allocation14 + $0x58] sm:$0xf]
    %v2447 = vld [vmem:[#allocation14 + $0x5c] sm:$0xf]
    %v2448 = vld [vmem:[#allocation14 + $0x60] sm:$0xf]
    %v2449 = vld [vmem:[#allocation14 + $0x64] sm:$0xf]
    %v2450 = vld [vmem:[#allocation14 + $0x68] sm:$0xf]
    %v2451 = vld [vmem:[#allocation14 + $0x6c] sm:$0xf]
    %v2452 = vld [vmem:[#allocation14 + $0x70] sm:$0xf]
    %v2453 = vld [vmem:[#allocation14 + $0x74] sm:$0xf]
    %v2454 = vld [vmem:[#allocation14 + $0x78] sm:$0xf]
    %v2455 = vld [vmem:[#allocation14 + $0x7c] sm:$0xf]
    %v2456 = vld [vmem:[#allocation14 + $0x80] sm:$0xf]
    %v2457 = vld [vmem:[#allocation14 + $0x84] sm:$0xf]
    %v2458 = vld [vmem:[#allocation14 + $0x88] sm:$0xf]
    %v2459 = vld [vmem:[#allocation14 + $0x8c] sm:$0xf]
    %v2460 = vld [vmem:[#allocation14 + $0x90] sm:$0xf]
    %v2461 = vld [vmem:[#allocation14 + $0x94] sm:$0xf]
    %v2462 = vld [vmem:[#allocation14 + $0x98] sm:$0xf]
    %v2463 = vld [vmem:[#allocation14 + $0x9c] sm:$0xf]
    %v2464 = vld [vmem:[#allocation14 + $0xa0] sm:$0xf]
    %v2465 = vld [vmem:[#allocation14 + $0xa4] sm:$0xf]
    %v2466 = vld [vmem:[#allocation14 + $0xa8] sm:$0xf]
    %v2467 = vld [vmem:[#allocation14 + $0xac] sm:$0xf]
    %v2468 = vld [vmem:[#allocation14 + $0xb0] sm:$0xf]
    %v2469 = vld [vmem:[#allocation14 + $0xb4] sm:$0xf]
    %v2470 = vld [vmem:[#allocation14 + $0xb8] sm:$0xf]
    %v2471 = vld [vmem:[#allocation14 + $0xbc] sm:$0xf]
    %v2472 = vld [vmem:[#allocation14 + $0xc0] sm:$0xf]
    %v2473 = vld [vmem:[#allocation14 + $0xc4] sm:$0xf]
    %v2474 = vld [vmem:[#allocation14 + $0xc8] sm:$0xf]
    %v2475 = vld [vmem:[#allocation14 + $0xcc] sm:$0xf]
    %v2476 = vld [vmem:[#allocation14 + $0xd0] sm:$0xf]
    %v2477 = vld [vmem:[#allocation14 + $0xd4] sm:$0xf]
    %v2478 = vld [vmem:[#allocation14 + $0xd8] sm:$0xf]
    %v2479 = vld [vmem:[#allocation14 + $0xdc] sm:$0xf]
    %v2480 = vld [vmem:[#allocation14 + $0xe0] sm:$0xf]
    %v2481 = vld [vmem:[#allocation14 + $0xe4] sm:$0xf]
    %v2482 = vld [vmem:[#allocation14 + $0xe8] sm:$0xf]
    %v2483 = vld [vmem:[#allocation14 + $0xec] sm:$0xf]
    %v2484 = vld [vmem:[#allocation14 + $0xf0] sm:$0xf]
    %v2485 = vld [vmem:[#allocation14 + $0xf4] sm:$0xf]
    %v2486 = vld [vmem:[#allocation14 + $0xf8] sm:$0xf]
    %v2487 = vld [vmem:[#allocation14 + $0xfc] sm:$0xf]
    %v2488 = vld [vmem:[%s13] sm:$0x1]
    %v2490 = vlaneseq
    %v2491 = vshrl.u32 %v2490, 7
    %v2492 = vsub.s32 0, %v2491
    %v2493 = vrot.slane %v2488, %v2492
    %v2559 = vunpack.c.l.b16 %v2424
    %v2560 = vunpack.c.l.b16 %v2425
    %v2561 = vunpack.c.l.b16 %v2426
    %v2562 = vunpack.c.l.b16 %v2427
    %v2563 = vunpack.c.l.b16 %v2428
    %v2564 = vunpack.c.l.b16 %v2429
    %v2565 = vunpack.c.l.b16 %v2430
    %v2566 = vunpack.c.l.b16 %v2431
    %v2567 = vunpack.c.l.b16 %v2432
    %v2568 = vunpack.c.l.b16 %v2433
    %v2569 = vunpack.c.l.b16 %v2434
    %v2570 = vunpack.c.l.b16 %v2435
    %v2571 = vunpack.c.l.b16 %v2436
    %v2572 = vunpack.c.l.b16 %v2437
    %v2573 = vunpack.c.l.b16 %v2438
    %v2574 = vunpack.c.l.b16 %v2439
    %v2575 = vunpack.c.l.b16 %v2440
    %v2576 = vunpack.c.l.b16 %v2441
    %v2577 = vunpack.c.l.b16 %v2442
    %v2578 = vunpack.c.l.b16 %v2443
    %v2579 = vunpack.c.l.b16 %v2444
    %v2580 = vunpack.c.l.b16 %v2445
    %v2581 = vunpack.c.l.b16 %v2446
    %v2582 = vunpack.c.l.b16 %v2447
    %v2583 = vunpack.c.l.b16 %v2448
    %v2584 = vunpack.c.l.b16 %v2449
    %v2585 = vunpack.c.l.b16 %v2450
    %v2586 = vunpack.c.l.b16 %v2451
    %v2587 = vunpack.c.l.b16 %v2452
    %v2588 = vunpack.c.l.b16 %v2453
    %v2589 = vunpack.c.l.b16 %v2454
    %v2590 = vunpack.c.l.b16 %v2455
    %v2591 = vunpack.c.l.b16 %v2456
    %v2592 = vunpack.c.l.b16 %v2457
    %v2593 = vunpack.c.l.b16 %v2458
    %v2594 = vunpack.c.l.b16 %v2459
    %v2595 = vunpack.c.l.b16 %v2460
    %v2596 = vunpack.c.l.b16 %v2461
    %v2597 = vunpack.c.l.b16 %v2462
    %v2598 = vunpack.c.l.b16 %v2463
    %v2599 = vunpack.c.l.b16 %v2464
    %v2600 = vunpack.c.l.b16 %v2465
    %v2601 = vunpack.c.l.b16 %v2466
    %v2602 = vunpack.c.l.b16 %v2467
    %v2603 = vunpack.c.l.b16 %v2468
    %v2604 = vunpack.c.l.b16 %v2469
    %v2605 = vunpack.c.l.b16 %v2470
    %v2606 = vunpack.c.l.b16 %v2471
    %v2607 = vunpack.c.l.b16 %v2472
    %v2608 = vunpack.c.l.b16 %v2473
    %v2609 = vunpack.c.l.b16 %v2474
    %v2610 = vunpack.c.l.b16 %v2475
    %v2611 = vunpack.c.l.b16 %v2476
    %v2612 = vunpack.c.l.b16 %v2477
    %v2613 = vunpack.c.l.b16 %v2478
    %v2614 = vunpack.c.l.b16 %v2479
    %v2615 = vunpack.c.l.b16 %v2480
    %v2616 = vunpack.c.l.b16 %v2481
    %v2617 = vunpack.c.l.b16 %v2482
    %v2618 = vunpack.c.l.b16 %v2483
    %v2619 = vunpack.c.l.b16 %v2484
    %v2620 = vunpack.c.l.b16 %v2485
    %v2621 = vunpack.c.l.b16 %v2486
    %v2622 = vunpack.c.l.b16 %v2487
    %v2623 = vpack.c.b16 %v2560, %v2559
    %v2624 = vpack.c.b16 %v2562, %v2561
    %v2625 = vpack.c.b16 %v2564, %v2563
    %v2626 = vpack.c.b16 %v2566, %v2565
    %v2627 = vpack.c.b16 %v2568, %v2567
    %v2628 = vpack.c.b16 %v2570, %v2569
    %v2629 = vpack.c.b16 %v2572, %v2571
    %v2630 = vpack.c.b16 %v2574, %v2573
    %v2631 = vpack.c.b16 %v2576, %v2575
    %v2632 = vpack.c.b16 %v2578, %v2577
    %v2633 = vpack.c.b16 %v2580, %v2579
    %v2634 = vpack.c.b16 %v2582, %v2581
    %v2635 = vpack.c.b16 %v2584, %v2583
    %v2636 = vpack.c.b16 %v2586, %v2585
    %v2637 = vpack.c.b16 %v2588, %v2587
    %v2638 = vpack.c.b16 %v2590, %v2589
    %v2639 = vpack.c.b16 %v2592, %v2591
    %v2640 = vpack.c.b16 %v2594, %v2593
    %v2641 = vpack.c.b16 %v2596, %v2595
    %v2642 = vpack.c.b16 %v2598, %v2597
    %v2643 = vpack.c.b16 %v2600, %v2599
    %v2644 = vpack.c.b16 %v2602, %v2601
    %v2645 = vpack.c.b16 %v2604, %v2603
    %v2646 = vpack.c.b16 %v2606, %v2605
    %v2647 = vpack.c.b16 %v2608, %v2607
    %v2648 = vpack.c.b16 %v2610, %v2609
    %v2649 = vpack.c.b16 %v2612, %v2611
    %v2650 = vpack.c.b16 %v2614, %v2613
    %v2651 = vpack.c.b16 %v2616, %v2615
    %v2652 = vpack.c.b16 %v2618, %v2617
    %v2653 = vpack.c.b16 %v2620, %v2619
    %v2654 = vpack.c.b16 %v2622, %v2621
    %2687 = vmatprep.subr.bf16.mxu0 0
    %2688 = vmatpush1.bf16.msra.mxu0 %v2623
    %2689 = vmatprep.subr.bf16.mxu0 0
    %2690 = vmatpush1.bf16.msra.mxu0 %v2624
    %2691 = vmatprep.subr.bf16.mxu0 0
    %2692 = vmatpush1.bf16.msra.mxu0 %v2625
    %2693 = vmatprep.subr.bf16.mxu0 0
    %2694 = vmatpush1.bf16.msra.mxu0 %v2626
    %2695 = vmatprep.subr.bf16.mxu0 0
    %2696 = vmatpush1.bf16.msra.mxu0 %v2627
    %2697 = vmatprep.subr.bf16.mxu0 0
    %2698 = vmatpush1.bf16.msra.mxu0 %v2628
    %2699 = vmatprep.subr.bf16.mxu0 0
    %2700 = vmatpush1.bf16.msra.mxu0 %v2629
    %2701 = vmatprep.subr.bf16.mxu0 0
    %2702 = vmatpush1.bf16.msra.mxu0 %v2630
    %2703 = vmatprep.subr.bf16.mxu0 0
    %2704 = vmatpush1.bf16.msra.mxu0 %v2631
    %2705 = vmatprep.subr.bf16.mxu0 0
    %2706 = vmatpush1.bf16.msra.mxu0 %v2632
    %2707 = vmatprep.subr.bf16.mxu0 0
    %2708 = vmatpush1.bf16.msra.mxu0 %v2633
    %2709 = vmatprep.subr.bf16.mxu0 0
    %2710 = vmatpush1.bf16.msra.mxu0 %v2634
    %2711 = vmatprep.subr.bf16.mxu0 0
    %2712 = vmatpush1.bf16.msra.mxu0 %v2635
    %2713 = vmatprep.subr.bf16.mxu0 0
    %2714 = vmatpush1.bf16.msra.mxu0 %v2636
    %2715 = vmatprep.subr.bf16.mxu0 0
    %2716 = vmatpush1.bf16.msra.mxu0 %v2637
    %2717 = vmatprep.subr.bf16.mxu0 0
    %2718 = vmatpush1.bf16.msra.mxu0 %v2638
    %2719 = vmatprep.mubr.bf16.mxu0 %v2417
    %2720 = vmatmul.mubr.bf16.gmra.mrb[0].mxu0 %v2416
    %v2721 = vpop.f32.mrb[0].mxu0
    %v2722 = vadd.f32 %v2493, %v2721
    %v2723 = vpop.f32.mrb[0].mxu0
    %v2724 = vpop.f32.mrb[0].mxu0
    %v2725 = vadd.f32 %v2493, %v2724
    %v2726 = vpop.f32.mrb[0].mxu0
    %2727 = vmatprep.mubr.bf16.mxu0 %v2421
    %2728 = vmatmul.mubr.bf16.gmra.mrb[0].mxu0 %v2420
    %v2729 = vpop.f32.mrb[0].mxu0
    %v2730 = vadd.f32 %v2493, %v2729
    %v2731 = vpop.f32.mrb[0].mxu0
    %v2732 = vpop.f32.mrb[0].mxu0
    %v2733 = vadd.f32 %v2493, %v2732
    %v2734 = vpop.f32.mrb[0].mxu0
    %2735 = vdwg.mxu0
    %2736 = vmatprep.subr.bf16.mxu0 0
    %2737 = vmatpush1.bf16.msra.mxu0 %v2639
    %2738 = vmatprep.subr.bf16.mxu0 0
    %2739 = vmatpush1.bf16.msra.mxu0 %v2640
    %2740 = vmatprep.subr.bf16.mxu0 0
    %2741 = vmatpush1.bf16.msra.mxu0 %v2641
    %2742 = vmatprep.subr.bf16.mxu0 0
    %2743 = vmatpush1.bf16.msra.mxu0 %v2642
    %2744 = vmatprep.subr.bf16.mxu0 0
    %2745 = vmatpush1.bf16.msra.mxu0 %v2643
    %2746 = vmatprep.subr.bf16.mxu0 0
    %2747 = vmatpush1.bf16.msra.mxu0 %v2644
    %2748 = vmatprep.subr.bf16.mxu0 0
    %2749 = vmatpush1.bf16.msra.mxu0 %v2645
    %2750 = vmatprep.subr.bf16.mxu0 0
    %2751 = vmatpush1.bf16.msra.mxu0 %v2646
    %2752 = vmatprep.subr.bf16.mxu0 0
    %2753 = vmatpush1.bf16.msra.mxu0 %v2647
    %2754 = vmatprep.subr.bf16.mxu0 0
    %2755 = vmatpush1.bf16.msra.mxu0 %v2648
    %2756 = vmatprep.subr.bf16.mxu0 0
    %2757 = vmatpush1.bf16.msra.mxu0 %v2649
    %2758 = vmatprep.subr.bf16.mxu0 0
    %2759 = vmatpush1.bf16.msra.mxu0 %v2650
    %2760 = vmatprep.subr.bf16.mxu0 0
    %2761 = vmatpush1.bf16.msra.mxu0 %v2651
    %2762 = vmatprep.subr.bf16.mxu0 0
    %2763 = vmatpush1.bf16.msra.mxu0 %v2652
    %2764 = vmatprep.subr.bf16.mxu0 0
    %2765 = vmatpush1.bf16.msra.mxu0 %v2653
    %2766 = vmatprep.subr.bf16.mxu0 0
    %2767 = vmatpush1.bf16.msra.mxu0 %v2654
    %2768 = vmatprep.mubr.bf16.mxu0 %v2419
    %2769 = vmatmul.mubr.bf16.gmra.mrb[0].mxu0 %v2418
    %v2770 = vpop.f32.mrb[0].mxu0
    %v2771 = vadd.f32 %v2722, %v2770
    %v2772 = vpop.f32.mrb[0].mxu0
    %v2773 = vpop.f32.mrb[0].mxu0
    %v2774 = vadd.f32 %v2725, %v2773
    %v2775 = vpop.f32.mrb[0].mxu0
    %2776 = vmatprep.mubr.bf16.mxu0 %v2423
    %2777 = vmatmul.mubr.bf16.gmra.mrb[0].mxu0 %v2422
    %v2778 = vpop.f32.mrb[0].mxu0
    %v2779 = vadd.f32 %v2730, %v2778
    %v2780 = vpop.f32.mrb[0].mxu0
    %v2781 = vpop.f32.mrb[0].mxu0
    %v2782 = vadd.f32 %v2733, %v2781
    %v2783 = vpop.f32.mrb[0].mxu0
    %2784 = vdwg.mxu0
    %v2785 = vadd.f32 %v2771, %v1946
    %v2786 = vadd.f32 %v2774, %v1947
    %v2787 = vadd.f32 %v2779, %v1948
    %v2788 = vadd.f32 %v2782, %v1949
    %v2789 = vld [vmem:[#allocation15] sm:$0x1]
    %v2790 = vld [vmem:[#allocation17] sm:$0x1]
    %2791 = vadd.xlane.f32.xlu0 %v2785
    %v2792 = vpop.xlane.xlu0 %2791
    %2793 = vadd.xlane.f32.xlu0 %v2786
    %v2794 = vpop.xlane.xlu0 %2793
    %2795 = vadd.xlane.f32.xlu0 %v2787
    %v2796 = vpop.xlane.xlu0 %2795
    %2797 = vadd.xlane.f32.xlu0 %v2788
    %v2798 = vpop.xlane.xlu0 %2797
    %v2799 = vmul.f32 %v2792, %v236
    %v2800 = vmul.f32 %v2794, %v236
    %v2801 = vmul.f32 %v2796, %v236
    %v2802 = vmul.f32 %v2798, %v236
    %v2803 = vsub.f32 %v2785, %v2799
    %v2804 = vsub.f32 %v2786, %v2800
    %v2805 = vsub.f32 %v2787, %v2801
    %v2806 = vsub.f32 %v2788, %v2802
    %v2807 = vmul.f32 %v2803, %v2803
    %v2808 = vmul.f32 %v2804, %v2804
    %v2809 = vmul.f32 %v2805, %v2805
    %v2810 = vmul.f32 %v2806, %v2806
    %2811 = vadd.xlane.f32.xlu0 %v2807
    %v2812 = vpop.xlane.xlu0 %2811
    %2813 = vadd.xlane.f32.xlu0 %v2808
    %v2814 = vpop.xlane.xlu0 %2813
    %2815 = vadd.xlane.f32.xlu0 %v2809
    %v2816 = vpop.xlane.xlu0 %2815
    %2817 = vadd.xlane.f32.xlu0 %v2810
    %v2818 = vpop.xlane.xlu0 %2817
    %v2819 = vmul.f32 %v2812, %v236
    %v2820 = vmul.f32 %v2814, %v236
    %v2821 = vmul.f32 %v2816, %v236
    %v2822 = vmul.f32 %v2818, %v236
    %v2823 = vadd.f32 %v2819, 1e-12
    %v2824 = vadd.f32 %v2820, 1e-12
    %v2825 = vadd.f32 %v2821, 1e-12
    %v2826 = vadd.f32 %v2822, 1e-12
    %v2827 = vrsqrt.pop %v2823
    %v2828 = vrsqrt.pop %v2824
    %v2829 = vrsqrt.pop %v2825
    %v2830 = vrsqrt.pop %v2826
    %v2831 = vmul.f32 %v2803, %v2827
    %v2832 = vmul.f32 %v2804, %v2828
    %v2833 = vmul.f32 %v2805, %v2829
    %v2834 = vmul.f32 %v2806, %v2830
    %v2836 = vlaneseq
    %v2837 = vshrl.u32 %v2836, 7
    %v2838 = vsub.s32 0, %v2837
    %v2839 = vrot.slane %v2789, %v2838
    %v2841 = vmul.f32 %v2831, %v2839
    %v2842 = vmul.f32 %v2832, %v2839
    %v2843 = vmul.f32 %v2833, %v2839
    %v2844 = vmul.f32 %v2834, %v2839
    %v2846 = vlaneseq
    %v2847 = vshrl.u32 %v2846, 7
    %v2848 = vsub.s32 0, %v2847
    %v2849 = vrot.slane %v2790, %v2848
    %v2851 = vadd.f32 %v2841, %v2849
    %v2852 = vadd.f32 %v2842, %v2849
    %v2853 = vadd.f32 %v2843, %v2849
    %v2854 = vadd.f32 %v2844, %v2849
    %v2855 = vpack.c.bf16 %v2852, %v2851
    %v2856 = vpack.c.bf16 %v2854, %v2853
    %s2857 = scalar_lea.vmem %s4, 192
    %v2858 = vld [vmem:[%s2857] sm:$0xff]
    %v2859 = vld [vmem:[%s2857 + $0x8] sm:$0xf]
    %v2860 = vld [vmem:[%s2857 + $0xc] sm:$0xff]
    %v2861 = vld [vmem:[%s2857 + $0x14] sm:$0xf]
    %v2862 = vld [vmem:[%s2857 + $0x18] sm:$0xff]
    %v2863 = vld [vmem:[%s2857 + $0x20] sm:$0xf]
    %v2864 = vld [vmem:[%s2857 + $0x24] sm:$0xff]
    %v2865 = vld [vmem:[%s2857 + $0x2c] sm:$0xf]
    %v2866 = vld [vmem:[%s2857 + $0x30] sm:$0xff]
    %v2867 = vld [vmem:[%s2857 + $0x38] sm:$0xf]
    %v2868 = vld [vmem:[%s2857 + $0x3c] sm:$0xff]
    %v2869 = vld [vmem:[%s2857 + $0x44] sm:$0xf]
    %v2870 = vld [vmem:[%s2857 + $0x48] sm:$0xff]
    %v2871 = vld [vmem:[%s2857 + $0x50] sm:$0xf]
    %v2872 = vld [vmem:[%s2857 + $0x54] sm:$0xff]
    %v2873 = vld [vmem:[%s2857 + $0x5c] sm:$0xf]
    %v2874 = vld [vmem:[%s2857 + $0x60] sm:$0xff]
    %v2875 = vld [vmem:[%s2857 + $0x68] sm:$0xf]
    %v2876 = vld [vmem:[%s2857 + $0x6c] sm:$0xff]
    %v2877 = vld [vmem:[%s2857 + $0x74] sm:$0xf]
    %v2878 = vld [vmem:[%s2857 + $0x78] sm:$0xff]
    %v2879 = vld [vmem:[%s2857 + $0x80] sm:$0xf]
    %v2880 = vld [vmem:[%s2857 + $0x84] sm:$0xff]
    %v2881 = vld [vmem:[%s2857 + $0x8c] sm:$0xf]
    %v2882 = vld [vmem:[%s2857 + $0x90] sm:$0xff]
    %v2883 = vld [vmem:[%s2857 + $0x98] sm:$0xf]
    %v2884 = vld [vmem:[%s2857 + $0x9c] sm:$0xff]
    %v2885 = vld [vmem:[%s2857 + $0xa4] sm:$0xf]
    %v2886 = vld [vmem:[%s2857 + $0xa8] sm:$0xff]
    %v2887 = vld [vmem:[%s2857 + $0xb0] sm:$0xf]
    %v2888 = vld [vmem:[%s2857 + $0xb4] sm:$0xff]
    %v2889 = vld [vmem:[%s2857 + $0xbc] sm:$0xf]
    %s2890 = scalar_lea.vmem %s5, 3
    %v2891 = vld [vmem:[%s2890] sm:$0x7]
    %v2893 = vlaneseq
    %v2894 = vshrl.u32 %v2893, 7
    %v2895 = vsub.s32 0, %v2894
    %v2896 = vrot.slane %v2891, %v2895
    %v2897 = vlaneseq
    %v2898 = vshrl.u32 %v2897, 7
    %v2899 = vsub.s32 1, %v2898
    %v2900 = vrot.slane %v2891, %v2899
    %v2901 = vlaneseq
    %v2902 = vshrl.u32 %v2901, 7
    %v2903 = vsub.s32 2, %v2902
    %v2904 = vrot.slane %v2891, %v2903
    %v2940 = vunpack.c.l.b16 %v2858
    %v2941 = vunpack.c.h.b16 %v2858
    %v2942 = vunpack.c.l.b16 %v2859
    %v2943 = vunpack.c.l.b16 %v2860
    %v2944 = vunpack.c.h.b16 %v2860
    %v2945 = vunpack.c.l.b16 %v2861
    %v2946 = vunpack.c.l.b16 %v2862
    %v2947 = vunpack.c.h.b16 %v2862
    %v2948 = vunpack.c.l.b16 %v2863
    %v2949 = vunpack.c.l.b16 %v2864
    %v2950 = vunpack.c.h.b16 %v2864
    %v2951 = vunpack.c.l.b16 %v2865
    %v2952 = vunpack.c.l.b16 %v2866
    %v2953 = vunpack.c.h.b16 %v2866
    %v2954 = vunpack.c.l.b16 %v2867
    %v2955 = vunpack.c.l.b16 %v2868
    %v2956 = vunpack.c.h.b16 %v2868
    %v2957 = vunpack.c.l.b16 %v2869
    %v2958 = vunpack.c.l.b16 %v2870
    %v2959 = vunpack.c.h.b16 %v2870
    %v2960 = vunpack.c.l.b16 %v2871
    %v2961 = vunpack.c.l.b16 %v2872
    %v2962 = vunpack.c.h.b16 %v2872
    %v2963 = vunpack.c.l.b16 %v2873
    %v2964 = vunpack.c.l.b16 %v2874
    %v2965 = vunpack.c.h.b16 %v2874
    %v2966 = vunpack.c.l.b16 %v2875
    %v2967 = vunpack.c.l.b16 %v2876
    %v2968 = vunpack.c.h.b16 %v2876
    %v2969 = vunpack.c.l.b16 %v2877
    %v2970 = vunpack.c.l.b16 %v2878
    %v2971 = vunpack.c.h.b16 %v2878
    %v2972 = vunpack.c.l.b16 %v2879
    %v2973 = vunpack.c.l.b16 %v2880
    %v2974 = vunpack.c.h.b16 %v2880
    %v2975 = vunpack.c.l.b16 %v2881
    %v2976 = vunpack.c.l.b16 %v2882
    %v2977 = vunpack.c.h.b16 %v2882
    %v2978 = vunpack.c.l.b16 %v2883
    %v2979 = vunpack.c.l.b16 %v2884
    %v2980 = vunpack.c.h.b16 %v2884
    %v2981 = vunpack.c.l.b16 %v2885
    %v2982 = vunpack.c.l.b16 %v2886
    %v2983 = vunpack.c.h.b16 %v2886
    %v2984 = vunpack.c.l.b16 %v2887
    %v2985 = vunpack.c.l.b16 %v2888
    %v2986 = vunpack.c.h.b16 %v2888
    %v2987 = vunpack.c.l.b16 %v2889
    %v2988 = vpack.c.b16 %v2943, %v2940
    %v2989 = vpack.c.b16 %v2944, %v2941
    %v2990 = vpack.c.b16 %v2945, %v2942
    %v2991 = vpack.c.b16 %v2949, %v2946
    %v2992 = vpack.c.b16 %v2950, %v2947
    %v2993 = vpack.c.b16 %v2951, %v2948
    %v2994 = vpack.c.b16 %v2955, %v2952
    %v2995 = vpack.c.b16 %v2956, %v2953
    %v2996 = vpack.c.b16 %v2957, %v2954
    %v2997 = vpack.c.b16 %v2961, %v2958
    %v2998 = vpack.c.b16 %v2962, %v2959
    %v2999 = vpack.c.b16 %v2963, %v2960
    %v3000 = vpack.c.b16 %v2967, %v2964
    %v3001 = vpack.c.b16 %v2968, %v2965
    %v3002 = vpack.c.b16 %v2969, %v2966
    %v3003 = vpack.c.b16 %v2973, %v2970
    %v3004 = vpack.c.b16 %v2974, %v2971
    %v3005 = vpack.c.b16 %v2975, %v2972
    %v3006 = vpack.c.b16 %v2979, %v2976
    %v3007 = vpack.c.b16 %v2980, %v2977
    %v3008 = vpack.c.b16 %v2981, %v2978
    %v3009 = vpack.c.b16 %v2985, %v2982
    %v3010 = vpack.c.b16 %v2986, %v2983
    %v3011 = vpack.c.b16 %v2987, %v2984
    %3036 = vmatprep.subr.bf16.mxu0 %v2989
    %3037 = vmatpush1.bf16.msra.mxu0 %v2988
    %3038 = vmatprep.subr.bf16.mxu0 %v2992
    %3039 = vmatpush1.bf16.msra.mxu0 %v2991
    %3040 = vmatprep.subr.bf16.mxu0 %v2995
    %3041 = vmatpush1.bf16.msra.mxu0 %v2994
    %3042 = vmatprep.subr.bf16.mxu0 %v2998
    %3043 = vmatpush1.bf16.msra.mxu0 %v2997
    %3044 = vmatprep.subr.bf16.mxu0 %v3001
    %3045 = vmatpush1.bf16.msra.mxu0 %v3000
    %3046 = vmatprep.subr.bf16.mxu0 %v3004
    %3047 = vmatpush1.bf16.msra.mxu0 %v3003
    %3048 = vmatprep.subr.bf16.mxu0 %v3007
    %3049 = vmatpush1.bf16.msra.mxu0 %v3006
    %3050 = vmatprep.subr.bf16.mxu0 %v3010
    %3051 = vmatpush1.bf16.msra.mxu0 %v3009
    %3052 = vmatprep.subr.bf16.mxu0 0
    %3053 = vmatpush1.bf16.msra.mxu0 0
    %3054 = vmatprep.subr.bf16.mxu0 0
    %3055 = vmatpush1.bf16.msra.mxu0 0
    %3056 = vmatprep.subr.bf16.mxu0 0
    %3057 = vmatpush1.bf16.msra.mxu0 0
    %3058 = vmatprep.subr.bf16.mxu0 0
    %3059 = vmatpush1.bf16.msra.mxu0 0
    %3060 = vmatprep.subr.bf16.mxu0 0
    %3061 = vmatpush1.bf16.msra.mxu0 0
    %3062 = vmatprep.subr.bf16.mxu0 0
    %3063 = vmatpush1.bf16.msra.mxu0 0
    %3064 = vmatprep.subr.bf16.mxu0 0
    %3065 = vmatpush1.bf16.msra.mxu0 0
    %3066 = vmatprep.subr.bf16.mxu0 0
    %3067 = vmatpush1.bf16.msra.mxu0 0
    %3068 = vmatprep.mubr.bf16.mxu0 0
    %3069 = vmatmul.mubr.bf16.gmra.mrb[0].mxu0 %v2855
    %v3070 = vpop.f32.mrb[0].mxu0
    %v3071 = vadd.f32 %v2896, %v3070
    %v3072 = vpop.f32.mrb[0].mxu0
    %v3073 = vadd.f32 %v2900, %v3072
    %v3074 = vpop.f32.mrb[0].mxu0
    %v3075 = vadd.f32 %v2896, %v3074
    %v3076 = vpop.f32.mrb[0].mxu0
    %v3077 = vadd.f32 %v2900, %v3076
    %3078 = vmatprep.mubr.bf16.mxu0 0
    %3079 = vmatmul.mubr.bf16.gmra.mrb[0].mxu0 %v2856
    %v3080 = vpop.f32.mrb[0].mxu0
    %v3081 = vadd.f32 %v2896, %v3080
    %v3082 = vpop.f32.mrb[0].mxu0
    %v3083 = vadd.f32 %v2900, %v3082
    %v3084 = vpop.f32.mrb[0].mxu0
    %v3085 = vadd.f32 %v2896, %v3084
    %v3086 = vpop.f32.mrb[0].mxu0
    %v3087 = vadd.f32 %v2900, %v3086
    %3088 = vdwg.mxu0
    %3089 = vmatprep.subr.bf16.mxu0 0
    %3090 = vmatpush1.bf16.msra.mxu0 %v2990
    %3091 = vmatprep.subr.bf16.mxu0 0
    %3092 = vmatpush1.bf16.msra.mxu0 %v2993
    %3093 = vmatprep.subr.bf16.mxu0 0
    %3094 = vmatpush1.bf16.msra.mxu0 %v2996
    %3095 = vmatprep.subr.bf16.mxu0 0
    %3096 = vmatpush1.bf16.msra.mxu0 %v2999
    %3097 = vmatprep.subr.bf16.mxu0 0
    %3098 = vmatpush1.bf16.msra.mxu0 %v3002
    %3099 = vmatprep.subr.bf16.mxu0 0
    %3100 = vmatpush1.bf16.msra.mxu0 %v3005
    %3101 = vmatprep.subr.bf16.mxu0 0
    %3102 = vmatpush1.bf16.msra.mxu0 %v3008
    %3103 = vmatprep.subr.bf16.mxu0 0
    %3104 = vmatpush1.bf16.msra.mxu0 %v3011
    %3105 = vmatprep.subr.bf16.mxu0 0
    %3106 = vmatpush1.bf16.msra.mxu0 0
    %3107 = vmatprep.subr.bf16.mxu0 0
    %3108 = vmatpush1.bf16.msra.mxu0 0
    %3109 = vmatprep.subr.bf16.mxu0 0
    %3110 = vmatpush1.bf16.msra.mxu0 0
    %3111 = vmatprep.subr.bf16.mxu0 0
    %3112 = vmatpush1.bf16.msra.mxu0 0
    %3113 = vmatprep.subr.bf16.mxu0 0
    %3114 = vmatpush1.bf16.msra.mxu0 0
    %3115 = vmatprep.subr.bf16.mxu0 0
    %3116 = vmatpush1.bf16.msra.mxu0 0
    %3117 = vmatprep.subr.bf16.mxu0 0
    %3118 = vmatpush1.bf16.msra.mxu0 0
    %3119 = vmatprep.subr.bf16.mxu0 0
    %3120 = vmatpush1.bf16.msra.mxu0 0
    %3121 = vmatprep.mubr.bf16.mxu0 0
    %3122 = vmatmul.mubr.bf16.gmra.mrb[0].mxu0 %v2855
    %v3123 = vpop.f32.mrb[0].mxu0
    %v3124 = vadd.f32 %v2904, %v3123
    %v3125 = vpop.f32.mrb[0].mxu0
    %v3126 = vpop.f32.mrb[0].mxu0
    %v3127 = vadd.f32 %v2904, %v3126
    %v3128 = vpop.f32.mrb[0].mxu0
    %3129 = vmatprep.mubr.bf16.mxu0 0
    %3130 = vmatmul.mubr.bf16.gmra.mrb[0].mxu0 %v2856
    %v3131 = vpop.f32.mrb[0].mxu0
    %v3132 = vadd.f32 %v2904, %v3131
    %v3133 = vpop.f32.mrb[0].mxu0
    %v3134 = vpop.f32.mrb[0].mxu0
    %v3135 = vadd.f32 %v2904, %v3134
    %v3136 = vpop.f32.mrb[0].mxu0
    %3137 = vdwg.mxu0
    %v3139 = vsel %vm590, %v3071, 0
    %v3142 = vsel %vm590, %v3075, 0
    %v3145 = vsel %vm590, %v3081, 0
    %v3148 = vsel %vm590, %v3085, 0
    %v3151 = vsel %vm590, %v3073, 0
    %v3154 = vsel %vm590, %v3077, 0
    %v3157 = vsel %vm590, %v3083, 0
    %v3160 = vsel %vm590, %v3087, 0
    %3162 = vmatprep.subr.mxu0 0.0
    %3163 = vmatpush1.xpose.msra.mxu0 %v3151
    %3164 = vmatprep.subr.mxu0 0.0
    %3165 = vmatpush1.xpose.msra.mxu0 %v3154
    %3166 = vmatprep.subr.mxu0 0.0
    %3167 = vmatpush1.xpose.msra.mxu0 %v3157
    %3168 = vmatprep.subr.mxu0 0.0
    %3169 = vmatpush1.xpose.msra.mxu0 %v3160
    %3170 = vmatprep.subr.mxu0 0.0
    %3171 = vmatpush1.xpose.msra.mxu0 0.0
    %3172 = vmatprep.subr.mxu0 0.0
    %3173 = vmatpush1.xpose.msra.mxu0 0.0
    %3174 = vmatprep.subr.mxu0 0.0
    %3175 = vmatpush1.xpose.msra.mxu0 0.0
    %3176 = vmatprep.subr.mxu0 0.0
    %3177 = vmatpush1.xpose.msra.mxu0 0.0
    %3178 = vmatprep.subr.mxu0 0.0
    %3179 = vmatpush1.xpose.msra.mxu0 0.0
    %3180 = vmatprep.subr.mxu0 0.0
    %3181 = vmatpush1.xpose.msra.mxu0 0.0
    %3182 = vmatprep.subr.mxu0 0.0
    %3183 = vmatpush1.xpose.msra.mxu0 0.0
    %3184 = vmatprep.subr.mxu0 0.0
    %3185 = vmatpush1.xpose.msra.mxu0 0.0
    %3186 = vmatprep.subr.mxu0 0.0
    %3187 = vmatpush1.xpose.msra.mxu0 0.0
    %3188 = vmatprep.subr.mxu0 0.0
    %3189 = vmatpush1.xpose.msra.mxu0 0.0
    %3190 = vmatprep.subr.mxu0 0.0
    %3191 = vmatpush1.xpose.msra.mxu0 0.0
    %3192 = vmatprep.subr.mxu0 0.0
    %3193 = vmatpush1.xpose.msra.mxu0 0.0
    %3194 = vmatprep.subr.mxu0 0.0
    %3195 = vmatpush1.xpose.msra.mxu0 0.0
    %3196 = vmatprep.subr.mxu0 0.0
    %3197 = vmatpush1.xpose.msra.mxu0 0.0
    %3198 = vmatprep.subr.mxu0 0.0
    %3199 = vmatpush1.xpose.msra.mxu0 0.0
    %3200 = vmatprep.subr.mxu0 0.0
    %3201 = vmatpush1.xpose.msra.mxu0 0.0
    %3202 = vmatprep.subr.mxu0 0.0
    %3203 = vmatpush1.xpose.msra.mxu0 0.0
    %3204 = vmatprep.subr.mxu0 0.0
    %3205 = vmatpush1.xpose.msra.mxu0 0.0
    %3206 = vmatprep.subr.mxu0 0.0
    %3207 = vmatpush1.xpose.msra.mxu0 0.0
    %3208 = vmatprep.subr.mxu0 0.0
    %3209 = vmatpush1.xpose.msra.mxu0 0.0
    %3210 = vmatprep.subr.mxu0 0.0
    %3211 = vmatpush1.xpose.msra.mxu0 0.0
    %3212 = vmatprep.subr.mxu0 0.0
    %3213 = vmatpush1.xpose.msra.mxu0 0.0
    %3214 = vmatprep.subr.mxu0 0.0
    %3215 = vmatpush1.xpose.msra.mxu0 0.0
    %3216 = vmatprep.subr.mxu0 0.0
    %3217 = vmatpush1.xpose.msra.mxu0 0.0
    %3218 = vmatprep.subr.mxu0 0.0
    %3219 = vmatpush1.xpose.msra.mxu0 0.0
    %3220 = vmatprep.subr.mxu0 0.0
    %3221 = vmatpush1.xpose.msra.mxu0 0.0
    %3222 = vmatprep.subr.mxu0 0.0
    %3223 = vmatpush1.xpose.msra.mxu0 0.0
    %3224 = vmatprep.subr.mxu0 0.0
    %3225 = vmatpush1.xpose.msra.mxu0 0.0
    %3226 = vmatprep.mubr.f32.mxu0 0.0
    %3227 = vmatmul.mubr.f32.gmra.mrb[0].mxu0 %v3139
    %v3228 = vpop.f32.mrb[0].mxu0
    %v3229 = vadd.f32 0.0, %v3228
    %v3230 = vpop.f32.mrb[0].mxu0
    %3231 = vmatprep.mubr.f32.mxu0 0.0
    %3232 = vmatmul.mubr.f32.gmra.mrb[0].mxu0 %v3142
    %v3233 = vpop.f32.mrb[0].mxu0
    %v3234 = vadd.f32 0.0, %v3233
    %v3235 = vpop.f32.mrb[0].mxu0
    %3236 = vmatprep.mubr.f32.mxu0 0.0
    %3237 = vmatmul.mubr.f32.gmra.mrb[0].mxu0 %v3145
    %v3238 = vpop.f32.mrb[0].mxu0
    %v3239 = vadd.f32 0.0, %v3238
    %v3240 = vpop.f32.mrb[0].mxu0
    %3241 = vmatprep.mubr.f32.mxu0 0.0
    %3242 = vmatmul.mubr.f32.gmra.mrb[0].mxu0 %v3148
    %v3243 = vpop.f32.mrb[0].mxu0
    %v3244 = vadd.f32 0.0, %v3243
    %v3245 = vpop.f32.mrb[0].mxu0
    %3246 = vdwg.mxu0
    %3247 = vrot.lane.b32.xlu0 %v3071, 96
    %v3248 = vpop.permute.xlu0 %3247
    %3249 = vrot.lane.b32.xlu0 %v3075, 96
    %v3250 = vpop.permute.xlu0 %3249
    %3251 = vrot.lane.b32.xlu0 %v3081, 96
    %v3252 = vpop.permute.xlu0 %3251
    %3253 = vrot.lane.b32.xlu0 %v3085, 96
    %v3254 = vpop.permute.xlu0 %3253
    %3255 = vrot.lane.b32.xlu0 %v3073, 96
    %v3256 = vpop.permute.xlu0 %3255
    %3257 = vrot.lane.b32.xlu0 %v3077, 96
    %v3258 = vpop.permute.xlu0 %3257
    %3259 = vrot.lane.b32.xlu0 %v3083, 96
    %v3260 = vpop.permute.xlu0 %3259
    %3261 = vrot.lane.b32.xlu0 %v3087, 96
    %v3262 = vpop.permute.xlu0 %3261
    %v3263 = vsel %vm590, %v3248, 0
    %v3265 = vsel %vm590, %v3250, 0
    %v3267 = vsel %vm590, %v3252, 0
    %v3269 = vsel %vm590, %v3254, 0
    %v3271 = vsel %vm590, %v3256, 0
    %v3273 = vsel %vm590, %v3258, 0
    %v3275 = vsel %vm590, %v3260, 0
    %v3277 = vsel %vm590, %v3262, 0
    %3279 = vmatprep.subr.mxu0 0.0
    %3280 = vmatpush1.xpose.msra.mxu0 %v3271
    %3281 = vmatprep.subr.mxu0 0.0
    %3282 = vmatpush1.xpose.msra.mxu0 %v3273
    %3283 = vmatprep.subr.mxu0 0.0
    %3284 = vmatpush1.xpose.msra.mxu0 %v3275
    %3285 = vmatprep.subr.mxu0 0.0
    %3286 = vmatpush1.xpose.msra.mxu0 %v3277
    %3287 = vmatprep.subr.mxu0 0.0
    %3288 = vmatpush1.xpose.msra.mxu0 0.0
    %3289 = vmatprep.subr.mxu0 0.0
    %3290 = vmatpush1.xpose.msra.mxu0 0.0
    %3291 = vmatprep.subr.mxu0 0.0
    %3292 = vmatpush1.xpose.msra.mxu0 0.0
    %3293 = vmatprep.subr.mxu0 0.0
    %3294 = vmatpush1.xpose.msra.mxu0 0.0
    %3295 = vmatprep.subr.mxu0 0.0
    %3296 = vmatpush1.xpose.msra.mxu0 0.0
    %3297 = vmatprep.subr.mxu0 0.0
    %3298 = vmatpush1.xpose.msra.mxu0 0.0
    %3299 = vmatprep.subr.mxu0 0.0
    %3300 = vmatpush1.xpose.msra.mxu0 0.0
    %3301 = vmatprep.subr.mxu0 0.0
    %3302 = vmatpush1.xpose.msra.mxu0 0.0
    %3303 = vmatprep.subr.mxu0 0.0
    %3304 = vmatpush1.xpose.msra.mxu0 0.0
    %3305 = vmatprep.subr.mxu0 0.0
    %3306 = vmatpush1.xpose.msra.mxu0 0.0
    %3307 = vmatprep.subr.mxu0 0.0
    %3308 = vmatpush1.xpose.msra.mxu0 0.0
    %3309 = vmatprep.subr.mxu0 0.0
    %3310 = vmatpush1.xpose.msra.mxu0 0.0
    %3311 = vmatprep.subr.mxu0 0.0
    %3312 = vmatpush1.xpose.msra.mxu0 0.0
    %3313 = vmatprep.subr.mxu0 0.0
    %3314 = vmatpush1.xpose.msra.mxu0 0.0
    %3315 = vmatprep.subr.mxu0 0.0
    %3316 = vmatpush1.xpose.msra.mxu0 0.0
    %3317 = vmatprep.subr.mxu0 0.0
    %3318 = vmatpush1.xpose.msra.mxu0 0.0
    %3319 = vmatprep.subr.mxu0 0.0
    %3320 = vmatpush1.xpose.msra.mxu0 0.0
    %3321 = vmatprep.subr.mxu0 0.0
    %3322 = vmatpush1.xpose.msra.mxu0 0.0
    %3323 = vmatprep.subr.mxu0 0.0
    %3324 = vmatpush1.xpose.msra.mxu0 0.0
    %3325 = vmatprep.subr.mxu0 0.0
    %3326 = vmatpush1.xpose.msra.mxu0 0.0
    %3327 = vmatprep.subr.mxu0 0.0
    %3328 = vmatpush1.xpose.msra.mxu0 0.0
    %3329 = vmatprep.subr.mxu0 0.0
    %3330 = vmatpush1.xpose.msra.mxu0 0.0
    %3331 = vmatprep.subr.mxu0 0.0
    %3332 = vmatpush1.xpose.msra.mxu0 0.0
    %3333 = vmatprep.subr.mxu0 0.0
    %3334 = vmatpush1.xpose.msra.mxu0 0.0
    %3335 = vmatprep.subr.mxu0 0.0
    %3336 = vmatpush1.xpose.msra.mxu0 0.0
    %3337 = vmatprep.subr.mxu0 0.0
    %3338 = vmatpush1.xpose.msra.mxu0 0.0
    %3339 = vmatprep.subr.mxu0 0.0
    %3340 = vmatpush1.xpose.msra.mxu0 0.0
    %3341 = vmatprep.subr.mxu0 0.0
    %3342 = vmatpush1.xpose.msra.mxu0 0.0
    %3343 = vmatprep.mubr.f32.mxu0 0.0
    %3344 = vmatmul.mubr.f32.gmra.mrb[0].mxu0 %v3263
    %v3345 = vpop.f32.mrb[0].mxu0
    %v3346 = vadd.f32 0.0, %v3345
    %v3347 = vpop.f32.mrb[0].mxu0
    %3348 = vmatprep.mubr.f32.mxu0 0.0
    %3349 = vmatmul.mubr.f32.gmra.mrb[0].mxu0 %v3265
    %v3350 = vpop.f32.mrb[0].mxu0
    %v3351 = vadd.f32 0.0, %v3350
    %v3352 = vpop.f32.mrb[0].mxu0
    %3353 = vmatprep.mubr.f32.mxu0 0.0
    %3354 = vmatmul.mubr.f32.gmra.mrb[0].mxu0 %v3267
    %v3355 = vpop.f32.mrb[0].mxu0
    %v3356 = vadd.f32 0.0, %v3355
    %v3357 = vpop.f32.mrb[0].mxu0
    %3358 = vmatprep.mubr.f32.mxu0 0.0
    %3359 = vmatmul.mubr.f32.gmra.mrb[0].mxu0 %v3269
    %v3360 = vpop.f32.mrb[0].mxu0
    %v3361 = vadd.f32 0.0, %v3360
    %v3362 = vpop.f32.mrb[0].mxu0
    %3363 = vdwg.mxu0
    %3364 = vrot.lane.b32.xlu0 %v3071, 64
    %v3365 = vpop.permute.xlu0 %3364
    %3366 = vrot.lane.b32.xlu0 %v3075, 64
    %v3367 = vpop.permute.xlu0 %3366
    %3368 = vrot.lane.b32.xlu0 %v3081, 64
    %v3369 = vpop.permute.xlu0 %3368
    %3370 = vrot.lane.b32.xlu0 %v3085, 64
    %v3371 = vpop.permute.xlu0 %3370
    %3372 = vrot.lane.b32.xlu0 %v3073, 64
    %v3373 = vpop.permute.xlu0 %3372
    %3374 = vrot.lane.b32.xlu0 %v3077, 64
    %v3375 = vpop.permute.xlu0 %3374
    %3376 = vrot.lane.b32.xlu0 %v3083, 64
    %v3377 = vpop.permute.xlu0 %3376
    %3378 = vrot.lane.b32.xlu0 %v3087, 64
    %v3379 = vpop.permute.xlu0 %3378
    %v3380 = vsel %vm590, %v3365, 0
    %v3382 = vsel %vm590, %v3367, 0
    %v3384 = vsel %vm590, %v3369, 0
    %v3386 = vsel %vm590, %v3371, 0
    %v3388 = vsel %vm590, %v3373, 0
    %v3390 = vsel %vm590, %v3375, 0
    %v3392 = vsel %vm590, %v3377, 0
    %v3394 = vsel %vm590, %v3379, 0
    %3396 = vmatprep.subr.mxu0 0.0
    %3397 = vmatpush1.xpose.msra.mxu0 %v3388
    %3398 = vmatprep.subr.mxu0 0.0
    %3399 = vmatpush1.xpose.msra.mxu0 %v3390
    %3400 = vmatprep.subr.mxu0 0.0
    %3401 = vmatpush1.xpose.msra.mxu0 %v3392
    %3402 = vmatprep.subr.mxu0 0.0
    %3403 = vmatpush1.xpose.msra.mxu0 %v3394
    %3404 = vmatprep.subr.mxu0 0.0
    %3405 = vmatpush1.xpose.msra.mxu0 0.0
    %3406 = vmatprep.subr.mxu0 0.0
    %3407 = vmatpush1.xpose.msra.mxu0 0.0
    %3408 = vmatprep.subr.mxu0 0.0
    %3409 = vmatpush1.xpose.msra.mxu0 0.0
    %3410 = vmatprep.subr.mxu0 0.0
    %3411 = vmatpush1.xpose.msra.mxu0 0.0
    %3412 = vmatprep.subr.mxu0 0.0
    %3413 = vmatpush1.xpose.msra.mxu0 0.0
    %3414 = vmatprep.subr.mxu0 0.0
    %3415 = vmatpush1.xpose.msra.mxu0 0.0
    %3416 = vmatprep.subr.mxu0 0.0
    %3417 = vmatpush1.xpose.msra.mxu0 0.0
    %3418 = vmatprep.subr.mxu0 0.0
    %3419 = vmatpush1.xpose.msra.mxu0 0.0
    %3420 = vmatprep.subr.mxu0 0.0
    %3421 = vmatpush1.xpose.msra.mxu0 0.0
    %3422 = vmatprep.subr.mxu0 0.0
    %3423 = vmatpush1.xpose.msra.mxu0 0.0
    %3424 = vmatprep.subr.mxu0 0.0
    %3425 = vmatpush1.xpose.msra.mxu0 0.0
    %3426 = vmatprep.subr.mxu0 0.0
    %3427 = vmatpush1.xpose.msra.mxu0 0.0
    %3428 = vmatprep.subr.mxu0 0.0
    %3429 = vmatpush1.xpose.msra.mxu0 0.0
    %3430 = vmatprep.subr.mxu0 0.0
    %3431 = vmatpush1.xpose.msra.mxu0 0.0
    %3432 = vmatprep.subr.mxu0 0.0
    %3433 = vmatpush1.xpose.msra.mxu0 0.0
    %3434 = vmatprep.subr.mxu0 0.0
    %3435 = vmatpush1.xpose.msra.mxu0 0.0
    %3436 = vmatprep.subr.mxu0 0.0
    %3437 = vmatpush1.xpose.msra.mxu0 0.0
    %3438 = vmatprep.subr.mxu0 0.0
    %3439 = vmatpush1.xpose.msra.mxu0 0.0
    %3440 = vmatprep.subr.mxu0 0.0
    %3441 = vmatpush1.xpose.msra.mxu0 0.0
    %3442 = vmatprep.subr.mxu0 0.0
    %3443 = vmatpush1.xpose.msra.mxu0 0.0
    %3444 = vmatprep.subr.mxu0 0.0
    %3445 = vmatpush1.xpose.msra.mxu0 0.0
    %3446 = vmatprep.subr.mxu0 0.0
    %3447 = vmatpush1.xpose.msra.mxu0 0.0
    %3448 = vmatprep.subr.mxu0 0.0
    %3449 = vmatpush1.xpose.msra.mxu0 0.0
    %3450 = vmatprep.subr.mxu0 0.0
    %3451 = vmatpush1.xpose.msra.mxu0 0.0
    %3452 = vmatprep.subr.mxu0 0.0
    %3453 = vmatpush1.xpose.msra.mxu0 0.0
    %3454 = vmatprep.subr.mxu0 0.0
    %3455 = vmatpush1.xpose.msra.mxu0 0.0
    %3456 = vmatprep.subr.mxu0 0.0
    %3457 = vmatpush1.xpose.msra.mxu0 0.0
    %3458 = vmatprep.subr.mxu0 0.0
    %3459 = vmatpush1.xpose.msra.mxu0 0.0
    %3460 = vmatprep.mubr.f32.mxu0 0.0
    %3461 = vmatmul.mubr.f32.gmra.mrb[0].mxu0 %v3380
    %v3462 = vpop.f32.mrb[0].mxu0
    %v3463 = vadd.f32 0.0, %v3462
    %v3464 = vpop.f32.mrb[0].mxu0
    %3465 = vmatprep.mubr.f32.mxu0 0.0
    %3466 = vmatmul.mubr.f32.gmra.mrb[0].mxu0 %v3382
    %v3467 = vpop.f32.mrb[0].mxu0
    %v3468 = vadd.f32 0.0, %v3467
    %v3469 = vpop.f32.mrb[0].mxu0
    %3470 = vmatprep.mubr.f32.mxu0 0.0
    %3471 = vmatmul.mubr.f32.gmra.mrb[0].mxu0 %v3384
    %v3472 = vpop.f32.mrb[0].mxu0
    %v3473 = vadd.f32 0.0, %v3472
    %v3474 = vpop.f32.mrb[0].mxu0
    %3475 = vmatprep.mubr.f32.mxu0 0.0
    %3476 = vmatmul.mubr.f32.gmra.mrb[0].mxu0 %v3386
    %v3477 = vpop.f32.mrb[0].mxu0
    %v3478 = vadd.f32 0.0, %v3477
    %v3479 = vpop.f32.mrb[0].mxu0
    %3480 = vdwg.mxu0
    %3481 = vrot.lane.b32.xlu0 %v3071, 32
    %v3482 = vpop.permute.xlu0 %3481
    %3483 = vrot.lane.b32.xlu0 %v3075, 32
    %v3484 = vpop.permute.xlu0 %3483
    %3485 = vrot.lane.b32.xlu0 %v3081, 32
    %v3486 = vpop.permute.xlu0 %3485
    %3487 = vrot.lane.b32.xlu0 %v3085, 32
    %v3488 = vpop.permute.xlu0 %3487
    %3489 = vrot.lane.b32.xlu0 %v3073, 32
    %v3490 = vpop.permute.xlu0 %3489
    %3491 = vrot.lane.b32.xlu0 %v3077, 32
    %v3492 = vpop.permute.xlu0 %3491
    %3493 = vrot.lane.b32.xlu0 %v3083, 32
    %v3494 = vpop.permute.xlu0 %3493
    %3495 = vrot.lane.b32.xlu0 %v3087, 32
    %v3496 = vpop.permute.xlu0 %3495
    %v3497 = vsel %vm590, %v3482, 0
    %v3499 = vsel %vm590, %v3484, 0
    %v3501 = vsel %vm590, %v3486, 0
    %v3503 = vsel %vm590, %v3488, 0
    %v3505 = vsel %vm590, %v3490, 0
    %v3507 = vsel %vm590, %v3492, 0
    %v3509 = vsel %vm590, %v3494, 0
    %v3511 = vsel %vm590, %v3496, 0
    %3513 = vmatprep.subr.mxu0 0.0
    %3514 = vmatpush1.xpose.msra.mxu0 %v3505
    %3515 = vmatprep.subr.mxu0 0.0
    %3516 = vmatpush1.xpose.msra.mxu0 %v3507
    %3517 = vmatprep.subr.mxu0 0.0
    %3518 = vmatpush1.xpose.msra.mxu0 %v3509
    %3519 = vmatprep.subr.mxu0 0.0
    %3520 = vmatpush1.xpose.msra.mxu0 %v3511
    %3521 = vmatprep.subr.mxu0 0.0
    %3522 = vmatpush1.xpose.msra.mxu0 0.0
    %3523 = vmatprep.subr.mxu0 0.0
    %3524 = vmatpush1.xpose.msra.mxu0 0.0
    %3525 = vmatprep.subr.mxu0 0.0
    %3526 = vmatpush1.xpose.msra.mxu0 0.0
    %3527 = vmatprep.subr.mxu0 0.0
    %3528 = vmatpush1.xpose.msra.mxu0 0.0
    %3529 = vmatprep.subr.mxu0 0.0
    %3530 = vmatpush1.xpose.msra.mxu0 0.0
    %3531 = vmatprep.subr.mxu0 0.0
    %3532 = vmatpush1.xpose.msra.mxu0 0.0
    %3533 = vmatprep.subr.mxu0 0.0
    %3534 = vmatpush1.xpose.msra.mxu0 0.0
    %3535 = vmatprep.subr.mxu0 0.0
    %3536 = vmatpush1.xpose.msra.mxu0 0.0
    %3537 = vmatprep.subr.mxu0 0.0
    %3538 = vmatpush1.xpose.msra.mxu0 0.0
    %3539 = vmatprep.subr.mxu0 0.0
    %3540 = vmatpush1.xpose.msra.mxu0 0.0
    %3541 = vmatprep.subr.mxu0 0.0
    %3542 = vmatpush1.xpose.msra.mxu0 0.0
    %3543 = vmatprep.subr.mxu0 0.0
    %3544 = vmatpush1.xpose.msra.mxu0 0.0
    %3545 = vmatprep.subr.mxu0 0.0
    %3546 = vmatpush1.xpose.msra.mxu0 0.0
    %3547 = vmatprep.subr.mxu0 0.0
    %3548 = vmatpush1.xpose.msra.mxu0 0.0
    %3549 = vmatprep.subr.mxu0 0.0
    %3550 = vmatpush1.xpose.msra.mxu0 0.0
    %3551 = vmatprep.subr.mxu0 0.0
    %3552 = vmatpush1.xpose.msra.mxu0 0.0
    %3553 = vmatprep.subr.mxu0 0.0
    %3554 = vmatpush1.xpose.msra.mxu0 0.0
    %3555 = vmatprep.subr.mxu0 0.0
    %3556 = vmatpush1.xpose.msra.mxu0 0.0
    %3557 = vmatprep.subr.mxu0 0.0
    %3558 = vmatpush1.xpose.msra.mxu0 0.0
    %3559 = vmatprep.subr.mxu0 0.0
    %3560 = vmatpush1.xpose.msra.mxu0 0.0
    %3561 = vmatprep.subr.mxu0 0.0
    %3562 = vmatpush1.xpose.msra.mxu0 0.0
    %3563 = vmatprep.subr.mxu0 0.0
    %3564 = vmatpush1.xpose.msra.mxu0 0.0
    %3565 = vmatprep.subr.mxu0 0.0
    %3566 = vmatpush1.xpose.msra.mxu0 0.0
    %3567 = vmatprep.subr.mxu0 0.0
    %3568 = vmatpush1.xpose.msra.mxu0 0.0
    %3569 = vmatprep.subr.mxu0 0.0
    %3570 = vmatpush1.xpose.msra.mxu0 0.0
    %3571 = vmatprep.subr.mxu0 0.0
    %3572 = vmatpush1.xpose.msra.mxu0 0.0
    %3573 = vmatprep.subr.mxu0 0.0
    %3574 = vmatpush1.xpose.msra.mxu0 0.0
    %3575 = vmatprep.subr.mxu0 0.0
    %3576 = vmatpush1.xpose.msra.mxu0 0.0
    %3577 = vmatprep.mubr.f32.mxu0 0.0
    %3578 = vmatmul.mubr.f32.gmra.mrb[0].mxu0 %v3497
    %v3579 = vpop.f32.mrb[0].mxu0
    %v3580 = vadd.f32 0.0, %v3579
    %v3581 = vpop.f32.mrb[0].mxu0
    %3582 = vmatprep.mubr.f32.mxu0 0.0
    %3583 = vmatmul.mubr.f32.gmra.mrb[0].mxu0 %v3499
    %v3584 = vpop.f32.mrb[0].mxu0
    %v3585 = vadd.f32 0.0, %v3584
    %v3586 = vpop.f32.mrb[0].mxu0
    %3587 = vmatprep.mubr.f32.mxu0 0.0
    %3588 = vmatmul.mubr.f32.gmra.mrb[0].mxu0 %v3501
    %v3589 = vpop.f32.mrb[0].mxu0
    %v3590 = vadd.f32 0.0, %v3589
    %v3591 = vpop.f32.mrb[0].mxu0
    %3592 = vmatprep.mubr.f32.mxu0 0.0
    %3593 = vmatmul.mubr.f32.gmra.mrb[0].mxu0 %v3503
    %v3594 = vpop.f32.mrb[0].mxu0
    %v3595 = vadd.f32 0.0, %v3594
    %v3596 = vpop.f32.mrb[0].mxu0
    %3597 = vdwg.mxu0
    %v3598 = vmul.f32 %v3229, 0.17677669
    %v3599 = vmul.f32 %v3234, 0.17677669
    %v3600 = vmul.f32 %v3239, 0.17677669
    %v3601 = vmul.f32 %v3244, 0.17677669
    %v3602 = vmul.f32 %v3346, 0.17677669
    %v3603 = vmul.f32 %v3351, 0.17677669
    %v3604 = vmul.f32 %v3356, 0.17677669
    %v3605 = vmul.f32 %v3361, 0.17677669
    %v3606 = vmul.f32 %v3463, 0.17677669
    %v3607 = vmul.f32 %v3468, 0.17677669
    %v3608 = vmul.f32 %v3473, 0.17677669
    %v3609 = vmul.f32 %v3478, 0.17677669
    %v3610 = vmul.f32 %v3580, 0.17677669
    %v3611 = vmul.f32 %v3585, 0.17677669
    %v3612 = vmul.f32 %v3590, 0.17677669
    %v3613 = vmul.f32 %v3595, 0.17677669
    %v3614 = vadd.f32 %v3598, %v293
    %v3615 = vadd.f32 %v3599, %v294
    %v3616 = vadd.f32 %v3600, %v295
    %v3617 = vadd.f32 %v3601, %v296
    %v3618 = vadd.f32 %v3602, %v297
    %v3619 = vadd.f32 %v3603, %v298
    %v3620 = vadd.f32 %v3604, %v299
    %v3621 = vadd.f32 %v3605, %v300
    %v3622 = vadd.f32 %v3606, %v301
    %v3623 = vadd.f32 %v3607, %v302
    %v3624 = vadd.f32 %v3608, %v303
    %v3625 = vadd.f32 %v3609, %v304
    %v3626 = vadd.f32 %v3610, %v305
    %v3627 = vadd.f32 %v3611, %v306
    %v3628 = vadd.f32 %v3612, %v307
    %v3629 = vadd.f32 %v3613, %v308
    %v3630 = vsel %vm590, %v3614, -inf
    %3631 = vmax.xlane.f32.xlu0 %v3630
    %v3632 = vpop.xlane.xlu0 %3631
    %v3633 = vsel %vm590, %v3615, -inf
    %3634 = vmax.xlane.f32.xlu0 %v3633
    %v3635 = vpop.xlane.xlu0 %3634
    %v3636 = vsel %vm590, %v3616, -inf
    %3637 = vmax.xlane.f32.xlu0 %v3636
    %v3638 = vpop.xlane.xlu0 %3637
    %v3639 = vsel %vm590, %v3617, -inf
    %3640 = vmax.xlane.f32.xlu0 %v3639
    %v3641 = vpop.xlane.xlu0 %3640
    %v3642 = vsel %vm590, %v3618, -inf
    %3643 = vmax.xlane.f32.xlu0 %v3642
    %v3644 = vpop.xlane.xlu0 %3643
    %v3645 = vsel %vm590, %v3619, -inf
    %3646 = vmax.xlane.f32.xlu0 %v3645
    %v3647 = vpop.xlane.xlu0 %3646
    %v3648 = vsel %vm590, %v3620, -inf
    %3649 = vmax.xlane.f32.xlu0 %v3648
    %v3650 = vpop.xlane.xlu0 %3649
    %v3651 = vsel %vm590, %v3621, -inf
    %3652 = vmax.xlane.f32.xlu0 %v3651
    %v3653 = vpop.xlane.xlu0 %3652
    %v3654 = vsel %vm590, %v3622, -inf
    %3655 = vmax.xlane.f32.xlu0 %v3654
    %v3656 = vpop.xlane.xlu0 %3655
    %v3657 = vsel %vm590, %v3623, -inf
    %3658 = vmax.xlane.f32.xlu0 %v3657
    %v3659 = vpop.xlane.xlu0 %3658
    %v3660 = vsel %vm590, %v3624, -inf
    %3661 = vmax.xlane.f32.xlu0 %v3660
    %v3662 = vpop.xlane.xlu0 %3661
    %v3663 = vsel %vm590, %v3625, -inf
    %3664 = vmax.xlane.f32.xlu0 %v3663
    %v3665 = vpop.xlane.xlu0 %3664
    %v3666 = vsel %vm590, %v3626, -inf
    %3667 = vmax.xlane.f32.xlu0 %v3666
    %v3668 = vpop.xlane.xlu0 %3667
    %v3669 = vsel %vm590, %v3627, -inf
    %3670 = vmax.xlane.f32.xlu0 %v3669
    %v3671 = vpop.xlane.xlu0 %3670
    %v3672 = vsel %vm590, %v3628, -inf
    %3673 = vmax.xlane.f32.xlu0 %v3672
    %v3674 = vpop.xlane.xlu0 %3673
    %v3675 = vsel %vm590, %v3629, -inf
    %3676 = vmax.xlane.f32.xlu0 %v3675
    %v3677 = vpop.xlane.xlu0 %3676
    %v3678 = vsub.f32 %v3614, %v3632
    %v3679 = vsub.f32 %v3615, %v3635
    %v3680 = vsub.f32 %v3616, %v3638
    %v3681 = vsub.f32 %v3617, %v3641
    %v3682 = vsub.f32 %v3618, %v3644
    %v3683 = vsub.f32 %v3619, %v3647
    %v3684 = vsub.f32 %v3620, %v3650
    %v3685 = vsub.f32 %v3621, %v3653
    %v3686 = vsub.f32 %v3622, %v3656
    %v3687 = vsub.f32 %v3623, %v3659
    %v3688 = vsub.f32 %v3624, %v3662
    %v3689 = vsub.f32 %v3625, %v3665
    %v3690 = vsub.f32 %v3626, %v3668
    %v3691 = vsub.f32 %v3627, %v3671
    %v3692 = vsub.f32 %v3628, %v3674
    %v3693 = vsub.f32 %v3629, %v3677
    %v3694 = vmul.f32 %v3678, 1.442695
    %v3695 = vpow.pop %v3694
    %v3696 = vmul.f32 %v3679, 1.442695
    %v3697 = vpow.pop %v3696
    %v3698 = vmul.f32 %v3680, 1.442695
    %v3699 = vpow.pop %v3698
    %v3700 = vmul.f32 %v3681, 1.442695
    %v3701 = vpow.pop %v3700
    %v3702 = vmul.f32 %v3682, 1.442695
    %v3703 = vpow.pop %v3702
    %v3704 = vmul.f32 %v3683, 1.442695
    %v3705 = vpow.pop %v3704
    %v3706 = vmul.f32 %v3684, 1.442695
    %v3707 = vpow.pop %v3706
    %v3708 = vmul.f32 %v3685, 1.442695
    %v3709 = vpow.pop %v3708
    %v3710 = vmul.f32 %v3686, 1.442695
    %v3711 = vpow.pop %v3710
    %v3712 = vmul.f32 %v3687, 1.442695
    %v3713 = vpow.pop %v3712
    %v3714 = vmul.f32 %v3688, 1.442695
    %v3715 = vpow.pop %v3714
    %v3716 = vmul.f32 %v3689, 1.442695
    %v3717 = vpow.pop %v3716
    %v3718 = vmul.f32 %v3690, 1.442695
    %v3719 = vpow.pop %v3718
    %v3720 = vmul.f32 %v3691, 1.442695
    %v3721 = vpow.pop %v3720
    %v3722 = vmul.f32 %v3692, 1.442695
    %v3723 = vpow.pop %v3722
    %v3724 = vmul.f32 %v3693, 1.442695
    %v3725 = vpow.pop %v3724
    %v3726 = vsel %vm590, %v3695, 0.0
    %3727 = vadd.xlane.f32.xlu0 %v3726
    %v3728 = vpop.xlane.xlu0 %3727
    %v3729 = vsel %vm590, %v3697, 0.0
    %3730 = vadd.xlane.f32.xlu0 %v3729
    %v3731 = vpop.xlane.xlu0 %3730
    %v3732 = vsel %vm590, %v3699, 0.0
    %3733 = vadd.xlane.f32.xlu0 %v3732
    %v3734 = vpop.xlane.xlu0 %3733
    %v3735 = vsel %vm590, %v3701, 0.0
    %3736 = vadd.xlane.f32.xlu0 %v3735
    %v3737 = vpop.xlane.xlu0 %3736
    %v3738 = vsel %vm590, %v3703, 0.0
    %3739 = vadd.xlane.f32.xlu0 %v3738
    %v3740 = vpop.xlane.xlu0 %3739
    %v3741 = vsel %vm590, %v3705, 0.0
    %3742 = vadd.xlane.f32.xlu0 %v3741
    %v3743 = vpop.xlane.xlu0 %3742
    %v3744 = vsel %vm590, %v3707, 0.0
    %3745 = vadd.xlane.f32.xlu0 %v3744
    %v3746 = vpop.xlane.xlu0 %3745
    %v3747 = vsel %vm590, %v3709, 0.0
    %3748 = vadd.xlane.f32.xlu0 %v3747
    %v3749 = vpop.xlane.xlu0 %3748
    %v3750 = vsel %vm590, %v3711, 0.0
    %3751 = vadd.xlane.f32.xlu0 %v3750
    %v3752 = vpop.xlane.xlu0 %3751
    %v3753 = vsel %vm590, %v3713, 0.0
    %3754 = vadd.xlane.f32.xlu0 %v3753
    %v3755 = vpop.xlane.xlu0 %3754
    %v3756 = vsel %vm590, %v3715, 0.0
    %3757 = vadd.xlane.f32.xlu0 %v3756
    %v3758 = vpop.xlane.xlu0 %3757
    %v3759 = vsel %vm590, %v3717, 0.0
    %3760 = vadd.xlane.f32.xlu0 %v3759
    %v3761 = vpop.xlane.xlu0 %3760
    %v3762 = vsel %vm590, %v3719, 0.0
    %3763 = vadd.xlane.f32.xlu0 %v3762
    %v3764 = vpop.xlane.xlu0 %3763
    %v3765 = vsel %vm590, %v3721, 0.0
    %3766 = vadd.xlane.f32.xlu0 %v3765
    %v3767 = vpop.xlane.xlu0 %3766
    %v3768 = vsel %vm590, %v3723, 0.0
    %3769 = vadd.xlane.f32.xlu0 %v3768
    %v3770 = vpop.xlane.xlu0 %3769
    %v3771 = vsel %vm590, %v3725, 0.0
    %3772 = vadd.xlane.f32.xlu0 %v3771
    %v3773 = vpop.xlane.xlu0 %3772
    %v3774 = vrcp.pop %v3728
    %v3775 = vrcp.pop %v3731
    %v3776 = vrcp.pop %v3734
    %v3777 = vrcp.pop %v3737
    %v3778 = vrcp.pop %v3740
    %v3779 = vrcp.pop %v3743
    %v3780 = vrcp.pop %v3746
    %v3781 = vrcp.pop %v3749
    %v3782 = vrcp.pop %v3752
    %v3783 = vrcp.pop %v3755
    %v3784 = vrcp.pop %v3758
    %v3785 = vrcp.pop %v3761
    %v3786 = vrcp.pop %v3764
    %v3787 = vrcp.pop %v3767
    %v3788 = vrcp.pop %v3770
    %v3789 = vrcp.pop %v3773
    %v3790 = vmul.f32 %v3695, %v3774
    %v3791 = vmul.f32 %v3697, %v3775
    %v3792 = vmul.f32 %v3699, %v3776
    %v3793 = vmul.f32 %v3701, %v3777
    %v3794 = vmul.f32 %v3703, %v3778
    %v3795 = vmul.f32 %v3705, %v3779
    %v3796 = vmul.f32 %v3707, %v3780
    %v3797 = vmul.f32 %v3709, %v3781
    %v3798 = vmul.f32 %v3711, %v3782
    %v3799 = vmul.f32 %v3713, %v3783
    %v3800 = vmul.f32 %v3715, %v3784
    %v3801 = vmul.f32 %v3717, %v3785
    %v3802 = vmul.f32 %v3719, %v3786
    %v3803 = vmul.f32 %v3721, %v3787
    %v3804 = vmul.f32 %v3723, %v3788
    %v3805 = vmul.f32 %v3725, %v3789
    %v3807 = vsel %vm590, %v3790, 0
    %v3810 = vsel %vm590, %v3791, 0
    %v3813 = vsel %vm590, %v3792, 0
    %v3816 = vsel %vm590, %v3793, 0
    %3818 = vmatprep.subr.mxu0 0.0
    %3819 = vmatpush1.msra.mxu0 %v3124
    %3820 = vmatprep.subr.mxu0 0.0
    %3821 = vmatpush1.msra.mxu0 %v3127
    %3822 = vmatprep.subr.mxu0 0.0
    %3823 = vmatpush1.msra.mxu0 %v3132
    %3824 = vmatprep.subr.mxu0 0.0
    %3825 = vmatpush1.msra.mxu0 %v3135
    %3826 = vmatprep.subr.mxu0 0.0
    %3827 = vmatpush1.msra.mxu0 0.0
    %3828 = vmatprep.subr.mxu0 0.0
    %3829 = vmatpush1.msra.mxu0 0.0
    %3830 = vmatprep.subr.mxu0 0.0
    %3831 = vmatpush1.msra.mxu0 0.0
    %3832 = vmatprep.subr.mxu0 0.0
    %3833 = vmatpush1.msra.mxu0 0.0
    %3834 = vmatprep.subr.mxu0 0.0
    %3835 = vmatpush1.msra.mxu0 0.0
    %3836 = vmatprep.subr.mxu0 0.0
    %3837 = vmatpush1.msra.mxu0 0.0
    %3838 = vmatprep.subr.mxu0 0.0
    %3839 = vmatpush1.msra.mxu0 0.0
    %3840 = vmatprep.subr.mxu0 0.0
    %3841 = vmatpush1.msra.mxu0 0.0
    %3842 = vmatprep.subr.mxu0 0.0
    %3843 = vmatpush1.msra.mxu0 0.0
    %3844 = vmatprep.subr.mxu0 0.0
    %3845 = vmatpush1.msra.mxu0 0.0
    %3846 = vmatprep.subr.mxu0 0.0
    %3847 = vmatpush1.msra.mxu0 0.0
    %3848 = vmatprep.subr.mxu0 0.0
    %3849 = vmatpush1.msra.mxu0 0.0
    %3850 = vmatprep.subr.mxu0 0.0
    %3851 = vmatpush1.msra.mxu0 0.0
    %3852 = vmatprep.subr.mxu0 0.0
    %3853 = vmatpush1.msra.mxu0 0.0
    %3854 = vmatprep.subr.mxu0 0.0
    %3855 = vmatpush1.msra.mxu0 0.0
    %3856 = vmatprep.subr.mxu0 0.0
    %3857 = vmatpush1.msra.mxu0 0.0
    %3858 = vmatprep.subr.mxu0 0.0
    %3859 = vmatpush1.msra.mxu0 0.0
    %3860 = vmatprep.subr.mxu0 0.0
    %3861 = vmatpush1.msra.mxu0 0.0
    %3862 = vmatprep.subr.mxu0 0.0
    %3863 = vmatpush1.msra.mxu0 0.0
    %3864 = vmatprep.subr.mxu0 0.0
    %3865 = vmatpush1.msra.mxu0 0.0
    %3866 = vmatprep.subr.mxu0 0.0
    %3867 = vmatpush1.msra.mxu0 0.0
    %3868 = vmatprep.subr.mxu0 0.0
    %3869 = vmatpush1.msra.mxu0 0.0
    %3870 = vmatprep.subr.mxu0 0.0
    %3871 = vmatpush1.msra.mxu0 0.0
    %3872 = vmatprep.subr.mxu0 0.0
    %3873 = vmatpush1.msra.mxu0 0.0
    %3874 = vmatprep.subr.mxu0 0.0
    %3875 = vmatpush1.msra.mxu0 0.0
    %3876 = vmatprep.subr.mxu0 0.0
    %3877 = vmatpush1.msra.mxu0 0.0
    %3878 = vmatprep.subr.mxu0 0.0
    %3879 = vmatpush1.msra.mxu0 0.0
    %3880 = vmatprep.subr.mxu0 0.0
    %3881 = vmatpush1.msra.mxu0 0.0
    %3882 = vmatprep.mubr.f32.mxu0 0.0
    %3883 = vmatmul.mubr.f32.gmra.mrb[0].mxu0 %v3807
    %v3884 = vpop.f32.mrb[0].mxu0
    %v3885 = vadd.f32 0.0, %v3884
    %v3886 = vpop.f32.mrb[0].mxu0
    %3887 = vmatprep.mubr.f32.mxu0 0.0
    %3888 = vmatmul.mubr.f32.gmra.mrb[0].mxu0 %v3810
    %v3889 = vpop.f32.mrb[0].mxu0
    %v3890 = vadd.f32 0.0, %v3889
    %v3891 = vpop.f32.mrb[0].mxu0
    %3892 = vmatprep.mubr.f32.mxu0 0.0
    %3893 = vmatmul.mubr.f32.gmra.mrb[0].mxu0 %v3813
    %v3894 = vpop.f32.mrb[0].mxu0
    %v3895 = vadd.f32 0.0, %v3894
    %v3896 = vpop.f32.mrb[0].mxu0
    %3897 = vmatprep.mubr.f32.mxu0 0.0
    %3898 = vmatmul.mubr.f32.gmra.mrb[0].mxu0 %v3816
    %v3899 = vpop.f32.mrb[0].mxu0
    %v3900 = vadd.f32 0.0, %v3899
    %v3901 = vpop.f32.mrb[0].mxu0
    %3902 = vdwg.mxu0
    %3903 = vst.msk [vmem:[#allocation2] sm:$0xff] %vm590, %v3885
    %3904 = vst.msk [vmem:[#allocation2 + $0x8] sm:$0xff] %vm590, %v3890
    %3905 = vst.msk [vmem:[#allocation2 + $0x10] sm:$0xff] %vm590, %v3895
    %3906 = vst.msk [vmem:[#allocation2 + $0x18] sm:$0xff] %vm590, %v3900
    %3911 = vrot.lane.b32.xlu0 %v3124, 96
    %v3912 = vpop.permute.xlu0 %3911
    %3913 = vrot.lane.b32.xlu0 %v3127, 96
    %v3914 = vpop.permute.xlu0 %3913
    %3915 = vrot.lane.b32.xlu0 %v3132, 96
    %v3916 = vpop.permute.xlu0 %3915
    %3917 = vrot.lane.b32.xlu0 %v3135, 96
    %v3918 = vpop.permute.xlu0 %3917
    %v3924 = vsel %vm590, %v3794, 0
    %v3927 = vsel %vm590, %v3795, 0
    %v3930 = vsel %vm590, %v3796, 0
    %v3933 = vsel %vm590, %v3797, 0
    %3935 = vmatprep.subr.mxu0 0.0
    %3936 = vmatpush1.msra.mxu0 %v3912
    %3937 = vmatprep.subr.mxu0 0.0
    %3938 = vmatpush1.msra.mxu0 %v3914
    %3939 = vmatprep.subr.mxu0 0.0
    %3940 = vmatpush1.msra.mxu0 %v3916
    %3941 = vmatprep.subr.mxu0 0.0
    %3942 = vmatpush1.msra.mxu0 %v3918
    %3943 = vmatprep.subr.mxu0 0.0
    %3944 = vmatpush1.msra.mxu0 0.0
    %3945 = vmatprep.subr.mxu0 0.0
    %3946 = vmatpush1.msra.mxu0 0.0
    %3947 = vmatprep.subr.mxu0 0.0
    %3948 = vmatpush1.msra.mxu0 0.0
    %3949 = vmatprep.subr.mxu0 0.0
    %3950 = vmatpush1.msra.mxu0 0.0
    %3951 = vmatprep.subr.mxu0 0.0
    %3952 = vmatpush1.msra.mxu0 0.0
    %3953 = vmatprep.subr.mxu0 0.0
    %3954 = vmatpush1.msra.mxu0 0.0
    %3955 = vmatprep.subr.mxu0 0.0
    %3956 = vmatpush1.msra.mxu0 0.0
    %3957 = vmatprep.subr.mxu0 0.0
    %3958 = vmatpush1.msra.mxu0 0.0
    %3959 = vmatprep.subr.mxu0 0.0
    %3960 = vmatpush1.msra.mxu0 0.0
    %3961 = vmatprep.subr.mxu0 0.0
    %3962 = vmatpush1.msra.mxu0 0.0
    %3963 = vmatprep.subr.mxu0 0.0
    %3964 = vmatpush1.msra.mxu0 0.0
    %3965 = vmatprep.subr.mxu0 0.0
    %3966 = vmatpush1.msra.mxu0 0.0
    %3967 = vmatprep.subr.mxu0 0.0
    %3968 = vmatpush1.msra.mxu0 0.0
    %3969 = vmatprep.subr.mxu0 0.0
    %3970 = vmatpush1.msra.mxu0 0.0
    %3971 = vmatprep.subr.mxu0 0.0
    %3972 = vmatpush1.msra.mxu0 0.0
    %3973 = vmatprep.subr.mxu0 0.0
    %3974 = vmatpush1.msra.mxu0 0.0
    %3975 = vmatprep.subr.mxu0 0.0
    %3976 = vmatpush1.msra.mxu0 0.0
    %3977 = vmatprep.subr.mxu0 0.0
    %3978 = vmatpush1.msra.mxu0 0.0
    %3979 = vmatprep.subr.mxu0 0.0
    %3980 = vmatpush1.msra.mxu0 0.0
    %3981 = vmatprep.subr.mxu0 0.0
    %3982 = vmatpush1.msra.mxu0 0.0
    %3983 = vmatprep.subr.mxu0 0.0
    %3984 = vmatpush1.msra.mxu0 0.0
    %3985 = vmatprep.subr.mxu0 0.0
    %3986 = vmatpush1.msra.mxu0 0.0
    %3987 = vmatprep.subr.mxu0 0.0
    %3988 = vmatpush1.msra.mxu0 0.0
    %3989 = vmatprep.subr.mxu0 0.0
    %3990 = vmatpush1.msra.mxu0 0.0
    %3991 = vmatprep.subr.mxu0 0.0
    %3992 = vmatpush1.msra.mxu0 0.0
    %3993 = vmatprep.subr.mxu0 0.0
    %3994 = vmatpush1.msra.mxu0 0.0
    %3995 = vmatprep.subr.mxu0 0.0
    %3996 = vmatpush1.msra.mxu0 0.0
    %3997 = vmatprep.subr.mxu0 0.0
    %3998 = vmatpush1.msra.mxu0 0.0
    %3999 = vmatprep.mubr.f32.mxu0 0.0
    %4000 = vmatmul.mubr.f32.gmra.mrb[0].mxu0 %v3924
    %v4001 = vpop.f32.mrb[0].mxu0
    %v4002 = vadd.f32 0.0, %v4001
    %v4003 = vpop.f32.mrb[0].mxu0
    %4004 = vmatprep.mubr.f32.mxu0 0.0
    %4005 = vmatmul.mubr.f32.gmra.mrb[0].mxu0 %v3927
    %v4006 = vpop.f32.mrb[0].mxu0
    %v4007 = vadd.f32 0.0, %v4006
    %v4008 = vpop.f32.mrb[0].mxu0
    %4009 = vmatprep.mubr.f32.mxu0 0.0
    %4010 = vmatmul.mubr.f32.gmra.mrb[0].mxu0 %v3930
    %v4011 = vpop.f32.mrb[0].mxu0
    %v4012 = vadd.f32 0.0, %v4011
    %v4013 = vpop.f32.mrb[0].mxu0
    %4014 = vmatprep.mubr.f32.mxu0 0.0
    %4015 = vmatmul.mubr.f32.gmra.mrb[0].mxu0 %v3933
    %v4016 = vpop.f32.mrb[0].mxu0
    %v4017 = vadd.f32 0.0, %v4016
    %v4018 = vpop.f32.mrb[0].mxu0
    %4019 = vdwg.mxu0
    %4024 = vrot.lane.b32.xlu0 %v4002, 32
    %v4025 = vpop.permute.xlu0 %4024
    %4026 = vrot.lane.b32.xlu0 %v4007, 32
    %v4027 = vpop.permute.xlu0 %4026
    %4028 = vrot.lane.b32.xlu0 %v4012, 32
    %v4029 = vpop.permute.xlu0 %4028
    %4030 = vrot.lane.b32.xlu0 %v4017, 32
    %v4031 = vpop.permute.xlu0 %4030
    %4036 = vst.msk [vmem:[#allocation2] sm:$0xff] %vm1489, %v4025
    %4037 = vst.msk [vmem:[#allocation2 + $0x8] sm:$0xff] %vm1489, %v4027
    %4038 = vst.msk [vmem:[#allocation2 + $0x10] sm:$0xff] %vm1489, %v4029
    %4039 = vst.msk [vmem:[#allocation2 + $0x18] sm:$0xff] %vm1489, %v4031
    %4040 = vrot.lane.b32.xlu0 %v3124, 64
    %v4041 = vpop.permute.xlu0 %4040
    %4042 = vrot.lane.b32.xlu0 %v3127, 64
    %v4043 = vpop.permute.xlu0 %4042
    %4044 = vrot.lane.b32.xlu0 %v3132, 64
    %v4045 = vpop.permute.xlu0 %4044
    %4046 = vrot.lane.b32.xlu0 %v3135, 64
    %v4047 = vpop.permute.xlu0 %4046
    %v4053 = vsel %vm590, %v3798, 0
    %v4056 = vsel %vm590, %v3799, 0
    %v4059 = vsel %vm590, %v3800, 0
    %v4062 = vsel %vm590, %v3801, 0
    %4064 = vmatprep.subr.mxu0 0.0
    %4065 = vmatpush1.msra.mxu0 %v4041
    %4066 = vmatprep.subr.mxu0 0.0
    %4067 = vmatpush1.msra.mxu0 %v4043
    %4068 = vmatprep.subr.mxu0 0.0
    %4069 = vmatpush1.msra.mxu0 %v4045
    %4070 = vmatprep.subr.mxu0 0.0
    %4071 = vmatpush1.msra.mxu0 %v4047
    %4072 = vmatprep.subr.mxu0 0.0
    %4073 = vmatpush1.msra.mxu0 0.0
    %4074 = vmatprep.subr.mxu0 0.0
    %4075 = vmatpush1.msra.mxu0 0.0
    %4076 = vmatprep.subr.mxu0 0.0
    %4077 = vmatpush1.msra.mxu0 0.0
    %4078 = vmatprep.subr.mxu0 0.0
    %4079 = vmatpush1.msra.mxu0 0.0
    %4080 = vmatprep.subr.mxu0 0.0
    %4081 = vmatpush1.msra.mxu0 0.0
    %4082 = vmatprep.subr.mxu0 0.0
    %4083 = vmatpush1.msra.mxu0 0.0
    %4084 = vmatprep.subr.mxu0 0.0
    %4085 = vmatpush1.msra.mxu0 0.0
    %4086 = vmatprep.subr.mxu0 0.0
    %4087 = vmatpush1.msra.mxu0 0.0
    %4088 = vmatprep.subr.mxu0 0.0
    %4089 = vmatpush1.msra.mxu0 0.0
    %4090 = vmatprep.subr.mxu0 0.0
    %4091 = vmatpush1.msra.mxu0 0.0
    %4092 = vmatprep.subr.mxu0 0.0
    %4093 = vmatpush1.msra.mxu0 0.0
    %4094 = vmatprep.subr.mxu0 0.0
    %4095 = vmatpush1.msra.mxu0 0.0
    %4096 = vmatprep.subr.mxu0 0.0
    %4097 = vmatpush1.msra.mxu0 0.0
    %4098 = vmatprep.subr.mxu0 0.0
    %4099 = vmatpush1.msra.mxu0 0.0
    %4100 = vmatprep.subr.mxu0 0.0
    %4101 = vmatpush1.msra.mxu0 0.0
    %4102 = vmatprep.subr.mxu0 0.0
    %4103 = vmatpush1.msra.mxu0 0.0
    %4104 = vmatprep.subr.mxu0 0.0
    %4105 = vmatpush1.msra.mxu0 0.0
    %4106 = vmatprep.subr.mxu0 0.0
    %4107 = vmatpush1.msra.mxu0 0.0
    %4108 = vmatprep.subr.mxu0 0.0
    %4109 = vmatpush1.msra.mxu0 0.0
    %4110 = vmatprep.subr.mxu0 0.0
    %4111 = vmatpush1.msra.mxu0 0.0
    %4112 = vmatprep.subr.mxu0 0.0
    %4113 = vmatpush1.msra.mxu0 0.0
    %4114 = vmatprep.subr.mxu0 0.0
    %4115 = vmatpush1.msra.mxu0 0.0
    %4116 = vmatprep.subr.mxu0 0.0
    %4117 = vmatpush1.msra.mxu0 0.0
    %4118 = vmatprep.subr.mxu0 0.0
    %4119 = vmatpush1.msra.mxu0 0.0
    %4120 = vmatprep.subr.mxu0 0.0
    %4121 = vmatpush1.msra.mxu0 0.0
    %4122 = vmatprep.subr.mxu0 0.0
    %4123 = vmatpush1.msra.mxu0 0.0
    %4124 = vmatprep.subr.mxu0 0.0
    %4125 = vmatpush1.msra.mxu0 0.0
    %4126 = vmatprep.subr.mxu0 0.0
    %4127 = vmatpush1.msra.mxu0 0.0
    %4128 = vmatprep.mubr.f32.mxu0 0.0
    %4129 = vmatmul.mubr.f32.gmra.mrb[0].mxu0 %v4053
    %v4130 = vpop.f32.mrb[0].mxu0
    %v4131 = vadd.f32 0.0, %v4130
    %v4132 = vpop.f32.mrb[0].mxu0
    %4133 = vmatprep.mubr.f32.mxu0 0.0
    %4134 = vmatmul.mubr.f32.gmra.mrb[0].mxu0 %v4056
    %v4135 = vpop.f32.mrb[0].mxu0
    %v4136 = vadd.f32 0.0, %v4135
    %v4137 = vpop.f32.mrb[0].mxu0
    %4138 = vmatprep.mubr.f32.mxu0 0.0
    %4139 = vmatmul.mubr.f32.gmra.mrb[0].mxu0 %v4059
    %v4140 = vpop.f32.mrb[0].mxu0
    %v4141 = vadd.f32 0.0, %v4140
    %v4142 = vpop.f32.mrb[0].mxu0
    %4143 = vmatprep.mubr.f32.mxu0 0.0
    %4144 = vmatmul.mubr.f32.gmra.mrb[0].mxu0 %v4062
    %v4145 = vpop.f32.mrb[0].mxu0
    %v4146 = vadd.f32 0.0, %v4145
    %v4147 = vpop.f32.mrb[0].mxu0
    %4148 = vdwg.mxu0
    %4153 = vrot.lane.b32.xlu0 %v4131, 64
    %v4154 = vpop.permute.xlu0 %4153
    %4155 = vrot.lane.b32.xlu0 %v4136, 64
    %v4156 = vpop.permute.xlu0 %4155
    %4157 = vrot.lane.b32.xlu0 %v4141, 64
    %v4158 = vpop.permute.xlu0 %4157
    %4159 = vrot.lane.b32.xlu0 %v4146, 64
    %v4160 = vpop.permute.xlu0 %4159
    %4165 = vst.msk [vmem:[#allocation2] sm:$0xff] %vm1619, %v4154
    %4166 = vst.msk [vmem:[#allocation2 + $0x8] sm:$0xff] %vm1619, %v4156
    %4167 = vst.msk [vmem:[#allocation2 + $0x10] sm:$0xff] %vm1619, %v4158
    %4168 = vst.msk [vmem:[#allocation2 + $0x18] sm:$0xff] %vm1619, %v4160
    %4169 = vrot.lane.b32.xlu0 %v3124, 32
    %v4170 = vpop.permute.xlu0 %4169
    %4171 = vrot.lane.b32.xlu0 %v3127, 32
    %v4172 = vpop.permute.xlu0 %4171
    %4173 = vrot.lane.b32.xlu0 %v3132, 32
    %v4174 = vpop.permute.xlu0 %4173
    %4175 = vrot.lane.b32.xlu0 %v3135, 32
    %v4176 = vpop.permute.xlu0 %4175
    %v4182 = vsel %vm590, %v3802, 0
    %v4185 = vsel %vm590, %v3803, 0
    %v4188 = vsel %vm590, %v3804, 0
    %v4191 = vsel %vm590, %v3805, 0
    %4193 = vmatprep.subr.mxu0 0.0
    %4194 = vmatpush1.msra.mxu0 %v4170
    %4195 = vmatprep.subr.mxu0 0.0
    %4196 = vmatpush1.msra.mxu0 %v4172
    %4197 = vmatprep.subr.mxu0 0.0
    %4198 = vmatpush1.msra.mxu0 %v4174
    %4199 = vmatprep.subr.mxu0 0.0
    %4200 = vmatpush1.msra.mxu0 %v4176
    %4201 = vmatprep.subr.mxu0 0.0
    %4202 = vmatpush1.msra.mxu0 0.0
    %4203 = vmatprep.subr.mxu0 0.0
    %4204 = vmatpush1.msra.mxu0 0.0
    %4205 = vmatprep.subr.mxu0 0.0
    %4206 = vmatpush1.msra.mxu0 0.0
    %4207 = vmatprep.subr.mxu0 0.0
    %4208 = vmatpush1.msra.mxu0 0.0
    %4209 = vmatprep.subr.mxu0 0.0
    %4210 = vmatpush1.msra.mxu0 0.0
    %4211 = vmatprep.subr.mxu0 0.0
    %4212 = vmatpush1.msra.mxu0 0.0
    %4213 = vmatprep.subr.mxu0 0.0
    %4214 = vmatpush1.msra.mxu0 0.0
    %4215 = vmatprep.subr.mxu0 0.0
    %4216 = vmatpush1.msra.mxu0 0.0
    %4217 = vmatprep.subr.mxu0 0.0
    %4218 = vmatpush1.msra.mxu0 0.0
    %4219 = vmatprep.subr.mxu0 0.0
    %4220 = vmatpush1.msra.mxu0 0.0
    %4221 = vmatprep.subr.mxu0 0.0
    %4222 = vmatpush1.msra.mxu0 0.0
    %4223 = vmatprep.subr.mxu0 0.0
    %4224 = vmatpush1.msra.mxu0 0.0
    %4225 = vmatprep.subr.mxu0 0.0
    %4226 = vmatpush1.msra.mxu0 0.0
    %4227 = vmatprep.subr.mxu0 0.0
    %4228 = vmatpush1.msra.mxu0 0.0
    %4229 = vmatprep.subr.mxu0 0.0
    %4230 = vmatpush1.msra.mxu0 0.0
    %4231 = vmatprep.subr.mxu0 0.0
    %4232 = vmatpush1.msra.mxu0 0.0
    %4233 = vmatprep.subr.mxu0 0.0
    %4234 = vmatpush1.msra.mxu0 0.0
    %4235 = vmatprep.subr.mxu0 0.0
    %4236 = vmatpush1.msra.mxu0 0.0
    %4237 = vmatprep.subr.mxu0 0.0
    %4238 = vmatpush1.msra.mxu0 0.0
    %4239 = vmatprep.subr.mxu0 0.0
    %4240 = vmatpush1.msra.mxu0 0.0
    %4241 = vmatprep.subr.mxu0 0.0
    %4242 = vmatpush1.msra.mxu0 0.0
    %4243 = vmatprep.subr.mxu0 0.0
    %4244 = vmatpush1.msra.mxu0 0.0
    %4245 = vmatprep.subr.mxu0 0.0
    %4246 = vmatpush1.msra.mxu0 0.0
    %4247 = vmatprep.subr.mxu0 0.0
    %4248 = vmatpush1.msra.mxu0 0.0
    %4249 = vmatprep.subr.mxu0 0.0
    %4250 = vmatpush1.msra.mxu0 0.0
    %4251 = vmatprep.subr.mxu0 0.0
    %4252 = vmatpush1.msra.mxu0 0.0
    %4253 = vmatprep.subr.mxu0 0.0
    %4254 = vmatpush1.msra.mxu0 0.0
    %4255 = vmatprep.subr.mxu0 0.0
    %4256 = vmatpush1.msra.mxu0 0.0
    %4257 = vmatprep.mubr.f32.mxu0 0.0
    %4258 = vmatmul.mubr.f32.gmra.mrb[0].mxu0 %v4182
    %v4259 = vpop.f32.mrb[0].mxu0
    %v4260 = vadd.f32 0.0, %v4259
    %v4261 = vpop.f32.mrb[0].mxu0
    %4262 = vmatprep.mubr.f32.mxu0 0.0
    %4263 = vmatmul.mubr.f32.gmra.mrb[0].mxu0 %v4185
    %v4264 = vpop.f32.mrb[0].mxu0
    %v4265 = vadd.f32 0.0, %v4264
    %v4266 = vpop.f32.mrb[0].mxu0
    %4267 = vmatprep.mubr.f32.mxu0 0.0
    %4268 = vmatmul.mubr.f32.gmra.mrb[0].mxu0 %v4188
    %v4269 = vpop.f32.mrb[0].mxu0
    %v4270 = vadd.f32 0.0, %v4269
    %v4271 = vpop.f32.mrb[0].mxu0
    %4272 = vmatprep.mubr.f32.mxu0 0.0
    %4273 = vmatmul.mubr.f32.gmra.mrb[0].mxu0 %v4191
    %v4274 = vpop.f32.mrb[0].mxu0
    %v4275 = vadd.f32 0.0, %v4274
    %v4276 = vpop.f32.mrb[0].mxu0
    %4277 = vdwg.mxu0
    %4282 = vrot.lane.b32.xlu0 %v4260, 96
    %v4283 = vpop.permute.xlu0 %4282
    %4284 = vrot.lane.b32.xlu0 %v4265, 96
    %v4285 = vpop.permute.xlu0 %4284
    %4286 = vrot.lane.b32.xlu0 %v4270, 96
    %v4287 = vpop.permute.xlu0 %4286
    %4288 = vrot.lane.b32.xlu0 %v4275, 96
    %v4289 = vpop.permute.xlu0 %4288
    %4294 = vst.msk [vmem:[#allocation2] sm:$0xff] %vm1749, %v4283
    %4295 = vst.msk [vmem:[#allocation2 + $0x8] sm:$0xff] %vm1749, %v4285
    %4296 = vst.msk [vmem:[#allocation2 + $0x10] sm:$0xff] %vm1749, %v4287
    %4297 = vst.msk [vmem:[#allocation2 + $0x18] sm:$0xff] %vm1749, %v4289
    %v4298 = vld [vmem:[#allocation2] sm:$0xff]
    %v4299 = vld [vmem:[#allocation2 + $0x8] sm:$0xff]
    %v4300 = vld [vmem:[#allocation2 + $0x10] sm:$0xff]
    %v4301 = vld [vmem:[#allocation2 + $0x18] sm:$0xff]
    %v4302 = vpack.c.bf16 %v4299, %v4298
    %v4303 = vpack.c.bf16 %v4301, %v4300
    %s4304 = scalar_lea.vmem [#allocation8], 64
    %v4305 = vld [vmem:[%s4304] sm:$0xf]
    %v4306 = vld [vmem:[%s4304 + $0x4] sm:$0xf]
    %v4307 = vld [vmem:[%s4304 + $0x8] sm:$0xf]
    %v4308 = vld [vmem:[%s4304 + $0xc] sm:$0xf]
    %v4309 = vld [vmem:[%s4304 + $0x10] sm:$0xf]
    %v4310 = vld [vmem:[%s4304 + $0x14] sm:$0xf]
    %v4311 = vld [vmem:[%s4304 + $0x18] sm:$0xf]
    %v4312 = vld [vmem:[%s4304 + $0x1c] sm:$0xf]
    %v4313 = vld [vmem:[%s4304 + $0x20] sm:$0xf]
    %v4314 = vld [vmem:[%s4304 + $0x24] sm:$0xf]
    %v4315 = vld [vmem:[%s4304 + $0x28] sm:$0xf]
    %v4316 = vld [vmem:[%s4304 + $0x2c] sm:$0xf]
    %v4317 = vld [vmem:[%s4304 + $0x30] sm:$0xf]
    %v4318 = vld [vmem:[%s4304 + $0x34] sm:$0xf]
    %v4319 = vld [vmem:[%s4304 + $0x38] sm:$0xf]
    %v4320 = vld [vmem:[%s4304 + $0x3c] sm:$0xf]
    %s4321 = scalar_lea.vmem %s7, 1
    %v4322 = vld [vmem:[%s4321] sm:$0x1]
    %v4324 = vlaneseq
    %v4325 = vshrl.u32 %v4324, 7
    %v4326 = vsub.s32 0, %v4325
    %v4327 = vrot.slane %v4322, %v4326
    %v4345 = vunpack.c.l.b16 %v4305
    %v4346 = vunpack.c.l.b16 %v4306
    %v4347 = vunpack.c.l.b16 %v4307
    %v4348 = vunpack.c.l.b16 %v4308
    %v4349 = vunpack.c.l.b16 %v4309
    %v4350 = vunpack.c.l.b16 %v4310
    %v4351 = vunpack.c.l.b16 %v4311
    %v4352 = vunpack.c.l.b16 %v4312
    %v4353 = vunpack.c.l.b16 %v4313
    %v4354 = vunpack.c.l.b16 %v4314
    %v4355 = vunpack.c.l.b16 %v4315
    %v4356 = vunpack.c.l.b16 %v4316
    %v4357 = vunpack.c.l.b16 %v4317
    %v4358 = vunpack.c.l.b16 %v4318
    %v4359 = vunpack.c.l.b16 %v4319
    %v4360 = vunpack.c.l.b16 %v4320
    %v4361 = vpack.c.b16 %v4346, %v4345
    %v4362 = vpack.c.b16 %v4348, %v4347
    %v4363 = vpack.c.b16 %v4350, %v4349
    %v4364 = vpack.c.b16 %v4352, %v4351
    %v4365 = vpack.c.b16 %v4354, %v4353
    %v4366 = vpack.c.b16 %v4356, %v4355
    %v4367 = vpack.c.b16 %v4358, %v4357
    %v4368 = vpack.c.b16 %v4360, %v4359
    %4377 = vmatprep.subr.bf16.mxu0 0
    %4378 = vmatpush1.bf16.msra.mxu0 %v4361
    %4379 = vmatprep.subr.bf16.mxu0 0
    %4380 = vmatpush1.bf16.msra.mxu0 %v4362
    %4381 = vmatprep.subr.bf16.mxu0 0
    %4382 = vmatpush1.bf16.msra.mxu0 %v4363
    %4383 = vmatprep.subr.bf16.mxu0 0
    %4384 = vmatpush1.bf16.msra.mxu0 %v4364
    %4385 = vmatprep.subr.bf16.mxu0 0
    %4386 = vmatpush1.bf16.msra.mxu0 %v4365
    %4387 = vmatprep.subr.bf16.mxu0 0
    %4388 = vmatpush1.bf16.msra.mxu0 %v4366
    %4389 = vmatprep.subr.bf16.mxu0 0
    %4390 = vmatpush1.bf16.msra.mxu0 %v4367
    %4391 = vmatprep.subr.bf16.mxu0 0
    %4392 = vmatpush1.bf16.msra.mxu0 %v4368
    %4393 = vmatprep.subr.bf16.mxu0 0
    %4394 = vmatpush1.bf16.msra.mxu0 0
    %4395 = vmatprep.subr.bf16.mxu0 0
    %4396 = vmatpush1.bf16.msra.mxu0 0
    %4397 = vmatprep.subr.bf16.mxu0 0
    %4398 = vmatpush1.bf16.msra.mxu0 0
    %4399 = vmatprep.subr.bf16.mxu0 0
    %4400 = vmatpush1.bf16.msra.mxu0 0
    %4401 = vmatprep.subr.bf16.mxu0 0
    %4402 = vmatpush1.bf16.msra.mxu0 0
    %4403 = vmatprep.subr.bf16.mxu0 0
    %4404 = vmatpush1.bf16.msra.mxu0 0
    %4405 = vmatprep.subr.bf16.mxu0 0
    %4406 = vmatpush1.bf16.msra.mxu0 0
    %4407 = vmatprep.subr.bf16.mxu0 0
    %4408 = vmatpush1.bf16.msra.mxu0 0
    %4409 = vmatprep.mubr.bf16.mxu0 0
    %4410 = vmatmul.mubr.bf16.gmra.mrb[0].mxu0 %v4302
    %v4411 = vpop.f32.mrb[0].mxu0
    %v4412 = vadd.f32 %v4327, %v4411
    %v4413 = vpop.f32.mrb[0].mxu0
    %v4414 = vpop.f32.mrb[0].mxu0
    %v4415 = vadd.f32 %v4327, %v4414
    %v4416 = vpop.f32.mrb[0].mxu0
    %4417 = vmatprep.mubr.bf16.mxu0 0
    %4418 = vmatmul.mubr.bf16.gmra.mrb[0].mxu0 %v4303
    %v4419 = vpop.f32.mrb[0].mxu0
    %v4420 = vadd.f32 %v4327, %v4419
    %v4421 = vpop.f32.mrb[0].mxu0
    %v4422 = vpop.f32.mrb[0].mxu0
    %v4423 = vadd.f32 %v4327, %v4422
    %v4424 = vpop.f32.mrb[0].mxu0
    %4425 = vdwg.mxu0
    %v4426 = vadd.f32 %v4412, %v2851
    %v4427 = vadd.f32 %v4415, %v2852
    %v4428 = vadd.f32 %v4420, %v2853
    %v4429 = vadd.f32 %v4423, %v2854
    %s4430 = scalar_lea.vmem [#allocation9], 1
    %v4431 = vld [vmem:[%s4430] sm:$0x1]
    %s4432 = scalar_lea.vmem [#allocation11], 1
    %v4433 = vld [vmem:[%s4432] sm:$0x1]
    %4434 = vadd.xlane.f32.xlu0 %v4426
    %v4435 = vpop.xlane.xlu0 %4434
    %4436 = vadd.xlane.f32.xlu0 %v4427
    %v4437 = vpop.xlane.xlu0 %4436
    %4438 = vadd.xlane.f32.xlu0 %v4428
    %v4439 = vpop.xlane.xlu0 %4438
    %4440 = vadd.xlane.f32.xlu0 %v4429
    %v4441 = vpop.xlane.xlu0 %4440
    %v4442 = vmul.f32 %v4435, %v236
    %v4443 = vmul.f32 %v4437, %v236
    %v4444 = vmul.f32 %v4439, %v236
    %v4445 = vmul.f32 %v4441, %v236
    %v4446 = vsub.f32 %v4426, %v4442
    %v4447 = vsub.f32 %v4427, %v4443
    %v4448 = vsub.f32 %v4428, %v4444
    %v4449 = vsub.f32 %v4429, %v4445
    %v4450 = vmul.f32 %v4446, %v4446
    %v4451 = vmul.f32 %v4447, %v4447
    %v4452 = vmul.f32 %v4448, %v4448
    %v4453 = vmul.f32 %v4449, %v4449
    %4454 = vadd.xlane.f32.xlu0 %v4450
    %v4455 = vpop.xlane.xlu0 %4454
    %4456 = vadd.xlane.f32.xlu0 %v4451
    %v4457 = vpop.xlane.xlu0 %4456
    %4458 = vadd.xlane.f32.xlu0 %v4452
    %v4459 = vpop.xlane.xlu0 %4458
    %4460 = vadd.xlane.f32.xlu0 %v4453
    %v4461 = vpop.xlane.xlu0 %4460
    %v4462 = vmul.f32 %v4455, %v236
    %v4463 = vmul.f32 %v4457, %v236
    %v4464 = vmul.f32 %v4459, %v236
    %v4465 = vmul.f32 %v4461, %v236
    %v4466 = vadd.f32 %v4462, 1e-12
    %v4467 = vadd.f32 %v4463, 1e-12
    %v4468 = vadd.f32 %v4464, 1e-12
    %v4469 = vadd.f32 %v4465, 1e-12
    %v4470 = vrsqrt.pop %v4466
    %v4471 = vrsqrt.pop %v4467
    %v4472 = vrsqrt.pop %v4468
    %v4473 = vrsqrt.pop %v4469
    %v4474 = vmul.f32 %v4446, %v4470
    %v4475 = vmul.f32 %v4447, %v4471
    %v4476 = vmul.f32 %v4448, %v4472
    %v4477 = vmul.f32 %v4449, %v4473
    %v4479 = vlaneseq
    %v4480 = vshrl.u32 %v4479, 7
    %v4481 = vsub.s32 0, %v4480
    %v4482 = vrot.slane %v4431, %v4481
    %v4484 = vmul.f32 %v4474, %v4482
    %v4485 = vmul.f32 %v4475, %v4482
    %v4486 = vmul.f32 %v4476, %v4482
    %v4487 = vmul.f32 %v4477, %v4482
    %v4489 = vlaneseq
    %v4490 = vshrl.u32 %v4489, 7
    %v4491 = vsub.s32 0, %v4490
    %v4492 = vrot.slane %v4433, %v4491
    %v4494 = vadd.f32 %v4484, %v4492
    %v4495 = vadd.f32 %v4485, %v4492
    %v4496 = vadd.f32 %v4486, %v4492
    %v4497 = vadd.f32 %v4487, %v4492
    %v4498 = vpack.c.bf16 %v4495, %v4494
    %v4499 = vpack.c.bf16 %v4497, %v4496
    %s4500 = scalar_lea.vmem [#allocation12], 256
    %v4501 = vld [vmem:[%s4500] sm:$0xff]
    %v4502 = vld [vmem:[%s4500 + $0x8] sm:$0xff]
    %v4503 = vld [vmem:[%s4500 + $0x10] sm:$0xff]
    %v4504 = vld [vmem:[%s4500 + $0x18] sm:$0xff]
    %v4505 = vld [vmem:[%s4500 + $0x20] sm:$0xff]
    %v4506 = vld [vmem:[%s4500 + $0x28] sm:$0xff]
    %v4507 = vld [vmem:[%s4500 + $0x30] sm:$0xff]
    %v4508 = vld [vmem:[%s4500 + $0x38] sm:$0xff]
    %v4509 = vld [vmem:[%s4500 + $0x40] sm:$0xff]
    %v4510 = vld [vmem:[%s4500 + $0x48] sm:$0xff]
    %v4511 = vld [vmem:[%s4500 + $0x50] sm:$0xff]
    %v4512 = vld [vmem:[%s4500 + $0x58] sm:$0xff]
    %v4513 = vld [vmem:[%s4500 + $0x60] sm:$0xff]
    %v4514 = vld [vmem:[%s4500 + $0x68] sm:$0xff]
    %v4515 = vld [vmem:[%s4500 + $0x70] sm:$0xff]
    %v4516 = vld [vmem:[%s4500 + $0x78] sm:$0xff]
    %v4517 = vld [vmem:[%s4500 + $0x80] sm:$0xff]
    %v4518 = vld [vmem:[%s4500 + $0x88] sm:$0xff]
    %v4519 = vld [vmem:[%s4500 + $0x90] sm:$0xff]
    %v4520 = vld [vmem:[%s4500 + $0x98] sm:$0xff]
    %v4521 = vld [vmem:[%s4500 + $0xa0] sm:$0xff]
    %v4522 = vld [vmem:[%s4500 + $0xa8] sm:$0xff]
    %v4523 = vld [vmem:[%s4500 + $0xb0] sm:$0xff]
    %v4524 = vld [vmem:[%s4500 + $0xb8] sm:$0xff]
    %v4525 = vld [vmem:[%s4500 + $0xc0] sm:$0xff]
    %v4526 = vld [vmem:[%s4500 + $0xc8] sm:$0xff]
    %v4527 = vld [vmem:[%s4500 + $0xd0] sm:$0xff]
    %v4528 = vld [vmem:[%s4500 + $0xd8] sm:$0xff]
    %v4529 = vld [vmem:[%s4500 + $0xe0] sm:$0xff]
    %v4530 = vld [vmem:[%s4500 + $0xe8] sm:$0xff]
    %v4531 = vld [vmem:[%s4500 + $0xf0] sm:$0xff]
    %v4532 = vld [vmem:[%s4500 + $0xf8] sm:$0xff]
    %s4533 = scalar_lea.vmem %s11, 4
    %v4534 = vld [vmem:[%s4533] sm:$0xf]
    %v4536 = vlaneseq
    %v4537 = vshrl.u32 %v4536, 7
    %v4538 = vsub.s32 0, %v4537
    %v4539 = vrot.slane %v4534, %v4538
    %v4540 = vlaneseq
    %v4541 = vshrl.u32 %v4540, 7
    %v4542 = vsub.s32 1, %v4541
    %v4543 = vrot.slane %v4534, %v4542
    %v4544 = vlaneseq
    %v4545 = vshrl.u32 %v4544, 7
    %v4546 = vsub.s32 2, %v4545
    %v4547 = vrot.slane %v4534, %v4546
    %v4548 = vlaneseq
    %v4549 = vshrl.u32 %v4548, 7
    %v4550 = vsub.s32 3, %v4549
    %v4551 = vrot.slane %v4534, %v4550
    %v4588 = vunpack.c.l.b16 %v4501
    %v4589 = vunpack.c.h.b16 %v4501
    %v4590 = vunpack.c.l.b16 %v4502
    %v4591 = vunpack.c.h.b16 %v4502
    %v4592 = vunpack.c.l.b16 %v4503
    %v4593 = vunpack.c.h.b16 %v4503
    %v4594 = vunpack.c.l.b16 %v4504
    %v4595 = vunpack.c.h.b16 %v4504
    %v4596 = vunpack.c.l.b16 %v4505
    %v4597 = vunpack.c.h.b16 %v4505
    %v4598 = vunpack.c.l.b16 %v4506
    %v4599 = vunpack.c.h.b16 %v4506
    %v4600 = vunpack.c.l.b16 %v4507
    %v4601 = vunpack.c.h.b16 %v4507
    %v4602 = vunpack.c.l.b16 %v4508
    %v4603 = vunpack.c.h.b16 %v4508
    %v4604 = vunpack.c.l.b16 %v4509
    %v4605 = vunpack.c.h.b16 %v4509
    %v4606 = vunpack.c.l.b16 %v4510
    %v4607 = vunpack.c.h.b16 %v4510
    %v4608 = vunpack.c.l.b16 %v4511
    %v4609 = vunpack.c.h.b16 %v4511
    %v4610 = vunpack.c.l.b16 %v4512
    %v4611 = vunpack.c.h.b16 %v4512
    %v4612 = vunpack.c.l.b16 %v4513
    %v4613 = vunpack.c.h.b16 %v4513
    %v4614 = vunpack.c.l.b16 %v4514
    %v4615 = vunpack.c.h.b16 %v4514
    %v4616 = vunpack.c.l.b16 %v4515
    %v4617 = vunpack.c.h.b16 %v4515
    %v4618 = vunpack.c.l.b16 %v4516
    %v4619 = vunpack.c.h.b16 %v4516
    %v4620 = vunpack.c.l.b16 %v4517
    %v4621 = vunpack.c.h.b16 %v4517
    %v4622 = vunpack.c.l.b16 %v4518
    %v4623 = vunpack.c.h.b16 %v4518
    %v4624 = vunpack.c.l.b16 %v4519
    %v4625 = vunpack.c.h.b16 %v4519
    %v4626 = vunpack.c.l.b16 %v4520
    %v4627 = vunpack.c.h.b16 %v4520
    %v4628 = vunpack.c.l.b16 %v4521
    %v4629 = vunpack.c.h.b16 %v4521
    %v4630 = vunpack.c.l.b16 %v4522
    %v4631 = vunpack.c.h.b16 %v4522
    %v4632 = vunpack.c.l.b16 %v4523
    %v4633 = vunpack.c.h.b16 %v4523
    %v4634 = vunpack.c.l.b16 %v4524
    %v4635 = vunpack.c.h.b16 %v4524
    %v4636 = vunpack.c.l.b16 %v4525
    %v4637 = vunpack.c.h.b16 %v4525
    %v4638 = vunpack.c.l.b16 %v4526
    %v4639 = vunpack.c.h.b16 %v4526
    %v4640 = vunpack.c.l.b16 %v4527
    %v4641 = vunpack.c.h.b16 %v4527
    %v4642 = vunpack.c.l.b16 %v4528
    %v4643 = vunpack.c.h.b16 %v4528
    %v4644 = vunpack.c.l.b16 %v4529
    %v4645 = vunpack.c.h.b16 %v4529
    %v4646 = vunpack.c.l.b16 %v4530
    %v4647 = vunpack.c.h.b16 %v4530
    %v4648 = vunpack.c.l.b16 %v4531
    %v4649 = vunpack.c.h.b16 %v4531
    %v4650 = vunpack.c.l.b16 %v4532
    %v4651 = vunpack.c.h.b16 %v4532
    %v4652 = vpack.c.b16 %v4592, %v4588
    %v4653 = vpack.c.b16 %v4593, %v4589
    %v4654 = vpack.c.b16 %v4594, %v4590
    %v4655 = vpack.c.b16 %v4595, %v4591
    %v4656 = vpack.c.b16 %v4600, %v4596
    %v4657 = vpack.c.b16 %v4601, %v4597
    %v4658 = vpack.c.b16 %v4602, %v4598
    %v4659 = vpack.c.b16 %v4603, %v4599
    %v4660 = vpack.c.b16 %v4608, %v4604
    %v4661 = vpack.c.b16 %v4609, %v4605
    %v4662 = vpack.c.b16 %v4610, %v4606
    %v4663 = vpack.c.b16 %v4611, %v4607
    %v4664 = vpack.c.b16 %v4616, %v4612
    %v4665 = vpack.c.b16 %v4617, %v4613
    %v4666 = vpack.c.b16 %v4618, %v4614
    %v4667 = vpack.c.b16 %v4619, %v4615
    %v4668 = vpack.c.b16 %v4624, %v4620
    %v4669 = vpack.c.b16 %v4625, %v4621
    %v4670 = vpack.c.b16 %v4626, %v4622
    %v4671 = vpack.c.b16 %v4627, %v4623
    %v4672 = vpack.c.b16 %v4632, %v4628
    %v4673 = vpack.c.b16 %v4633, %v4629
    %v4674 = vpack.c.b16 %v4634, %v4630
    %v4675 = vpack.c.b16 %v4635, %v4631
    %v4676 = vpack.c.b16 %v4640, %v4636
    %v4677 = vpack.c.b16 %v4641, %v4637
    %v4678 = vpack.c.b16 %v4642, %v4638
    %v4679 = vpack.c.b16 %v4643, %v4639
    %v4680 = vpack.c.b16 %v4648, %v4644
    %v4681 = vpack.c.b16 %v4649, %v4645
    %v4682 = vpack.c.b16 %v4650, %v4646
    %v4683 = vpack.c.b16 %v4651, %v4647
    %4716 = vmatprep.subr.bf16.mxu0 %v4653
    %4717 = vmatpush1.bf16.msra.mxu0 %v4652
    %4718 = vmatprep.subr.bf16.mxu0 %v4657
    %4719 = vmatpush1.bf16.msra.mxu0 %v4656
    %4720 = vmatprep.subr.bf16.mxu0 %v4661
    %4721 = vmatpush1.bf16.msra.mxu0 %v4660
    %4722 = vmatprep.subr.bf16.mxu0 %v4665
    %4723 = vmatpush1.bf16.msra.mxu0 %v4664
    %4724 = vmatprep.subr.bf16.mxu0 %v4669
    %4725 = vmatpush1.bf16.msra.mxu0 %v4668
    %4726 = vmatprep.subr.bf16.mxu0 %v4673
    %4727 = vmatpush1.bf16.msra.mxu0 %v4672
    %4728 = vmatprep.subr.bf16.mxu0 %v4677
    %4729 = vmatpush1.bf16.msra.mxu0 %v4676
    %4730 = vmatprep.subr.bf16.mxu0 %v4681
    %4731 = vmatpush1.bf16.msra.mxu0 %v4680
    %4732 = vmatprep.subr.bf16.mxu0 0
    %4733 = vmatpush1.bf16.msra.mxu0 0
    %4734 = vmatprep.subr.bf16.mxu0 0
    %4735 = vmatpush1.bf16.msra.mxu0 0
    %4736 = vmatprep.subr.bf16.mxu0 0
    %4737 = vmatpush1.bf16.msra.mxu0 0
    %4738 = vmatprep.subr.bf16.mxu0 0
    %4739 = vmatpush1.bf16.msra.mxu0 0
    %4740 = vmatprep.subr.bf16.mxu0 0
    %4741 = vmatpush1.bf16.msra.mxu0 0
    %4742 = vmatprep.subr.bf16.mxu0 0
    %4743 = vmatpush1.bf16.msra.mxu0 0
    %4744 = vmatprep.subr.bf16.mxu0 0
    %4745 = vmatpush1.bf16.msra.mxu0 0
    %4746 = vmatprep.subr.bf16.mxu0 0
    %4747 = vmatpush1.bf16.msra.mxu0 0
    %4748 = vmatprep.mubr.bf16.mxu0 0
    %4749 = vmatmul.mubr.bf16.gmra.mrb[0].mxu0 %v4498
    %v4750 = vpop.f32.mrb[0].mxu0
    %v4751 = vadd.f32 %v4539, %v4750
    %v4752 = vpop.f32.mrb[0].mxu0
    %v4753 = vadd.f32 %v4543, %v4752
    %v4754 = vpop.f32.mrb[0].mxu0
    %v4755 = vadd.f32 %v4539, %v4754
    %v4756 = vpop.f32.mrb[0].mxu0
    %v4757 = vadd.f32 %v4543, %v4756
    %4758 = vmatprep.mubr.bf16.mxu0 0
    %4759 = vmatmul.mubr.bf16.gmra.mrb[0].mxu0 %v4499
    %v4760 = vpop.f32.mrb[0].mxu0
    %v4761 = vadd.f32 %v4539, %v4760
    %v4762 = vpop.f32.mrb[0].mxu0
    %v4763 = vadd.f32 %v4543, %v4762
    %v4764 = vpop.f32.mrb[0].mxu0
    %v4765 = vadd.f32 %v4539, %v4764
    %v4766 = vpop.f32.mrb[0].mxu0
    %v4767 = vadd.f32 %v4543, %v4766
    %4768 = vdwg.mxu0
    %4769 = vmatprep.subr.bf16.mxu0 %v4655
    %4770 = vmatpush1.bf16.msra.mxu0 %v4654
    %4771 = vmatprep.subr.bf16.mxu0 %v4659
    %4772 = vmatpush1.bf16.msra.mxu0 %v4658
    %4773 = vmatprep.subr.bf16.mxu0 %v4663
    %4774 = vmatpush1.bf16.msra.mxu0 %v4662
    %4775 = vmatprep.subr.bf16.mxu0 %v4667
    %4776 = vmatpush1.bf16.msra.mxu0 %v4666
    %4777 = vmatprep.subr.bf16.mxu0 %v4671
    %4778 = vmatpush1.bf16.msra.mxu0 %v4670
    %4779 = vmatprep.subr.bf16.mxu0 %v4675
    %4780 = vmatpush1.bf16.msra.mxu0 %v4674
    %4781 = vmatprep.subr.bf16.mxu0 %v4679
    %4782 = vmatpush1.bf16.msra.mxu0 %v4678
    %4783 = vmatprep.subr.bf16.mxu0 %v4683
    %4784 = vmatpush1.bf16.msra.mxu0 %v4682
    %4785 = vmatprep.subr.bf16.mxu0 0
    %4786 = vmatpush1.bf16.msra.mxu0 0
    %4787 = vmatprep.subr.bf16.mxu0 0
    %4788 = vmatpush1.bf16.msra.mxu0 0
    %4789 = vmatprep.subr.bf16.mxu0 0
    %4790 = vmatpush1.bf16.msra.mxu0 0
    %4791 = vmatprep.subr.bf16.mxu0 0
    %4792 = vmatpush1.bf16.msra.mxu0 0
    %4793 = vmatprep.subr.bf16.mxu0 0
    %4794 = vmatpush1.bf16.msra.mxu0 0
    %4795 = vmatprep.subr.bf16.mxu0 0
    %4796 = vmatpush1.bf16.msra.mxu0 0
    %4797 = vmatprep.subr.bf16.mxu0 0
    %4798 = vmatpush1.bf16.msra.mxu0 0
    %4799 = vmatprep.subr.bf16.mxu0 0
    %4800 = vmatpush1.bf16.msra.mxu0 0
    %4801 = vmatprep.mubr.bf16.mxu0 0
    %4802 = vmatmul.mubr.bf16.gmra.mrb[0].mxu0 %v4498
    %v4803 = vpop.f32.mrb[0].mxu0
    %v4804 = vadd.f32 %v4547, %v4803
    %v4805 = vpop.f32.mrb[0].mxu0
    %v4806 = vadd.f32 %v4551, %v4805
    %v4807 = vpop.f32.mrb[0].mxu0
    %v4808 = vadd.f32 %v4547, %v4807
    %v4809 = vpop.f32.mrb[0].mxu0
    %v4810 = vadd.f32 %v4551, %v4809
    %4811 = vmatprep.mubr.bf16.mxu0 0
    %4812 = vmatmul.mubr.bf16.gmra.mrb[0].mxu0 %v4499
    %v4813 = vpop.f32.mrb[0].mxu0
    %v4814 = vadd.f32 %v4547, %v4813
    %v4815 = vpop.f32.mrb[0].mxu0
    %v4816 = vadd.f32 %v4551, %v4815
    %v4817 = vpop.f32.mrb[0].mxu0
    %v4818 = vadd.f32 %v4547, %v4817
    %v4819 = vpop.f32.mrb[0].mxu0
    %v4820 = vadd.f32 %v4551, %v4819
    %4821 = vdwg.mxu0
    %v4822 = vmul.f32 %v4751, %v4751
    %v4823 = vmul.f32 %v4753, %v4753
    %v4824 = vmul.f32 %v4804, %v4804
    %v4825 = vmul.f32 %v4806, %v4806
    %v4826 = vmul.f32 %v4755, %v4755
    %v4827 = vmul.f32 %v4757, %v4757
    %v4828 = vmul.f32 %v4808, %v4808
    %v4829 = vmul.f32 %v4810, %v4810
    %v4830 = vmul.f32 %v4761, %v4761
    %v4831 = vmul.f32 %v4763, %v4763
    %v4832 = vmul.f32 %v4814, %v4814
    %v4833 = vmul.f32 %v4816, %v4816
    %v4834 = vmul.f32 %v4765, %v4765
    %v4835 = vmul.f32 %v4767, %v4767
    %v4836 = vmul.f32 %v4818, %v4818
    %v4837 = vmul.f32 %v4820, %v4820
    %v4838 = vmul.f32 %v4751, %v4822
    %v4839 = vmul.f32 %v4753, %v4823
    %v4840 = vmul.f32 %v4804, %v4824
    %v4841 = vmul.f32 %v4806, %v4825
    %v4842 = vmul.f32 %v4755, %v4826
    %v4843 = vmul.f32 %v4757, %v4827
    %v4844 = vmul.f32 %v4808, %v4828
    %v4845 = vmul.f32 %v4810, %v4829
    %v4846 = vmul.f32 %v4761, %v4830
    %v4847 = vmul.f32 %v4763, %v4831
    %v4848 = vmul.f32 %v4814, %v4832
    %v4849 = vmul.f32 %v4816, %v4833
    %v4850 = vmul.f32 %v4765, %v4834
    %v4851 = vmul.f32 %v4767, %v4835
    %v4852 = vmul.f32 %v4818, %v4836
    %v4853 = vmul.f32 %v4820, %v4837
    %v4854 = vmul.f32 %v4838, 0.044715
    %v4855 = vmul.f32 %v4839, 0.044715
    %v4856 = vmul.f32 %v4840, 0.044715
    %v4857 = vmul.f32 %v4841, 0.044715
    %v4858 = vmul.f32 %v4842, 0.044715
    %v4859 = vmul.f32 %v4843, 0.044715
    %v4860 = vmul.f32 %v4844, 0.044715
    %v4861 = vmul.f32 %v4845, 0.044715
    %v4862 = vmul.f32 %v4846, 0.044715
    %v4863 = vmul.f32 %v4847, 0.044715
    %v4864 = vmul.f32 %v4848, 0.044715
    %v4865 = vmul.f32 %v4849, 0.044715
    %v4866 = vmul.f32 %v4850, 0.044715
    %v4867 = vmul.f32 %v4851, 0.044715
    %v4868 = vmul.f32 %v4852, 0.044715
    %v4869 = vmul.f32 %v4853, 0.044715
    %v4870 = vadd.f32 %v4751, %v4854
    %v4871 = vadd.f32 %v4753, %v4855
    %v4872 = vadd.f32 %v4804, %v4856
    %v4873 = vadd.f32 %v4806, %v4857
    %v4874 = vadd.f32 %v4755, %v4858
    %v4875 = vadd.f32 %v4757, %v4859
    %v4876 = vadd.f32 %v4808, %v4860
    %v4877 = vadd.f32 %v4810, %v4861
    %v4878 = vadd.f32 %v4761, %v4862
    %v4879 = vadd.f32 %v4763, %v4863
    %v4880 = vadd.f32 %v4814, %v4864
    %v4881 = vadd.f32 %v4816, %v4865
    %v4882 = vadd.f32 %v4765, %v4866
    %v4883 = vadd.f32 %v4767, %v4867
    %v4884 = vadd.f32 %v4818, %v4868
    %v4885 = vadd.f32 %v4820, %v4869
    %v4886 = vmul.f32 %v4870, 0.7978846
    %v4887 = vmul.f32 %v4871, 0.7978846
    %v4888 = vmul.f32 %v4872, 0.7978846
    %v4889 = vmul.f32 %v4873, 0.7978846
    %v4890 = vmul.f32 %v4874, 0.7978846
    %v4891 = vmul.f32 %v4875, 0.7978846
    %v4892 = vmul.f32 %v4876, 0.7978846
    %v4893 = vmul.f32 %v4877, 0.7978846
    %v4894 = vmul.f32 %v4878, 0.7978846
    %v4895 = vmul.f32 %v4879, 0.7978846
    %v4896 = vmul.f32 %v4880, 0.7978846
    %v4897 = vmul.f32 %v4881, 0.7978846
    %v4898 = vmul.f32 %v4882, 0.7978846
    %v4899 = vmul.f32 %v4883, 0.7978846
    %v4900 = vmul.f32 %v4884, 0.7978846
    %v4901 = vmul.f32 %v4885, 0.7978846
    %v4902 = vtanh.pop %v4886
    %v4903 = vtanh.pop %v4887
    %v4904 = vtanh.pop %v4888
    %v4905 = vtanh.pop %v4889
    %v4906 = vtanh.pop %v4890
    %v4907 = vtanh.pop %v4891
    %v4908 = vtanh.pop %v4892
    %v4909 = vtanh.pop %v4893
    %v4910 = vtanh.pop %v4894
    %v4911 = vtanh.pop %v4895
    %v4912 = vtanh.pop %v4896
    %v4913 = vtanh.pop %v4897
    %v4914 = vtanh.pop %v4898
    %v4915 = vtanh.pop %v4899
    %v4916 = vtanh.pop %v4900
    %v4917 = vtanh.pop %v4901
    %v4918 = vadd.f32 %v4902, 1.0
    %v4919 = vadd.f32 %v4903, 1.0
    %v4920 = vadd.f32 %v4904, 1.0
    %v4921 = vadd.f32 %v4905, 1.0
    %v4922 = vadd.f32 %v4906, 1.0
    %v4923 = vadd.f32 %v4907, 1.0
    %v4924 = vadd.f32 %v4908, 1.0
    %v4925 = vadd.f32 %v4909, 1.0
    %v4926 = vadd.f32 %v4910, 1.0
    %v4927 = vadd.f32 %v4911, 1.0
    %v4928 = vadd.f32 %v4912, 1.0
    %v4929 = vadd.f32 %v4913, 1.0
    %v4930 = vadd.f32 %v4914, 1.0
    %v4931 = vadd.f32 %v4915, 1.0
    %v4932 = vadd.f32 %v4916, 1.0
    %v4933 = vadd.f32 %v4917, 1.0
    %v4934 = vmul.f32 %v4918, 0.5
    %v4935 = vmul.f32 %v4919, 0.5
    %v4936 = vmul.f32 %v4920, 0.5
    %v4937 = vmul.f32 %v4921, 0.5
    %v4938 = vmul.f32 %v4922, 0.5
    %v4939 = vmul.f32 %v4923, 0.5
    %v4940 = vmul.f32 %v4924, 0.5
    %v4941 = vmul.f32 %v4925, 0.5
    %v4942 = vmul.f32 %v4926, 0.5
    %v4943 = vmul.f32 %v4927, 0.5
    %v4944 = vmul.f32 %v4928, 0.5
    %v4945 = vmul.f32 %v4929, 0.5
    %v4946 = vmul.f32 %v4930, 0.5
    %v4947 = vmul.f32 %v4931, 0.5
    %v4948 = vmul.f32 %v4932, 0.5
    %v4949 = vmul.f32 %v4933, 0.5
    %v4950 = vmul.f32 %v4751, %v4934
    %v4951 = vmul.f32 %v4753, %v4935
    %v4952 = vmul.f32 %v4804, %v4936
    %v4953 = vmul.f32 %v4806, %v4937
    %v4954 = vmul.f32 %v4755, %v4938
    %v4955 = vmul.f32 %v4757, %v4939
    %v4956 = vmul.f32 %v4808, %v4940
    %v4957 = vmul.f32 %v4810, %v4941
    %v4958 = vmul.f32 %v4761, %v4942
    %v4959 = vmul.f32 %v4763, %v4943
    %v4960 = vmul.f32 %v4814, %v4944
    %v4961 = vmul.f32 %v4816, %v4945
    %v4962 = vmul.f32 %v4765, %v4946
    %v4963 = vmul.f32 %v4767, %v4947
    %v4964 = vmul.f32 %v4818, %v4948
    %v4965 = vmul.f32 %v4820, %v4949
    %v4966 = vpack.c.bf16 %v4954, %v4950
    %v4967 = vpack.c.bf16 %v4955, %v4951
    %v4968 = vpack.c.bf16 %v4956, %v4952
    %v4969 = vpack.c.bf16 %v4957, %v4953
    %v4970 = vpack.c.bf16 %v4962, %v4958
    %v4971 = vpack.c.bf16 %v4963, %v4959
    %v4972 = vpack.c.bf16 %v4964, %v4960
    %v4973 = vpack.c.bf16 %v4965, %v4961
    %s4974 = scalar_lea.vmem [#allocation14], 256
    %v4975 = vld [vmem:[%s4974] sm:$0xf]
    %v4976 = vld [vmem:[%s4974 + $0x4] sm:$0xf]
    %v4977 = vld [vmem:[%s4974 + $0x8] sm:$0xf]
    %v4978 = vld [vmem:[%s4974 + $0xc] sm:$0xf]
    %v4979 = vld [vmem:[%s4974 + $0x10] sm:$0xf]
    %v4980 = vld [vmem:[%s4974 + $0x14] sm:$0xf]
    %v4981 = vld [vmem:[%s4974 + $0x18] sm:$0xf]
    %v4982 = vld [vmem:[%s4974 + $0x1c] sm:$0xf]
    %v4983 = vld [vmem:[%s4974 + $0x20] sm:$0xf]
    %v4984 = vld [vmem:[%s4974 + $0x24] sm:$0xf]
    %v4985 = vld [vmem:[%s4974 + $0x28] sm:$0xf]
    %v4986 = vld [vmem:[%s4974 + $0x2c] sm:$0xf]
    %v4987 = vld [vmem:[%s4974 + $0x30] sm:$0xf]
    %v4988 = vld [vmem:[%s4974 + $0x34] sm:$0xf]
    %v4989 = vld [vmem:[%s4974 + $0x38] sm:$0xf]
    %v4990 = vld [vmem:[%s4974 + $0x3c] sm:$0xf]
    %v4991 = vld [vmem:[%s4974 + $0x40] sm:$0xf]
    %v4992 = vld [vmem:[%s4974 + $0x44] sm:$0xf]
    %v4993 = vld [vmem:[%s4974 + $0x48] sm:$0xf]
    %v4994 = vld [vmem:[%s4974 + $0x4c] sm:$0xf]
    %v4995 = vld [vmem:[%s4974 + $0x50] sm:$0xf]
    %v4996 = vld [vmem:[%s4974 + $0x54] sm:$0xf]
    %v4997 = vld [vmem:[%s4974 + $0x58] sm:$0xf]
    %v4998 = vld [vmem:[%s4974 + $0x5c] sm:$0xf]
    %v4999 = vld [vmem:[%s4974 + $0x60] sm:$0xf]
    %v5000 = vld [vmem:[%s4974 + $0x64] sm:$0xf]
    %v5001 = vld [vmem:[%s4974 + $0x68] sm:$0xf]
    %v5002 = vld [vmem:[%s4974 + $0x6c] sm:$0xf]
    %v5003 = vld [vmem:[%s4974 + $0x70] sm:$0xf]
    %v5004 = vld [vmem:[%s4974 + $0x74] sm:$0xf]
    %v5005 = vld [vmem:[%s4974 + $0x78] sm:$0xf]
    %v5006 = vld [vmem:[%s4974 + $0x7c] sm:$0xf]
    %v5007 = vld [vmem:[%s4974 + $0x80] sm:$0xf]
    %v5008 = vld [vmem:[%s4974 + $0x84] sm:$0xf]
    %v5009 = vld [vmem:[%s4974 + $0x88] sm:$0xf]
    %v5010 = vld [vmem:[%s4974 + $0x8c] sm:$0xf]
    %v5011 = vld [vmem:[%s4974 + $0x90] sm:$0xf]
    %v5012 = vld [vmem:[%s4974 + $0x94] sm:$0xf]
    %v5013 = vld [vmem:[%s4974 + $0x98] sm:$0xf]
    %v5014 = vld [vmem:[%s4974 + $0x9c] sm:$0xf]
    %v5015 = vld [vmem:[%s4974 + $0xa0] sm:$0xf]
    %v5016 = vld [vmem:[%s4974 + $0xa4] sm:$0xf]
    %v5017 = vld [vmem:[%s4974 + $0xa8] sm:$0xf]
    %v5018 = vld [vmem:[%s4974 + $0xac] sm:$0xf]
    %v5019 = vld [vmem:[%s4974 + $0xb0] sm:$0xf]
    %v5020 = vld [vmem:[%s4974 + $0xb4] sm:$0xf]
    %v5021 = vld [vmem:[%s4974 + $0xb8] sm:$0xf]
    %v5022 = vld [vmem:[%s4974 + $0xbc] sm:$0xf]
    %v5023 = vld [vmem:[%s4974 + $0xc0] sm:$0xf]
    %v5024 = vld [vmem:[%s4974 + $0xc4] sm:$0xf]
    %v5025 = vld [vmem:[%s4974 + $0xc8] sm:$0xf]
    %v5026 = vld [vmem:[%s4974 + $0xcc] sm:$0xf]
    %v5027 = vld [vmem:[%s4974 + $0xd0] sm:$0xf]
    %v5028 = vld [vmem:[%s4974 + $0xd4] sm:$0xf]
    %v5029 = vld [vmem:[%s4974 + $0xd8] sm:$0xf]
    %v5030 = vld [vmem:[%s4974 + $0xdc] sm:$0xf]
    %v5031 = vld [vmem:[%s4974 + $0xe0] sm:$0xf]
    %v5032 = vld [vmem:[%s4974 + $0xe4] sm:$0xf]
    %v5033 = vld [vmem:[%s4974 + $0xe8] sm:$0xf]
    %v5034 = vld [vmem:[%s4974 + $0xec] sm:$0xf]
    %v5035 = vld [vmem:[%s4974 + $0xf0] sm:$0xf]
    %v5036 = vld [vmem:[%s4974 + $0xf4] sm:$0xf]
    %v5037 = vld [vmem:[%s4974 + $0xf8] sm:$0xf]
    %v5038 = vld [vmem:[%s4974 + $0xfc] sm:$0xf]
    %s5039 = scalar_lea.vmem %s13, 1
    %v5040 = vld [vmem:[%s5039] sm:$0x1]
    %v5042 = vlaneseq
    %v5043 = vshrl.u32 %v5042, 7
    %v5044 = vsub.s32 0, %v5043
    %v5045 = vrot.slane %v5040, %v5044
    %v5111 = vunpack.c.l.b16 %v4975
    %v5112 = vunpack.c.l.b16 %v4976
    %v5113 = vunpack.c.l.b16 %v4977
    %v5114 = vunpack.c.l.b16 %v4978
    %v5115 = vunpack.c.l.b16 %v4979
    %v5116 = vunpack.c.l.b16 %v4980
    %v5117 = vunpack.c.l.b16 %v4981
    %v5118 = vunpack.c.l.b16 %v4982
    %v5119 = vunpack.c.l.b16 %v4983
    %v5120 = vunpack.c.l.b16 %v4984
    %v5121 = vunpack.c.l.b16 %v4985
    %v5122 = vunpack.c.l.b16 %v4986
    %v5123 = vunpack.c.l.b16 %v4987
    %v5124 = vunpack.c.l.b16 %v4988
    %v5125 = vunpack.c.l.b16 %v4989
    %v5126 = vunpack.c.l.b16 %v4990
    %v5127 = vunpack.c.l.b16 %v4991
    %v5128 = vunpack.c.l.b16 %v4992
    %v5129 = vunpack.c.l.b16 %v4993
    %v5130 = vunpack.c.l.b16 %v4994
    %v5131 = vunpack.c.l.b16 %v4995
    %v5132 = vunpack.c.l.b16 %v4996
    %v5133 = vunpack.c.l.b16 %v4997
    %v5134 = vunpack.c.l.b16 %v4998
    %v5135 = vunpack.c.l.b16 %v4999
    %v5136 = vunpack.c.l.b16 %v5000
    %v5137 = vunpack.c.l.b16 %v5001
    %v5138 = vunpack.c.l.b16 %v5002
    %v5139 = vunpack.c.l.b16 %v5003
    %v5140 = vunpack.c.l.b16 %v5004
    %v5141 = vunpack.c.l.b16 %v5005
    %v5142 = vunpack.c.l.b16 %v5006
    %v5143 = vunpack.c.l.b16 %v5007
    %v5144 = vunpack.c.l.b16 %v5008
    %v5145 = vunpack.c.l.b16 %v5009
    %v5146 = vunpack.c.l.b16 %v5010
    %v5147 = vunpack.c.l.b16 %v5011
    %v5148 = vunpack.c.l.b16 %v5012
    %v5149 = vunpack.c.l.b16 %v5013
    %v5150 = vunpack.c.l.b16 %v5014
    %v5151 = vunpack.c.l.b16 %v5015
    %v5152 = vunpack.c.l.b16 %v5016
    %v5153 = vunpack.c.l.b16 %v5017
    %v5154 = vunpack.c.l.b16 %v5018
    %v5155 = vunpack.c.l.b16 %v5019
    %v5156 = vunpack.c.l.b16 %v5020
    %v5157 = vunpack.c.l.b16 %v5021
    %v5158 = vunpack.c.l.b16 %v5022
    %v5159 = vunpack.c.l.b16 %v5023
    %v5160 = vunpack.c.l.b16 %v5024
    %v5161 = vunpack.c.l.b16 %v5025
    %v5162 = vunpack.c.l.b16 %v5026
    %v5163 = vunpack.c.l.b16 %v5027
    %v5164 = vunpack.c.l.b16 %v5028
    %v5165 = vunpack.c.l.b16 %v5029
    %v5166 = vunpack.c.l.b16 %v5030
    %v5167 = vunpack.c.l.b16 %v5031
    %v5168 = vunpack.c.l.b16 %v5032
    %v5169 = vunpack.c.l.b16 %v5033
    %v5170 = vunpack.c.l.b16 %v5034
    %v5171 = vunpack.c.l.b16 %v5035
    %v5172 = vunpack.c.l.b16 %v5036
    %v5173 = vunpack.c.l.b16 %v5037
    %v5174 = vunpack.c.l.b16 %v5038
    %v5175 = vpack.c.b16 %v5112, %v5111
    %v5176 = vpack.c.b16 %v5114, %v5113
    %v5177 = vpack.c.b16 %v5116, %v5115
    %v5178 = vpack.c.b16 %v5118, %v5117
    %v5179 = vpack.c.b16 %v5120, %v5119
    %v5180 = vpack.c.b16 %v5122, %v5121
    %v5181 = vpack.c.b16 %v5124, %v5123
    %v5182 = vpack.c.b16 %v5126, %v5125
    %v5183 = vpack.c.b16 %v5128, %v5127
    %v5184 = vpack.c.b16 %v5130, %v5129
    %v5185 = vpack.c.b16 %v5132, %v5131
    %v5186 = vpack.c.b16 %v5134, %v5133
    %v5187 = vpack.c.b16 %v5136, %v5135
    %v5188 = vpack.c.b16 %v5138, %v5137
    %v5189 = vpack.c.b16 %v5140, %v5139
    %v5190 = vpack.c.b16 %v5142, %v5141
    %v5191 = vpack.c.b16 %v5144, %v5143
    %v5192 = vpack.c.b16 %v5146, %v5145
    %v5193 = vpack.c.b16 %v5148, %v5147
    %v5194 = vpack.c.b16 %v5150, %v5149
    %v5195 = vpack.c.b16 %v5152, %v5151
    %v5196 = vpack.c.b16 %v5154, %v5153
    %v5197 = vpack.c.b16 %v5156, %v5155
    %v5198 = vpack.c.b16 %v5158, %v5157
    %v5199 = vpack.c.b16 %v5160, %v5159
    %v5200 = vpack.c.b16 %v5162, %v5161
    %v5201 = vpack.c.b16 %v5164, %v5163
    %v5202 = vpack.c.b16 %v5166, %v5165
    %v5203 = vpack.c.b16 %v5168, %v5167
    %v5204 = vpack.c.b16 %v5170, %v5169
    %v5205 = vpack.c.b16 %v5172, %v5171
    %v5206 = vpack.c.b16 %v5174, %v5173
    %5239 = vmatprep.subr.bf16.mxu0 0
    %5240 = vmatpush1.bf16.msra.mxu0 %v5175
    %5241 = vmatprep.subr.bf16.mxu0 0
    %5242 = vmatpush1.bf16.msra.mxu0 %v5176
    %5243 = vmatprep.subr.bf16.mxu0 0
    %5244 = vmatpush1.bf16.msra.mxu0 %v5177
    %5245 = vmatprep.subr.bf16.mxu0 0
    %5246 = vmatpush1.bf16.msra.mxu0 %v5178
    %5247 = vmatprep.subr.bf16.mxu0 0
    %5248 = vmatpush1.bf16.msra.mxu0 %v5179
    %5249 = vmatprep.subr.bf16.mxu0 0
    %5250 = vmatpush1.bf16.msra.mxu0 %v5180
    %5251 = vmatprep.subr.bf16.mxu0 0
    %5252 = vmatpush1.bf16.msra.mxu0 %v5181
    %5253 = vmatprep.subr.bf16.mxu0 0
    %5254 = vmatpush1.bf16.msra.mxu0 %v5182
    %5255 = vmatprep.subr.bf16.mxu0 0
    %5256 = vmatpush1.bf16.msra.mxu0 %v5183
    %5257 = vmatprep.subr.bf16.mxu0 0
    %5258 = vmatpush1.bf16.msra.mxu0 %v5184
    %5259 = vmatprep.subr.bf16.mxu0 0
    %5260 = vmatpush1.bf16.msra.mxu0 %v5185
    %5261 = vmatprep.subr.bf16.mxu0 0
    %5262 = vmatpush1.bf16.msra.mxu0 %v5186
    %5263 = vmatprep.subr.bf16.mxu0 0
    %5264 = vmatpush1.bf16.msra.mxu0 %v5187
    %5265 = vmatprep.subr.bf16.mxu0 0
    %5266 = vmatpush1.bf16.msra.mxu0 %v5188
    %5267 = vmatprep.subr.bf16.mxu0 0
    %5268 = vmatpush1.bf16.msra.mxu0 %v5189
    %5269 = vmatprep.subr.bf16.mxu0 0
    %5270 = vmatpush1.bf16.msra.mxu0 %v5190
    %5271 = vmatprep.mubr.bf16.mxu0 %v4967
    %5272 = vmatmul.mubr.bf16.gmra.mrb[0].mxu0 %v4966
    %v5273 = vpop.f32.mrb[0].mxu0
    %v5274 = vadd.f32 %v5045, %v5273
    %v5275 = vpop.f32.mrb[0].mxu0
    %v5276 = vpop.f32.mrb[0].mxu0
    %v5277 = vadd.f32 %v5045, %v5276
    %v5278 = vpop.f32.mrb[0].mxu0
    %5279 = vmatprep.mubr.bf16.mxu0 %v4971
    %5280 = vmatmul.mubr.bf16.gmra.mrb[0].mxu0 %v4970
    %v5281 = vpop.f32.mrb[0].mxu0
    %v5282 = vadd.f32 %v5045, %v5281
    %v5283 = vpop.f32.mrb[0].mxu0
    %v5284 = vpop.f32.mrb[0].mxu0
    %v5285 = vadd.f32 %v5045, %v5284
    %v5286 = vpop.f32.mrb[0].mxu0
    %5287 = vdwg.mxu0
    %5288 = vmatprep.subr.bf16.mxu0 0
    %5289 = vmatpush1.bf16.msra.mxu0 %v5191
    %5290 = vmatprep.subr.bf16.mxu0 0
    %5291 = vmatpush1.bf16.msra.mxu0 %v5192
    %5292 = vmatprep.subr.bf16.mxu0 0
    %5293 = vmatpush1.bf16.msra.mxu0 %v5193
    %5294 = vmatprep.subr.bf16.mxu0 0
    %5295 = vmatpush1.bf16.msra.mxu0 %v5194
    %5296 = vmatprep.subr.bf16.mxu0 0
    %5297 = vmatpush1.bf16.msra.mxu0 %v5195
    %5298 = vmatprep.subr.bf16.mxu0 0
    %5299 = vmatpush1.bf16.msra.mxu0 %v5196
    %5300 = vmatprep.subr.bf16.mxu0 0
    %5301 = vmatpush1.bf16.msra.mxu0 %v5197
    %5302 = vmatprep.subr.bf16.mxu0 0
    %5303 = vmatpush1.bf16.msra.mxu0 %v5198
    %5304 = vmatprep.subr.bf16.mxu0 0
    %5305 = vmatpush1.bf16.msra.mxu0 %v5199
    %5306 = vmatprep.subr.bf16.mxu0 0
    %5307 = vmatpush1.bf16.msra.mxu0 %v5200
    %5308 = vmatprep.subr.bf16.mxu0 0
    %5309 = vmatpush1.bf16.msra.mxu0 %v5201
    %5310 = vmatprep.subr.bf16.mxu0 0
    %5311 = vmatpush1.bf16.msra.mxu0 %v5202
    %5312 = vmatprep.subr.bf16.mxu0 0
    %5313 = vmatpush1.bf16.msra.mxu0 %v5203
    %5314 = vmatprep.subr.bf16.mxu0 0
    %5315 = vmatpush1.bf16.msra.mxu0 %v5204
    %5316 = vmatprep.subr.bf16.mxu0 0
    %5317 = vmatpush1.bf16.msra.mxu0 %v5205
    %5318 = vmatprep.subr.bf16.mxu0 0
    %5319 = vmatpush1.bf16.msra.mxu0 %v5206
    %5320 = vmatprep.mubr.bf16.mxu0 %v4969
    %5321 = vmatmul.mubr.bf16.gmra.mrb[0].mxu0 %v4968
    %v5322 = vpop.f32.mrb[0].mxu0
    %v5323 = vadd.f32 %v5274, %v5322
    %v5324 = vpop.f32.mrb[0].mxu0
    %v5325 = vpop.f32.mrb[0].mxu0
    %v5326 = vadd.f32 %v5277, %v5325
    %v5327 = vpop.f32.mrb[0].mxu0
    %5328 = vmatprep.mubr.bf16.mxu0 %v4973
    %5329 = vmatmul.mubr.bf16.gmra.mrb[0].mxu0 %v4972
    %v5330 = vpop.f32.mrb[0].mxu0
    %v5331 = vadd.f32 %v5282, %v5330
    %v5332 = vpop.f32.mrb[0].mxu0
    %v5333 = vpop.f32.mrb[0].mxu0
    %v5334 = vadd.f32 %v5285, %v5333
    %v5335 = vpop.f32.mrb[0].mxu0
    %5336 = vdwg.mxu0
    %v5337 = vadd.f32 %v5323, %v4494
    %v5338 = vadd.f32 %v5326, %v4495
    %v5339 = vadd.f32 %v5331, %v4496
    %v5340 = vadd.f32 %v5334, %v4497
    %s5341 = scalar_lea.vmem [#allocation15], 1
    %v5342 = vld [vmem:[%s5341] sm:$0x1]
    %s5343 = scalar_lea.vmem [#allocation17], 1
    %v5344 = vld [vmem:[%s5343] sm:$0x1]
    %5345 = vadd.xlane.f32.xlu0 %v5337
    %v5346 = vpop.xlane.xlu0 %5345
    %5347 = vadd.xlane.f32.xlu0 %v5338
    %v5348 = vpop.xlane.xlu0 %5347
    %5349 = vadd.xlane.f32.xlu0 %v5339
    %v5350 = vpop.xlane.xlu0 %5349
    %5351 = vadd.xlane.f32.xlu0 %v5340
    %v5352 = vpop.xlane.xlu0 %5351
    %v5353 = vmul.f32 %v5346, %v236
    %v5354 = vmul.f32 %v5348, %v236
    %v5355 = vmul.f32 %v5350, %v236
    %v5356 = vmul.f32 %v5352, %v236
    %v5357 = vsub.f32 %v5337, %v5353
    %v5358 = vsub.f32 %v5338, %v5354
    %v5359 = vsub.f32 %v5339, %v5355
    %v5360 = vsub.f32 %v5340, %v5356
    %v5361 = vmul.f32 %v5357, %v5357
    %v5362 = vmul.f32 %v5358, %v5358
    %v5363 = vmul.f32 %v5359, %v5359
    %v5364 = vmul.f32 %v5360, %v5360
    %5365 = vadd.xlane.f32.xlu0 %v5361
    %v5366 = vpop.xlane.xlu0 %5365
    %5367 = vadd.xlane.f32.xlu0 %v5362
    %v5368 = vpop.xlane.xlu0 %5367
    %5369 = vadd.xlane.f32.xlu0 %v5363
    %v5370 = vpop.xlane.xlu0 %5369
    %5371 = vadd.xlane.f32.xlu0 %v5364
    %v5372 = vpop.xlane.xlu0 %5371
    %v5373 = vmul.f32 %v5366, %v236
    %v5374 = vmul.f32 %v5368, %v236
    %v5375 = vmul.f32 %v5370, %v236
    %v5376 = vmul.f32 %v5372, %v236
    %v5377 = vadd.f32 %v5373, 1e-12
    %v5378 = vadd.f32 %v5374, 1e-12
    %v5379 = vadd.f32 %v5375, 1e-12
    %v5380 = vadd.f32 %v5376, 1e-12
    %v5381 = vrsqrt.pop %v5377
    %v5382 = vrsqrt.pop %v5378
    %v5383 = vrsqrt.pop %v5379
    %v5384 = vrsqrt.pop %v5380
    %v5385 = vmul.f32 %v5357, %v5381
    %v5386 = vmul.f32 %v5358, %v5382
    %v5387 = vmul.f32 %v5359, %v5383
    %v5388 = vmul.f32 %v5360, %v5384
    %v5390 = vlaneseq
    %v5391 = vshrl.u32 %v5390, 7
    %v5392 = vsub.s32 0, %v5391
    %v5393 = vrot.slane %v5342, %v5392
    %v5395 = vmul.f32 %v5385, %v5393
    %v5396 = vmul.f32 %v5386, %v5393
    %v5397 = vmul.f32 %v5387, %v5393
    %v5398 = vmul.f32 %v5388, %v5393
    %v5400 = vlaneseq
    %v5401 = vshrl.u32 %v5400, 7
    %v5402 = vsub.s32 0, %v5401
    %v5403 = vrot.slane %v5344, %v5402
    %v5405 = vadd.f32 %v5395, %v5403
    %v5406 = vadd.f32 %v5396, %v5403
    %v5407 = vadd.f32 %v5397, %v5403
    %v5408 = vadd.f32 %v5398, %v5403
    %v5409 = vpack.c.bf16 %v5406, %v5405
    %v5410 = vpack.c.bf16 %v5408, %v5407
    %s5411 = scalar_lea.vmem %s4, 384
    %v5412 = vld [vmem:[%s5411] sm:$0xff]
    %v5413 = vld [vmem:[%s5411 + $0x8] sm:$0xf]
    %v5414 = vld [vmem:[%s5411 + $0xc] sm:$0xff]
    %v5415 = vld [vmem:[%s5411 + $0x14] sm:$0xf]
    %v5416 = vld [vmem:[%s5411 + $0x18] sm:$0xff]
    %v5417 = vld [vmem:[%s5411 + $0x20] sm:$0xf]
    %v5418 = vld [vmem:[%s5411 + $0x24] sm:$0xff]
    %v5419 = vld [vmem:[%s5411 + $0x2c] sm:$0xf]
    %v5420 = vld [vmem:[%s5411 + $0x30] sm:$0xff]
    %v5421 = vld [vmem:[%s5411 + $0x38] sm:$0xf]
    %v5422 = vld [vmem:[%s5411 + $0x3c] sm:$0xff]
    %v5423 = vld [vmem:[%s5411 + $0x44] sm:$0xf]
    %v5424 = vld [vmem:[%s5411 + $0x48] sm:$0xff]
    %v5425 = vld [vmem:[%s5411 + $0x50] sm:$0xf]
    %v5426 = vld [vmem:[%s5411 + $0x54] sm:$0xff]
    %v5427 = vld [vmem:[%s5411 + $0x5c] sm:$0xf]
    %v5428 = vld [vmem:[%s5411 + $0x60] sm:$0xff]
    %v5429 = vld [vmem:[%s5411 + $0x68] sm:$0xf]
    %v5430 = vld [vmem:[%s5411 + $0x6c] sm:$0xff]
    %v5431 = vld [vmem:[%s5411 + $0x74] sm:$0xf]
    %v5432 = vld [vmem:[%s5411 + $0x78] sm:$0xff]
    %v5433 = vld [vmem:[%s5411 + $0x80] sm:$0xf]
    %v5434 = vld [vmem:[%s5411 + $0x84] sm:$0xff]
    %v5435 = vld [vmem:[%s5411 + $0x8c] sm:$0xf]
    %v5436 = vld [vmem:[%s5411 + $0x90] sm:$0xff]
    %v5437 = vld [vmem:[%s5411 + $0x98] sm:$0xf]
    %v5438 = vld [vmem:[%s5411 + $0x9c] sm:$0xff]
    %v5439 = vld [vmem:[%s5411 + $0xa4] sm:$0xf]
    %v5440 = vld [vmem:[%s5411 + $0xa8] sm:$0xff]
    %v5441 = vld [vmem:[%s5411 + $0xb0] sm:$0xf]
    %v5442 = vld [vmem:[%s5411 + $0xb4] sm:$0xff]
    %v5443 = vld [vmem:[%s5411 + $0xbc] sm:$0xf]
    %s5444 = scalar_lea.vmem %s5, 6
    %v5445 = vld [vmem:[%s5444] sm:$0x7]
    %v5447 = vlaneseq
    %v5448 = vshrl.u32 %v5447, 7
    %v5449 = vsub.s32 0, %v5448
    %v5450 = vrot.slane %v5445, %v5449
    %v5451 = vlaneseq
    %v5452 = vshrl.u32 %v5451, 7
    %v5453 = vsub.s32 1, %v5452
    %v5454 = vrot.slane %v5445, %v5453
    %v5455 = vlaneseq
    %v5456 = vshrl.u32 %v5455, 7
    %v5457 = vsub.s32 2, %v5456
    %v5458 = vrot.slane %v5445, %v5457
    %v5494 = vunpack.c.l.b16 %v5412
    %v5495 = vunpack.c.h.b16 %v5412
    %v5496 = vunpack.c.l.b16 %v5413
    %v5497 = vunpack.c.l.b16 %v5414
    %v5498 = vunpack.c.h.b16 %v5414
    %v5499 = vunpack.c.l.b16 %v5415
    %v5500 = vunpack.c.l.b16 %v5416
    %v5501 = vunpack.c.h.b16 %v5416
    %v5502 = vunpack.c.l.b16 %v5417
    %v5503 = vunpack.c.l.b16 %v5418
    %v5504 = vunpack.c.h.b16 %v5418
    %v5505 = vunpack.c.l.b16 %v5419
    %v5506 = vunpack.c.l.b16 %v5420
    %v5507 = vunpack.c.h.b16 %v5420
    %v5508 = vunpack.c.l.b16 %v5421
    %v5509 = vunpack.c.l.b16 %v5422
    %v5510 = vunpack.c.h.b16 %v5422
    %v5511 = vunpack.c.l.b16 %v5423
    %v5512 = vunpack.c.l.b16 %v5424
    %v5513 = vunpack.c.h.b16 %v5424
    %v5514 = vunpack.c.l.b16 %v5425
    %v5515 = vunpack.c.l.b16 %v5426
    %v5516 = vunpack.c.h.b16 %v5426
    %v5517 = vunpack.c.l.b16 %v5427
    %v5518 = vunpack.c.l.b16 %v5428
    %v5519 = vunpack.c.h.b16 %v5428
    %v5520 = vunpack.c.l.b16 %v5429
    %v5521 = vunpack.c.l.b16 %v5430
    %v5522 = vunpack.c.h.b16 %v5430
    %v5523 = vunpack.c.l.b16 %v5431
    %v5524 = vunpack.c.l.b16 %v5432
    %v5525 = vunpack.c.h.b16 %v5432
    %v5526 = vunpack.c.l.b16 %v5433
    %v5527 = vunpack.c.l.b16 %v5434
    %v5528 = vunpack.c.h.b16 %v5434
    %v5529 = vunpack.c.l.b16 %v5435
    %v5530 = vunpack.c.l.b16 %v5436
    %v5531 = vunpack.c.h.b16 %v5436
    %v5532 = vunpack.c.l.b16 %v5437
    %v5533 = vunpack.c.l.b16 %v5438
    %v5534 = vunpack.c.h.b16 %v5438
    %v5535 = vunpack.c.l.b16 %v5439
    %v5536 = vunpack.c.l.b16 %v5440
    %v5537 = vunpack.c.h.b16 %v5440
    %v5538 = vunpack.c.l.b16 %v5441
    %v5539 = vunpack.c.l.b16 %v5442
    %v5540 = vunpack.c.h.b16 %v5442
    %v5541 = vunpack.c.l.b16 %v5443
    %v5542 = vpack.c.b16 %v5497, %v5494
    %v5543 = vpack.c.b16 %v5498, %v5495
    %v5544 = vpack.c.b16 %v5499, %v5496
    %v5545 = vpack.c.b16 %v5503, %v5500
    %v5546 = vpack.c.b16 %v5504, %v5501
    %v5547 = vpack.c.b16 %v5505, %v5502
    %v5548 = vpack.c.b16 %v5509, %v5506
    %v5549 = vpack.c.b16 %v5510, %v5507
    %v5550 = vpack.c.b16 %v5511, %v5508
    %v5551 = vpack.c.b16 %v5515, %v5512
    %v5552 = vpack.c.b16 %v5516, %v5513
    %v5553 = vpack.c.b16 %v5517, %v5514
    %v5554 = vpack.c.b16 %v5521, %v5518
    %v5555 = vpack.c.b16 %v5522, %v5519
    %v5556 = vpack.c.b16 %v5523, %v5520
    %v5557 = vpack.c.b16 %v5527, %v5524
    %v5558 = vpack.c.b16 %v5528, %v5525
    %v5559 = vpack.c.b16 %v5529, %v5526
    %v5560 = vpack.c.b16 %v5533, %v5530
    %v5561 = vpack.c.b16 %v5534, %v5531
    %v5562 = vpack.c.b16 %v5535, %v5532
    %v5563 = vpack.c.b16 %v5539, %v5536
    %v5564 = vpack.c.b16 %v5540, %v5537
    %v5565 = vpack.c.b16 %v5541, %v5538
    %5590 = vmatprep.subr.bf16.mxu0 %v5543
    %5591 = vmatpush1.bf16.msra.mxu0 %v5542
    %5592 = vmatprep.subr.bf16.mxu0 %v5546
    %5593 = vmatpush1.bf16.msra.mxu0 %v5545
    %5594 = vmatprep.subr.bf16.mxu0 %v5549
    %5595 = vmatpush1.bf16.msra.mxu0 %v5548
    %5596 = vmatprep.subr.bf16.mxu0 %v5552
    %5597 = vmatpush1.bf16.msra.mxu0 %v5551
    %5598 = vmatprep.subr.bf16.mxu0 %v5555
    %5599 = vmatpush1.bf16.msra.mxu0 %v5554
    %5600 = vmatprep.subr.bf16.mxu0 %v5558
    %5601 = vmatpush1.bf16.msra.mxu0 %v5557
    %5602 = vmatprep.subr.bf16.mxu0 %v5561
    %5603 = vmatpush1.bf16.msra.mxu0 %v5560
    %5604 = vmatprep.subr.bf16.mxu0 %v5564
    %5605 = vmatpush1.bf16.msra.mxu0 %v5563
    %5606 = vmatprep.subr.bf16.mxu0 0
    %5607 = vmatpush1.bf16.msra.mxu0 0
    %5608 = vmatprep.subr.bf16.mxu0 0
    %5609 = vmatpush1.bf16.msra.mxu0 0
    %5610 = vmatprep.subr.bf16.mxu0 0
    %5611 = vmatpush1.bf16.msra.mxu0 0
    %5612 = vmatprep.subr.bf16.mxu0 0
    %5613 = vmatpush1.bf16.msra.mxu0 0
    %5614 = vmatprep.subr.bf16.mxu0 0
    %5615 = vmatpush1.bf16.msra.mxu0 0
    %5616 = vmatprep.subr.bf16.mxu0 0
    %5617 = vmatpush1.bf16.msra.mxu0 0
    %5618 = vmatprep.subr.bf16.mxu0 0
    %5619 = vmatpush1.bf16.msra.mxu0 0
    %5620 = vmatprep.subr.bf16.mxu0 0
    %5621 = vmatpush1.bf16.msra.mxu0 0
    %5622 = vmatprep.mubr.bf16.mxu0 0
    %5623 = vmatmul.mubr.bf16.gmra.mrb[0].mxu0 %v5409
    %v5624 = vpop.f32.mrb[0].mxu0
    %v5625 = vadd.f32 %v5450, %v5624
    %v5626 = vpop.f32.mrb[0].mxu0
    %v5627 = vadd.f32 %v5454, %v5626
    %v5628 = vpop.f32.mrb[0].mxu0
    %v5629 = vadd.f32 %v5450, %v5628
    %v5630 = vpop.f32.mrb[0].mxu0
    %v5631 = vadd.f32 %v5454, %v5630
    %5632 = vmatprep.mubr.bf16.mxu0 0
    %5633 = vmatmul.mubr.bf16.gmra.mrb[0].mxu0 %v5410
    %v5634 = vpop.f32.mrb[0].mxu0
    %v5635 = vadd.f32 %v5450, %v5634
    %v5636 = vpop.f32.mrb[0].mxu0
    %v5637 = vadd.f32 %v5454, %v5636
    %v5638 = vpop.f32.mrb[0].mxu0
    %v5639 = vadd.f32 %v5450, %v5638
    %v5640 = vpop.f32.mrb[0].mxu0
    %v5641 = vadd.f32 %v5454, %v5640
    %5642 = vdwg.mxu0
    %5643 = vmatprep.subr.bf16.mxu0 0
    %5644 = vmatpush1.bf16.msra.mxu0 %v5544
    %5645 = vmatprep.subr.bf16.mxu0 0
    %5646 = vmatpush1.bf16.msra.mxu0 %v5547
    %5647 = vmatprep.subr.bf16.mxu0 0
    %5648 = vmatpush1.bf16.msra.mxu0 %v5550
    %5649 = vmatprep.subr.bf16.mxu0 0
    %5650 = vmatpush1.bf16.msra.mxu0 %v5553
    %5651 = vmatprep.subr.bf16.mxu0 0
    %5652 = vmatpush1.bf16.msra.mxu0 %v5556
    %5653 = vmatprep.subr.bf16.mxu0 0
    %5654 = vmatpush1.bf16.msra.mxu0 %v5559
    %5655 = vmatprep.subr.bf16.mxu0 0
    %5656 = vmatpush1.bf16.msra.mxu0 %v5562
    %5657 = vmatprep.subr.bf16.mxu0 0
    %5658 = vmatpush1.bf16.msra.mxu0 %v5565
    %5659 = vmatprep.subr.bf16.mxu0 0
    %5660 = vmatpush1.bf16.msra.mxu0 0
    %5661 = vmatprep.subr.bf16.mxu0 0
    %5662 = vmatpush1.bf16.msra.mxu0 0
    %5663 = vmatprep.subr.bf16.mxu0 0
    %5664 = vmatpush1.bf16.msra.mxu0 0
    %5665 = vmatprep.subr.bf16.mxu0 0
    %5666 = vmatpush1.bf16.msra.mxu0 0
    %5667 = vmatprep.subr.bf16.mxu0 0
    %5668 = vmatpush1.bf16.msra.mxu0 0
    %5669 = vmatprep.subr.bf16.mxu0 0
    %5670 = vmatpush1.bf16.msra.mxu0 0
    %5671 = vmatprep.subr.bf16.mxu0 0
    %5672 = vmatpush1.bf16.msra.mxu0 0
    %5673 = vmatprep.subr.bf16.mxu0 0
    %5674 = vmatpush1.bf16.msra.mxu0 0
    %5675 = vmatprep.mubr.bf16.mxu0 0
    %5676 = vmatmul.mubr.bf16.gmra.mrb[0].mxu0 %v5409
    %v5677 = vpop.f32.mrb[0].mxu0
    %v5678 = vadd.f32 %v5458, %v5677
    %v5679 = vpop.f32.mrb[0].mxu0
    %v5680 = vpop.f32.mrb[0].mxu0
    %v5681 = vadd.f32 %v5458, %v5680
    %v5682 = vpop.f32.mrb[0].mxu0
    %5683 = vmatprep.mubr.bf16.mxu0 0
    %5684 = vmatmul.mubr.bf16.gmra.mrb[0].mxu0 %v5410
    %v5685 = vpop.f32.mrb[0].mxu0
    %v5686 = vadd.f32 %v5458, %v5685
    %v5687 = vpop.f32.mrb[0].mxu0
    %v5688 = vpop.f32.mrb[0].mxu0
    %v5689 = vadd.f32 %v5458, %v5688
    %v5690 = vpop.f32.mrb[0].mxu0
    %5691 = vdwg.mxu0
    %v5693 = vsel %vm590, %v5625, 0
    %v5696 = vsel %vm590, %v5629, 0
    %v5699 = vsel %vm590, %v5635, 0
    %v5702 = vsel %vm590, %v5639, 0
    %v5705 = vsel %vm590, %v5627, 0
    %v5708 = vsel %vm590, %v5631, 0
    %v5711 = vsel %vm590, %v5637, 0
    %v5714 = vsel %vm590, %v5641, 0
    %5716 = vmatprep.subr.mxu0 0.0
    %5717 = vmatpush1.xpose.msra.mxu0 %v5705
    %5718 = vmatprep.subr.mxu0 0.0
    %5719 = vmatpush1.xpose.msra.mxu0 %v5708
    %5720 = vmatprep.subr.mxu0 0.0
    %5721 = vmatpush1.xpose.msra.mxu0 %v5711
    %5722 = vmatprep.subr.mxu0 0.0
    %5723 = vmatpush1.xpose.msra.mxu0 %v5714
    %5724 = vmatprep.subr.mxu0 0.0
    %5725 = vmatpush1.xpose.msra.mxu0 0.0
    %5726 = vmatprep.subr.mxu0 0.0
    %5727 = vmatpush1.xpose.msra.mxu0 0.0
    %5728 = vmatprep.subr.mxu0 0.0
    %5729 = vmatpush1.xpose.msra.mxu0 0.0
    %5730 = vmatprep.subr.mxu0 0.0
    %5731 = vmatpush1.xpose.msra.mxu0 0.0
    %5732 = vmatprep.subr.mxu0 0.0
    %5733 = vmatpush1.xpose.msra.mxu0 0.0
    %5734 = vmatprep.subr.mxu0 0.0
    %5735 = vmatpush1.xpose.msra.mxu0 0.0
    %5736 = vmatprep.subr.mxu0 0.0
    %5737 = vmatpush1.xpose.msra.mxu0 0.0
    %5738 = vmatprep.subr.mxu0 0.0
    %5739 = vmatpush1.xpose.msra.mxu0 0.0
    %5740 = vmatprep.subr.mxu0 0.0
    %5741 = vmatpush1.xpose.msra.mxu0 0.0
    %5742 = vmatprep.subr.mxu0 0.0
    %5743 = vmatpush1.xpose.msra.mxu0 0.0
    %5744 = vmatprep.subr.mxu0 0.0
    %5745 = vmatpush1.xpose.msra.mxu0 0.0
    %5746 = vmatprep.subr.mxu0 0.0
    %5747 = vmatpush1.xpose.msra.mxu0 0.0
    %5748 = vmatprep.subr.mxu0 0.0
    %5749 = vmatpush1.xpose.msra.mxu0 0.0
    %5750 = vmatprep.subr.mxu0 0.0
    %5751 = vmatpush1.xpose.msra.mxu0 0.0
    %5752 = vmatprep.subr.mxu0 0.0
    %5753 = vmatpush1.xpose.msra.mxu0 0.0
    %5754 = vmatprep.subr.mxu0 0.0
    %5755 = vmatpush1.xpose.msra.mxu0 0.0
    %5756 = vmatprep.subr.mxu0 0.0
    %5757 = vmatpush1.xpose.msra.mxu0 0.0
    %5758 = vmatprep.subr.mxu0 0.0
    %5759 = vmatpush1.xpose.msra.mxu0 0.0
    %5760 = vmatprep.subr.mxu0 0.0
    %5761 = vmatpush1.xpose.msra.mxu0 0.0
    %5762 = vmatprep.subr.mxu0 0.0
    %5763 = vmatpush1.xpose.msra.mxu0 0.0
    %5764 = vmatprep.subr.mxu0 0.0
    %5765 = vmatpush1.xpose.msra.mxu0 0.0
    %5766 = vmatprep.subr.mxu0 0.0
    %5767 = vmatpush1.xpose.msra.mxu0 0.0
    %5768 = vmatprep.subr.mxu0 0.0
    %5769 = vmatpush1.xpose.msra.mxu0 0.0
    %5770 = vmatprep.subr.mxu0 0.0
    %5771 = vmatpush1.xpose.msra.mxu0 0.0
    %5772 = vmatprep.subr.mxu0 0.0
    %5773 = vmatpush1.xpose.msra.mxu0 0.0
    %5774 = vmatprep.subr.mxu0 0.0
    %5775 = vmatpush1.xpose.msra.mxu0 0.0
    %5776 = vmatprep.subr.mxu0 0.0
    %5777 = vmatpush1.xpose.msra.mxu0 0.0
    %5778 = vmatprep.subr.mxu0 0.0
    %5779 = vmatpush1.xpose.msra.mxu0 0.0
    %5780 = vmatprep.mubr.f32.mxu0 0.0
    %5781 = vmatmul.mubr.f32.gmra.mrb[0].mxu0 %v5693
    %v5782 = vpop.f32.mrb[0].mxu0
    %v5783 = vadd.f32 0.0, %v5782
    %v5784 = vpop.f32.mrb[0].mxu0
    %5785 = vmatprep.mubr.f32.mxu0 0.0
    %5786 = vmatmul.mubr.f32.gmra.mrb[0].mxu0 %v5696
    %v5787 = vpop.f32.mrb[0].mxu0
    %v5788 = vadd.f32 0.0, %v5787
    %v5789 = vpop.f32.mrb[0].mxu0
    %5790 = vmatprep.mubr.f32.mxu0 0.0
    %5791 = vmatmul.mubr.f32.gmra.mrb[0].mxu0 %v5699
    %v5792 = vpop.f32.mrb[0].mxu0
    %v5793 = vadd.f32 0.0, %v5792
    %v5794 = vpop.f32.mrb[0].mxu0
    %5795 = vmatprep.mubr.f32.mxu0 0.0
    %5796 = vmatmul.mubr.f32.gmra.mrb[0].mxu0 %v5702
    %v5797 = vpop.f32.mrb[0].mxu0
    %v5798 = vadd.f32 0.0, %v5797
    %v5799 = vpop.f32.mrb[0].mxu0
    %5800 = vdwg.mxu0
    %5801 = vrot.lane.b32.xlu0 %v5625, 96
    %v5802 = vpop.permute.xlu0 %5801
    %5803 = vrot.lane.b32.xlu0 %v5629, 96
    %v5804 = vpop.permute.xlu0 %5803
    %5805 = vrot.lane.b32.xlu0 %v5635, 96
    %v5806 = vpop.permute.xlu0 %5805
    %5807 = vrot.lane.b32.xlu0 %v5639, 96
    %v5808 = vpop.permute.xlu0 %5807
    %5809 = vrot.lane.b32.xlu0 %v5627, 96
    %v5810 = vpop.permute.xlu0 %5809
    %5811 = vrot.lane.b32.xlu0 %v5631, 96
    %v5812 = vpop.permute.xlu0 %5811
    %5813 = vrot.lane.b32.xlu0 %v5637, 96
    %v5814 = vpop.permute.xlu0 %5813
    %5815 = vrot.lane.b32.xlu0 %v5641, 96
    %v5816 = vpop.permute.xlu0 %5815
    %v5817 = vsel %vm590, %v5802, 0
    %v5819 = vsel %vm590, %v5804, 0
    %v5821 = vsel %vm590, %v5806, 0
    %v5823 = vsel %vm590, %v5808, 0
    %v5825 = vsel %vm590, %v5810, 0
    %v5827 = vsel %vm590, %v5812, 0
    %v5829 = vsel %vm590, %v5814, 0
    %v5831 = vsel %vm590, %v5816, 0
    %5833 = vmatprep.subr.mxu0 0.0
    %5834 = vmatpush1.xpose.msra.mxu0 %v5825
    %5835 = vmatprep.subr.mxu0 0.0
    %5836 = vmatpush1.xpose.msra.mxu0 %v5827
    %5837 = vmatprep.subr.mxu0 0.0
    %5838 = vmatpush1.xpose.msra.mxu0 %v5829
    %5839 = vmatprep.subr.mxu0 0.0
    %5840 = vmatpush1.xpose.msra.mxu0 %v5831
    %5841 = vmatprep.subr.mxu0 0.0
    %5842 = vmatpush1.xpose.msra.mxu0 0.0
    %5843 = vmatprep.subr.mxu0 0.0
    %5844 = vmatpush1.xpose.msra.mxu0 0.0
    %5845 = vmatprep.subr.mxu0 0.0
    %5846 = vmatpush1.xpose.msra.mxu0 0.0
    %5847 = vmatprep.subr.mxu0 0.0
    %5848 = vmatpush1.xpose.msra.mxu0 0.0
    %5849 = vmatprep.subr.mxu0 0.0
    %5850 = vmatpush1.xpose.msra.mxu0 0.0
    %5851 = vmatprep.subr.mxu0 0.0
    %5852 = vmatpush1.xpose.msra.mxu0 0.0
    %5853 = vmatprep.subr.mxu0 0.0
    %5854 = vmatpush1.xpose.msra.mxu0 0.0
    %5855 = vmatprep.subr.mxu0 0.0
    %5856 = vmatpush1.xpose.msra.mxu0 0.0
    %5857 = vmatprep.subr.mxu0 0.0
    %5858 = vmatpush1.xpose.msra.mxu0 0.0
    %5859 = vmatprep.subr.mxu0 0.0
    %5860 = vmatpush1.xpose.msra.mxu0 0.0
    %5861 = vmatprep.subr.mxu0 0.0
    %5862 = vmatpush1.xpose.msra.mxu0 0.0
    %5863 = vmatprep.subr.mxu0 0.0
    %5864 = vmatpush1.xpose.msra.mxu0 0.0
    %5865 = vmatprep.subr.mxu0 0.0
    %5866 = vmatpush1.xpose.msra.mxu0 0.0
    %5867 = vmatprep.subr.mxu0 0.0
    %5868 = vmatpush1.xpose.msra.mxu0 0.0
    %5869 = vmatprep.subr.mxu0 0.0
    %5870 = vmatpush1.xpose.msra.mxu0 0.0
    %5871 = vmatprep.subr.mxu0 0.0
    %5872 = vmatpush1.xpose.msra.mxu0 0.0
    %5873 = vmatprep.subr.mxu0 0.0
    %5874 = vmatpush1.xpose.msra.mxu0 0.0
    %5875 = vmatprep.subr.mxu0 0.0
    %5876 = vmatpush1.xpose.msra.mxu0 0.0
    %5877 = vmatprep.subr.mxu0 0.0
    %5878 = vmatpush1.xpose.msra.mxu0 0.0
    %5879 = vmatprep.subr.mxu0 0.0
    %5880 = vmatpush1.xpose.msra.mxu0 0.0
    %5881 = vmatprep.subr.mxu0 0.0
    %5882 = vmatpush1.xpose.msra.mxu0 0.0
    %5883 = vmatprep.subr.mxu0 0.0
    %5884 = vmatpush1.xpose.msra.mxu0 0.0
    %5885 = vmatprep.subr.mxu0 0.0
    %5886 = vmatpush1.xpose.msra.mxu0 0.0
    %5887 = vmatprep.subr.mxu0 0.0
    %5888 = vmatpush1.xpose.msra.mxu0 0.0
    %5889 = vmatprep.subr.mxu0 0.0
    %5890 = vmatpush1.xpose.msra.mxu0 0.0
    %5891 = vmatprep.subr.mxu0 0.0
    %5892 = vmatpush1.xpose.msra.mxu0 0.0
    %5893 = vmatprep.subr.mxu0 0.0
    %5894 = vmatpush1.xpose.msra.mxu0 0.0
    %5895 = vmatprep.subr.mxu0 0.0
    %5896 = vmatpush1.xpose.msra.mxu0 0.0
    %5897 = vmatprep.mubr.f32.mxu0 0.0
    %5898 = vmatmul.mubr.f32.gmra.mrb[0].mxu0 %v5817
    %v5899 = vpop.f32.mrb[0].mxu0
    %v5900 = vadd.f32 0.0, %v5899
    %v5901 = vpop.f32.mrb[0].mxu0
    %5902 = vmatprep.mubr.f32.mxu0 0.0
    %5903 = vmatmul.mubr.f32.gmra.mrb[0].mxu0 %v5819
    %v5904 = vpop.f32.mrb[0].mxu0
    %v5905 = vadd.f32 0.0, %v5904
    %v5906 = vpop.f32.mrb[0].mxu0
    %5907 = vmatprep.mubr.f32.mxu0 0.0
    %5908 = vmatmul.mubr.f32.gmra.mrb[0].mxu0 %v5821
    %v5909 = vpop.f32.mrb[0].mxu0
    %v5910 = vadd.f32 0.0, %v5909
    %v5911 = vpop.f32.mrb[0].mxu0
    %5912 = vmatprep.mubr.f32.mxu0 0.0
    %5913 = vmatmul.mubr.f32.gmra.mrb[0].mxu0 %v5823
    %v5914 = vpop.f32.mrb[0].mxu0
    %v5915 = vadd.f32 0.0, %v5914
    %v5916 = vpop.f32.mrb[0].mxu0
    %5917 = vdwg.mxu0
    %5918 = vrot.lane.b32.xlu0 %v5625, 64
    %v5919 = vpop.permute.xlu0 %5918
    %5920 = vrot.lane.b32.xlu0 %v5629, 64
    %v5921 = vpop.permute.xlu0 %5920
    %5922 = vrot.lane.b32.xlu0 %v5635, 64
    %v5923 = vpop.permute.xlu0 %5922
    %5924 = vrot.lane.b32.xlu0 %v5639, 64
    %v5925 = vpop.permute.xlu0 %5924
    %5926 = vrot.lane.b32.xlu0 %v5627, 64
    %v5927 = vpop.permute.xlu0 %5926
    %5928 = vrot.lane.b32.xlu0 %v5631, 64
    %v5929 = vpop.permute.xlu0 %5928
    %5930 = vrot.lane.b32.xlu0 %v5637, 64
    %v5931 = vpop.permute.xlu0 %5930
    %5932 = vrot.lane.b32.xlu0 %v5641, 64
    %v5933 = vpop.permute.xlu0 %5932
    %v5934 = vsel %vm590, %v5919, 0
    %v5936 = vsel %vm590, %v5921, 0
    %v5938 = vsel %vm590, %v5923, 0
    %v5940 = vsel %vm590, %v5925, 0
    %v5942 = vsel %vm590, %v5927, 0
    %v5944 = vsel %vm590, %v5929, 0
    %v5946 = vsel %vm590, %v5931, 0
    %v5948 = vsel %vm590, %v5933, 0
    %5950 = vmatprep.subr.mxu0 0.0
    %5951 = vmatpush1.xpose.msra.mxu0 %v5942
    %5952 = vmatprep.subr.mxu0 0.0
    %5953 = vmatpush1.xpose.msra.mxu0 %v5944
    %5954 = vmatprep.subr.mxu0 0.0
    %5955 = vmatpush1.xpose.msra.mxu0 %v5946
    %5956 = vmatprep.subr.mxu0 0.0
    %5957 = vmatpush1.xpose.msra.mxu0 %v5948
    %5958 = vmatprep.subr.mxu0 0.0
    %5959 = vmatpush1.xpose.msra.mxu0 0.0
    %5960 = vmatprep.subr.mxu0 0.0
    %5961 = vmatpush1.xpose.msra.mxu0 0.0
    %5962 = vmatprep.subr.mxu0 0.0
    %5963 = vmatpush1.xpose.msra.mxu0 0.0
    %5964 = vmatprep.subr.mxu0 0.0
    %5965 = vmatpush1.xpose.msra.mxu0 0.0
    %5966 = vmatprep.subr.mxu0 0.0
    %5967 = vmatpush1.xpose.msra.mxu0 0.0
    %5968 = vmatprep.subr.mxu0 0.0
    %5969 = vmatpush1.xpose.msra.mxu0 0.0
    %5970 = vmatprep.subr.mxu0 0.0
    %5971 = vmatpush1.xpose.msra.mxu0 0.0
    %5972 = vmatprep.subr.mxu0 0.0
    %5973 = vmatpush1.xpose.msra.mxu0 0.0
    %5974 = vmatprep.subr.mxu0 0.0
    %5975 = vmatpush1.xpose.msra.mxu0 0.0
    %5976 = vmatprep.subr.mxu0 0.0
    %5977 = vmatpush1.xpose.msra.mxu0 0.0
    %5978 = vmatprep.subr.mxu0 0.0
    %5979 = vmatpush1.xpose.msra.mxu0 0.0
    %5980 = vmatprep.subr.mxu0 0.0
    %5981 = vmatpush1.xpose.msra.mxu0 0.0
    %5982 = vmatprep.subr.mxu0 0.0
    %5983 = vmatpush1.xpose.msra.mxu0 0.0
    %5984 = vmatprep.subr.mxu0 0.0
    %5985 = vmatpush1.xpose.msra.mxu0 0.0
    %5986 = vmatprep.subr.mxu0 0.0
    %5987 = vmatpush1.xpose.msra.mxu0 0.0
    %5988 = vmatprep.subr.mxu0 0.0
    %5989 = vmatpush1.xpose.msra.mxu0 0.0
    %5990 = vmatprep.subr.mxu0 0.0
    %5991 = vmatpush1.xpose.msra.mxu0 0.0
    %5992 = vmatprep.subr.mxu0 0.0
    %5993 = vmatpush1.xpose.msra.mxu0 0.0
    %5994 = vmatprep.subr.mxu0 0.0
    %5995 = vmatpush1.xpose.msra.mxu0 0.0
    %5996 = vmatprep.subr.mxu0 0.0
    %5997 = vmatpush1.xpose.msra.mxu0 0.0
    %5998 = vmatprep.subr.mxu0 0.0
    %5999 = vmatpush1.xpose.msra.mxu0 0.0
    %6000 = vmatprep.subr.mxu0 0.0
    %6001 = vmatpush1.xpose.msra.mxu0 0.0
    %6002 = vmatprep.subr.mxu0 0.0
    %6003 = vmatpush1.xpose.msra.mxu0 0.0
    %6004 = vmatprep.subr.mxu0 0.0
    %6005 = vmatpush1.xpose.msra.mxu0 0.0
    %6006 = vmatprep.subr.mxu0 0.0
    %6007 = vmatpush1.xpose.msra.mxu0 0.0
    %6008 = vmatprep.subr.mxu0 0.0
    %6009 = vmatpush1.xpose.msra.mxu0 0.0
    %6010 = vmatprep.subr.mxu0 0.0
    %6011 = vmatpush1.xpose.msra.mxu0 0.0
    %6012 = vmatprep.subr.mxu0 0.0
    %6013 = vmatpush1.xpose.msra.mxu0 0.0
    %6014 = vmatprep.mubr.f32.mxu0 0.0
    %6015 = vmatmul.mubr.f32.gmra.mrb[0].mxu0 %v5934
    %v6016 = vpop.f32.mrb[0].mxu0
    %v6017 = vadd.f32 0.0, %v6016
    %v6018 = vpop.f32.mrb[0].mxu0
    %6019 = vmatprep.mubr.f32.mxu0 0.0
    %6020 = vmatmul.mubr.f32.gmra.mrb[0].mxu0 %v5936
    %v6021 = vpop.f32.mrb[0].mxu0
    %v6022 = vadd.f32 0.0, %v6021
    %v6023 = vpop.f32.mrb[0].mxu0
    %6024 = vmatprep.mubr.f32.mxu0 0.0
    %6025 = vmatmul.mubr.f32.gmra.mrb[0].mxu0 %v5938
    %v6026 = vpop.f32.mrb[0].mxu0
    %v6027 = vadd.f32 0.0, %v6026
    %v6028 = vpop.f32.mrb[0].mxu0
    %6029 = vmatprep.mubr.f32.mxu0 0.0
    %6030 = vmatmul.mubr.f32.gmra.mrb[0].mxu0 %v5940
    %v6031 = vpop.f32.mrb[0].mxu0
    %v6032 = vadd.f32 0.0, %v6031
    %v6033 = vpop.f32.mrb[0].mxu0
    %6034 = vdwg.mxu0
    %6035 = vrot.lane.b32.xlu0 %v5625, 32
    %v6036 = vpop.permute.xlu0 %6035
    %6037 = vrot.lane.b32.xlu0 %v5629, 32
    %v6038 = vpop.permute.xlu0 %6037
    %6039 = vrot.lane.b32.xlu0 %v5635, 32
    %v6040 = vpop.permute.xlu0 %6039
    %6041 = vrot.lane.b32.xlu0 %v5639, 32
    %v6042 = vpop.permute.xlu0 %6041
    %6043 = vrot.lane.b32.xlu0 %v5627, 32
    %v6044 = vpop.permute.xlu0 %6043
    %6045 = vrot.lane.b32.xlu0 %v5631, 32
    %v6046 = vpop.permute.xlu0 %6045
    %6047 = vrot.lane.b32.xlu0 %v5637, 32
    %v6048 = vpop.permute.xlu0 %6047
    %6049 = vrot.lane.b32.xlu0 %v5641, 32
    %v6050 = vpop.permute.xlu0 %6049
    %v6051 = vsel %vm590, %v6036, 0
    %v6053 = vsel %vm590, %v6038, 0
    %v6055 = vsel %vm590, %v6040, 0
    %v6057 = vsel %vm590, %v6042, 0
    %v6059 = vsel %vm590, %v6044, 0
    %v6061 = vsel %vm590, %v6046, 0
    %v6063 = vsel %vm590, %v6048, 0
    %v6065 = vsel %vm590, %v6050, 0
    %6067 = vmatprep.subr.mxu0 0.0
    %6068 = vmatpush1.xpose.msra.mxu0 %v6059
    %6069 = vmatprep.subr.mxu0 0.0
    %6070 = vmatpush1.xpose.msra.mxu0 %v6061
    %6071 = vmatprep.subr.mxu0 0.0
    %6072 = vmatpush1.xpose.msra.mxu0 %v6063
    %6073 = vmatprep.subr.mxu0 0.0
    %6074 = vmatpush1.xpose.msra.mxu0 %v6065
    %6075 = vmatprep.subr.mxu0 0.0
    %6076 = vmatpush1.xpose.msra.mxu0 0.0
    %6077 = vmatprep.subr.mxu0 0.0
    %6078 = vmatpush1.xpose.msra.mxu0 0.0
    %6079 = vmatprep.subr.mxu0 0.0
    %6080 = vmatpush1.xpose.msra.mxu0 0.0
    %6081 = vmatprep.subr.mxu0 0.0
    %6082 = vmatpush1.xpose.msra.mxu0 0.0
    %6083 = vmatprep.subr.mxu0 0.0
    %6084 = vmatpush1.xpose.msra.mxu0 0.0
    %6085 = vmatprep.subr.mxu0 0.0
    %6086 = vmatpush1.xpose.msra.mxu0 0.0
    %6087 = vmatprep.subr.mxu0 0.0
    %6088 = vmatpush1.xpose.msra.mxu0 0.0
    %6089 = vmatprep.subr.mxu0 0.0
    %6090 = vmatpush1.xpose.msra.mxu0 0.0
    %6091 = vmatprep.subr.mxu0 0.0
    %6092 = vmatpush1.xpose.msra.mxu0 0.0
    %6093 = vmatprep.subr.mxu0 0.0
    %6094 = vmatpush1.xpose.msra.mxu0 0.0
    %6095 = vmatprep.subr.mxu0 0.0
    %6096 = vmatpush1.xpose.msra.mxu0 0.0
    %6097 = vmatprep.subr.mxu0 0.0
    %6098 = vmatpush1.xpose.msra.mxu0 0.0
    %6099 = vmatprep.subr.mxu0 0.0
    %6100 = vmatpush1.xpose.msra.mxu0 0.0
    %6101 = vmatprep.subr.mxu0 0.0
    %6102 = vmatpush1.xpose.msra.mxu0 0.0
    %6103 = vmatprep.subr.mxu0 0.0
    %6104 = vmatpush1.xpose.msra.mxu0 0.0
    %6105 = vmatprep.subr.mxu0 0.0
    %6106 = vmatpush1.xpose.msra.mxu0 0.0
    %6107 = vmatprep.subr.mxu0 0.0
    %6108 = vmatpush1.xpose.msra.mxu0 0.0
    %6109 = vmatprep.subr.mxu0 0.0
    %6110 = vmatpush1.xpose.msra.mxu0 0.0
    %6111 = vmatprep.subr.mxu0 0.0
    %6112 = vmatpush1.xpose.msra.mxu0 0.0
    %6113 = vmatprep.subr.mxu0 0.0
    %6114 = vmatpush1.xpose.msra.mxu0 0.0
    %6115 = vmatprep.subr.mxu0 0.0
    %6116 = vmatpush1.xpose.msra.mxu0 0.0
    %6117 = vmatprep.subr.mxu0 0.0
    %6118 = vmatpush1.xpose.msra.mxu0 0.0
    %6119 = vmatprep.subr.mxu0 0.0
    %6120 = vmatpush1.xpose.msra.mxu0 0.0
    %6121 = vmatprep.subr.mxu0 0.0
    %6122 = vmatpush1.xpose.msra.mxu0 0.0
    %6123 = vmatprep.subr.mxu0 0.0
    %6124 = vmatpush1.xpose.msra.mxu0 0.0
    %6125 = vmatprep.subr.mxu0 0.0
    %6126 = vmatpush1.xpose.msra.mxu0 0.0
    %6127 = vmatprep.subr.mxu0 0.0
    %6128 = vmatpush1.xpose.msra.mxu0 0.0
    %6129 = vmatprep.subr.mxu0 0.0
    %6130 = vmatpush1.xpose.msra.mxu0 0.0
    %6131 = vmatprep.mubr.f32.mxu0 0.0
    %6132 = vmatmul.mubr.f32.gmra.mrb[0].mxu0 %v6051
    %v6133 = vpop.f32.mrb[0].mxu0
    %v6134 = vadd.f32 0.0, %v6133
    %v6135 = vpop.f32.mrb[0].mxu0
    %6136 = vmatprep.mubr.f32.mxu0 0.0
    %6137 = vmatmul.mubr.f32.gmra.mrb[0].mxu0 %v6053
    %v6138 = vpop.f32.mrb[0].mxu0
    %v6139 = vadd.f32 0.0, %v6138
    %v6140 = vpop.f32.mrb[0].mxu0
    %6141 = vmatprep.mubr.f32.mxu0 0.0
    %6142 = vmatmul.mubr.f32.gmra.mrb[0].mxu0 %v6055
    %v6143 = vpop.f32.mrb[0].mxu0
    %v6144 = vadd.f32 0.0, %v6143
    %v6145 = vpop.f32.mrb[0].mxu0
    %6146 = vmatprep.mubr.f32.mxu0 0.0
    %6147 = vmatmul.mubr.f32.gmra.mrb[0].mxu0 %v6057
    %v6148 = vpop.f32.mrb[0].mxu0
    %v6149 = vadd.f32 0.0, %v6148
    %v6150 = vpop.f32.mrb[0].mxu0
    %6151 = vdwg.mxu0
    %v6152 = vmul.f32 %v5783, 0.17677669
    %v6153 = vmul.f32 %v5788, 0.17677669
    %v6154 = vmul.f32 %v5793, 0.17677669
    %v6155 = vmul.f32 %v5798, 0.17677669
    %v6156 = vmul.f32 %v5900, 0.17677669
    %v6157 = vmul.f32 %v5905, 0.17677669
    %v6158 = vmul.f32 %v5910, 0.17677669
    %v6159 = vmul.f32 %v5915, 0.17677669
    %v6160 = vmul.f32 %v6017, 0.17677669
    %v6161 = vmul.f32 %v6022, 0.17677669
    %v6162 = vmul.f32 %v6027, 0.17677669
    %v6163 = vmul.f32 %v6032, 0.17677669
    %v6164 = vmul.f32 %v6134, 0.17677669
    %v6165 = vmul.f32 %v6139, 0.17677669
    %v6166 = vmul.f32 %v6144, 0.17677669
    %v6167 = vmul.f32 %v6149, 0.17677669
    %v6168 = vadd.f32 %v6152, %v293
    %v6169 = vadd.f32 %v6153, %v294
    %v6170 = vadd.f32 %v6154, %v295
    %v6171 = vadd.f32 %v6155, %v296
    %v6172 = vadd.f32 %v6156, %v297
    %v6173 = vadd.f32 %v6157, %v298
    %v6174 = vadd.f32 %v6158, %v299
    %v6175 = vadd.f32 %v6159, %v300
    %v6176 = vadd.f32 %v6160, %v301
    %v6177 = vadd.f32 %v6161, %v302
    %v6178 = vadd.f32 %v6162, %v303
    %v6179 = vadd.f32 %v6163, %v304
    %v6180 = vadd.f32 %v6164, %v305
    %v6181 = vadd.f32 %v6165, %v306
    %v6182 = vadd.f32 %v6166, %v307
    %v6183 = vadd.f32 %v6167, %v308
    %v6184 = vsel %vm590, %v6168, -inf
    %6185 = vmax.xlane.f32.xlu0 %v6184
    %v6186 = vpop.xlane.xlu0 %6185
    %v6187 = vsel %vm590, %v6169, -inf
    %6188 = vmax.xlane.f32.xlu0 %v6187
    %v6189 = vpop.xlane.xlu0 %6188
    %v6190 = vsel %vm590, %v6170, -inf
    %6191 = vmax.xlane.f32.xlu0 %v6190
    %v6192 = vpop.xlane.xlu0 %6191
    %v6193 = vsel %vm590, %v6171, -inf
    %6194 = vmax.xlane.f32.xlu0 %v6193
    %v6195 = vpop.xlane.xlu0 %6194
    %v6196 = vsel %vm590, %v6172, -inf
    %6197 = vmax.xlane.f32.xlu0 %v6196
    %v6198 = vpop.xlane.xlu0 %6197
    %v6199 = vsel %vm590, %v6173, -inf
    %6200 = vmax.xlane.f32.xlu0 %v6199
    %v6201 = vpop.xlane.xlu0 %6200
    %v6202 = vsel %vm590, %v6174, -inf
    %6203 = vmax.xlane.f32.xlu0 %v6202
    %v6204 = vpop.xlane.xlu0 %6203
    %v6205 = vsel %vm590, %v6175, -inf
    %6206 = vmax.xlane.f32.xlu0 %v6205
    %v6207 = vpop.xlane.xlu0 %6206
    %v6208 = vsel %vm590, %v6176, -inf
    %6209 = vmax.xlane.f32.xlu0 %v6208
    %v6210 = vpop.xlane.xlu0 %6209
    %v6211 = vsel %vm590, %v6177, -inf
    %6212 = vmax.xlane.f32.xlu0 %v6211
    %v6213 = vpop.xlane.xlu0 %6212
    %v6214 = vsel %vm590, %v6178, -inf
    %6215 = vmax.xlane.f32.xlu0 %v6214
    %v6216 = vpop.xlane.xlu0 %6215
    %v6217 = vsel %vm590, %v6179, -inf
    %6218 = vmax.xlane.f32.xlu0 %v6217
    %v6219 = vpop.xlane.xlu0 %6218
    %v6220 = vsel %vm590, %v6180, -inf
    %6221 = vmax.xlane.f32.xlu0 %v6220
    %v6222 = vpop.xlane.xlu0 %6221
    %v6223 = vsel %vm590, %v6181, -inf
    %6224 = vmax.xlane.f32.xlu0 %v6223
    %v6225 = vpop.xlane.xlu0 %6224
    %v6226 = vsel %vm590, %v6182, -inf
    %6227 = vmax.xlane.f32.xlu0 %v6226
    %v6228 = vpop.xlane.xlu0 %6227
    %v6229 = vsel %vm590, %v6183, -inf
    %6230 = vmax.xlane.f32.xlu0 %v6229
    %v6231 = vpop.xlane.xlu0 %6230
    %v6232 = vsub.f32 %v6168, %v6186
    %v6233 = vsub.f32 %v6169, %v6189
    %v6234 = vsub.f32 %v6170, %v6192
    %v6235 = vsub.f32 %v6171, %v6195
    %v6236 = vsub.f32 %v6172, %v6198
    %v6237 = vsub.f32 %v6173, %v6201
    %v6238 = vsub.f32 %v6174, %v6204
    %v6239 = vsub.f32 %v6175, %v6207
    %v6240 = vsub.f32 %v6176, %v6210
    %v6241 = vsub.f32 %v6177, %v6213
    %v6242 = vsub.f32 %v6178, %v6216
    %v6243 = vsub.f32 %v6179, %v6219
    %v6244 = vsub.f32 %v6180, %v6222
    %v6245 = vsub.f32 %v6181, %v6225
    %v6246 = vsub.f32 %v6182, %v6228
    %v6247 = vsub.f32 %v6183, %v6231
    %v6248 = vmul.f32 %v6232, 1.442695
    %v6249 = vpow.pop %v6248
    %v6250 = vmul.f32 %v6233, 1.442695
    %v6251 = vpow.pop %v6250
    %v6252 = vmul.f32 %v6234, 1.442695
    %v6253 = vpow.pop %v6252
    %v6254 = vmul.f32 %v6235, 1.442695
    %v6255 = vpow.pop %v6254
    %v6256 = vmul.f32 %v6236, 1.442695
    %v6257 = vpow.pop %v6256
    %v6258 = vmul.f32 %v6237, 1.442695
    %v6259 = vpow.pop %v6258
    %v6260 = vmul.f32 %v6238, 1.442695
    %v6261 = vpow.pop %v6260
    %v6262 = vmul.f32 %v6239, 1.442695
    %v6263 = vpow.pop %v6262
    %v6264 = vmul.f32 %v6240, 1.442695
    %v6265 = vpow.pop %v6264
    %v6266 = vmul.f32 %v6241, 1.442695
    %v6267 = vpow.pop %v6266
    %v6268 = vmul.f32 %v6242, 1.442695
    %v6269 = vpow.pop %v6268
    %v6270 = vmul.f32 %v6243, 1.442695
    %v6271 = vpow.pop %v6270
    %v6272 = vmul.f32 %v6244, 1.442695
    %v6273 = vpow.pop %v6272
    %v6274 = vmul.f32 %v6245, 1.442695
    %v6275 = vpow.pop %v6274
    %v6276 = vmul.f32 %v6246, 1.442695
    %v6277 = vpow.pop %v6276
    %v6278 = vmul.f32 %v6247, 1.442695
    %v6279 = vpow.pop %v6278
    %v6280 = vsel %vm590, %v6249, 0.0
    %6281 = vadd.xlane.f32.xlu0 %v6280
    %v6282 = vpop.xlane.xlu0 %6281
    %v6283 = vsel %vm590, %v6251, 0.0
    %6284 = vadd.xlane.f32.xlu0 %v6283
    %v6285 = vpop.xlane.xlu0 %6284
    %v6286 = vsel %vm590, %v6253, 0.0
    %6287 = vadd.xlane.f32.xlu0 %v6286
    %v6288 = vpop.xlane.xlu0 %6287
    %v6289 = vsel %vm590, %v6255, 0.0
    %6290 = vadd.xlane.f32.xlu0 %v6289
    %v6291 = vpop.xlane.xlu0 %6290
    %v6292 = vsel %vm590, %v6257, 0.0
    %6293 = vadd.xlane.f32.xlu0 %v6292
    %v6294 = vpop.xlane.xlu0 %6293
    %v6295 = vsel %vm590, %v6259, 0.0
    %6296 = vadd.xlane.f32.xlu0 %v6295
    %v6297 = vpop.xlane.xlu0 %6296
    %v6298 = vsel %vm590, %v6261, 0.0
    %6299 = vadd.xlane.f32.xlu0 %v6298
    %v6300 = vpop.xlane.xlu0 %6299
    %v6301 = vsel %vm590, %v6263, 0.0
    %6302 = vadd.xlane.f32.xlu0 %v6301
    %v6303 = vpop.xlane.xlu0 %6302
    %v6304 = vsel %vm590, %v6265, 0.0
    %6305 = vadd.xlane.f32.xlu0 %v6304
    %v6306 = vpop.xlane.xlu0 %6305
    %v6307 = vsel %vm590, %v6267, 0.0
    %6308 = vadd.xlane.f32.xlu0 %v6307
    %v6309 = vpop.xlane.xlu0 %6308
    %v6310 = vsel %vm590, %v6269, 0.0
    %6311 = vadd.xlane.f32.xlu0 %v6310
    %v6312 = vpop.xlane.xlu0 %6311
    %v6313 = vsel %vm590, %v6271, 0.0
    %6314 = vadd.xlane.f32.xlu0 %v6313
    %v6315 = vpop.xlane.xlu0 %6314
    %v6316 = vsel %vm590, %v6273, 0.0
    %6317 = vadd.xlane.f32.xlu0 %v6316
    %v6318 = vpop.xlane.xlu0 %6317
    %v6319 = vsel %vm590, %v6275, 0.0
    %6320 = vadd.xlane.f32.xlu0 %v6319
    %v6321 = vpop.xlane.xlu0 %6320
    %v6322 = vsel %vm590, %v6277, 0.0
    %6323 = vadd.xlane.f32.xlu0 %v6322
    %v6324 = vpop.xlane.xlu0 %6323
    %v6325 = vsel %vm590, %v6279, 0.0
    %6326 = vadd.xlane.f32.xlu0 %v6325
    %v6327 = vpop.xlane.xlu0 %6326
    %v6328 = vrcp.pop %v6282
    %v6329 = vrcp.pop %v6285
    %v6330 = vrcp.pop %v6288
    %v6331 = vrcp.pop %v6291
    %v6332 = vrcp.pop %v6294
    %v6333 = vrcp.pop %v6297
    %v6334 = vrcp.pop %v6300
    %v6335 = vrcp.pop %v6303
    %v6336 = vrcp.pop %v6306
    %v6337 = vrcp.pop %v6309
    %v6338 = vrcp.pop %v6312
    %v6339 = vrcp.pop %v6315
    %v6340 = vrcp.pop %v6318
    %v6341 = vrcp.pop %v6321
    %v6342 = vrcp.pop %v6324
    %v6343 = vrcp.pop %v6327
    %v6344 = vmul.f32 %v6249, %v6328
    %v6345 = vmul.f32 %v6251, %v6329
    %v6346 = vmul.f32 %v6253, %v6330
    %v6347 = vmul.f32 %v6255, %v6331
    %v6348 = vmul.f32 %v6257, %v6332
    %v6349 = vmul.f32 %v6259, %v6333
    %v6350 = vmul.f32 %v6261, %v6334
    %v6351 = vmul.f32 %v6263, %v6335
    %v6352 = vmul.f32 %v6265, %v6336
    %v6353 = vmul.f32 %v6267, %v6337
    %v6354 = vmul.f32 %v6269, %v6338
    %v6355 = vmul.f32 %v6271, %v6339
    %v6356 = vmul.f32 %v6273, %v6340
    %v6357 = vmul.f32 %v6275, %v6341
    %v6358 = vmul.f32 %v6277, %v6342
    %v6359 = vmul.f32 %v6279, %v6343
    %v6361 = vsel %vm590, %v6344, 0
    %v6364 = vsel %vm590, %v6345, 0
    %v6367 = vsel %vm590, %v6346, 0
    %v6370 = vsel %vm590, %v6347, 0
    %6372 = vmatprep.subr.mxu0 0.0
    %6373 = vmatpush1.msra.mxu0 %v5678
    %6374 = vmatprep.subr.mxu0 0.0
    %6375 = vmatpush1.msra.mxu0 %v5681
    %6376 = vmatprep.subr.mxu0 0.0
    %6377 = vmatpush1.msra.mxu0 %v5686
    %6378 = vmatprep.subr.mxu0 0.0
    %6379 = vmatpush1.msra.mxu0 %v5689
    %6380 = vmatprep.subr.mxu0 0.0
    %6381 = vmatpush1.msra.mxu0 0.0
    %6382 = vmatprep.subr.mxu0 0.0
    %6383 = vmatpush1.msra.mxu0 0.0
    %6384 = vmatprep.subr.mxu0 0.0
    %6385 = vmatpush1.msra.mxu0 0.0
    %6386 = vmatprep.subr.mxu0 0.0
    %6387 = vmatpush1.msra.mxu0 0.0
    %6388 = vmatprep.subr.mxu0 0.0
    %6389 = vmatpush1.msra.mxu0 0.0
    %6390 = vmatprep.subr.mxu0 0.0
    %6391 = vmatpush1.msra.mxu0 0.0
    %6392 = vmatprep.subr.mxu0 0.0
    %6393 = vmatpush1.msra.mxu0 0.0
    %6394 = vmatprep.subr.mxu0 0.0
    %6395 = vmatpush1.msra.mxu0 0.0
    %6396 = vmatprep.subr.mxu0 0.0
    %6397 = vmatpush1.msra.mxu0 0.0
    %6398 = vmatprep.subr.mxu0 0.0
    %6399 = vmatpush1.msra.mxu0 0.0
    %6400 = vmatprep.subr.mxu0 0.0
    %6401 = vmatpush1.msra.mxu0 0.0
    %6402 = vmatprep.subr.mxu0 0.0
    %6403 = vmatpush1.msra.mxu0 0.0
    %6404 = vmatprep.subr.mxu0 0.0
    %6405 = vmatpush1.msra.mxu0 0.0
    %6406 = vmatprep.subr.mxu0 0.0
    %6407 = vmatpush1.msra.mxu0 0.0
    %6408 = vmatprep.subr.mxu0 0.0
    %6409 = vmatpush1.msra.mxu0 0.0
    %6410 = vmatprep.subr.mxu0 0.0
    %6411 = vmatpush1.msra.mxu0 0.0
    %6412 = vmatprep.subr.mxu0 0.0
    %6413 = vmatpush1.msra.mxu0 0.0
    %6414 = vmatprep.subr.mxu0 0.0
    %6415 = vmatpush1.msra.mxu0 0.0
    %6416 = vmatprep.subr.mxu0 0.0
    %6417 = vmatpush1.msra.mxu0 0.0
    %6418 = vmatprep.subr.mxu0 0.0
    %6419 = vmatpush1.msra.mxu0 0.0
    %6420 = vmatprep.subr.mxu0 0.0
    %6421 = vmatpush1.msra.mxu0 0.0
    %6422 = vmatprep.subr.mxu0 0.0
    %6423 = vmatpush1.msra.mxu0 0.0
    %6424 = vmatprep.subr.mxu0 0.0
    %6425 = vmatpush1.msra.mxu0 0.0
    %6426 = vmatprep.subr.mxu0 0.0
    %6427 = vmatpush1.msra.mxu0 0.0
    %6428 = vmatprep.subr.mxu0 0.0
    %6429 = vmatpush1.msra.mxu0 0.0
    %6430 = vmatprep.subr.mxu0 0.0
    %6431 = vmatpush1.msra.mxu0 0.0
    %6432 = vmatprep.subr.mxu0 0.0
    %6433 = vmatpush1.msra.mxu0 0.0
    %6434 = vmatprep.subr.mxu0 0.0
    %6435 = vmatpush1.msra.mxu0 0.0
    %6436 = vmatprep.mubr.f32.mxu0 0.0
    %6437 = vmatmul.mubr.f32.gmra.mrb[0].mxu0 %v6361
    %v6438 = vpop.f32.mrb[0].mxu0
    %v6439 = vadd.f32 0.0, %v6438
    %v6440 = vpop.f32.mrb[0].mxu0
    %6441 = vmatprep.mubr.f32.mxu0 0.0
    %6442 = vmatmul.mubr.f32.gmra.mrb[0].mxu0 %v6364
    %v6443 = vpop.f32.mrb[0].mxu0
    %v6444 = vadd.f32 0.0, %v6443
    %v6445 = vpop.f32.mrb[0].mxu0
    %6446 = vmatprep.mubr.f32.mxu0 0.0
    %6447 = vmatmul.mubr.f32.gmra.mrb[0].mxu0 %v6367
    %v6448 = vpop.f32.mrb[0].mxu0
    %v6449 = vadd.f32 0.0, %v6448
    %v6450 = vpop.f32.mrb[0].mxu0
    %6451 = vmatprep.mubr.f32.mxu0 0.0
    %6452 = vmatmul.mubr.f32.gmra.mrb[0].mxu0 %v6370
    %v6453 = vpop.f32.mrb[0].mxu0
    %v6454 = vadd.f32 0.0, %v6453
    %v6455 = vpop.f32.mrb[0].mxu0
    %6456 = vdwg.mxu0
    %6457 = vst.msk [vmem:[#allocation2] sm:$0xff] %vm590, %v6439
    %6458 = vst.msk [vmem:[#allocation2 + $0x8] sm:$0xff] %vm590, %v6444
    %6459 = vst.msk [vmem:[#allocation2 + $0x10] sm:$0xff] %vm590, %v6449
    %6460 = vst.msk [vmem:[#allocation2 + $0x18] sm:$0xff] %vm590, %v6454
    %6465 = vrot.lane.b32.xlu0 %v5678, 96
    %v6466 = vpop.permute.xlu0 %6465
    %6467 = vrot.lane.b32.xlu0 %v5681, 96
    %v6468 = vpop.permute.xlu0 %6467
    %6469 = vrot.lane.b32.xlu0 %v5686, 96
    %v6470 = vpop.permute.xlu0 %6469
    %6471 = vrot.lane.b32.xlu0 %v5689, 96
    %v6472 = vpop.permute.xlu0 %6471
    %v6478 = vsel %vm590, %v6348, 0
    %v6481 = vsel %vm590, %v6349, 0
    %v6484 = vsel %vm590, %v6350, 0
    %v6487 = vsel %vm590, %v6351, 0
    %6489 = vmatprep.subr.mxu0 0.0
    %6490 = vmatpush1.msra.mxu0 %v6466
    %6491 = vmatprep.subr.mxu0 0.0
    %6492 = vmatpush1.msra.mxu0 %v6468
    %6493 = vmatprep.subr.mxu0 0.0
    %6494 = vmatpush1.msra.mxu0 %v6470
    %6495 = vmatprep.subr.mxu0 0.0
    %6496 = vmatpush1.msra.mxu0 %v6472
    %6497 = vmatprep.subr.mxu0 0.0
    %6498 = vmatpush1.msra.mxu0 0.0
    %6499 = vmatprep.subr.mxu0 0.0
    %6500 = vmatpush1.msra.mxu0 0.0
    %6501 = vmatprep.subr.mxu0 0.0
    %6502 = vmatpush1.msra.mxu0 0.0
    %6503 = vmatprep.subr.mxu0 0.0
    %6504 = vmatpush1.msra.mxu0 0.0
    %6505 = vmatprep.subr.mxu0 0.0
    %6506 = vmatpush1.msra.mxu0 0.0
    %6507 = vmatprep.subr.mxu0 0.0
    %6508 = vmatpush1.msra.mxu0 0.0
    %6509 = vmatprep.subr.mxu0 0.0
    %6510 = vmatpush1.msra.mxu0 0.0
    %6511 = vmatprep.subr.mxu0 0.0
    %6512 = vmatpush1.msra.mxu0 0.0
    %6513 = vmatprep.subr.mxu0 0.0
    %6514 = vmatpush1.msra.mxu0 0.0
    %6515 = vmatprep.subr.mxu0 0.0
    %6516 = vmatpush1.msra.mxu0 0.0
    %6517 = vmatprep.subr.mxu0 0.0
    %6518 = vmatpush1.msra.mxu0 0.0
    %6519 = vmatprep.subr.mxu0 0.0
    %6520 = vmatpush1.msra.mxu0 0.0
    %6521 = vmatprep.subr.mxu0 0.0
    %6522 = vmatpush1.msra.mxu0 0.0
    %6523 = vmatprep.subr.mxu0 0.0
    %6524 = vmatpush1.msra.mxu0 0.0
    %6525 = vmatprep.subr.mxu0 0.0
    %6526 = vmatpush1.msra.mxu0 0.0
    %6527 = vmatprep.subr.mxu0 0.0
    %6528 = vmatpush1.msra.mxu0 0.0
    %6529 = vmatprep.subr.mxu0 0.0
    %6530 = vmatpush1.msra.mxu0 0.0
    %6531 = vmatprep.subr.mxu0 0.0
    %6532 = vmatpush1.msra.mxu0 0.0
    %6533 = vmatprep.subr.mxu0 0.0
    %6534 = vmatpush1.msra.mxu0 0.0
    %6535 = vmatprep.subr.mxu0 0.0
    %6536 = vmatpush1.msra.mxu0 0.0
    %6537 = vmatprep.subr.mxu0 0.0
    %6538 = vmatpush1.msra.mxu0 0.0
    %6539 = vmatprep.subr.mxu0 0.0
    %6540 = vmatpush1.msra.mxu0 0.0
    %6541 = vmatprep.subr.mxu0 0.0
    %6542 = vmatpush1.msra.mxu0 0.0
    %6543 = vmatprep.subr.mxu0 0.0
    %6544 = vmatpush1.msra.mxu0 0.0
    %6545 = vmatprep.subr.mxu0 0.0
    %6546 = vmatpush1.msra.mxu0 0.0
    %6547 = vmatprep.subr.mxu0 0.0
    %6548 = vmatpush1.msra.mxu0 0.0
    %6549 = vmatprep.subr.mxu0 0.0
    %6550 = vmatpush1.msra.mxu0 0.0
    %6551 = vmatprep.subr.mxu0 0.0
    %6552 = vmatpush1.msra.mxu0 0.0
    %6553 = vmatprep.mubr.f32.mxu0 0.0
    %6554 = vmatmul.mubr.f32.gmra.mrb[0].mxu0 %v6478
    %v6555 = vpop.f32.mrb[0].mxu0
    %v6556 = vadd.f32 0.0, %v6555
    %v6557 = vpop.f32.mrb[0].mxu0
    %6558 = vmatprep.mubr.f32.mxu0 0.0
    %6559 = vmatmul.mubr.f32.gmra.mrb[0].mxu0 %v6481
    %v6560 = vpop.f32.mrb[0].mxu0
    %v6561 = vadd.f32 0.0, %v6560
    %v6562 = vpop.f32.mrb[0].mxu0
    %6563 = vmatprep.mubr.f32.mxu0 0.0
    %6564 = vmatmul.mubr.f32.gmra.mrb[0].mxu0 %v6484
    %v6565 = vpop.f32.mrb[0].mxu0
    %v6566 = vadd.f32 0.0, %v6565
    %v6567 = vpop.f32.mrb[0].mxu0
    %6568 = vmatprep.mubr.f32.mxu0 0.0
    %6569 = vmatmul.mubr.f32.gmra.mrb[0].mxu0 %v6487
    %v6570 = vpop.f32.mrb[0].mxu0
    %v6571 = vadd.f32 0.0, %v6570
    %v6572 = vpop.f32.mrb[0].mxu0
    %6573 = vdwg.mxu0
    %6578 = vrot.lane.b32.xlu0 %v6556, 32
    %v6579 = vpop.permute.xlu0 %6578
    %6580 = vrot.lane.b32.xlu0 %v6561, 32
    %v6581 = vpop.permute.xlu0 %6580
    %6582 = vrot.lane.b32.xlu0 %v6566, 32
    %v6583 = vpop.permute.xlu0 %6582
    %6584 = vrot.lane.b32.xlu0 %v6571, 32
    %v6585 = vpop.permute.xlu0 %6584
    %6590 = vst.msk [vmem:[#allocation2] sm:$0xff] %vm1489, %v6579
    %6591 = vst.msk [vmem:[#allocation2 + $0x8] sm:$0xff] %vm1489, %v6581
    %6592 = vst.msk [vmem:[#allocation2 + $0x10] sm:$0xff] %vm1489, %v6583
    %6593 = vst.msk [vmem:[#allocation2 + $0x18] sm:$0xff] %vm1489, %v6585
    %6594 = vrot.lane.b32.xlu0 %v5678, 64
    %v6595 = vpop.permute.xlu0 %6594
    %6596 = vrot.lane.b32.xlu0 %v5681, 64
    %v6597 = vpop.permute.xlu0 %6596
    %6598 = vrot.lane.b32.xlu0 %v5686, 64
    %v6599 = vpop.permute.xlu0 %6598
    %6600 = vrot.lane.b32.xlu0 %v5689, 64
    %v6601 = vpop.permute.xlu0 %6600
    %v6607 = vsel %vm590, %v6352, 0
    %v6610 = vsel %vm590, %v6353, 0
    %v6613 = vsel %vm590, %v6354, 0
    %v6616 = vsel %vm590, %v6355, 0
    %6618 = vmatprep.subr.mxu0 0.0
    %6619 = vmatpush1.msra.mxu0 %v6595
    %6620 = vmatprep.subr.mxu0 0.0
    %6621 = vmatpush1.msra.mxu0 %v6597
    %6622 = vmatprep.subr.mxu0 0.0
    %6623 = vmatpush1.msra.mxu0 %v6599
    %6624 = vmatprep.subr.mxu0 0.0
    %6625 = vmatpush1.msra.mxu0 %v6601
    %6626 = vmatprep.subr.mxu0 0.0
    %6627 = vmatpush1.msra.mxu0 0.0
    %6628 = vmatprep.subr.mxu0 0.0
    %6629 = vmatpush1.msra.mxu0 0.0
    %6630 = vmatprep.subr.mxu0 0.0
    %6631 = vmatpush1.msra.mxu0 0.0
    %6632 = vmatprep.subr.mxu0 0.0
    %6633 = vmatpush1.msra.mxu0 0.0
    %6634 = vmatprep.subr.mxu0 0.0
    %6635 = vmatpush1.msra.mxu0 0.0
    %6636 = vmatprep.subr.mxu0 0.0
    %6637 = vmatpush1.msra.mxu0 0.0
    %6638 = vmatprep.subr.mxu0 0.0
    %6639 = vmatpush1.msra.mxu0 0.0
    %6640 = vmatprep.subr.mxu0 0.0
    %6641 = vmatpush1.msra.mxu0 0.0
    %6642 = vmatprep.subr.mxu0 0.0
    %6643 = vmatpush1.msra.mxu0 0.0
    %6644 = vmatprep.subr.mxu0 0.0
    %6645 = vmatpush1.msra.mxu0 0.0
    %6646 = vmatprep.subr.mxu0 0.0
    %6647 = vmatpush1.msra.mxu0 0.0
    %6648 = vmatprep.subr.mxu0 0.0
    %6649 = vmatpush1.msra.mxu0 0.0
    %6650 = vmatprep.subr.mxu0 0.0
    %6651 = vmatpush1.msra.mxu0 0.0
    %6652 = vmatprep.subr.mxu0 0.0
    %6653 = vmatpush1.msra.mxu0 0.0
    %6654 = vmatprep.subr.mxu0 0.0
    %6655 = vmatpush1.msra.mxu0 0.0
    %6656 = vmatprep.subr.mxu0 0.0
    %6657 = vmatpush1.msra.mxu0 0.0
    %6658 = vmatprep.subr.mxu0 0.0
    %6659 = vmatpush1.msra.mxu0 0.0
    %6660 = vmatprep.subr.mxu0 0.0
    %6661 = vmatpush1.msra.mxu0 0.0
    %6662 = vmatprep.subr.mxu0 0.0
    %6663 = vmatpush1.msra.mxu0 0.0
    %6664 = vmatprep.subr.mxu0 0.0
    %6665 = vmatpush1.msra.mxu0 0.0
    %6666 = vmatprep.subr.mxu0 0.0
    %6667 = vmatpush1.msra.mxu0 0.0
    %6668 = vmatprep.subr.mxu0 0.0
    %6669 = vmatpush1.msra.mxu0 0.0
    %6670 = vmatprep.subr.mxu0 0.0
    %6671 = vmatpush1.msra.mxu0 0.0
    %6672 = vmatprep.subr.mxu0 0.0
    %6673 = vmatpush1.msra.mxu0 0.0
    %6674 = vmatprep.subr.mxu0 0.0
    %6675 = vmatpush1.msra.mxu0 0.0
    %6676 = vmatprep.subr.mxu0 0.0
    %6677 = vmatpush1.msra.mxu0 0.0
    %6678 = vmatprep.subr.mxu0 0.0
    %6679 = vmatpush1.msra.mxu0 0.0
    %6680 = vmatprep.subr.mxu0 0.0
    %6681 = vmatpush1.msra.mxu0 0.0
    %6682 = vmatprep.mubr.f32.mxu0 0.0
    %6683 = vmatmul.mubr.f32.gmra.mrb[0].mxu0 %v6607
    %v6684 = vpop.f32.mrb[0].mxu0
    %v6685 = vadd.f32 0.0, %v6684
    %v6686 = vpop.f32.mrb[0].mxu0
    %6687 = vmatprep.mubr.f32.mxu0 0.0
    %6688 = vmatmul.mubr.f32.gmra.mrb[0].mxu0 %v6610
    %v6689 = vpop.f32.mrb[0].mxu0
    %v6690 = vadd.f32 0.0, %v6689
    %v6691 = vpop.f32.mrb[0].mxu0
    %6692 = vmatprep.mubr.f32.mxu0 0.0
    %6693 = vmatmul.mubr.f32.gmra.mrb[0].mxu0 %v6613
    %v6694 = vpop.f32.mrb[0].mxu0
    %v6695 = vadd.f32 0.0, %v6694
    %v6696 = vpop.f32.mrb[0].mxu0
    %6697 = vmatprep.mubr.f32.mxu0 0.0
    %6698 = vmatmul.mubr.f32.gmra.mrb[0].mxu0 %v6616
    %v6699 = vpop.f32.mrb[0].mxu0
    %v6700 = vadd.f32 0.0, %v6699
    %v6701 = vpop.f32.mrb[0].mxu0
    %6702 = vdwg.mxu0
    %6707 = vrot.lane.b32.xlu0 %v6685, 64
    %v6708 = vpop.permute.xlu0 %6707
    %6709 = vrot.lane.b32.xlu0 %v6690, 64
    %v6710 = vpop.permute.xlu0 %6709
    %6711 = vrot.lane.b32.xlu0 %v6695, 64
    %v6712 = vpop.permute.xlu0 %6711
    %6713 = vrot.lane.b32.xlu0 %v6700, 64
    %v6714 = vpop.permute.xlu0 %6713
    %6719 = vst.msk [vmem:[#allocation2] sm:$0xff] %vm1619, %v6708
    %6720 = vst.msk [vmem:[#allocation2 + $0x8] sm:$0xff] %vm1619, %v6710
    %6721 = vst.msk [vmem:[#allocation2 + $0x10] sm:$0xff] %vm1619, %v6712
    %6722 = vst.msk [vmem:[#allocation2 + $0x18] sm:$0xff] %vm1619, %v6714
    %6723 = vrot.lane.b32.xlu0 %v5678, 32
    %v6724 = vpop.permute.xlu0 %6723
    %6725 = vrot.lane.b32.xlu0 %v5681, 32
    %v6726 = vpop.permute.xlu0 %6725
    %6727 = vrot.lane.b32.xlu0 %v5686, 32
    %v6728 = vpop.permute.xlu0 %6727
    %6729 = vrot.lane.b32.xlu0 %v5689, 32
    %v6730 = vpop.permute.xlu0 %6729
    %v6736 = vsel %vm590, %v6356, 0
    %v6739 = vsel %vm590, %v6357, 0
    %v6742 = vsel %vm590, %v6358, 0
    %v6745 = vsel %vm590, %v6359, 0
    %6747 = vmatprep.subr.mxu0 0.0
    %6748 = vmatpush1.msra.mxu0 %v6724
    %6749 = vmatprep.subr.mxu0 0.0
    %6750 = vmatpush1.msra.mxu0 %v6726
    %6751 = vmatprep.subr.mxu0 0.0
    %6752 = vmatpush1.msra.mxu0 %v6728
    %6753 = vmatprep.subr.mxu0 0.0
    %6754 = vmatpush1.msra.mxu0 %v6730
    %6755 = vmatprep.subr.mxu0 0.0
    %6756 = vmatpush1.msra.mxu0 0.0
    %6757 = vmatprep.subr.mxu0 0.0
    %6758 = vmatpush1.msra.mxu0 0.0
    %6759 = vmatprep.subr.mxu0 0.0
    %6760 = vmatpush1.msra.mxu0 0.0
    %6761 = vmatprep.subr.mxu0 0.0
    %6762 = vmatpush1.msra.mxu0 0.0
    %6763 = vmatprep.subr.mxu0 0.0
    %6764 = vmatpush1.msra.mxu0 0.0
    %6765 = vmatprep.subr.mxu0 0.0
    %6766 = vmatpush1.msra.mxu0 0.0
    %6767 = vmatprep.subr.mxu0 0.0
    %6768 = vmatpush1.msra.mxu0 0.0
    %6769 = vmatprep.subr.mxu0 0.0
    %6770 = vmatpush1.msra.mxu0 0.0
    %6771 = vmatprep.subr.mxu0 0.0
    %6772 = vmatpush1.msra.mxu0 0.0
    %6773 = vmatprep.subr.mxu0 0.0
    %6774 = vmatpush1.msra.mxu0 0.0
    %6775 = vmatprep.subr.mxu0 0.0
    %6776 = vmatpush1.msra.mxu0 0.0
    %6777 = vmatprep.subr.mxu0 0.0
    %6778 = vmatpush1.msra.mxu0 0.0
    %6779 = vmatprep.subr.mxu0 0.0
    %6780 = vmatpush1.msra.mxu0 0.0
    %6781 = vmatprep.subr.mxu0 0.0
    %6782 = vmatpush1.msra.mxu0 0.0
    %6783 = vmatprep.subr.mxu0 0.0
    %6784 = vmatpush1.msra.mxu0 0.0
    %6785 = vmatprep.subr.mxu0 0.0
    %6786 = vmatpush1.msra.mxu0 0.0
    %6787 = vmatprep.subr.mxu0 0.0
    %6788 = vmatpush1.msra.mxu0 0.0
    %6789 = vmatprep.subr.mxu0 0.0
    %6790 = vmatpush1.msra.mxu0 0.0
    %6791 = vmatprep.subr.mxu0 0.0
    %6792 = vmatpush1.msra.mxu0 0.0
    %6793 = vmatprep.subr.mxu0 0.0
    %6794 = vmatpush1.msra.mxu0 0.0
    %6795 = vmatprep.subr.mxu0 0.0
    %6796 = vmatpush1.msra.mxu0 0.0
    %6797 = vmatprep.subr.mxu0 0.0
    %6798 = vmatpush1.msra.mxu0 0.0
    %6799 = vmatprep.subr.mxu0 0.0
    %6800 = vmatpush1.msra.mxu0 0.0
    %6801 = vmatprep.subr.mxu0 0.0
    %6802 = vmatpush1.msra.mxu0 0.0
    %6803 = vmatprep.subr.mxu0 0.0
    %6804 = vmatpush1.msra.mxu0 0.0
    %6805 = vmatprep.subr.mxu0 0.0
    %6806 = vmatpush1.msra.mxu0 0.0
    %6807 = vmatprep.subr.mxu0 0.0
    %6808 = vmatpush1.msra.mxu0 0.0
    %6809 = vmatprep.subr.mxu0 0.0
    %6810 = vmatpush1.msra.mxu0 0.0
    %6811 = vmatprep.mubr.f32.mxu0 0.0
    %6812 = vmatmul.mubr.f32.gmra.mrb[0].mxu0 %v6736
    %v6813 = vpop.f32.mrb[0].mxu0
    %v6814 = vadd.f32 0.0, %v6813
    %v6815 = vpop.f32.mrb[0].mxu0
    %6816 = vmatprep.mubr.f32.mxu0 0.0
    %6817 = vmatmul.mubr.f32.gmra.mrb[0].mxu0 %v6739
    %v6818 = vpop.f32.mrb[0].mxu0
    %v6819 = vadd.f32 0.0, %v6818
    %v6820 = vpop.f32.mrb[0].mxu0
    %6821 = vmatprep.mubr.f32.mxu0 0.0
    %6822 = vmatmul.mubr.f32.gmra.mrb[0].mxu0 %v6742
    %v6823 = vpop.f32.mrb[0].mxu0
    %v6824 = vadd.f32 0.0, %v6823
    %v6825 = vpop.f32.mrb[0].mxu0
    %6826 = vmatprep.mubr.f32.mxu0 0.0
    %6827 = vmatmul.mubr.f32.gmra.mrb[0].mxu0 %v6745
    %v6828 = vpop.f32.mrb[0].mxu0
    %v6829 = vadd.f32 0.0, %v6828
    %v6830 = vpop.f32.mrb[0].mxu0
    %6831 = vdwg.mxu0
    %6836 = vrot.lane.b32.xlu0 %v6814, 96
    %v6837 = vpop.permute.xlu0 %6836
    %6838 = vrot.lane.b32.xlu0 %v6819, 96
    %v6839 = vpop.permute.xlu0 %6838
    %6840 = vrot.lane.b32.xlu0 %v6824, 96
    %v6841 = vpop.permute.xlu0 %6840
    %6842 = vrot.lane.b32.xlu0 %v6829, 96
    %v6843 = vpop.permute.xlu0 %6842
    %6848 = vst.msk [vmem:[#allocation2] sm:$0xff] %vm1749, %v6837
    %6849 = vst.msk [vmem:[#allocation2 + $0x8] sm:$0xff] %vm1749, %v6839
    %6850 = vst.msk [vmem:[#allocation2 + $0x10] sm:$0xff] %vm1749, %v6841
    %6851 = vst.msk [vmem:[#allocation2 + $0x18] sm:$0xff] %vm1749, %v6843
    %v6852 = vld [vmem:[#allocation2] sm:$0xff]
    %v6853 = vld [vmem:[#allocation2 + $0x8] sm:$0xff]
    %v6854 = vld [vmem:[#allocation2 + $0x10] sm:$0xff]
    %v6855 = vld [vmem:[#allocation2 + $0x18] sm:$0xff]
    %v6856 = vpack.c.bf16 %v6853, %v6852
    %v6857 = vpack.c.bf16 %v6855, %v6854
    %s6858 = scalar_lea.vmem [#allocation8], 128
    %v6859 = vld [vmem:[%s6858] sm:$0xf]
    %v6860 = vld [vmem:[%s6858 + $0x4] sm:$0xf]
    %v6861 = vld [vmem:[%s6858 + $0x8] sm:$0xf]
    %v6862 = vld [vmem:[%s6858 + $0xc] sm:$0xf]
    %v6863 = vld [vmem:[%s6858 + $0x10] sm:$0xf]
    %v6864 = vld [vmem:[%s6858 + $0x14] sm:$0xf]
    %v6865 = vld [vmem:[%s6858 + $0x18] sm:$0xf]
    %v6866 = vld [vmem:[%s6858 + $0x1c] sm:$0xf]
    %v6867 = vld [vmem:[%s6858 + $0x20] sm:$0xf]
    %v6868 = vld [vmem:[%s6858 + $0x24] sm:$0xf]
    %v6869 = vld [vmem:[%s6858 + $0x28] sm:$0xf]
    %v6870 = vld [vmem:[%s6858 + $0x2c] sm:$0xf]
    %v6871 = vld [vmem:[%s6858 + $0x30] sm:$0xf]
    %v6872 = vld [vmem:[%s6858 + $0x34] sm:$0xf]
    %v6873 = vld [vmem:[%s6858 + $0x38] sm:$0xf]
    %v6874 = vld [vmem:[%s6858 + $0x3c] sm:$0xf]
    %s6875 = scalar_lea.vmem %s7, 2
    %v6876 = vld [vmem:[%s6875] sm:$0x1]
    %v6878 = vlaneseq
    %v6879 = vshrl.u32 %v6878, 7
    %v6880 = vsub.s32 0, %v6879
    %v6881 = vrot.slane %v6876, %v6880
    %v6899 = vunpack.c.l.b16 %v6859
    %v6900 = vunpack.c.l.b16 %v6860
    %v6901 = vunpack.c.l.b16 %v6861
    %v6902 = vunpack.c.l.b16 %v6862
    %v6903 = vunpack.c.l.b16 %v6863
    %v6904 = vunpack.c.l.b16 %v6864
    %v6905 = vunpack.c.l.b16 %v6865
    %v6906 = vunpack.c.l.b16 %v6866
    %v6907 = vunpack.c.l.b16 %v6867
    %v6908 = vunpack.c.l.b16 %v6868
    %v6909 = vunpack.c.l.b16 %v6869
    %v6910 = vunpack.c.l.b16 %v6870
    %v6911 = vunpack.c.l.b16 %v6871
    %v6912 = vunpack.c.l.b16 %v6872
    %v6913 = vunpack.c.l.b16 %v6873
    %v6914 = vunpack.c.l.b16 %v6874
    %v6915 = vpack.c.b16 %v6900, %v6899
    %v6916 = vpack.c.b16 %v6902, %v6901
    %v6917 = vpack.c.b16 %v6904, %v6903
    %v6918 = vpack.c.b16 %v6906, %v6905
    %v6919 = vpack.c.b16 %v6908, %v6907
    %v6920 = vpack.c.b16 %v6910, %v6909
    %v6921 = vpack.c.b16 %v6912, %v6911
    %v6922 = vpack.c.b16 %v6914, %v6913
    %6931 = vmatprep.subr.bf16.mxu0 0
    %6932 = vmatpush1.bf16.msra.mxu0 %v6915
    %6933 = vmatprep.subr.bf16.mxu0 0
    %6934 = vmatpush1.bf16.msra.mxu0 %v6916
    %6935 = vmatprep.subr.bf16.mxu0 0
    %6936 = vmatpush1.bf16.msra.mxu0 %v6917
    %6937 = vmatprep.subr.bf16.mxu0 0
    %6938 = vmatpush1.bf16.msra.mxu0 %v6918
    %6939 = vmatprep.subr.bf16.mxu0 0
    %6940 = vmatpush1.bf16.msra.mxu0 %v6919
    %6941 = vmatprep.subr.bf16.mxu0 0
    %6942 = vmatpush1.bf16.msra.mxu0 %v6920
    %6943 = vmatprep.subr.bf16.mxu0 0
    %6944 = vmatpush1.bf16.msra.mxu0 %v6921
    %6945 = vmatprep.subr.bf16.mxu0 0
    %6946 = vmatpush1.bf16.msra.mxu0 %v6922
    %6947 = vmatprep.subr.bf16.mxu0 0
    %6948 = vmatpush1.bf16.msra.mxu0 0
    %6949 = vmatprep.subr.bf16.mxu0 0
    %6950 = vmatpush1.bf16.msra.mxu0 0
    %6951 = vmatprep.subr.bf16.mxu0 0
    %6952 = vmatpush1.bf16.msra.mxu0 0
    %6953 = vmatprep.subr.bf16.mxu0 0
    %6954 = vmatpush1.bf16.msra.mxu0 0
    %6955 = vmatprep.subr.bf16.mxu0 0
    %6956 = vmatpush1.bf16.msra.mxu0 0
    %6957 = vmatprep.subr.bf16.mxu0 0
    %6958 = vmatpush1.bf16.msra.mxu0 0
    %6959 = vmatprep.subr.bf16.mxu0 0
    %6960 = vmatpush1.bf16.msra.mxu0 0
    %6961 = vmatprep.subr.bf16.mxu0 0
    %6962 = vmatpush1.bf16.msra.mxu0 0
    %6963 = vmatprep.mubr.bf16.mxu0 0
    %6964 = vmatmul.mubr.bf16.gmra.mrb[0].mxu0 %v6856
    %v6965 = vpop.f32.mrb[0].mxu0
    %v6966 = vadd.f32 %v6881, %v6965
    %v6967 = vpop.f32.mrb[0].mxu0
    %v6968 = vpop.f32.mrb[0].mxu0
    %v6969 = vadd.f32 %v6881, %v6968
    %v6970 = vpop.f32.mrb[0].mxu0
    %6971 = vmatprep.mubr.bf16.mxu0 0
    %6972 = vmatmul.mubr.bf16.gmra.mrb[0].mxu0 %v6857
    %v6973 = vpop.f32.mrb[0].mxu0
    %v6974 = vadd.f32 %v6881, %v6973
    %v6975 = vpop.f32.mrb[0].mxu0
    %v6976 = vpop.f32.mrb[0].mxu0
    %v6977 = vadd.f32 %v6881, %v6976
    %v6978 = vpop.f32.mrb[0].mxu0
    %6979 = vdwg.mxu0
    %v6980 = vadd.f32 %v6966, %v5405
    %v6981 = vadd.f32 %v6969, %v5406
    %v6982 = vadd.f32 %v6974, %v5407
    %v6983 = vadd.f32 %v6977, %v5408
    %s6984 = scalar_lea.vmem [#allocation9], 2
    %v6985 = vld [vmem:[%s6984] sm:$0x1]
    %s6986 = scalar_lea.vmem [#allocation11], 2
    %v6987 = vld [vmem:[%s6986] sm:$0x1]
    %6988 = vadd.xlane.f32.xlu0 %v6980
    %v6989 = vpop.xlane.xlu0 %6988
    %6990 = vadd.xlane.f32.xlu0 %v6981
    %v6991 = vpop.xlane.xlu0 %6990
    %6992 = vadd.xlane.f32.xlu0 %v6982
    %v6993 = vpop.xlane.xlu0 %6992
    %6994 = vadd.xlane.f32.xlu0 %v6983
    %v6995 = vpop.xlane.xlu0 %6994
    %v6996 = vmul.f32 %v6989, %v236
    %v6997 = vmul.f32 %v6991, %v236
    %v6998 = vmul.f32 %v6993, %v236
    %v6999 = vmul.f32 %v6995, %v236
    %v7000 = vsub.f32 %v6980, %v6996
    %v7001 = vsub.f32 %v6981, %v6997
    %v7002 = vsub.f32 %v6982, %v6998
    %v7003 = vsub.f32 %v6983, %v6999
    %v7004 = vmul.f32 %v7000, %v7000
    %v7005 = vmul.f32 %v7001, %v7001
    %v7006 = vmul.f32 %v7002, %v7002
    %v7007 = vmul.f32 %v7003, %v7003
    %7008 = vadd.xlane.f32.xlu0 %v7004
    %v7009 = vpop.xlane.xlu0 %7008
    %7010 = vadd.xlane.f32.xlu0 %v7005
    %v7011 = vpop.xlane.xlu0 %7010
    %7012 = vadd.xlane.f32.xlu0 %v7006
    %v7013 = vpop.xlane.xlu0 %7012
    %7014 = vadd.xlane.f32.xlu0 %v7007
    %v7015 = vpop.xlane.xlu0 %7014
    %v7016 = vmul.f32 %v7009, %v236
    %v7017 = vmul.f32 %v7011, %v236
    %v7018 = vmul.f32 %v7013, %v236
    %v7019 = vmul.f32 %v7015, %v236
    %v7020 = vadd.f32 %v7016, 1e-12
    %v7021 = vadd.f32 %v7017, 1e-12
    %v7022 = vadd.f32 %v7018, 1e-12
    %v7023 = vadd.f32 %v7019, 1e-12
    %v7024 = vrsqrt.pop %v7020
    %v7025 = vrsqrt.pop %v7021
    %v7026 = vrsqrt.pop %v7022
    %v7027 = vrsqrt.pop %v7023
    %v7028 = vmul.f32 %v7000, %v7024
    %v7029 = vmul.f32 %v7001, %v7025
    %v7030 = vmul.f32 %v7002, %v7026
    %v7031 = vmul.f32 %v7003, %v7027
    %v7033 = vlaneseq
    %v7034 = vshrl.u32 %v7033, 7
    %v7035 = vsub.s32 0, %v7034
    %v7036 = vrot.slane %v6985, %v7035
    %v7038 = vmul.f32 %v7028, %v7036
    %v7039 = vmul.f32 %v7029, %v7036
    %v7040 = vmul.f32 %v7030, %v7036
    %v7041 = vmul.f32 %v7031, %v7036
    %v7043 = vlaneseq
    %v7044 = vshrl.u32 %v7043, 7
    %v7045 = vsub.s32 0, %v7044
    %v7046 = vrot.slane %v6987, %v7045
    %v7048 = vadd.f32 %v7038, %v7046
    %v7049 = vadd.f32 %v7039, %v7046
    %v7050 = vadd.f32 %v7040, %v7046
    %v7051 = vadd.f32 %v7041, %v7046
    %v7052 = vpack.c.bf16 %v7049, %v7048
    %v7053 = vpack.c.bf16 %v7051, %v7050
    %s7054 = scalar_lea.vmem [#allocation12], 512
    %v7055 = vld [vmem:[%s7054] sm:$0xff]
    %v7056 = vld [vmem:[%s7054 + $0x8] sm:$0xff]
    %v7057 = vld [vmem:[%s7054 + $0x10] sm:$0xff]
    %v7058 = vld [vmem:[%s7054 + $0x18] sm:$0xff]
    %v7059 = vld [vmem:[%s7054 + $0x20] sm:$0xff]
    %v7060 = vld [vmem:[%s7054 + $0x28] sm:$0xff]
    %v7061 = vld [vmem:[%s7054 + $0x30] sm:$0xff]
    %v7062 = vld [vmem:[%s7054 + $0x38] sm:$0xff]
    %v7063 = vld [vmem:[%s7054 + $0x40] sm:$0xff]
    %v7064 = vld [vmem:[%s7054 + $0x48] sm:$0xff]
    %v7065 = vld [vmem:[%s7054 + $0x50] sm:$0xff]
    %v7066 = vld [vmem:[%s7054 + $0x58] sm:$0xff]
    %v7067 = vld [vmem:[%s7054 + $0x60] sm:$0xff]
    %v7068 = vld [vmem:[%s7054 + $0x68] sm:$0xff]
    %v7069 = vld [vmem:[%s7054 + $0x70] sm:$0xff]
    %v7070 = vld [vmem:[%s7054 + $0x78] sm:$0xff]
    %v7071 = vld [vmem:[%s7054 + $0x80] sm:$0xff]
    %v7072 = vld [vmem:[%s7054 + $0x88] sm:$0xff]
    %v7073 = vld [vmem:[%s7054 + $0x90] sm:$0xff]
    %v7074 = vld [vmem:[%s7054 + $0x98] sm:$0xff]
    %v7075 = vld [vmem:[%s7054 + $0xa0] sm:$0xff]
    %v7076 = vld [vmem:[%s7054 + $0xa8] sm:$0xff]
    %v7077 = vld [vmem:[%s7054 + $0xb0] sm:$0xff]
    %v7078 = vld [vmem:[%s7054 + $0xb8] sm:$0xff]
    %v7079 = vld [vmem:[%s7054 + $0xc0] sm:$0xff]
    %v7080 = vld [vmem:[%s7054 + $0xc8] sm:$0xff]
    %v7081 = vld [vmem:[%s7054 + $0xd0] sm:$0xff]
    %v7082 = vld [vmem:[%s7054 + $0xd8] sm:$0xff]
    %v7083 = vld [vmem:[%s7054 + $0xe0] sm:$0xff]
    %v7084 = vld [vmem:[%s7054 + $0xe8] sm:$0xff]
    %v7085 = vld [vmem:[%s7054 + $0xf0] sm:$0xff]
    %v7086 = vld [vmem:[%s7054 + $0xf8] sm:$0xff]
    %s7087 = scalar_lea.vmem %s11, 8
    %v7088 = vld [vmem:[%s7087] sm:$0xf]
    %v7090 = vlaneseq
    %v7091 = vshrl.u32 %v7090, 7
    %v7092 = vsub.s32 0, %v7091
    %v7093 = vrot.slane %v7088, %v7092
    %v7094 = vlaneseq
    %v7095 = vshrl.u32 %v7094, 7
    %v7096 = vsub.s32 1, %v7095
    %v7097 = vrot.slane %v7088, %v7096
    %v7098 = vlaneseq
    %v7099 = vshrl.u32 %v7098, 7
    %v7100 = vsub.s32 2, %v7099
    %v7101 = vrot.slane %v7088, %v7100
    %v7102 = vlaneseq
    %v7103 = vshrl.u32 %v7102, 7
    %v7104 = vsub.s32 3, %v7103
    %v7105 = vrot.slane %v7088, %v7104
    %v7142 = vunpack.c.l.b16 %v7055
    %v7143 = vunpack.c.h.b16 %v7055
    %v7144 = vunpack.c.l.b16 %v7056
    %v7145 = vunpack.c.h.b16 %v7056
    %v7146 = vunpack.c.l.b16 %v7057
    %v7147 = vunpack.c.h.b16 %v7057
    %v7148 = vunpack.c.l.b16 %v7058
    %v7149 = vunpack.c.h.b16 %v7058
    %v7150 = vunpack.c.l.b16 %v7059
    %v7151 = vunpack.c.h.b16 %v7059
    %v7152 = vunpack.c.l.b16 %v7060
    %v7153 = vunpack.c.h.b16 %v7060
    %v7154 = vunpack.c.l.b16 %v7061
    %v7155 = vunpack.c.h.b16 %v7061
    %v7156 = vunpack.c.l.b16 %v7062
    %v7157 = vunpack.c.h.b16 %v7062
    %v7158 = vunpack.c.l.b16 %v7063
    %v7159 = vunpack.c.h.b16 %v7063
    %v7160 = vunpack.c.l.b16 %v7064
    %v7161 = vunpack.c.h.b16 %v7064
    %v7162 = vunpack.c.l.b16 %v7065
    %v7163 = vunpack.c.h.b16 %v7065
    %v7164 = vunpack.c.l.b16 %v7066
    %v7165 = vunpack.c.h.b16 %v7066
    %v7166 = vunpack.c.l.b16 %v7067
    %v7167 = vunpack.c.h.b16 %v7067
    %v7168 = vunpack.c.l.b16 %v7068
    %v7169 = vunpack.c.h.b16 %v7068
    %v7170 = vunpack.c.l.b16 %v7069
    %v7171 = vunpack.c.h.b16 %v7069
    %v7172 = vunpack.c.l.b16 %v7070
    %v7173 = vunpack.c.h.b16 %v7070
    %v7174 = vunpack.c.l.b16 %v7071
    %v7175 = vunpack.c.h.b16 %v7071
    %v7176 = vunpack.c.l.b16 %v7072
    %v7177 = vunpack.c.h.b16 %v7072
    %v7178 = vunpack.c.l.b16 %v7073
    %v7179 = vunpack.c.h.b16 %v7073
    %v7180 = vunpack.c.l.b16 %v7074
    %v7181 = vunpack.c.h.b16 %v7074
    %v7182 = vunpack.c.l.b16 %v7075
    %v7183 = vunpack.c.h.b16 %v7075
    %v7184 = vunpack.c.l.b16 %v7076
    %v7185 = vunpack.c.h.b16 %v7076
    %v7186 = vunpack.c.l.b16 %v7077
    %v7187 = vunpack.c.h.b16 %v7077
    %v7188 = vunpack.c.l.b16 %v7078
    %v7189 = vunpack.c.h.b16 %v7078
    %v7190 = vunpack.c.l.b16 %v7079
    %v7191 = vunpack.c.h.b16 %v7079
    %v7192 = vunpack.c.l.b16 %v7080
    %v7193 = vunpack.c.h.b16 %v7080
    %v7194 = vunpack.c.l.b16 %v7081
    %v7195 = vunpack.c.h.b16 %v7081
    %v7196 = vunpack.c.l.b16 %v7082
    %v7197 = vunpack.c.h.b16 %v7082
    %v7198 = vunpack.c.l.b16 %v7083
    %v7199 = vunpack.c.h.b16 %v7083
    %v7200 = vunpack.c.l.b16 %v7084
    %v7201 = vunpack.c.h.b16 %v7084
    %v7202 = vunpack.c.l.b16 %v7085
    %v7203 = vunpack.c.h.b16 %v7085
    %v7204 = vunpack.c.l.b16 %v7086
    %v7205 = vunpack.c.h.b16 %v7086
    %v7206 = vpack.c.b16 %v7146, %v7142
    %v7207 = vpack.c.b16 %v7147, %v7143
    %v7208 = vpack.c.b16 %v7148, %v7144
    %v7209 = vpack.c.b16 %v7149, %v7145
    %v7210 = vpack.c.b16 %v7154, %v7150
    %v7211 = vpack.c.b16 %v7155, %v7151
    %v7212 = vpack.c.b16 %v7156, %v7152
    %v7213 = vpack.c.b16 %v7157, %v7153
    %v7214 = vpack.c.b16 %v7162, %v7158
    %v7215 = vpack.c.b16 %v7163, %v7159
    %v7216 = vpack.c.b16 %v7164, %v7160
    %v7217 = vpack.c.b16 %v7165, %v7161
    %v7218 = vpack.c.b16 %v7170, %v7166
    %v7219 = vpack.c.b16 %v7171, %v7167
    %v7220 = vpack.c.b16 %v7172, %v7168
    %v7221 = vpack.c.b16 %v7173, %v7169
    %v7222 = vpack.c.b16 %v7178, %v7174
    %v7223 = vpack.c.b16 %v7179, %v7175
    %v7224 = vpack.c.b16 %v7180, %v7176
    %v7225 = vpack.c.b16 %v7181, %v7177
    %v7226 = vpack.c.b16 %v7186, %v7182
    %v7227 = vpack.c.b16 %v7187, %v7183
    %v7228 = vpack.c.b16 %v7188, %v7184
    %v7229 = vpack.c.b16 %v7189, %v7185
    %v7230 = vpack.c.b16 %v7194, %v7190
    %v7231 = vpack.c.b16 %v7195, %v7191
    %v7232 = vpack.c.b16 %v7196, %v7192
    %v7233 = vpack.c.b16 %v7197, %v7193
    %v7234 = vpack.c.b16 %v7202, %v7198
    %v7235 = vpack.c.b16 %v7203, %v7199
    %v7236 = vpack.c.b16 %v7204, %v7200
    %v7237 = vpack.c.b16 %v7205, %v7201
    %7270 = vmatprep.subr.bf16.mxu0 %v7207
    %7271 = vmatpush1.bf16.msra.mxu0 %v7206
    %7272 = vmatprep.subr.bf16.mxu0 %v7211
    %7273 = vmatpush1.bf16.msra.mxu0 %v7210
    %7274 = vmatprep.subr.bf16.mxu0 %v7215
    %7275 = vmatpush1.bf16.msra.mxu0 %v7214
    %7276 = vmatprep.subr.bf16.mxu0 %v7219
    %7277 = vmatpush1.bf16.msra.mxu0 %v7218
    %7278 = vmatprep.subr.bf16.mxu0 %v7223
    %7279 = vmatpush1.bf16.msra.mxu0 %v7222
    %7280 = vmatprep.subr.bf16.mxu0 %v7227
    %7281 = vmatpush1.bf16.msra.mxu0 %v7226
    %7282 = vmatprep.subr.bf16.mxu0 %v7231
    %7283 = vmatpush1.bf16.msra.mxu0 %v7230
    %7284 = vmatprep.subr.bf16.mxu0 %v7235
    %7285 = vmatpush1.bf16.msra.mxu0 %v7234
    %7286 = vmatprep.subr.bf16.mxu0 0
    %7287 = vmatpush1.bf16.msra.mxu0 0
    %7288 = vmatprep.subr.bf16.mxu0 0
    %7289 = vmatpush1.bf16.msra.mxu0 0
    %7290 = vmatprep.subr.bf16.mxu0 0
    %7291 = vmatpush1.bf16.msra.mxu0 0
    %7292 = vmatprep.subr.bf16.mxu0 0
    %7293 = vmatpush1.bf16.msra.mxu0 0
    %7294 = vmatprep.subr.bf16.mxu0 0
    %7295 = vmatpush1.bf16.msra.mxu0 0
    %7296 = vmatprep.subr.bf16.mxu0 0
    %7297 = vmatpush1.bf16.msra.mxu0 0
    %7298 = vmatprep.subr.bf16.mxu0 0
    %7299 = vmatpush1.bf16.msra.mxu0 0
    %7300 = vmatprep.subr.bf16.mxu0 0
    %7301 = vmatpush1.bf16.msra.mxu0 0
    %7302 = vmatprep.mubr.bf16.mxu0 0
    %7303 = vmatmul.mubr.bf16.gmra.mrb[0].mxu0 %v7052
    %v7304 = vpop.f32.mrb[0].mxu0
    %v7305 = vadd.f32 %v7093, %v7304
    %v7306 = vpop.f32.mrb[0].mxu0
    %v7307 = vadd.f32 %v7097, %v7306
    %v7308 = vpop.f32.mrb[0].mxu0
    %v7309 = vadd.f32 %v7093, %v7308
    %v7310 = vpop.f32.mrb[0].mxu0
    %v7311 = vadd.f32 %v7097, %v7310
    %7312 = vmatprep.mubr.bf16.mxu0 0
    %7313 = vmatmul.mubr.bf16.gmra.mrb[0].mxu0 %v7053
    %v7314 = vpop.f32.mrb[0].mxu0
    %v7315 = vadd.f32 %v7093, %v7314
    %v7316 = vpop.f32.mrb[0].mxu0
    %v7317 = vadd.f32 %v7097, %v7316
    %v7318 = vpop.f32.mrb[0].mxu0
    %v7319 = vadd.f32 %v7093, %v7318
    %v7320 = vpop.f32.mrb[0].mxu0
    %v7321 = vadd.f32 %v7097, %v7320
    %7322 = vdwg.mxu0
    %7323 = vmatprep.subr.bf16.mxu0 %v7209
    %7324 = vmatpush1.bf16.msra.mxu0 %v7208
    %7325 = vmatprep.subr.bf16.mxu0 %v7213
    %7326 = vmatpush1.bf16.msra.mxu0 %v7212
    %7327 = vmatprep.subr.bf16.mxu0 %v7217
    %7328 = vmatpush1.bf16.msra.mxu0 %v7216
    %7329 = vmatprep.subr.bf16.mxu0 %v7221
    %7330 = vmatpush1.bf16.msra.mxu0 %v7220
    %7331 = vmatprep.subr.bf16.mxu0 %v7225
    %7332 = vmatpush1.bf16.msra.mxu0 %v7224
    %7333 = vmatprep.subr.bf16.mxu0 %v7229
    %7334 = vmatpush1.bf16.msra.mxu0 %v7228
    %7335 = vmatprep.subr.bf16.mxu0 %v7233
    %7336 = vmatpush1.bf16.msra.mxu0 %v7232
    %7337 = vmatprep.subr.bf16.mxu0 %v7237
    %7338 = vmatpush1.bf16.msra.mxu0 %v7236
    %7339 = vmatprep.subr.bf16.mxu0 0
    %7340 = vmatpush1.bf16.msra.mxu0 0
    %7341 = vmatprep.subr.bf16.mxu0 0
    %7342 = vmatpush1.bf16.msra.mxu0 0
    %7343 = vmatprep.subr.bf16.mxu0 0
    %7344 = vmatpush1.bf16.msra.mxu0 0
    %7345 = vmatprep.subr.bf16.mxu0 0
    %7346 = vmatpush1.bf16.msra.mxu0 0
    %7347 = vmatprep.subr.bf16.mxu0 0
    %7348 = vmatpush1.bf16.msra.mxu0 0
    %7349 = vmatprep.subr.bf16.mxu0 0
    %7350 = vmatpush1.bf16.msra.mxu0 0
    %7351 = vmatprep.subr.bf16.mxu0 0
    %7352 = vmatpush1.bf16.msra.mxu0 0
    %7353 = vmatprep.subr.bf16.mxu0 0
    %7354 = vmatpush1.bf16.msra.mxu0 0
    %7355 = vmatprep.mubr.bf16.mxu0 0
    %7356 = vmatmul.mubr.bf16.gmra.mrb[0].mxu0 %v7052
    %v7357 = vpop.f32.mrb[0].mxu0
    %v7358 = vadd.f32 %v7101, %v7357
    %v7359 = vpop.f32.mrb[0].mxu0
    %v7360 = vadd.f32 %v7105, %v7359
    %v7361 = vpop.f32.mrb[0].mxu0
    %v7362 = vadd.f32 %v7101, %v7361
    %v7363 = vpop.f32.mrb[0].mxu0
    %v7364 = vadd.f32 %v7105, %v7363
    %7365 = vmatprep.mubr.bf16.mxu0 0
    %7366 = vmatmul.mubr.bf16.gmra.mrb[0].mxu0 %v7053
    %v7367 = vpop.f32.mrb[0].mxu0
    %v7368 = vadd.f32 %v7101, %v7367
    %v7369 = vpop.f32.mrb[0].mxu0
    %v7370 = vadd.f32 %v7105, %v7369
    %v7371 = vpop.f32.mrb[0].mxu0
    %v7372 = vadd.f32 %v7101, %v7371
    %v7373 = vpop.f32.mrb[0].mxu0
    %v7374 = vadd.f32 %v7105, %v7373
    %7375 = vdwg.mxu0
    %v7376 = vmul.f32 %v7305, %v7305
    %v7377 = vmul.f32 %v7307, %v7307
    %v7378 = vmul.f32 %v7358, %v7358
    %v7379 = vmul.f32 %v7360, %v7360
    %v7380 = vmul.f32 %v7309, %v7309
    %v7381 = vmul.f32 %v7311, %v7311
    %v7382 = vmul.f32 %v7362, %v7362
    %v7383 = vmul.f32 %v7364, %v7364
    %v7384 = vmul.f32 %v7315, %v7315
    %v7385 = vmul.f32 %v7317, %v7317
    %v7386 = vmul.f32 %v7368, %v7368
    %v7387 = vmul.f32 %v7370, %v7370
    %v7388 = vmul.f32 %v7319, %v7319
    %v7389 = vmul.f32 %v7321, %v7321
    %v7390 = vmul.f32 %v7372, %v7372
    %v7391 = vmul.f32 %v7374, %v7374
    %v7392 = vmul.f32 %v7305, %v7376
    %v7393 = vmul.f32 %v7307, %v7377
    %v7394 = vmul.f32 %v7358, %v7378
    %v7395 = vmul.f32 %v7360, %v7379
    %v7396 = vmul.f32 %v7309, %v7380
    %v7397 = vmul.f32 %v7311, %v7381
    %v7398 = vmul.f32 %v7362, %v7382
    %v7399 = vmul.f32 %v7364, %v7383
    %v7400 = vmul.f32 %v7315, %v7384
    %v7401 = vmul.f32 %v7317, %v7385
    %v7402 = vmul.f32 %v7368, %v7386
    %v7403 = vmul.f32 %v7370, %v7387
    %v7404 = vmul.f32 %v7319, %v7388
    %v7405 = vmul.f32 %v7321, %v7389
    %v7406 = vmul.f32 %v7372, %v7390
    %v7407 = vmul.f32 %v7374, %v7391
    %v7408 = vmul.f32 %v7392, 0.044715
    %v7409 = vmul.f32 %v7393, 0.044715
    %v7410 = vmul.f32 %v7394, 0.044715
    %v7411 = vmul.f32 %v7395, 0.044715
    %v7412 = vmul.f32 %v7396, 0.044715
    %v7413 = vmul.f32 %v7397, 0.044715
    %v7414 = vmul.f32 %v7398, 0.044715
    %v7415 = vmul.f32 %v7399, 0.044715
    %v7416 = vmul.f32 %v7400, 0.044715
    %v7417 = vmul.f32 %v7401, 0.044715
    %v7418 = vmul.f32 %v7402, 0.044715
    %v7419 = vmul.f32 %v7403, 0.044715
    %v7420 = vmul.f32 %v7404, 0.044715
    %v7421 = vmul.f32 %v7405, 0.044715
    %v7422 = vmul.f32 %v7406, 0.044715
    %v7423 = vmul.f32 %v7407, 0.044715
    %v7424 = vadd.f32 %v7305, %v7408
    %v7425 = vadd.f32 %v7307, %v7409
    %v7426 = vadd.f32 %v7358, %v7410
    %v7427 = vadd.f32 %v7360, %v7411
    %v7428 = vadd.f32 %v7309, %v7412
    %v7429 = vadd.f32 %v7311, %v7413
    %v7430 = vadd.f32 %v7362, %v7414
    %v7431 = vadd.f32 %v7364, %v7415
    %v7432 = vadd.f32 %v7315, %v7416
    %v7433 = vadd.f32 %v7317, %v7417
    %v7434 = vadd.f32 %v7368, %v7418
    %v7435 = vadd.f32 %v7370, %v7419
    %v7436 = vadd.f32 %v7319, %v7420
    %v7437 = vadd.f32 %v7321, %v7421
    %v7438 = vadd.f32 %v7372, %v7422
    %v7439 = vadd.f32 %v7374, %v7423
    %v7440 = vmul.f32 %v7424, 0.7978846
    %v7441 = vmul.f32 %v7425, 0.7978846
    %v7442 = vmul.f32 %v7426, 0.7978846
    %v7443 = vmul.f32 %v7427, 0.7978846
    %v7444 = vmul.f32 %v7428, 0.7978846
    %v7445 = vmul.f32 %v7429, 0.7978846
    %v7446 = vmul.f32 %v7430, 0.7978846
    %v7447 = vmul.f32 %v7431, 0.7978846
    %v7448 = vmul.f32 %v7432, 0.7978846
    %v7449 = vmul.f32 %v7433, 0.7978846
    %v7450 = vmul.f32 %v7434, 0.7978846
    %v7451 = vmul.f32 %v7435, 0.7978846
    %v7452 = vmul.f32 %v7436, 0.7978846
    %v7453 = vmul.f32 %v7437, 0.7978846
    %v7454 = vmul.f32 %v7438, 0.7978846
    %v7455 = vmul.f32 %v7439, 0.7978846
    %v7456 = vtanh.pop %v7440
    %v7457 = vtanh.pop %v7441
    %v7458 = vtanh.pop %v7442
    %v7459 = vtanh.pop %v7443
    %v7460 = vtanh.pop %v7444
    %v7461 = vtanh.pop %v7445
    %v7462 = vtanh.pop %v7446
    %v7463 = vtanh.pop %v7447
    %v7464 = vtanh.pop %v7448
    %v7465 = vtanh.pop %v7449
    %v7466 = vtanh.pop %v7450
    %v7467 = vtanh.pop %v7451
    %v7468 = vtanh.pop %v7452
    %v7469 = vtanh.pop %v7453
    %v7470 = vtanh.pop %v7454
    %v7471 = vtanh.pop %v7455
    %v7472 = vadd.f32 %v7456, 1.0
    %v7473 = vadd.f32 %v7457, 1.0
    %v7474 = vadd.f32 %v7458, 1.0
    %v7475 = vadd.f32 %v7459, 1.0
    %v7476 = vadd.f32 %v7460, 1.0
    %v7477 = vadd.f32 %v7461, 1.0
    %v7478 = vadd.f32 %v7462, 1.0
    %v7479 = vadd.f32 %v7463, 1.0
    %v7480 = vadd.f32 %v7464, 1.0
    %v7481 = vadd.f32 %v7465, 1.0
    %v7482 = vadd.f32 %v7466, 1.0
    %v7483 = vadd.f32 %v7467, 1.0
    %v7484 = vadd.f32 %v7468, 1.0
    %v7485 = vadd.f32 %v7469, 1.0
    %v7486 = vadd.f32 %v7470, 1.0
    %v7487 = vadd.f32 %v7471, 1.0
    %v7488 = vmul.f32 %v7472, 0.5
    %v7489 = vmul.f32 %v7473, 0.5
    %v7490 = vmul.f32 %v7474, 0.5
    %v7491 = vmul.f32 %v7475, 0.5
    %v7492 = vmul.f32 %v7476, 0.5
    %v7493 = vmul.f32 %v7477, 0.5
    %v7494 = vmul.f32 %v7478, 0.5
    %v7495 = vmul.f32 %v7479, 0.5
    %v7496 = vmul.f32 %v7480, 0.5
    %v7497 = vmul.f32 %v7481, 0.5
    %v7498 = vmul.f32 %v7482, 0.5
    %v7499 = vmul.f32 %v7483, 0.5
    %v7500 = vmul.f32 %v7484, 0.5
    %v7501 = vmul.f32 %v7485, 0.5
    %v7502 = vmul.f32 %v7486, 0.5
    %v7503 = vmul.f32 %v7487, 0.5
    %v7504 = vmul.f32 %v7305, %v7488
    %v7505 = vmul.f32 %v7307, %v7489
    %v7506 = vmul.f32 %v7358, %v7490
    %v7507 = vmul.f32 %v7360, %v7491
    %v7508 = vmul.f32 %v7309, %v7492
    %v7509 = vmul.f32 %v7311, %v7493
    %v7510 = vmul.f32 %v7362, %v7494
    %v7511 = vmul.f32 %v7364, %v7495
    %v7512 = vmul.f32 %v7315, %v7496
    %v7513 = vmul.f32 %v7317, %v7497
    %v7514 = vmul.f32 %v7368, %v7498
    %v7515 = vmul.f32 %v7370, %v7499
    %v7516 = vmul.f32 %v7319, %v7500
    %v7517 = vmul.f32 %v7321, %v7501
    %v7518 = vmul.f32 %v7372, %v7502
    %v7519 = vmul.f32 %v7374, %v7503
    %v7520 = vpack.c.bf16 %v7508, %v7504
    %v7521 = vpack.c.bf16 %v7509, %v7505
    %v7522 = vpack.c.bf16 %v7510, %v7506
    %v7523 = vpack.c.bf16 %v7511, %v7507
    %v7524 = vpack.c.bf16 %v7516, %v7512
    %v7525 = vpack.c.bf16 %v7517, %v7513
    %v7526 = vpack.c.bf16 %v7518, %v7514
    %v7527 = vpack.c.bf16 %v7519, %v7515
    %s7528 = scalar_lea.vmem [#allocation14], 512
    %v7529 = vld [vmem:[%s7528] sm:$0xf]
    %v7530 = vld [vmem:[%s7528 + $0x4] sm:$0xf]
    %v7531 = vld [vmem:[%s7528 + $0x8] sm:$0xf]
    %v7532 = vld [vmem:[%s7528 + $0xc] sm:$0xf]
    %v7533 = vld [vmem:[%s7528 + $0x10] sm:$0xf]
    %v7534 = vld [vmem:[%s7528 + $0x14] sm:$0xf]
    %v7535 = vld [vmem:[%s7528 + $0x18] sm:$0xf]
    %v7536 = vld [vmem:[%s7528 + $0x1c] sm:$0xf]
    %v7537 = vld [vmem:[%s7528 + $0x20] sm:$0xf]
    %v7538 = vld [vmem:[%s7528 + $0x24] sm:$0xf]
    %v7539 = vld [vmem:[%s7528 + $0x28] sm:$0xf]
    %v7540 = vld [vmem:[%s7528 + $0x2c] sm:$0xf]
    %v7541 = vld [vmem:[%s7528 + $0x30] sm:$0xf]
    %v7542 = vld [vmem:[%s7528 + $0x34] sm:$0xf]
    %v7543 = vld [vmem:[%s7528 + $0x38] sm:$0xf]
    %v7544 = vld [vmem:[%s7528 + $0x3c] sm:$0xf]
    %v7545 = vld [vmem:[%s7528 + $0x40] sm:$0xf]
    %v7546 = vld [vmem:[%s7528 + $0x44] sm:$0xf]
    %v7547 = vld [vmem:[%s7528 + $0x48] sm:$0xf]
    %v7548 = vld [vmem:[%s7528 + $0x4c] sm:$0xf]
    %v7549 = vld [vmem:[%s7528 + $0x50] sm:$0xf]
    %v7550 = vld [vmem:[%s7528 + $0x54] sm:$0xf]
    %v7551 = vld [vmem:[%s7528 + $0x58] sm:$0xf]
    %v7552 = vld [vmem:[%s7528 + $0x5c] sm:$0xf]
    %v7553 = vld [vmem:[%s7528 + $0x60] sm:$0xf]
    %v7554 = vld [vmem:[%s7528 + $0x64] sm:$0xf]
    %v7555 = vld [vmem:[%s7528 + $0x68] sm:$0xf]
    %v7556 = vld [vmem:[%s7528 + $0x6c] sm:$0xf]
    %v7557 = vld [vmem:[%s7528 + $0x70] sm:$0xf]
    %v7558 = vld [vmem:[%s7528 + $0x74] sm:$0xf]
    %v7559 = vld [vmem:[%s7528 + $0x78] sm:$0xf]
    %v7560 = vld [vmem:[%s7528 + $0x7c] sm:$0xf]
    %v7561 = vld [vmem:[%s7528 + $0x80] sm:$0xf]
    %v7562 = vld [vmem:[%s7528 + $0x84] sm:$0xf]
    %v7563 = vld [vmem:[%s7528 + $0x88] sm:$0xf]
    %v7564 = vld [vmem:[%s7528 + $0x8c] sm:$0xf]
    %v7565 = vld [vmem:[%s7528 + $0x90] sm:$0xf]
    %v7566 = vld [vmem:[%s7528 + $0x94] sm:$0xf]
    %v7567 = vld [vmem:[%s7528 + $0x98] sm:$0xf]
    %v7568 = vld [vmem:[%s7528 + $0x9c] sm:$0xf]
    %v7569 = vld [vmem:[%s7528 + $0xa0] sm:$0xf]
    %v7570 = vld [vmem:[%s7528 + $0xa4] sm:$0xf]
    %v7571 = vld [vmem:[%s7528 + $0xa8] sm:$0xf]
    %v7572 = vld [vmem:[%s7528 + $0xac] sm:$0xf]
    %v7573 = vld [vmem:[%s7528 + $0xb0] sm:$0xf]
    %v7574 = vld [vmem:[%s7528 + $0xb4] sm:$0xf]
    %v7575 = vld [vmem:[%s7528 + $0xb8] sm:$0xf]
    %v7576 = vld [vmem:[%s7528 + $0xbc] sm:$0xf]
    %v7577 = vld [vmem:[%s7528 + $0xc0] sm:$0xf]
    %v7578 = vld [vmem:[%s7528 + $0xc4] sm:$0xf]
    %v7579 = vld [vmem:[%s7528 + $0xc8] sm:$0xf]
    %v7580 = vld [vmem:[%s7528 + $0xcc] sm:$0xf]
    %v7581 = vld [vmem:[%s7528 + $0xd0] sm:$0xf]
    %v7582 = vld [vmem:[%s7528 + $0xd4] sm:$0xf]
    %v7583 = vld [vmem:[%s7528 + $0xd8] sm:$0xf]
    %v7584 = vld [vmem:[%s7528 + $0xdc] sm:$0xf]
    %v7585 = vld [vmem:[%s7528 + $0xe0] sm:$0xf]
    %v7586 = vld [vmem:[%s7528 + $0xe4] sm:$0xf]
    %v7587 = vld [vmem:[%s7528 + $0xe8] sm:$0xf]
    %v7588 = vld [vmem:[%s7528 + $0xec] sm:$0xf]
    %v7589 = vld [vmem:[%s7528 + $0xf0] sm:$0xf]
    %v7590 = vld [vmem:[%s7528 + $0xf4] sm:$0xf]
    %v7591 = vld [vmem:[%s7528 + $0xf8] sm:$0xf]
    %v7592 = vld [vmem:[%s7528 + $0xfc] sm:$0xf]
    %s7593 = scalar_lea.vmem %s13, 2
    %v7594 = vld [vmem:[%s7593] sm:$0x1]
    %v7596 = vlaneseq
    %v7597 = vshrl.u32 %v7596, 7
    %v7598 = vsub.s32 0, %v7597
    %v7599 = vrot.slane %v7594, %v7598
    %v7665 = vunpack.c.l.b16 %v7529
    %v7666 = vunpack.c.l.b16 %v7530
    %v7667 = vunpack.c.l.b16 %v7531
    %v7668 = vunpack.c.l.b16 %v7532
    %v7669 = vunpack.c.l.b16 %v7533
    %v7670 = vunpack.c.l.b16 %v7534
    %v7671 = vunpack.c.l.b16 %v7535
    %v7672 = vunpack.c.l.b16 %v7536
    %v7673 = vunpack.c.l.b16 %v7537
    %v7674 = vunpack.c.l.b16 %v7538
    %v7675 = vunpack.c.l.b16 %v7539
    %v7676 = vunpack.c.l.b16 %v7540
    %v7677 = vunpack.c.l.b16 %v7541
    %v7678 = vunpack.c.l.b16 %v7542
    %v7679 = vunpack.c.l.b16 %v7543
    %v7680 = vunpack.c.l.b16 %v7544
    %v7681 = vunpack.c.l.b16 %v7545
    %v7682 = vunpack.c.l.b16 %v7546
    %v7683 = vunpack.c.l.b16 %v7547
    %v7684 = vunpack.c.l.b16 %v7548
    %v7685 = vunpack.c.l.b16 %v7549
    %v7686 = vunpack.c.l.b16 %v7550
    %v7687 = vunpack.c.l.b16 %v7551
    %v7688 = vunpack.c.l.b16 %v7552
    %v7689 = vunpack.c.l.b16 %v7553
    %v7690 = vunpack.c.l.b16 %v7554
    %v7691 = vunpack.c.l.b16 %v7555
    %v7692 = vunpack.c.l.b16 %v7556
    %v7693 = vunpack.c.l.b16 %v7557
    %v7694 = vunpack.c.l.b16 %v7558
    %v7695 = vunpack.c.l.b16 %v7559
    %v7696 = vunpack.c.l.b16 %v7560
    %v7697 = vunpack.c.l.b16 %v7561
    %v7698 = vunpack.c.l.b16 %v7562
    %v7699 = vunpack.c.l.b16 %v7563
    %v7700 = vunpack.c.l.b16 %v7564
    %v7701 = vunpack.c.l.b16 %v7565
    %v7702 = vunpack.c.l.b16 %v7566
    %v7703 = vunpack.c.l.b16 %v7567
    %v7704 = vunpack.c.l.b16 %v7568
    %v7705 = vunpack.c.l.b16 %v7569
    %v7706 = vunpack.c.l.b16 %v7570
    %v7707 = vunpack.c.l.b16 %v7571
    %v7708 = vunpack.c.l.b16 %v7572
    %v7709 = vunpack.c.l.b16 %v7573
    %v7710 = vunpack.c.l.b16 %v7574
    %v7711 = vunpack.c.l.b16 %v7575
    %v7712 = vunpack.c.l.b16 %v7576
    %v7713 = vunpack.c.l.b16 %v7577
    %v7714 = vunpack.c.l.b16 %v7578
    %v7715 = vunpack.c.l.b16 %v7579
    %v7716 = vunpack.c.l.b16 %v7580
    %v7717 = vunpack.c.l.b16 %v7581
    %v7718 = vunpack.c.l.b16 %v7582
    %v7719 = vunpack.c.l.b16 %v7583
    %v7720 = vunpack.c.l.b16 %v7584
    %v7721 = vunpack.c.l.b16 %v7585
    %v7722 = vunpack.c.l.b16 %v7586
    %v7723 = vunpack.c.l.b16 %v7587
    %v7724 = vunpack.c.l.b16 %v7588
    %v7725 = vunpack.c.l.b16 %v7589
    %v7726 = vunpack.c.l.b16 %v7590
    %v7727 = vunpack.c.l.b16 %v7591
    %v7728 = vunpack.c.l.b16 %v7592
    %v7729 = vpack.c.b16 %v7666, %v7665
    %v7730 = vpack.c.b16 %v7668, %v7667
    %v7731 = vpack.c.b16 %v7670, %v7669
    %v7732 = vpack.c.b16 %v7672, %v7671
    %v7733 = vpack.c.b16 %v7674, %v7673
    %v7734 = vpack.c.b16 %v7676, %v7675
    %v7735 = vpack.c.b16 %v7678, %v7677
    %v7736 = vpack.c.b16 %v7680, %v7679
    %v7737 = vpack.c.b16 %v7682, %v7681
    %v7738 = vpack.c.b16 %v7684, %v7683
    %v7739 = vpack.c.b16 %v7686, %v7685
    %v7740 = vpack.c.b16 %v7688, %v7687
    %v7741 = vpack.c.b16 %v7690, %v7689
    %v7742 = vpack.c.b16 %v7692, %v7691
    %v7743 = vpack.c.b16 %v7694, %v7693
    %v7744 = vpack.c.b16 %v7696, %v7695
    %v7745 = vpack.c.b16 %v7698, %v7697
    %v7746 = vpack.c.b16 %v7700, %v7699
    %v7747 = vpack.c.b16 %v7702, %v7701
    %v7748 = vpack.c.b16 %v7704, %v7703
    %v7749 = vpack.c.b16 %v7706, %v7705
    %v7750 = vpack.c.b16 %v7708, %v7707
    %v7751 = vpack.c.b16 %v7710, %v7709
    %v7752 = vpack.c.b16 %v7712, %v7711
    %v7753 = vpack.c.b16 %v7714, %v7713
    %v7754 = vpack.c.b16 %v7716, %v7715
    %v7755 = vpack.c.b16 %v7718, %v7717
    %v7756 = vpack.c.b16 %v7720, %v7719
    %v7757 = vpack.c.b16 %v7722, %v7721
    %v7758 = vpack.c.b16 %v7724, %v7723
    %v7759 = vpack.c.b16 %v7726, %v7725
    %v7760 = vpack.c.b16 %v7728, %v7727
    %7793 = vmatprep.subr.bf16.mxu0 0
    %7794 = vmatpush1.bf16.msra.mxu0 %v7729
    %7795 = vmatprep.subr.bf16.mxu0 0
    %7796 = vmatpush1.bf16.msra.mxu0 %v7730
    %7797 = vmatprep.subr.bf16.mxu0 0
    %7798 = vmatpush1.bf16.msra.mxu0 %v7731
    %7799 = vmatprep.subr.bf16.mxu0 0
    %7800 = vmatpush1.bf16.msra.mxu0 %v7732
    %7801 = vmatprep.subr.bf16.mxu0 0
    %7802 = vmatpush1.bf16.msra.mxu0 %v7733
    %7803 = vmatprep.subr.bf16.mxu0 0
    %7804 = vmatpush1.bf16.msra.mxu0 %v7734
    %7805 = vmatprep.subr.bf16.mxu0 0
    %7806 = vmatpush1.bf16.msra.mxu0 %v7735
    %7807 = vmatprep.subr.bf16.mxu0 0
    %7808 = vmatpush1.bf16.msra.mxu0 %v7736
    %7809 = vmatprep.subr.bf16.mxu0 0
    %7810 = vmatpush1.bf16.msra.mxu0 %v7737
    %7811 = vmatprep.subr.bf16.mxu0 0
    %7812 = vmatpush1.bf16.msra.mxu0 %v7738
    %7813 = vmatprep.subr.bf16.mxu0 0
    %7814 = vmatpush1.bf16.msra.mxu0 %v7739
    %7815 = vmatprep.subr.bf16.mxu0 0
    %7816 = vmatpush1.bf16.msra.mxu0 %v7740
    %7817 = vmatprep.subr.bf16.mxu0 0
    %7818 = vmatpush1.bf16.msra.mxu0 %v7741
    %7819 = vmatprep.subr.bf16.mxu0 0
    %7820 = vmatpush1.bf16.msra.mxu0 %v7742
    %7821 = vmatprep.subr.bf16.mxu0 0
    %7822 = vmatpush1.bf16.msra.mxu0 %v7743
    %7823 = vmatprep.subr.bf16.mxu0 0
    %7824 = vmatpush1.bf16.msra.mxu0 %v7744
    %7825 = vmatprep.mubr.bf16.mxu0 %v7521
    %7826 = vmatmul.mubr.bf16.gmra.mrb[0].mxu0 %v7520
    %v7827 = vpop.f32.mrb[0].mxu0
    %v7828 = vadd.f32 %v7599, %v7827
    %v7829 = vpop.f32.mrb[0].mxu0
    %v7830 = vpop.f32.mrb[0].mxu0
    %v7831 = vadd.f32 %v7599, %v7830
    %v7832 = vpop.f32.mrb[0].mxu0
    %7833 = vmatprep.mubr.bf16.mxu0 %v7525
    %7834 = vmatmul.mubr.bf16.gmra.mrb[0].mxu0 %v7524
    %v7835 = vpop.f32.mrb[0].mxu0
    %v7836 = vadd.f32 %v7599, %v7835
    %v7837 = vpop.f32.mrb[0].mxu0
    %v7838 = vpop.f32.mrb[0].mxu0
    %v7839 = vadd.f32 %v7599, %v7838
    %v7840 = vpop.f32.mrb[0].mxu0
    %7841 = vdwg.mxu0
    %7842 = vmatprep.subr.bf16.mxu0 0
    %7843 = vmatpush1.bf16.msra.mxu0 %v7745
    %7844 = vmatprep.subr.bf16.mxu0 0
    %7845 = vmatpush1.bf16.msra.mxu0 %v7746
    %7846 = vmatprep.subr.bf16.mxu0 0
    %7847 = vmatpush1.bf16.msra.mxu0 %v7747
    %7848 = vmatprep.subr.bf16.mxu0 0
    %7849 = vmatpush1.bf16.msra.mxu0 %v7748
    %7850 = vmatprep.subr.bf16.mxu0 0
    %7851 = vmatpush1.bf16.msra.mxu0 %v7749
    %7852 = vmatprep.subr.bf16.mxu0 0
    %7853 = vmatpush1.bf16.msra.mxu0 %v7750
    %7854 = vmatprep.subr.bf16.mxu0 0
    %7855 = vmatpush1.bf16.msra.mxu0 %v7751
    %7856 = vmatprep.subr.bf16.mxu0 0
    %7857 = vmatpush1.bf16.msra.mxu0 %v7752
    %7858 = vmatprep.subr.bf16.mxu0 0
    %7859 = vmatpush1.bf16.msra.mxu0 %v7753
    %7860 = vmatprep.subr.bf16.mxu0 0
    %7861 = vmatpush1.bf16.msra.mxu0 %v7754
    %7862 = vmatprep.subr.bf16.mxu0 0
    %7863 = vmatpush1.bf16.msra.mxu0 %v7755
    %7864 = vmatprep.subr.bf16.mxu0 0
    %7865 = vmatpush1.bf16.msra.mxu0 %v7756
    %7866 = vmatprep.subr.bf16.mxu0 0
    %7867 = vmatpush1.bf16.msra.mxu0 %v7757
    %7868 = vmatprep.subr.bf16.mxu0 0
    %7869 = vmatpush1.bf16.msra.mxu0 %v7758
    %7870 = vmatprep.subr.bf16.mxu0 0
    %7871 = vmatpush1.bf16.msra.mxu0 %v7759
    %7872 = vmatprep.subr.bf16.mxu0 0
    %7873 = vmatpush1.bf16.msra.mxu0 %v7760
    %7874 = vmatprep.mubr.bf16.mxu0 %v7523
    %7875 = vmatmul.mubr.bf16.gmra.mrb[0].mxu0 %v7522
    %v7876 = vpop.f32.mrb[0].mxu0
    %v7877 = vadd.f32 %v7828, %v7876
    %v7878 = vpop.f32.mrb[0].mxu0
    %v7879 = vpop.f32.mrb[0].mxu0
    %v7880 = vadd.f32 %v7831, %v7879
    %v7881 = vpop.f32.mrb[0].mxu0
    %7882 = vmatprep.mubr.bf16.mxu0 %v7527
    %7883 = vmatmul.mubr.bf16.gmra.mrb[0].mxu0 %v7526
    %v7884 = vpop.f32.mrb[0].mxu0
    %v7885 = vadd.f32 %v7836, %v7884
    %v7886 = vpop.f32.mrb[0].mxu0
    %v7887 = vpop.f32.mrb[0].mxu0
    %v7888 = vadd.f32 %v7839, %v7887
    %v7889 = vpop.f32.mrb[0].mxu0
    %7890 = vdwg.mxu0
    %v7891 = vadd.f32 %v7877, %v7048
    %v7892 = vadd.f32 %v7880, %v7049
    %v7893 = vadd.f32 %v7885, %v7050
    %v7894 = vadd.f32 %v7888, %v7051
    %s7895 = scalar_lea.vmem [#allocation15], 2
    %v7896 = vld [vmem:[%s7895] sm:$0x1]
    %s7897 = scalar_lea.vmem [#allocation17], 2
    %v7898 = vld [vmem:[%s7897] sm:$0x1]
    %7899 = vadd.xlane.f32.xlu0 %v7891
    %v7900 = vpop.xlane.xlu0 %7899
    %7901 = vadd.xlane.f32.xlu0 %v7892
    %v7902 = vpop.xlane.xlu0 %7901
    %7903 = vadd.xlane.f32.xlu0 %v7893
    %v7904 = vpop.xlane.xlu0 %7903
    %7905 = vadd.xlane.f32.xlu0 %v7894
    %v7906 = vpop.xlane.xlu0 %7905
    %v7907 = vmul.f32 %v7900, %v236
    %v7908 = vmul.f32 %v7902, %v236
    %v7909 = vmul.f32 %v7904, %v236
    %v7910 = vmul.f32 %v7906, %v236
    %v7911 = vsub.f32 %v7891, %v7907
    %v7912 = vsub.f32 %v7892, %v7908
    %v7913 = vsub.f32 %v7893, %v7909
    %v7914 = vsub.f32 %v7894, %v7910
    %v7915 = vmul.f32 %v7911, %v7911
    %v7916 = vmul.f32 %v7912, %v7912
    %v7917 = vmul.f32 %v7913, %v7913
    %v7918 = vmul.f32 %v7914, %v7914
    %7919 = vadd.xlane.f32.xlu0 %v7915
    %v7920 = vpop.xlane.xlu0 %7919
    %7921 = vadd.xlane.f32.xlu0 %v7916
    %v7922 = vpop.xlane.xlu0 %7921
    %7923 = vadd.xlane.f32.xlu0 %v7917
    %v7924 = vpop.xlane.xlu0 %7923
    %7925 = vadd.xlane.f32.xlu0 %v7918
    %v7926 = vpop.xlane.xlu0 %7925
    %v7927 = vmul.f32 %v7920, %v236
    %v7928 = vmul.f32 %v7922, %v236
    %v7929 = vmul.f32 %v7924, %v236
    %v7930 = vmul.f32 %v7926, %v236
    %v7931 = vadd.f32 %v7927, 1e-12
    %v7932 = vadd.f32 %v7928, 1e-12
    %v7933 = vadd.f32 %v7929, 1e-12
    %v7934 = vadd.f32 %v7930, 1e-12
    %v7935 = vrsqrt.pop %v7931
    %v7936 = vrsqrt.pop %v7932
    %v7937 = vrsqrt.pop %v7933
    %v7938 = vrsqrt.pop %v7934
    %v7939 = vmul.f32 %v7911, %v7935
    %v7940 = vmul.f32 %v7912, %v7936
    %v7941 = vmul.f32 %v7913, %v7937
    %v7942 = vmul.f32 %v7914, %v7938
    %v7944 = vlaneseq
    %v7945 = vshrl.u32 %v7944, 7
    %v7946 = vsub.s32 0, %v7945
    %v7947 = vrot.slane %v7896, %v7946
    %v7949 = vmul.f32 %v7939, %v7947
    %v7950 = vmul.f32 %v7940, %v7947
    %v7951 = vmul.f32 %v7941, %v7947
    %v7952 = vmul.f32 %v7942, %v7947
    %v7954 = vlaneseq
    %v7955 = vshrl.u32 %v7954, 7
    %v7956 = vsub.s32 0, %v7955
    %v7957 = vrot.slane %v7898, %v7956
    %v7959 = vadd.f32 %v7949, %v7957
    %v7960 = vadd.f32 %v7950, %v7957
    %v7961 = vadd.f32 %v7951, %v7957
    %v7962 = vadd.f32 %v7952, %v7957
    %v7963 = vpack.c.bf16 %v7960, %v7959
    %v7964 = vpack.c.bf16 %v7962, %v7961
    %s7965 = scalar_lea.vmem %s4, 576
    %v7966 = vld [vmem:[%s7965] sm:$0xff]
    %v7967 = vld [vmem:[%s7965 + $0x8] sm:$0xf]
    %v7968 = vld [vmem:[%s7965 + $0xc] sm:$0xff]
    %v7969 = vld [vmem:[%s7965 + $0x14] sm:$0xf]
    %v7970 = vld [vmem:[%s7965 + $0x18] sm:$0xff]
    %v7971 = vld [vmem:[%s7965 + $0x20] sm:$0xf]
    %v7972 = vld [vmem:[%s7965 + $0x24] sm:$0xff]
    %v7973 = vld [vmem:[%s7965 + $0x2c] sm:$0xf]
    %v7974 = vld [vmem:[%s7965 + $0x30] sm:$0xff]
    %v7975 = vld [vmem:[%s7965 + $0x38] sm:$0xf]
    %v7976 = vld [vmem:[%s7965 + $0x3c] sm:$0xff]
    %v7977 = vld [vmem:[%s7965 + $0x44] sm:$0xf]
    %v7978 = vld [vmem:[%s7965 + $0x48] sm:$0xff]
    %v7979 = vld [vmem:[%s7965 + $0x50] sm:$0xf]
    %v7980 = vld [vmem:[%s7965 + $0x54] sm:$0xff]
    %v7981 = vld [vmem:[%s7965 + $0x5c] sm:$0xf]
    %v7982 = vld [vmem:[%s7965 + $0x60] sm:$0xff]
    %v7983 = vld [vmem:[%s7965 + $0x68] sm:$0xf]
    %v7984 = vld [vmem:[%s7965 + $0x6c] sm:$0xff]
    %v7985 = vld [vmem:[%s7965 + $0x74] sm:$0xf]
    %v7986 = vld [vmem:[%s7965 + $0x78] sm:$0xff]
    %v7987 = vld [vmem:[%s7965 + $0x80] sm:$0xf]
    %v7988 = vld [vmem:[%s7965 + $0x84] sm:$0xff]
    %v7989 = vld [vmem:[%s7965 + $0x8c] sm:$0xf]
    %v7990 = vld [vmem:[%s7965 + $0x90] sm:$0xff]
    %v7991 = vld [vmem:[%s7965 + $0x98] sm:$0xf]
    %v7992 = vld [vmem:[%s7965 + $0x9c] sm:$0xff]
    %v7993 = vld [vmem:[%s7965 + $0xa4] sm:$0xf]
    %v7994 = vld [vmem:[%s7965 + $0xa8] sm:$0xff]
    %v7995 = vld [vmem:[%s7965 + $0xb0] sm:$0xf]
    %v7996 = vld [vmem:[%s7965 + $0xb4] sm:$0xff]
    %v7997 = vld [vmem:[%s7965 + $0xbc] sm:$0xf]
    %s7998 = scalar_lea.vmem %s5, 9
    %v7999 = vld [vmem:[%s7998] sm:$0x7]
    %v8001 = vlaneseq
    %v8002 = vshrl.u32 %v8001, 7
    %v8003 = vsub.s32 0, %v8002
    %v8004 = vrot.slane %v7999, %v8003
    %v8005 = vlaneseq
    %v8006 = vshrl.u32 %v8005, 7
    %v8007 = vsub.s32 1, %v8006
    %v8008 = vrot.slane %v7999, %v8007
    %v8009 = vlaneseq
    %v8010 = vshrl.u32 %v8009, 7
    %v8011 = vsub.s32 2, %v8010
    %v8012 = vrot.slane %v7999, %v8011
    %v8048 = vunpack.c.l.b16 %v7966
    %v8049 = vunpack.c.h.b16 %v7966
    %v8050 = vunpack.c.l.b16 %v7967
    %v8051 = vunpack.c.l.b16 %v7968
    %v8052 = vunpack.c.h.b16 %v7968
    %v8053 = vunpack.c.l.b16 %v7969
    %v8054 = vunpack.c.l.b16 %v7970
    %v8055 = vunpack.c.h.b16 %v7970
    %v8056 = vunpack.c.l.b16 %v7971
    %v8057 = vunpack.c.l.b16 %v7972
    %v8058 = vunpack.c.h.b16 %v7972
    %v8059 = vunpack.c.l.b16 %v7973
    %v8060 = vunpack.c.l.b16 %v7974
    %v8061 = vunpack.c.h.b16 %v7974
    %v8062 = vunpack.c.l.b16 %v7975
    %v8063 = vunpack.c.l.b16 %v7976
    %v8064 = vunpack.c.h.b16 %v7976
    %v8065 = vunpack.c.l.b16 %v7977
    %v8066 = vunpack.c.l.b16 %v7978
    %v8067 = vunpack.c.h.b16 %v7978
    %v8068 = vunpack.c.l.b16 %v7979
    %v8069 = vunpack.c.l.b16 %v7980
    %v8070 = vunpack.c.h.b16 %v7980
    %v8071 = vunpack.c.l.b16 %v7981
    %v8072 = vunpack.c.l.b16 %v7982
    %v8073 = vunpack.c.h.b16 %v7982
    %v8074 = vunpack.c.l.b16 %v7983
    %v8075 = vunpack.c.l.b16 %v7984
    %v8076 = vunpack.c.h.b16 %v7984
    %v8077 = vunpack.c.l.b16 %v7985
    %v8078 = vunpack.c.l.b16 %v7986
    %v8079 = vunpack.c.h.b16 %v7986
    %v8080 = vunpack.c.l.b16 %v7987
    %v8081 = vunpack.c.l.b16 %v7988
    %v8082 = vunpack.c.h.b16 %v7988
    %v8083 = vunpack.c.l.b16 %v7989
    %v8084 = vunpack.c.l.b16 %v7990
    %v8085 = vunpack.c.h.b16 %v7990
    %v8086 = vunpack.c.l.b16 %v7991
    %v8087 = vunpack.c.l.b16 %v7992
    %v8088 = vunpack.c.h.b16 %v7992
    %v8089 = vunpack.c.l.b16 %v7993
    %v8090 = vunpack.c.l.b16 %v7994
    %v8091 = vunpack.c.h.b16 %v7994
    %v8092 = vunpack.c.l.b16 %v7995
    %v8093 = vunpack.c.l.b16 %v7996
    %v8094 = vunpack.c.h.b16 %v7996
    %v8095 = vunpack.c.l.b16 %v7997
    %v8096 = vpack.c.b16 %v8051, %v8048
    %v8097 = vpack.c.b16 %v8052, %v8049
    %v8098 = vpack.c.b16 %v8053, %v8050
    %v8099 = vpack.c.b16 %v8057, %v8054
    %v8100 = vpack.c.b16 %v8058, %v8055
    %v8101 = vpack.c.b16 %v8059, %v8056
    %v8102 = vpack.c.b16 %v8063, %v8060
    %v8103 = vpack.c.b16 %v8064, %v8061
    %v8104 = vpack.c.b16 %v8065, %v8062
    %v8105 = vpack.c.b16 %v8069, %v8066
    %v8106 = vpack.c.b16 %v8070, %v8067
    %v8107 = vpack.c.b16 %v8071, %v8068
    %v8108 = vpack.c.b16 %v8075, %v8072
    %v8109 = vpack.c.b16 %v8076, %v8073
    %v8110 = vpack.c.b16 %v8077, %v8074
    %v8111 = vpack.c.b16 %v8081, %v8078
    %v8112 = vpack.c.b16 %v8082, %v8079
    %v8113 = vpack.c.b16 %v8083, %v8080
    %v8114 = vpack.c.b16 %v8087, %v8084
    %v8115 = vpack.c.b16 %v8088, %v8085
    %v8116 = vpack.c.b16 %v8089, %v8086
    %v8117 = vpack.c.b16 %v8093, %v8090
    %v8118 = vpack.c.b16 %v8094, %v8091
    %v8119 = vpack.c.b16 %v8095, %v8092
    %8144 = vmatprep.subr.bf16.mxu0 %v8097
    %8145 = vmatpush1.bf16.msra.mxu0 %v8096
    %8146 = vmatprep.subr.bf16.mxu0 %v8100
    %8147 = vmatpush1.bf16.msra.mxu0 %v8099
    %8148 = vmatprep.subr.bf16.mxu0 %v8103
    %8149 = vmatpush1.bf16.msra.mxu0 %v8102
    %8150 = vmatprep.subr.bf16.mxu0 %v8106
    %8151 = vmatpush1.bf16.msra.mxu0 %v8105
    %8152 = vmatprep.subr.bf16.mxu0 %v8109
    %8153 = vmatpush1.bf16.msra.mxu0 %v8108
    %8154 = vmatprep.subr.bf16.mxu0 %v8112
    %8155 = vmatpush1.bf16.msra.mxu0 %v8111
    %8156 = vmatprep.subr.bf16.mxu0 %v8115
    %8157 = vmatpush1.bf16.msra.mxu0 %v8114
    %8158 = vmatprep.subr.bf16.mxu0 %v8118
    %8159 = vmatpush1.bf16.msra.mxu0 %v8117
    %8160 = vmatprep.subr.bf16.mxu0 0
    %8161 = vmatpush1.bf16.msra.mxu0 0
    %8162 = vmatprep.subr.bf16.mxu0 0
    %8163 = vmatpush1.bf16.msra.mxu0 0
    %8164 = vmatprep.subr.bf16.mxu0 0
    %8165 = vmatpush1.bf16.msra.mxu0 0
    %8166 = vmatprep.subr.bf16.mxu0 0
    %8167 = vmatpush1.bf16.msra.mxu0 0
    %8168 = vmatprep.subr.bf16.mxu0 0
    %8169 = vmatpush1.bf16.msra.mxu0 0
    %8170 = vmatprep.subr.bf16.mxu0 0
    %8171 = vmatpush1.bf16.msra.mxu0 0
    %8172 = vmatprep.subr.bf16.mxu0 0
    %8173 = vmatpush1.bf16.msra.mxu0 0
    %8174 = vmatprep.subr.bf16.mxu0 0
    %8175 = vmatpush1.bf16.msra.mxu0 0
    %8176 = vmatprep.mubr.bf16.mxu0 0
    %8177 = vmatmul.mubr.bf16.gmra.mrb[0].mxu0 %v7963
    %v8178 = vpop.f32.mrb[0].mxu0
    %v8179 = vadd.f32 %v8004, %v8178
    %v8180 = vpop.f32.mrb[0].mxu0
    %v8181 = vadd.f32 %v8008, %v8180
    %v8182 = vpop.f32.mrb[0].mxu0
    %v8183 = vadd.f32 %v8004, %v8182
    %v8184 = vpop.f32.mrb[0].mxu0
    %v8185 = vadd.f32 %v8008, %v8184
    %8186 = vmatprep.mubr.bf16.mxu0 0
    %8187 = vmatmul.mubr.bf16.gmra.mrb[0].mxu0 %v7964
    %v8188 = vpop.f32.mrb[0].mxu0
    %v8189 = vadd.f32 %v8004, %v8188
    %v8190 = vpop.f32.mrb[0].mxu0
    %v8191 = vadd.f32 %v8008, %v8190
    %v8192 = vpop.f32.mrb[0].mxu0
    %v8193 = vadd.f32 %v8004, %v8192
    %v8194 = vpop.f32.mrb[0].mxu0
    %v8195 = vadd.f32 %v8008, %v8194
    %8196 = vdwg.mxu0
    %8197 = vmatprep.subr.bf16.mxu0 0
    %8198 = vmatpush1.bf16.msra.mxu0 %v8098
    %8199 = vmatprep.subr.bf16.mxu0 0
    %8200 = vmatpush1.bf16.msra.mxu0 %v8101
    %8201 = vmatprep.subr.bf16.mxu0 0
    %8202 = vmatpush1.bf16.msra.mxu0 %v8104
    %8203 = vmatprep.subr.bf16.mxu0 0
    %8204 = vmatpush1.bf16.msra.mxu0 %v8107
    %8205 = vmatprep.subr.bf16.mxu0 0
    %8206 = vmatpush1.bf16.msra.mxu0 %v8110
    %8207 = vmatprep.subr.bf16.mxu0 0
    %8208 = vmatpush1.bf16.msra.mxu0 %v8113
    %8209 = vmatprep.subr.bf16.mxu0 0
    %8210 = vmatpush1.bf16.msra.mxu0 %v8116
    %8211 = vmatprep.subr.bf16.mxu0 0
    %8212 = vmatpush1.bf16.msra.mxu0 %v8119
    %8213 = vmatprep.subr.bf16.mxu0 0
    %8214 = vmatpush1.bf16.msra.mxu0 0
    %8215 = vmatprep.subr.bf16.mxu0 0
    %8216 = vmatpush1.bf16.msra.mxu0 0
    %8217 = vmatprep.subr.bf16.mxu0 0
    %8218 = vmatpush1.bf16.msra.mxu0 0
    %8219 = vmatprep.subr.bf16.mxu0 0
    %8220 = vmatpush1.bf16.msra.mxu0 0
    %8221 = vmatprep.subr.bf16.mxu0 0
    %8222 = vmatpush1.bf16.msra.mxu0 0
    %8223 = vmatprep.subr.bf16.mxu0 0
    %8224 = vmatpush1.bf16.msra.mxu0 0
    %8225 = vmatprep.subr.bf16.mxu0 0
    %8226 = vmatpush1.bf16.msra.mxu0 0
    %8227 = vmatprep.subr.bf16.mxu0 0
    %8228 = vmatpush1.bf16.msra.mxu0 0
    %8229 = vmatprep.mubr.bf16.mxu0 0
    %8230 = vmatmul.mubr.bf16.gmra.mrb[0].mxu0 %v7963
    %v8231 = vpop.f32.mrb[0].mxu0
    %v8232 = vadd.f32 %v8012, %v8231
    %v8233 = vpop.f32.mrb[0].mxu0
    %v8234 = vpop.f32.mrb[0].mxu0
    %v8235 = vadd.f32 %v8012, %v8234
    %v8236 = vpop.f32.mrb[0].mxu0
    %8237 = vmatprep.mubr.bf16.mxu0 0
    %8238 = vmatmul.mubr.bf16.gmra.mrb[0].mxu0 %v7964
    %v8239 = vpop.f32.mrb[0].mxu0
    %v8240 = vadd.f32 %v8012, %v8239
    %v8241 = vpop.f32.mrb[0].mxu0
    %v8242 = vpop.f32.mrb[0].mxu0
    %v8243 = vadd.f32 %v8012, %v8242
    %v8244 = vpop.f32.mrb[0].mxu0
    %8245 = vdwg.mxu0
    %v8247 = vsel %vm590, %v8179, 0
    %v8250 = vsel %vm590, %v8183, 0
    %v8253 = vsel %vm590, %v8189, 0
    %v8256 = vsel %vm590, %v8193, 0
    %v8259 = vsel %vm590, %v8181, 0
    %v8262 = vsel %vm590, %v8185, 0
    %v8265 = vsel %vm590, %v8191, 0
    %v8268 = vsel %vm590, %v8195, 0
    %8270 = vmatprep.subr.mxu0 0.0
    %8271 = vmatpush1.xpose.msra.mxu0 %v8259
    %8272 = vmatprep.subr.mxu0 0.0
    %8273 = vmatpush1.xpose.msra.mxu0 %v8262
    %8274 = vmatprep.subr.mxu0 0.0
    %8275 = vmatpush1.xpose.msra.mxu0 %v8265
    %8276 = vmatprep.subr.mxu0 0.0
    %8277 = vmatpush1.xpose.msra.mxu0 %v8268
    %8278 = vmatprep.subr.mxu0 0.0
    %8279 = vmatpush1.xpose.msra.mxu0 0.0
    %8280 = vmatprep.subr.mxu0 0.0
    %8281 = vmatpush1.xpose.msra.mxu0 0.0
    %8282 = vmatprep.subr.mxu0 0.0
    %8283 = vmatpush1.xpose.msra.mxu0 0.0
    %8284 = vmatprep.subr.mxu0 0.0
    %8285 = vmatpush1.xpose.msra.mxu0 0.0
    %8286 = vmatprep.subr.mxu0 0.0
    %8287 = vmatpush1.xpose.msra.mxu0 0.0
    %8288 = vmatprep.subr.mxu0 0.0
    %8289 = vmatpush1.xpose.msra.mxu0 0.0
    %8290 = vmatprep.subr.mxu0 0.0
    %8291 = vmatpush1.xpose.msra.mxu0 0.0
    %8292 = vmatprep.subr.mxu0 0.0
    %8293 = vmatpush1.xpose.msra.mxu0 0.0
    %8294 = vmatprep.subr.mxu0 0.0
    %8295 = vmatpush1.xpose.msra.mxu0 0.0
    %8296 = vmatprep.subr.mxu0 0.0
    %8297 = vmatpush1.xpose.msra.mxu0 0.0
    %8298 = vmatprep.subr.mxu0 0.0
    %8299 = vmatpush1.xpose.msra.mxu0 0.0
    %8300 = vmatprep.subr.mxu0 0.0
    %8301 = vmatpush1.xpose.msra.mxu0 0.0
    %8302 = vmatprep.subr.mxu0 0.0
    %8303 = vmatpush1.xpose.msra.mxu0 0.0
    %8304 = vmatprep.subr.mxu0 0.0
    %8305 = vmatpush1.xpose.msra.mxu0 0.0
    %8306 = vmatprep.subr.mxu0 0.0
    %8307 = vmatpush1.xpose.msra.mxu0 0.0
    %8308 = vmatprep.subr.mxu0 0.0
    %8309 = vmatpush1.xpose.msra.mxu0 0.0
    %8310 = vmatprep.subr.mxu0 0.0
    %8311 = vmatpush1.xpose.msra.mxu0 0.0
    %8312 = vmatprep.subr.mxu0 0.0
    %8313 = vmatpush1.xpose.msra.mxu0 0.0
    %8314 = vmatprep.subr.mxu0 0.0
    %8315 = vmatpush1.xpose.msra.mxu0 0.0
    %8316 = vmatprep.subr.mxu0 0.0
    %8317 = vmatpush1.xpose.msra.mxu0 0.0
    %8318 = vmatprep.subr.mxu0 0.0
    %8319 = vmatpush1.xpose.msra.mxu0 0.0
    %8320 = vmatprep.subr.mxu0 0.0
    %8321 = vmatpush1.xpose.msra.mxu0 0.0
    %8322 = vmatprep.subr.mxu0 0.0
    %8323 = vmatpush1.xpose.msra.mxu0 0.0
    %8324 = vmatprep.subr.mxu0 0.0
    %8325 = vmatpush1.xpose.msra.mxu0 0.0
    %8326 = vmatprep.subr.mxu0 0.0
    %8327 = vmatpush1.xpose.msra.mxu0 0.0
    %8328 = vmatprep.subr.mxu0 0.0
    %8329 = vmatpush1.xpose.msra.mxu0 0.0
    %8330 = vmatprep.subr.mxu0 0.0
    %8331 = vmatpush1.xpose.msra.mxu0 0.0
    %8332 = vmatprep.subr.mxu0 0.0
    %8333 = vmatpush1.xpose.msra.mxu0 0.0
    %8334 = vmatprep.mubr.f32.mxu0 0.0
    %8335 = vmatmul.mubr.f32.gmra.mrb[0].mxu0 %v8247
    %v8336 = vpop.f32.mrb[0].mxu0
    %v8337 = vadd.f32 0.0, %v8336
    %v8338 = vpop.f32.mrb[0].mxu0
    %8339 = vmatprep.mubr.f32.mxu0 0.0
    %8340 = vmatmul.mubr.f32.gmra.mrb[0].mxu0 %v8250
    %v8341 = vpop.f32.mrb[0].mxu0
    %v8342 = vadd.f32 0.0, %v8341
    %v8343 = vpop.f32.mrb[0].mxu0
    %8344 = vmatprep.mubr.f32.mxu0 0.0
    %8345 = vmatmul.mubr.f32.gmra.mrb[0].mxu0 %v8253
    %v8346 = vpop.f32.mrb[0].mxu0
    %v8347 = vadd.f32 0.0, %v8346
    %v8348 = vpop.f32.mrb[0].mxu0
    %8349 = vmatprep.mubr.f32.mxu0 0.0
    %8350 = vmatmul.mubr.f32.gmra.mrb[0].mxu0 %v8256
    %v8351 = vpop.f32.mrb[0].mxu0
    %v8352 = vadd.f32 0.0, %v8351
    %v8353 = vpop.f32.mrb[0].mxu0
    %8354 = vdwg.mxu0
    %8355 = vrot.lane.b32.xlu0 %v8179, 96
    %v8356 = vpop.permute.xlu0 %8355
    %8357 = vrot.lane.b32.xlu0 %v8183, 96
    %v8358 = vpop.permute.xlu0 %8357
    %8359 = vrot.lane.b32.xlu0 %v8189, 96
    %v8360 = vpop.permute.xlu0 %8359
    %8361 = vrot.lane.b32.xlu0 %v8193, 96
    %v8362 = vpop.permute.xlu0 %8361
    %8363 = vrot.lane.b32.xlu0 %v8181, 96
    %v8364 = vpop.permute.xlu0 %8363
    %8365 = vrot.lane.b32.xlu0 %v8185, 96
    %v8366 = vpop.permute.xlu0 %8365
    %8367 = vrot.lane.b32.xlu0 %v8191, 96
    %v8368 = vpop.permute.xlu0 %8367
    %8369 = vrot.lane.b32.xlu0 %v8195, 96
    %v8370 = vpop.permute.xlu0 %8369
    %v8371 = vsel %vm590, %v8356, 0
    %v8373 = vsel %vm590, %v8358, 0
    %v8375 = vsel %vm590, %v8360, 0
    %v8377 = vsel %vm590, %v8362, 0
    %v8379 = vsel %vm590, %v8364, 0
    %v8381 = vsel %vm590, %v8366, 0
    %v8383 = vsel %vm590, %v8368, 0
    %v8385 = vsel %vm590, %v8370, 0
    %8387 = vmatprep.subr.mxu0 0.0
    %8388 = vmatpush1.xpose.msra.mxu0 %v8379
    %8389 = vmatprep.subr.mxu0 0.0
    %8390 = vmatpush1.xpose.msra.mxu0 %v8381
    %8391 = vmatprep.subr.mxu0 0.0
    %8392 = vmatpush1.xpose.msra.mxu0 %v8383
    %8393 = vmatprep.subr.mxu0 0.0
    %8394 = vmatpush1.xpose.msra.mxu0 %v8385
    %8395 = vmatprep.subr.mxu0 0.0
    %8396 = vmatpush1.xpose.msra.mxu0 0.0
    %8397 = vmatprep.subr.mxu0 0.0
    %8398 = vmatpush1.xpose.msra.mxu0 0.0
    %8399 = vmatprep.subr.mxu0 0.0
    %8400 = vmatpush1.xpose.msra.mxu0 0.0
    %8401 = vmatprep.subr.mxu0 0.0
    %8402 = vmatpush1.xpose.msra.mxu0 0.0
    %8403 = vmatprep.subr.mxu0 0.0
    %8404 = vmatpush1.xpose.msra.mxu0 0.0
    %8405 = vmatprep.subr.mxu0 0.0
    %8406 = vmatpush1.xpose.msra.mxu0 0.0
    %8407 = vmatprep.subr.mxu0 0.0
    %8408 = vmatpush1.xpose.msra.mxu0 0.0
    %8409 = vmatprep.subr.mxu0 0.0
    %8410 = vmatpush1.xpose.msra.mxu0 0.0
    %8411 = vmatprep.subr.mxu0 0.0
    %8412 = vmatpush1.xpose.msra.mxu0 0.0
    %8413 = vmatprep.subr.mxu0 0.0
    %8414 = vmatpush1.xpose.msra.mxu0 0.0
    %8415 = vmatprep.subr.mxu0 0.0
    %8416 = vmatpush1.xpose.msra.mxu0 0.0
    %8417 = vmatprep.subr.mxu0 0.0
    %8418 = vmatpush1.xpose.msra.mxu0 0.0
    %8419 = vmatprep.subr.mxu0 0.0
    %8420 = vmatpush1.xpose.msra.mxu0 0.0
    %8421 = vmatprep.subr.mxu0 0.0
    %8422 = vmatpush1.xpose.msra.mxu0 0.0
    %8423 = vmatprep.subr.mxu0 0.0
    %8424 = vmatpush1.xpose.msra.mxu0 0.0
    %8425 = vmatprep.subr.mxu0 0.0
    %8426 = vmatpush1.xpose.msra.mxu0 0.0
    %8427 = vmatprep.subr.mxu0 0.0
    %8428 = vmatpush1.xpose.msra.mxu0 0.0
    %8429 = vmatprep.subr.mxu0 0.0
    %8430 = vmatpush1.xpose.msra.mxu0 0.0
    %8431 = vmatprep.subr.mxu0 0.0
    %8432 = vmatpush1.xpose.msra.mxu0 0.0
    %8433 = vmatprep.subr.mxu0 0.0
    %8434 = vmatpush1.xpose.msra.mxu0 0.0
    %8435 = vmatprep.subr.mxu0 0.0
    %8436 = vmatpush1.xpose.msra.mxu0 0.0
    %8437 = vmatprep.subr.mxu0 0.0
    %8438 = vmatpush1.xpose.msra.mxu0 0.0
    %8439 = vmatprep.subr.mxu0 0.0
    %8440 = vmatpush1.xpose.msra.mxu0 0.0
    %8441 = vmatprep.subr.mxu0 0.0
    %8442 = vmatpush1.xpose.msra.mxu0 0.0
    %8443 = vmatprep.subr.mxu0 0.0
    %8444 = vmatpush1.xpose.msra.mxu0 0.0
    %8445 = vmatprep.subr.mxu0 0.0
    %8446 = vmatpush1.xpose.msra.mxu0 0.0
    %8447 = vmatprep.subr.mxu0 0.0
    %8448 = vmatpush1.xpose.msra.mxu0 0.0
    %8449 = vmatprep.subr.mxu0 0.0
    %8450 = vmatpush1.xpose.msra.mxu0 0.0
    %8451 = vmatprep.mubr.f32.mxu0 0.0
    %8452 = vmatmul.mubr.f32.gmra.mrb[0].mxu0 %v8371
    %v8453 = vpop.f32.mrb[0].mxu0
    %v8454 = vadd.f32 0.0, %v8453
    %v8455 = vpop.f32.mrb[0].mxu0
    %8456 = vmatprep.mubr.f32.mxu0 0.0
    %8457 = vmatmul.mubr.f32.gmra.mrb[0].mxu0 %v8373
    %v8458 = vpop.f32.mrb[0].mxu0
    %v8459 = vadd.f32 0.0, %v8458
    %v8460 = vpop.f32.mrb[0].mxu0
    %8461 = vmatprep.mubr.f32.mxu0 0.0
    %8462 = vmatmul.mubr.f32.gmra.mrb[0].mxu0 %v8375
    %v8463 = vpop.f32.mrb[0].mxu0
    %v8464 = vadd.f32 0.0, %v8463
    %v8465 = vpop.f32.mrb[0].mxu0
    %8466 = vmatprep.mubr.f32.mxu0 0.0
    %8467 = vmatmul.mubr.f32.gmra.mrb[0].mxu0 %v8377
    %v8468 = vpop.f32.mrb[0].mxu0
    %v8469 = vadd.f32 0.0, %v8468
    %v8470 = vpop.f32.mrb[0].mxu0
    %8471 = vdwg.mxu0
    %8472 = vrot.lane.b32.xlu0 %v8179, 64
    %v8473 = vpop.permute.xlu0 %8472
    %8474 = vrot.lane.b32.xlu0 %v8183, 64
    %v8475 = vpop.permute.xlu0 %8474
    %8476 = vrot.lane.b32.xlu0 %v8189, 64
    %v8477 = vpop.permute.xlu0 %8476
    %8478 = vrot.lane.b32.xlu0 %v8193, 64
    %v8479 = vpop.permute.xlu0 %8478
    %8480 = vrot.lane.b32.xlu0 %v8181, 64
    %v8481 = vpop.permute.xlu0 %8480
    %8482 = vrot.lane.b32.xlu0 %v8185, 64
    %v8483 = vpop.permute.xlu0 %8482
    %8484 = vrot.lane.b32.xlu0 %v8191, 64
    %v8485 = vpop.permute.xlu0 %8484
    %8486 = vrot.lane.b32.xlu0 %v8195, 64
    %v8487 = vpop.permute.xlu0 %8486
    %v8488 = vsel %vm590, %v8473, 0
    %v8490 = vsel %vm590, %v8475, 0
    %v8492 = vsel %vm590, %v8477, 0
    %v8494 = vsel %vm590, %v8479, 0
    %v8496 = vsel %vm590, %v8481, 0
    %v8498 = vsel %vm590, %v8483, 0
    %v8500 = vsel %vm590, %v8485, 0
    %v8502 = vsel %vm590, %v8487, 0
    %8504 = vmatprep.subr.mxu0 0.0
    %8505 = vmatpush1.xpose.msra.mxu0 %v8496
    %8506 = vmatprep.subr.mxu0 0.0
    %8507 = vmatpush1.xpose.msra.mxu0 %v8498
    %8508 = vmatprep.subr.mxu0 0.0
    %8509 = vmatpush1.xpose.msra.mxu0 %v8500
    %8510 = vmatprep.subr.mxu0 0.0
    %8511 = vmatpush1.xpose.msra.mxu0 %v8502
    %8512 = vmatprep.subr.mxu0 0.0
    %8513 = vmatpush1.xpose.msra.mxu0 0.0
    %8514 = vmatprep.subr.mxu0 0.0
    %8515 = vmatpush1.xpose.msra.mxu0 0.0
    %8516 = vmatprep.subr.mxu0 0.0
    %8517 = vmatpush1.xpose.msra.mxu0 0.0
    %8518 = vmatprep.subr.mxu0 0.0
    %8519 = vmatpush1.xpose.msra.mxu0 0.0
    %8520 = vmatprep.subr.mxu0 0.0
    %8521 = vmatpush1.xpose.msra.mxu0 0.0
    %8522 = vmatprep.subr.mxu0 0.0
    %8523 = vmatpush1.xpose.msra.mxu0 0.0
    %8524 = vmatprep.subr.mxu0 0.0
    %8525 = vmatpush1.xpose.msra.mxu0 0.0
    %8526 = vmatprep.subr.mxu0 0.0
    %8527 = vmatpush1.xpose.msra.mxu0 0.0
    %8528 = vmatprep.subr.mxu0 0.0
    %8529 = vmatpush1.xpose.msra.mxu0 0.0
    %8530 = vmatprep.subr.mxu0 0.0
    %8531 = vmatpush1.xpose.msra.mxu0 0.0
    %8532 = vmatprep.subr.mxu0 0.0
    %8533 = vmatpush1.xpose.msra.mxu0 0.0
    %8534 = vmatprep.subr.mxu0 0.0
    %8535 = vmatpush1.xpose.msra.mxu0 0.0
    %8536 = vmatprep.subr.mxu0 0.0
    %8537 = vmatpush1.xpose.msra.mxu0 0.0
    %8538 = vmatprep.subr.mxu0 0.0
    %8539 = vmatpush1.xpose.msra.mxu0 0.0
    %8540 = vmatprep.subr.mxu0 0.0
    %8541 = vmatpush1.xpose.msra.mxu0 0.0
    %8542 = vmatprep.subr.mxu0 0.0
    %8543 = vmatpush1.xpose.msra.mxu0 0.0
    %8544 = vmatprep.subr.mxu0 0.0
    %8545 = vmatpush1.xpose.msra.mxu0 0.0
    %8546 = vmatprep.subr.mxu0 0.0
    %8547 = vmatpush1.xpose.msra.mxu0 0.0
    %8548 = vmatprep.subr.mxu0 0.0
    %8549 = vmatpush1.xpose.msra.mxu0 0.0
    %8550 = vmatprep.subr.mxu0 0.0
    %8551 = vmatpush1.xpose.msra.mxu0 0.0
    %8552 = vmatprep.subr.mxu0 0.0
    %8553 = vmatpush1.xpose.msra.mxu0 0.0
    %8554 = vmatprep.subr.mxu0 0.0
    %8555 = vmatpush1.xpose.msra.mxu0 0.0
    %8556 = vmatprep.subr.mxu0 0.0
    %8557 = vmatpush1.xpose.msra.mxu0 0.0
    %8558 = vmatprep.subr.mxu0 0.0
    %8559 = vmatpush1.xpose.msra.mxu0 0.0
    %8560 = vmatprep.subr.mxu0 0.0
    %8561 = vmatpush1.xpose.msra.mxu0 0.0
    %8562 = vmatprep.subr.mxu0 0.0
    %8563 = vmatpush1.xpose.msra.mxu0 0.0
    %8564 = vmatprep.subr.mxu0 0.0
    %8565 = vmatpush1.xpose.msra.mxu0 0.0
    %8566 = vmatprep.subr.mxu0 0.0
    %8567 = vmatpush1.xpose.msra.mxu0 0.0
    %8568 = vmatprep.mubr.f32.mxu0 0.0
    %8569 = vmatmul.mubr.f32.gmra.mrb[0].mxu0 %v8488
    %v8570 = vpop.f32.mrb[0].mxu0
    %v8571 = vadd.f32 0.0, %v8570
    %v8572 = vpop.f32.mrb[0].mxu0
    %8573 = vmatprep.mubr.f32.mxu0 0.0
    %8574 = vmatmul.mubr.f32.gmra.mrb[0].mxu0 %v8490
    %v8575 = vpop.f32.mrb[0].mxu0
    %v8576 = vadd.f32 0.0, %v8575
    %v8577 = vpop.f32.mrb[0].mxu0
    %8578 = vmatprep.mubr.f32.mxu0 0.0
    %8579 = vmatmul.mubr.f32.gmra.mrb[0].mxu0 %v8492
    %v8580 = vpop.f32.mrb[0].mxu0
    %v8581 = vadd.f32 0.0, %v8580
    %v8582 = vpop.f32.mrb[0].mxu0
    %8583 = vmatprep.mubr.f32.mxu0 0.0
    %8584 = vmatmul.mubr.f32.gmra.mrb[0].mxu0 %v8494
    %v8585 = vpop.f32.mrb[0].mxu0
    %v8586 = vadd.f32 0.0, %v8585
    %v8587 = vpop.f32.mrb[0].mxu0
    %8588 = vdwg.mxu0
    %8589 = vrot.lane.b32.xlu0 %v8179, 32
    %v8590 = vpop.permute.xlu0 %8589
    %8591 = vrot.lane.b32.xlu0 %v8183, 32
    %v8592 = vpop.permute.xlu0 %8591
    %8593 = vrot.lane.b32.xlu0 %v8189, 32
    %v8594 = vpop.permute.xlu0 %8593
    %8595 = vrot.lane.b32.xlu0 %v8193, 32
    %v8596 = vpop.permute.xlu0 %8595
    %8597 = vrot.lane.b32.xlu0 %v8181, 32
    %v8598 = vpop.permute.xlu0 %8597
    %8599 = vrot.lane.b32.xlu0 %v8185, 32
    %v8600 = vpop.permute.xlu0 %8599
    %8601 = vrot.lane.b32.xlu0 %v8191, 32
    %v8602 = vpop.permute.xlu0 %8601
    %8603 = vrot.lane.b32.xlu0 %v8195, 32
    %v8604 = vpop.permute.xlu0 %8603
    %v8605 = vsel %vm590, %v8590, 0
    %v8607 = vsel %vm590, %v8592, 0
    %v8609 = vsel %vm590, %v8594, 0
    %v8611 = vsel %vm590, %v8596, 0
    %v8613 = vsel %vm590, %v8598, 0
    %v8615 = vsel %vm590, %v8600, 0
    %v8617 = vsel %vm590, %v8602, 0
    %v8619 = vsel %vm590, %v8604, 0
    %8621 = vmatprep.subr.mxu0 0.0
    %8622 = vmatpush1.xpose.msra.mxu0 %v8613
    %8623 = vmatprep.subr.mxu0 0.0
    %8624 = vmatpush1.xpose.msra.mxu0 %v8615
    %8625 = vmatprep.subr.mxu0 0.0
    %8626 = vmatpush1.xpose.msra.mxu0 %v8617
    %8627 = vmatprep.subr.mxu0 0.0
    %8628 = vmatpush1.xpose.msra.mxu0 %v8619
    %8629 = vmatprep.subr.mxu0 0.0
    %8630 = vmatpush1.xpose.msra.mxu0 0.0
    %8631 = vmatprep.subr.mxu0 0.0
    %8632 = vmatpush1.xpose.msra.mxu0 0.0
    %8633 = vmatprep.subr.mxu0 0.0
    %8634 = vmatpush1.xpose.msra.mxu0 0.0
    %8635 = vmatprep.subr.mxu0 0.0
    %8636 = vmatpush1.xpose.msra.mxu0 0.0
    %8637 = vmatprep.subr.mxu0 0.0
    %8638 = vmatpush1.xpose.msra.mxu0 0.0
    %8639 = vmatprep.subr.mxu0 0.0
    %8640 = vmatpush1.xpose.msra.mxu0 0.0
    %8641 = vmatprep.subr.mxu0 0.0
    %8642 = vmatpush1.xpose.msra.mxu0 0.0
    %8643 = vmatprep.subr.mxu0 0.0
    %8644 = vmatpush1.xpose.msra.mxu0 0.0
    %8645 = vmatprep.subr.mxu0 0.0
    %8646 = vmatpush1.xpose.msra.mxu0 0.0
    %8647 = vmatprep.subr.mxu0 0.0
    %8648 = vmatpush1.xpose.msra.mxu0 0.0
    %8649 = vmatprep.subr.mxu0 0.0
    %8650 = vmatpush1.xpose.msra.mxu0 0.0
    %8651 = vmatprep.subr.mxu0 0.0
    %8652 = vmatpush1.xpose.msra.mxu0 0.0
    %8653 = vmatprep.subr.mxu0 0.0
    %8654 = vmatpush1.xpose.msra.mxu0 0.0
    %8655 = vmatprep.subr.mxu0 0.0
    %8656 = vmatpush1.xpose.msra.mxu0 0.0
    %8657 = vmatprep.subr.mxu0 0.0
    %8658 = vmatpush1.xpose.msra.mxu0 0.0
    %8659 = vmatprep.subr.mxu0 0.0
    %8660 = vmatpush1.xpose.msra.mxu0 0.0
    %8661 = vmatprep.subr.mxu0 0.0
    %8662 = vmatpush1.xpose.msra.mxu0 0.0
    %8663 = vmatprep.subr.mxu0 0.0
    %8664 = vmatpush1.xpose.msra.mxu0 0.0
    %8665 = vmatprep.subr.mxu0 0.0
    %8666 = vmatpush1.xpose.msra.mxu0 0.0
    %8667 = vmatprep.subr.mxu0 0.0
    %8668 = vmatpush1.xpose.msra.mxu0 0.0
    %8669 = vmatprep.subr.mxu0 0.0
    %8670 = vmatpush1.xpose.msra.mxu0 0.0
    %8671 = vmatprep.subr.mxu0 0.0
    %8672 = vmatpush1.xpose.msra.mxu0 0.0
    %8673 = vmatprep.subr.mxu0 0.0
    %8674 = vmatpush1.xpose.msra.mxu0 0.0
    %8675 = vmatprep.subr.mxu0 0.0
    %8676 = vmatpush1.xpose.msra.mxu0 0.0
    %8677 = vmatprep.subr.mxu0 0.0
    %8678 = vmatpush1.xpose.msra.mxu0 0.0
    %8679 = vmatprep.subr.mxu0 0.0
    %8680 = vmatpush1.xpose.msra.mxu0 0.0
    %8681 = vmatprep.subr.mxu0 0.0
    %8682 = vmatpush1.xpose.msra.mxu0 0.0
    %8683 = vmatprep.subr.mxu0 0.0
    %8684 = vmatpush1.xpose.msra.mxu0 0.0
    %8685 = vmatprep.mubr.f32.mxu0 0.0
    %8686 = vmatmul.mubr.f32.gmra.mrb[0].mxu0 %v8605
    %v8687 = vpop.f32.mrb[0].mxu0
    %v8688 = vadd.f32 0.0, %v8687
    %v8689 = vpop.f32.mrb[0].mxu0
    %8690 = vmatprep.mubr.f32.mxu0 0.0
    %8691 = vmatmul.mubr.f32.gmra.mrb[0].mxu0 %v8607
    %v8692 = vpop.f32.mrb[0].mxu0
    %v8693 = vadd.f32 0.0, %v8692
    %v8694 = vpop.f32.mrb[0].mxu0
    %8695 = vmatprep.mubr.f32.mxu0 0.0
    %8696 = vmatmul.mubr.f32.gmra.mrb[0].mxu0 %v8609
    %v8697 = vpop.f32.mrb[0].mxu0
    %v8698 = vadd.f32 0.0, %v8697
    %v8699 = vpop.f32.mrb[0].mxu0
    %8700 = vmatprep.mubr.f32.mxu0 0.0
    %8701 = vmatmul.mubr.f32.gmra.mrb[0].mxu0 %v8611
    %v8702 = vpop.f32.mrb[0].mxu0
    %v8703 = vadd.f32 0.0, %v8702
    %v8704 = vpop.f32.mrb[0].mxu0
    %8705 = vdwg.mxu0
    %v8706 = vmul.f32 %v8337, 0.17677669
    %v8707 = vmul.f32 %v8342, 0.17677669
    %v8708 = vmul.f32 %v8347, 0.17677669
    %v8709 = vmul.f32 %v8352, 0.17677669
    %v8710 = vmul.f32 %v8454, 0.17677669
    %v8711 = vmul.f32 %v8459, 0.17677669
    %v8712 = vmul.f32 %v8464, 0.17677669
    %v8713 = vmul.f32 %v8469, 0.17677669
    %v8714 = vmul.f32 %v8571, 0.17677669
    %v8715 = vmul.f32 %v8576, 0.17677669
    %v8716 = vmul.f32 %v8581, 0.17677669
    %v8717 = vmul.f32 %v8586, 0.17677669
    %v8718 = vmul.f32 %v8688, 0.17677669
    %v8719 = vmul.f32 %v8693, 0.17677669
    %v8720 = vmul.f32 %v8698, 0.17677669
    %v8721 = vmul.f32 %v8703, 0.17677669
    %v8722 = vadd.f32 %v8706, %v293
    %v8723 = vadd.f32 %v8707, %v294
    %v8724 = vadd.f32 %v8708, %v295
    %v8725 = vadd.f32 %v8709, %v296
    %v8726 = vadd.f32 %v8710, %v297
    %v8727 = vadd.f32 %v8711, %v298
    %v8728 = vadd.f32 %v8712, %v299
    %v8729 = vadd.f32 %v8713, %v300
    %v8730 = vadd.f32 %v8714, %v301
    %v8731 = vadd.f32 %v8715, %v302
    %v8732 = vadd.f32 %v8716, %v303
    %v8733 = vadd.f32 %v8717, %v304
    %v8734 = vadd.f32 %v8718, %v305
    %v8735 = vadd.f32 %v8719, %v306
    %v8736 = vadd.f32 %v8720, %v307
    %v8737 = vadd.f32 %v8721, %v308
    %v8738 = vsel %vm590, %v8722, -inf
    %8739 = vmax.xlane.f32.xlu0 %v8738
    %v8740 = vpop.xlane.xlu0 %8739
    %v8741 = vsel %vm590, %v8723, -inf
    %8742 = vmax.xlane.f32.xlu0 %v8741
    %v8743 = vpop.xlane.xlu0 %8742
    %v8744 = vsel %vm590, %v8724, -inf
    %8745 = vmax.xlane.f32.xlu0 %v8744
    %v8746 = vpop.xlane.xlu0 %8745
    %v8747 = vsel %vm590, %v8725, -inf
    %8748 = vmax.xlane.f32.xlu0 %v8747
    %v8749 = vpop.xlane.xlu0 %8748
    %v8750 = vsel %vm590, %v8726, -inf
    %8751 = vmax.xlane.f32.xlu0 %v8750
    %v8752 = vpop.xlane.xlu0 %8751
    %v8753 = vsel %vm590, %v8727, -inf
    %8754 = vmax.xlane.f32.xlu0 %v8753
    %v8755 = vpop.xlane.xlu0 %8754
    %v8756 = vsel %vm590, %v8728, -inf
    %8757 = vmax.xlane.f32.xlu0 %v8756
    %v8758 = vpop.xlane.xlu0 %8757
    %v8759 = vsel %vm590, %v8729, -inf
    %8760 = vmax.xlane.f32.xlu0 %v8759
    %v8761 = vpop.xlane.xlu0 %8760
    %v8762 = vsel %vm590, %v8730, -inf
    %8763 = vmax.xlane.f32.xlu0 %v8762
    %v8764 = vpop.xlane.xlu0 %8763
    %v8765 = vsel %vm590, %v8731, -inf
    %8766 = vmax.xlane.f32.xlu0 %v8765
    %v8767 = vpop.xlane.xlu0 %8766
    %v8768 = vsel %vm590, %v8732, -inf
    %8769 = vmax.xlane.f32.xlu0 %v8768
    %v8770 = vpop.xlane.xlu0 %8769
    %v8771 = vsel %vm590, %v8733, -inf
    %8772 = vmax.xlane.f32.xlu0 %v8771
    %v8773 = vpop.xlane.xlu0 %8772
    %v8774 = vsel %vm590, %v8734, -inf
    %8775 = vmax.xlane.f32.xlu0 %v8774
    %v8776 = vpop.xlane.xlu0 %8775
    %v8777 = vsel %vm590, %v8735, -inf
    %8778 = vmax.xlane.f32.xlu0 %v8777
    %v8779 = vpop.xlane.xlu0 %8778
    %v8780 = vsel %vm590, %v8736, -inf
    %8781 = vmax.xlane.f32.xlu0 %v8780
    %v8782 = vpop.xlane.xlu0 %8781
    %v8783 = vsel %vm590, %v8737, -inf
    %8784 = vmax.xlane.f32.xlu0 %v8783
    %v8785 = vpop.xlane.xlu0 %8784
    %v8786 = vsub.f32 %v8722, %v8740
    %v8787 = vsub.f32 %v8723, %v8743
    %v8788 = vsub.f32 %v8724, %v8746
    %v8789 = vsub.f32 %v8725, %v8749
    %v8790 = vsub.f32 %v8726, %v8752
    %v8791 = vsub.f32 %v8727, %v8755
    %v8792 = vsub.f32 %v8728, %v8758
    %v8793 = vsub.f32 %v8729, %v8761
    %v8794 = vsub.f32 %v8730, %v8764
    %v8795 = vsub.f32 %v8731, %v8767
    %v8796 = vsub.f32 %v8732, %v8770
    %v8797 = vsub.f32 %v8733, %v8773
    %v8798 = vsub.f32 %v8734, %v8776
    %v8799 = vsub.f32 %v8735, %v8779
    %v8800 = vsub.f32 %v8736, %v8782
    %v8801 = vsub.f32 %v8737, %v8785
    %v8802 = vmul.f32 %v8786, 1.442695
    %v8803 = vpow.pop %v8802
    %v8804 = vmul.f32 %v8787, 1.442695
    %v8805 = vpow.pop %v8804
    %v8806 = vmul.f32 %v8788, 1.442695
    %v8807 = vpow.pop %v8806
    %v8808 = vmul.f32 %v8789, 1.442695
    %v8809 = vpow.pop %v8808
    %v8810 = vmul.f32 %v8790, 1.442695
    %v8811 = vpow.pop %v8810
    %v8812 = vmul.f32 %v8791, 1.442695
    %v8813 = vpow.pop %v8812
    %v8814 = vmul.f32 %v8792, 1.442695
    %v8815 = vpow.pop %v8814
    %v8816 = vmul.f32 %v8793, 1.442695
    %v8817 = vpow.pop %v8816
    %v8818 = vmul.f32 %v8794, 1.442695
    %v8819 = vpow.pop %v8818
    %v8820 = vmul.f32 %v8795, 1.442695
    %v8821 = vpow.pop %v8820
    %v8822 = vmul.f32 %v8796, 1.442695
    %v8823 = vpow.pop %v8822
    %v8824 = vmul.f32 %v8797, 1.442695
    %v8825 = vpow.pop %v8824
    %v8826 = vmul.f32 %v8798, 1.442695
    %v8827 = vpow.pop %v8826
    %v8828 = vmul.f32 %v8799, 1.442695
    %v8829 = vpow.pop %v8828
    %v8830 = vmul.f32 %v8800, 1.442695
    %v8831 = vpow.pop %v8830
    %v8832 = vmul.f32 %v8801, 1.442695
    %v8833 = vpow.pop %v8832
    %v8834 = vsel %vm590, %v8803, 0.0
    %8835 = vadd.xlane.f32.xlu0 %v8834
    %v8836 = vpop.xlane.xlu0 %8835
    %v8837 = vsel %vm590, %v8805, 0.0
    %8838 = vadd.xlane.f32.xlu0 %v8837
    %v8839 = vpop.xlane.xlu0 %8838
    %v8840 = vsel %vm590, %v8807, 0.0
    %8841 = vadd.xlane.f32.xlu0 %v8840
    %v8842 = vpop.xlane.xlu0 %8841
    %v8843 = vsel %vm590, %v8809, 0.0
    %8844 = vadd.xlane.f32.xlu0 %v8843
    %v8845 = vpop.xlane.xlu0 %8844
    %v8846 = vsel %vm590, %v8811, 0.0
    %8847 = vadd.xlane.f32.xlu0 %v8846
    %v8848 = vpop.xlane.xlu0 %8847
    %v8849 = vsel %vm590, %v8813, 0.0
    %8850 = vadd.xlane.f32.xlu0 %v8849
    %v8851 = vpop.xlane.xlu0 %8850
    %v8852 = vsel %vm590, %v8815, 0.0
    %8853 = vadd.xlane.f32.xlu0 %v8852
    %v8854 = vpop.xlane.xlu0 %8853
    %v8855 = vsel %vm590, %v8817, 0.0
    %8856 = vadd.xlane.f32.xlu0 %v8855
    %v8857 = vpop.xlane.xlu0 %8856
    %v8858 = vsel %vm590, %v8819, 0.0
    %8859 = vadd.xlane.f32.xlu0 %v8858
    %v8860 = vpop.xlane.xlu0 %8859
    %v8861 = vsel %vm590, %v8821, 0.0
    %8862 = vadd.xlane.f32.xlu0 %v8861
    %v8863 = vpop.xlane.xlu0 %8862
    %v8864 = vsel %vm590, %v8823, 0.0
    %8865 = vadd.xlane.f32.xlu0 %v8864
    %v8866 = vpop.xlane.xlu0 %8865
    %v8867 = vsel %vm590, %v8825, 0.0
    %8868 = vadd.xlane.f32.xlu0 %v8867
    %v8869 = vpop.xlane.xlu0 %8868
    %v8870 = vsel %vm590, %v8827, 0.0
    %8871 = vadd.xlane.f32.xlu0 %v8870
    %v8872 = vpop.xlane.xlu0 %8871
    %v8873 = vsel %vm590, %v8829, 0.0
    %8874 = vadd.xlane.f32.xlu0 %v8873
    %v8875 = vpop.xlane.xlu0 %8874
    %v8876 = vsel %vm590, %v8831, 0.0
    %8877 = vadd.xlane.f32.xlu0 %v8876
    %v8878 = vpop.xlane.xlu0 %8877
    %v8879 = vsel %vm590, %v8833, 0.0
    %8880 = vadd.xlane.f32.xlu0 %v8879
    %v8881 = vpop.xlane.xlu0 %8880
    %v8882 = vrcp.pop %v8836
    %v8883 = vrcp.pop %v8839
    %v8884 = vrcp.pop %v8842
    %v8885 = vrcp.pop %v8845
    %v8886 = vrcp.pop %v8848
    %v8887 = vrcp.pop %v8851
    %v8888 = vrcp.pop %v8854
    %v8889 = vrcp.pop %v8857
    %v8890 = vrcp.pop %v8860
    %v8891 = vrcp.pop %v8863
    %v8892 = vrcp.pop %v8866
    %v8893 = vrcp.pop %v8869
    %v8894 = vrcp.pop %v8872
    %v8895 = vrcp.pop %v8875
    %v8896 = vrcp.pop %v8878
    %v8897 = vrcp.pop %v8881
    %v8898 = vmul.f32 %v8803, %v8882
    %v8899 = vmul.f32 %v8805, %v8883
    %v8900 = vmul.f32 %v8807, %v8884
    %v8901 = vmul.f32 %v8809, %v8885
    %v8902 = vmul.f32 %v8811, %v8886
    %v8903 = vmul.f32 %v8813, %v8887
    %v8904 = vmul.f32 %v8815, %v8888
    %v8905 = vmul.f32 %v8817, %v8889
    %v8906 = vmul.f32 %v8819, %v8890
    %v8907 = vmul.f32 %v8821, %v8891
    %v8908 = vmul.f32 %v8823, %v8892
    %v8909 = vmul.f32 %v8825, %v8893
    %v8910 = vmul.f32 %v8827, %v8894
    %v8911 = vmul.f32 %v8829, %v8895
    %v8912 = vmul.f32 %v8831, %v8896
    %v8913 = vmul.f32 %v8833, %v8897
    %v8915 = vsel %vm590, %v8898, 0
    %v8918 = vsel %vm590, %v8899, 0
    %v8921 = vsel %vm590, %v8900, 0
    %v8924 = vsel %vm590, %v8901, 0
    %8926 = vmatprep.subr.mxu0 0.0
    %8927 = vmatpush1.msra.mxu0 %v8232
    %8928 = vmatprep.subr.mxu0 0.0
    %8929 = vmatpush1.msra.mxu0 %v8235
    %8930 = vmatprep.subr.mxu0 0.0
    %8931 = vmatpush1.msra.mxu0 %v8240
    %8932 = vmatprep.subr.mxu0 0.0
    %8933 = vmatpush1.msra.mxu0 %v8243
    %8934 = vmatprep.subr.mxu0 0.0
    %8935 = vmatpush1.msra.mxu0 0.0
    %8936 = vmatprep.subr.mxu0 0.0
    %8937 = vmatpush1.msra.mxu0 0.0
    %8938 = vmatprep.subr.mxu0 0.0
    %8939 = vmatpush1.msra.mxu0 0.0
    %8940 = vmatprep.subr.mxu0 0.0
    %8941 = vmatpush1.msra.mxu0 0.0
    %8942 = vmatprep.subr.mxu0 0.0
    %8943 = vmatpush1.msra.mxu0 0.0
    %8944 = vmatprep.subr.mxu0 0.0
    %8945 = vmatpush1.msra.mxu0 0.0
    %8946 = vmatprep.subr.mxu0 0.0
    %8947 = vmatpush1.msra.mxu0 0.0
    %8948 = vmatprep.subr.mxu0 0.0
    %8949 = vmatpush1.msra.mxu0 0.0
    %8950 = vmatprep.subr.mxu0 0.0
    %8951 = vmatpush1.msra.mxu0 0.0
    %8952 = vmatprep.subr.mxu0 0.0
    %8953 = vmatpush1.msra.mxu0 0.0
    %8954 = vmatprep.subr.mxu0 0.0
    %8955 = vmatpush1.msra.mxu0 0.0
    %8956 = vmatprep.subr.mxu0 0.0
    %8957 = vmatpush1.msra.mxu0 0.0
    %8958 = vmatprep.subr.mxu0 0.0
    %8959 = vmatpush1.msra.mxu0 0.0
    %8960 = vmatprep.subr.mxu0 0.0
    %8961 = vmatpush1.msra.mxu0 0.0
    %8962 = vmatprep.subr.mxu0 0.0
    %8963 = vmatpush1.msra.mxu0 0.0
    %8964 = vmatprep.subr.mxu0 0.0
    %8965 = vmatpush1.msra.mxu0 0.0
    %8966 = vmatprep.subr.mxu0 0.0
    %8967 = vmatpush1.msra.mxu0 0.0
    %8968 = vmatprep.subr.mxu0 0.0
    %8969 = vmatpush1.msra.mxu0 0.0
    %8970 = vmatprep.subr.mxu0 0.0
    %8971 = vmatpush1.msra.mxu0 0.0
    %8972 = vmatprep.subr.mxu0 0.0
    %8973 = vmatpush1.msra.mxu0 0.0
    %8974 = vmatprep.subr.mxu0 0.0
    %8975 = vmatpush1.msra.mxu0 0.0
    %8976 = vmatprep.subr.mxu0 0.0
    %8977 = vmatpush1.msra.mxu0 0.0
    %8978 = vmatprep.subr.mxu0 0.0
    %8979 = vmatpush1.msra.mxu0 0.0
    %8980 = vmatprep.subr.mxu0 0.0
    %8981 = vmatpush1.msra.mxu0 0.0
    %8982 = vmatprep.subr.mxu0 0.0
    %8983 = vmatpush1.msra.mxu0 0.0
    %8984 = vmatprep.subr.mxu0 0.0
    %8985 = vmatpush1.msra.mxu0 0.0
    %8986 = vmatprep.subr.mxu0 0.0
    %8987 = vmatpush1.msra.mxu0 0.0
    %8988 = vmatprep.subr.mxu0 0.0
    %8989 = vmatpush1.msra.mxu0 0.0
    %8990 = vmatprep.mubr.f32.mxu0 0.0
    %8991 = vmatmul.mubr.f32.gmra.mrb[0].mxu0 %v8915
    %v8992 = vpop.f32.mrb[0].mxu0
    %v8993 = vadd.f32 0.0, %v8992
    %v8994 = vpop.f32.mrb[0].mxu0
    %8995 = vmatprep.mubr.f32.mxu0 0.0
    %8996 = vmatmul.mubr.f32.gmra.mrb[0].mxu0 %v8918
    %v8997 = vpop.f32.mrb[0].mxu0
    %v8998 = vadd.f32 0.0, %v8997
    %v8999 = vpop.f32.mrb[0].mxu0
    %9000 = vmatprep.mubr.f32.mxu0 0.0
    %9001 = vmatmul.mubr.f32.gmra.mrb[0].mxu0 %v8921
    %v9002 = vpop.f32.mrb[0].mxu0
    %v9003 = vadd.f32 0.0, %v9002
    %v9004 = vpop.f32.mrb[0].mxu0
    %9005 = vmatprep.mubr.f32.mxu0 0.0
    %9006 = vmatmul.mubr.f32.gmra.mrb[0].mxu0 %v8924
    %v9007 = vpop.f32.mrb[0].mxu0
    %v9008 = vadd.f32 0.0, %v9007
    %v9009 = vpop.f32.mrb[0].mxu0
    %9010 = vdwg.mxu0
    %9011 = vst.msk [vmem:[#allocation2] sm:$0xff] %vm590, %v8993
    %9012 = vst.msk [vmem:[#allocation2 + $0x8] sm:$0xff] %vm590, %v8998
    %9013 = vst.msk [vmem:[#allocation2 + $0x10] sm:$0xff] %vm590, %v9003
    %9014 = vst.msk [vmem:[#allocation2 + $0x18] sm:$0xff] %vm590, %v9008
    %9019 = vrot.lane.b32.xlu0 %v8232, 96
    %v9020 = vpop.permute.xlu0 %9019
    %9021 = vrot.lane.b32.xlu0 %v8235, 96
    %v9022 = vpop.permute.xlu0 %9021
    %9023 = vrot.lane.b32.xlu0 %v8240, 96
    %v9024 = vpop.permute.xlu0 %9023
    %9025 = vrot.lane.b32.xlu0 %v8243, 96
    %v9026 = vpop.permute.xlu0 %9025
    %v9032 = vsel %vm590, %v8902, 0
    %v9035 = vsel %vm590, %v8903, 0
    %v9038 = vsel %vm590, %v8904, 0
    %v9041 = vsel %vm590, %v8905, 0
    %9043 = vmatprep.subr.mxu0 0.0
    %9044 = vmatpush1.msra.mxu0 %v9020
    %9045 = vmatprep.subr.mxu0 0.0
    %9046 = vmatpush1.msra.mxu0 %v9022
    %9047 = vmatprep.subr.mxu0 0.0
    %9048 = vmatpush1.msra.mxu0 %v9024
    %9049 = vmatprep.subr.mxu0 0.0
    %9050 = vmatpush1.msra.mxu0 %v9026
    %9051 = vmatprep.subr.mxu0 0.0
    %9052 = vmatpush1.msra.mxu0 0.0
    %9053 = vmatprep.subr.mxu0 0.0
    %9054 = vmatpush1.msra.mxu0 0.0
    %9055 = vmatprep.subr.mxu0 0.0
    %9056 = vmatpush1.msra.mxu0 0.0
    %9057 = vmatprep.subr.mxu0 0.0
    %9058 = vmatpush1.msra.mxu0 0.0
    %9059 = vmatprep.subr.mxu0 0.0
    %9060 = vmatpush1.msra.mxu0 0.0
    %9061 = vmatprep.subr.mxu0 0.0
    %9062 = vmatpush1.msra.mxu0 0.0
    %9063 = vmatprep.subr.mxu0 0.0
    %9064 = vmatpush1.msra.mxu0 0.0
    %9065 = vmatprep.subr.mxu0 0.0
    %9066 = vmatpush1.msra.mxu0 0.0
    %9067 = vmatprep.subr.mxu0 0.0
    %9068 = vmatpush1.msra.mxu0 0.0
    %9069 = vmatprep.subr.mxu0 0.0
    %9070 = vmatpush1.msra.mxu0 0.0
    %9071 = vmatprep.subr.mxu0 0.0
    %9072 = vmatpush1.msra.mxu0 0.0
    %9073 = vmatprep.subr.mxu0 0.0
    %9074 = vmatpush1.msra.mxu0 0.0
    %9075 = vmatprep.subr.mxu0 0.0
    %9076 = vmatpush1.msra.mxu0 0.0
    %9077 = vmatprep.subr.mxu0 0.0
    %9078 = vmatpush1.msra.mxu0 0.0
    %9079 = vmatprep.subr.mxu0 0.0
    %9080 = vmatpush1.msra.mxu0 0.0
    %9081 = vmatprep.subr.mxu0 0.0
    %9082 = vmatpush1.msra.mxu0 0.0
    %9083 = vmatprep.subr.mxu0 0.0
    %9084 = vmatpush1.msra.mxu0 0.0
    %9085 = vmatprep.subr.mxu0 0.0
    %9086 = vmatpush1.msra.mxu0 0.0
    %9087 = vmatprep.subr.mxu0 0.0
    %9088 = vmatpush1.msra.mxu0 0.0
    %9089 = vmatprep.subr.mxu0 0.0
    %9090 = vmatpush1.msra.mxu0 0.0
    %9091 = vmatprep.subr.mxu0 0.0
    %9092 = vmatpush1.msra.mxu0 0.0
    %9093 = vmatprep.subr.mxu0 0.0
    %9094 = vmatpush1.msra.mxu0 0.0
    %9095 = vmatprep.subr.mxu0 0.0
    %9096 = vmatpush1.msra.mxu0 0.0
    %9097 = vmatprep.subr.mxu0 0.0
    %9098 = vmatpush1.msra.mxu0 0.0
    %9099 = vmatprep.subr.mxu0 0.0
    %9100 = vmatpush1.msra.mxu0 0.0
    %9101 = vmatprep.subr.mxu0 0.0
    %9102 = vmatpush1.msra.mxu0 0.0
    %9103 = vmatprep.subr.mxu0 0.0
    %9104 = vmatpush1.msra.mxu0 0.0
    %9105 = vmatprep.subr.mxu0 0.0
    %9106 = vmatpush1.msra.mxu0 0.0
    %9107 = vmatprep.mubr.f32.mxu0 0.0
    %9108 = vmatmul.mubr.f32.gmra.mrb[0].mxu0 %v9032
    %v9109 = vpop.f32.mrb[0].mxu0
    %v9110 = vadd.f32 0.0, %v9109
    %v9111 = vpop.f32.mrb[0].mxu0
    %9112 = vmatprep.mubr.f32.mxu0 0.0
    %9113 = vmatmul.mubr.f32.gmra.mrb[0].mxu0 %v9035
    %v9114 = vpop.f32.mrb[0].mxu0
    %v9115 = vadd.f32 0.0, %v9114
    %v9116 = vpop.f32.mrb[0].mxu0
    %9117 = vmatprep.mubr.f32.mxu0 0.0
    %9118 = vmatmul.mubr.f32.gmra.mrb[0].mxu0 %v9038
    %v9119 = vpop.f32.mrb[0].mxu0
    %v9120 = vadd.f32 0.0, %v9119
    %v9121 = vpop.f32.mrb[0].mxu0
    %9122 = vmatprep.mubr.f32.mxu0 0.0
    %9123 = vmatmul.mubr.f32.gmra.mrb[0].mxu0 %v9041
    %v9124 = vpop.f32.mrb[0].mxu0
    %v9125 = vadd.f32 0.0, %v9124
    %v9126 = vpop.f32.mrb[0].mxu0
    %9127 = vdwg.mxu0
    %9132 = vrot.lane.b32.xlu0 %v9110, 32
    %v9133 = vpop.permute.xlu0 %9132
    %9134 = vrot.lane.b32.xlu0 %v9115, 32
    %v9135 = vpop.permute.xlu0 %9134
    %9136 = vrot.lane.b32.xlu0 %v9120, 32
    %v9137 = vpop.permute.xlu0 %9136
    %9138 = vrot.lane.b32.xlu0 %v9125, 32
    %v9139 = vpop.permute.xlu0 %9138
    %9144 = vst.msk [vmem:[#allocation2] sm:$0xff] %vm1489, %v9133
    %9145 = vst.msk [vmem:[#allocation2 + $0x8] sm:$0xff] %vm1489, %v9135
    %9146 = vst.msk [vmem:[#allocation2 + $0x10] sm:$0xff] %vm1489, %v9137
    %9147 = vst.msk [vmem:[#allocation2 + $0x18] sm:$0xff] %vm1489, %v9139
    %9148 = vrot.lane.b32.xlu0 %v8232, 64
    %v9149 = vpop.permute.xlu0 %9148
    %9150 = vrot.lane.b32.xlu0 %v8235, 64
    %v9151 = vpop.permute.xlu0 %9150
    %9152 = vrot.lane.b32.xlu0 %v8240, 64
    %v9153 = vpop.permute.xlu0 %9152
    %9154 = vrot.lane.b32.xlu0 %v8243, 64
    %v9155 = vpop.permute.xlu0 %9154
    %v9161 = vsel %vm590, %v8906, 0
    %v9164 = vsel %vm590, %v8907, 0
    %v9167 = vsel %vm590, %v8908, 0
    %v9170 = vsel %vm590, %v8909, 0
    %9172 = vmatprep.subr.mxu0 0.0
    %9173 = vmatpush1.msra.mxu0 %v9149
    %9174 = vmatprep.subr.mxu0 0.0
    %9175 = vmatpush1.msra.mxu0 %v9151
    %9176 = vmatprep.subr.mxu0 0.0
    %9177 = vmatpush1.msra.mxu0 %v9153
    %9178 = vmatprep.subr.mxu0 0.0
    %9179 = vmatpush1.msra.mxu0 %v9155
    %9180 = vmatprep.subr.mxu0 0.0
    %9181 = vmatpush1.msra.mxu0 0.0
    %9182 = vmatprep.subr.mxu0 0.0
    %9183 = vmatpush1.msra.mxu0 0.0
    %9184 = vmatprep.subr.mxu0 0.0
    %9185 = vmatpush1.msra.mxu0 0.0
    %9186 = vmatprep.subr.mxu0 0.0
    %9187 = vmatpush1.msra.mxu0 0.0
    %9188 = vmatprep.subr.mxu0 0.0
    %9189 = vmatpush1.msra.mxu0 0.0
    %9190 = vmatprep.subr.mxu0 0.0
    %9191 = vmatpush1.msra.mxu0 0.0
    %9192 = vmatprep.subr.mxu0 0.0
    %9193 = vmatpush1.msra.mxu0 0.0
    %9194 = vmatprep.subr.mxu0 0.0
    %9195 = vmatpush1.msra.mxu0 0.0
    %9196 = vmatprep.subr.mxu0 0.0
    %9197 = vmatpush1.msra.mxu0 0.0
    %9198 = vmatprep.subr.mxu0 0.0
    %9199 = vmatpush1.msra.mxu0 0.0
    %9200 = vmatprep.subr.mxu0 0.0
    %9201 = vmatpush1.msra.mxu0 0.0
    %9202 = vmatprep.subr.mxu0 0.0
    %9203 = vmatpush1.msra.mxu0 0.0
    %9204 = vmatprep.subr.mxu0 0.0
    %9205 = vmatpush1.msra.mxu0 0.0
    %9206 = vmatprep.subr.mxu0 0.0
    %9207 = vmatpush1.msra.mxu0 0.0
    %9208 = vmatprep.subr.mxu0 0.0
    %9209 = vmatpush1.msra.mxu0 0.0
    %9210 = vmatprep.subr.mxu0 0.0
    %9211 = vmatpush1.msra.mxu0 0.0
    %9212 = vmatprep.subr.mxu0 0.0
    %9213 = vmatpush1.msra.mxu0 0.0
    %9214 = vmatprep.subr.mxu0 0.0
    %9215 = vmatpush1.msra.mxu0 0.0
    %9216 = vmatprep.subr.mxu0 0.0
    %9217 = vmatpush1.msra.mxu0 0.0
    %9218 = vmatprep.subr.mxu0 0.0
    %9219 = vmatpush1.msra.mxu0 0.0
    %9220 = vmatprep.subr.mxu0 0.0
    %9221 = vmatpush1.msra.mxu0 0.0
    %9222 = vmatprep.subr.mxu0 0.0
    %9223 = vmatpush1.msra.mxu0 0.0
    %9224 = vmatprep.subr.mxu0 0.0
    %9225 = vmatpush1.msra.mxu0 0.0
    %9226 = vmatprep.subr.mxu0 0.0
    %9227 = vmatpush1.msra.mxu0 0.0
    %9228 = vmatprep.subr.mxu0 0.0
    %9229 = vmatpush1.msra.mxu0 0.0
    %9230 = vmatprep.subr.mxu0 0.0
    %9231 = vmatpush1.msra.mxu0 0.0
    %9232 = vmatprep.subr.mxu0 0.0
    %9233 = vmatpush1.msra.mxu0 0.0
    %9234 = vmatprep.subr.mxu0 0.0
    %9235 = vmatpush1.msra.mxu0 0.0
    %9236 = vmatprep.mubr.f32.mxu0 0.0
    %9237 = vmatmul.mubr.f32.gmra.mrb[0].mxu0 %v9161
    %v9238 = vpop.f32.mrb[0].mxu0
    %v9239 = vadd.f32 0.0, %v9238
    %v9240 = vpop.f32.mrb[0].mxu0
    %9241 = vmatprep.mubr.f32.mxu0 0.0
    %9242 = vmatmul.mubr.f32.gmra.mrb[0].mxu0 %v9164
    %v9243 = vpop.f32.mrb[0].mxu0
    %v9244 = vadd.f32 0.0, %v9243
    %v9245 = vpop.f32.mrb[0].mxu0
    %9246 = vmatprep.mubr.f32.mxu0 0.0
    %9247 = vmatmul.mubr.f32.gmra.mrb[0].mxu0 %v9167
    %v9248 = vpop.f32.mrb[0].mxu0
    %v9249 = vadd.f32 0.0, %v9248
    %v9250 = vpop.f32.mrb[0].mxu0
    %9251 = vmatprep.mubr.f32.mxu0 0.0
    %9252 = vmatmul.mubr.f32.gmra.mrb[0].mxu0 %v9170
    %v9253 = vpop.f32.mrb[0].mxu0
    %v9254 = vadd.f32 0.0, %v9253
    %v9255 = vpop.f32.mrb[0].mxu0
    %9256 = vdwg.mxu0
    %9261 = vrot.lane.b32.xlu0 %v9239, 64
    %v9262 = vpop.permute.xlu0 %9261
    %9263 = vrot.lane.b32.xlu0 %v9244, 64
    %v9264 = vpop.permute.xlu0 %9263
    %9265 = vrot.lane.b32.xlu0 %v9249, 64
    %v9266 = vpop.permute.xlu0 %9265
    %9267 = vrot.lane.b32.xlu0 %v9254, 64
    %v9268 = vpop.permute.xlu0 %9267
    %9273 = vst.msk [vmem:[#allocation2] sm:$0xff] %vm1619, %v9262
    %9274 = vst.msk [vmem:[#allocation2 + $0x8] sm:$0xff] %vm1619, %v9264
    %9275 = vst.msk [vmem:[#allocation2 + $0x10] sm:$0xff] %vm1619, %v9266
    %9276 = vst.msk [vmem:[#allocation2 + $0x18] sm:$0xff] %vm1619, %v9268
    %9277 = vrot.lane.b32.xlu0 %v8232, 32
    %v9278 = vpop.permute.xlu0 %9277
    %9279 = vrot.lane.b32.xlu0 %v8235, 32
    %v9280 = vpop.permute.xlu0 %9279
    %9281 = vrot.lane.b32.xlu0 %v8240, 32
    %v9282 = vpop.permute.xlu0 %9281
    %9283 = vrot.lane.b32.xlu0 %v8243, 32
    %v9284 = vpop.permute.xlu0 %9283
    %v9290 = vsel %vm590, %v8910, 0
    %v9293 = vsel %vm590, %v8911, 0
    %v9296 = vsel %vm590, %v8912, 0
    %v9299 = vsel %vm590, %v8913, 0
    %9301 = vmatprep.subr.mxu0 0.0
    %9302 = vmatpush1.msra.mxu0 %v9278
    %9303 = vmatprep.subr.mxu0 0.0
    %9304 = vmatpush1.msra.mxu0 %v9280
    %9305 = vmatprep.subr.mxu0 0.0
    %9306 = vmatpush1.msra.mxu0 %v9282
    %9307 = vmatprep.subr.mxu0 0.0
    %9308 = vmatpush1.msra.mxu0 %v9284
    %9309 = vmatprep.subr.mxu0 0.0
    %9310 = vmatpush1.msra.mxu0 0.0
    %9311 = vmatprep.subr.mxu0 0.0
    %9312 = vmatpush1.msra.mxu0 0.0
    %9313 = vmatprep.subr.mxu0 0.0
    %9314 = vmatpush1.msra.mxu0 0.0
    %9315 = vmatprep.subr.mxu0 0.0
    %9316 = vmatpush1.msra.mxu0 0.0
    %9317 = vmatprep.subr.mxu0 0.0
    %9318 = vmatpush1.msra.mxu0 0.0
    %9319 = vmatprep.subr.mxu0 0.0
    %9320 = vmatpush1.msra.mxu0 0.0
    %9321 = vmatprep.subr.mxu0 0.0
    %9322 = vmatpush1.msra.mxu0 0.0
    %9323 = vmatprep.subr.mxu0 0.0
    %9324 = vmatpush1.msra.mxu0 0.0
    %9325 = vmatprep.subr.mxu0 0.0
    %9326 = vmatpush1.msra.mxu0 0.0
    %9327 = vmatprep.subr.mxu0 0.0
    %9328 = vmatpush1.msra.mxu0 0.0
    %9329 = vmatprep.subr.mxu0 0.0
    %9330 = vmatpush1.msra.mxu0 0.0
    %9331 = vmatprep.subr.mxu0 0.0
    %9332 = vmatpush1.msra.mxu0 0.0
    %9333 = vmatprep.subr.mxu0 0.0
    %9334 = vmatpush1.msra.mxu0 0.0
    %9335 = vmatprep.subr.mxu0 0.0
    %9336 = vmatpush1.msra.mxu0 0.0
    %9337 = vmatprep.subr.mxu0 0.0
    %9338 = vmatpush1.msra.mxu0 0.0
    %9339 = vmatprep.subr.mxu0 0.0
    %9340 = vmatpush1.msra.mxu0 0.0
    %9341 = vmatprep.subr.mxu0 0.0
    %9342 = vmatpush1.msra.mxu0 0.0
    %9343 = vmatprep.subr.mxu0 0.0
    %9344 = vmatpush1.msra.mxu0 0.0
    %9345 = vmatprep.subr.mxu0 0.0
    %9346 = vmatpush1.msra.mxu0 0.0
    %9347 = vmatprep.subr.mxu0 0.0
    %9348 = vmatpush1.msra.mxu0 0.0
    %9349 = vmatprep.subr.mxu0 0.0
    %9350 = vmatpush1.msra.mxu0 0.0
    %9351 = vmatprep.subr.mxu0 0.0
    %9352 = vmatpush1.msra.mxu0 0.0
    %9353 = vmatprep.subr.mxu0 0.0
    %9354 = vmatpush1.msra.mxu0 0.0
    %9355 = vmatprep.subr.mxu0 0.0
    %9356 = vmatpush1.msra.mxu0 0.0
    %9357 = vmatprep.subr.mxu0 0.0
    %9358 = vmatpush1.msra.mxu0 0.0
    %9359 = vmatprep.subr.mxu0 0.0
    %9360 = vmatpush1.msra.mxu0 0.0
    %9361 = vmatprep.subr.mxu0 0.0
    %9362 = vmatpush1.msra.mxu0 0.0
    %9363 = vmatprep.subr.mxu0 0.0
    %9364 = vmatpush1.msra.mxu0 0.0
    %9365 = vmatprep.mubr.f32.mxu0 0.0
    %9366 = vmatmul.mubr.f32.gmra.mrb[0].mxu0 %v9290
    %v9367 = vpop.f32.mrb[0].mxu0
    %v9368 = vadd.f32 0.0, %v9367
    %v9369 = vpop.f32.mrb[0].mxu0
    %9370 = vmatprep.mubr.f32.mxu0 0.0
    %9371 = vmatmul.mubr.f32.gmra.mrb[0].mxu0 %v9293
    %v9372 = vpop.f32.mrb[0].mxu0
    %v9373 = vadd.f32 0.0, %v9372
    %v9374 = vpop.f32.mrb[0].mxu0
    %9375 = vmatprep.mubr.f32.mxu0 0.0
    %9376 = vmatmul.mubr.f32.gmra.mrb[0].mxu0 %v9296
    %v9377 = vpop.f32.mrb[0].mxu0
    %v9378 = vadd.f32 0.0, %v9377
    %v9379 = vpop.f32.mrb[0].mxu0
    %9380 = vmatprep.mubr.f32.mxu0 0.0
    %9381 = vmatmul.mubr.f32.gmra.mrb[0].mxu0 %v9299
    %v9382 = vpop.f32.mrb[0].mxu0
    %v9383 = vadd.f32 0.0, %v9382
    %v9384 = vpop.f32.mrb[0].mxu0
    %9385 = vdwg.mxu0
    %9390 = vrot.lane.b32.xlu0 %v9368, 96
    %v9391 = vpop.permute.xlu0 %9390
    %9392 = vrot.lane.b32.xlu0 %v9373, 96
    %v9393 = vpop.permute.xlu0 %9392
    %9394 = vrot.lane.b32.xlu0 %v9378, 96
    %v9395 = vpop.permute.xlu0 %9394
    %9396 = vrot.lane.b32.xlu0 %v9383, 96
    %v9397 = vpop.permute.xlu0 %9396
    %9402 = vst.msk [vmem:[#allocation2] sm:$0xff] %vm1749, %v9391
    %9403 = vst.msk [vmem:[#allocation2 + $0x8] sm:$0xff] %vm1749, %v9393
    %9404 = vst.msk [vmem:[#allocation2 + $0x10] sm:$0xff] %vm1749, %v9395
    %9405 = vst.msk [vmem:[#allocation2 + $0x18] sm:$0xff] %vm1749, %v9397
    %v9406 = vld [vmem:[#allocation2] sm:$0xff]
    %v9407 = vld [vmem:[#allocation2 + $0x8] sm:$0xff]
    %v9408 = vld [vmem:[#allocation2 + $0x10] sm:$0xff]
    %v9409 = vld [vmem:[#allocation2 + $0x18] sm:$0xff]
    %v9410 = vpack.c.bf16 %v9407, %v9406
    %v9411 = vpack.c.bf16 %v9409, %v9408
    %s9412 = scalar_lea.vmem [#allocation8], 192
    %v9413 = vld [vmem:[%s9412] sm:$0xf]
    %v9414 = vld [vmem:[%s9412 + $0x4] sm:$0xf]
    %v9415 = vld [vmem:[%s9412 + $0x8] sm:$0xf]
    %v9416 = vld [vmem:[%s9412 + $0xc] sm:$0xf]
    %v9417 = vld [vmem:[%s9412 + $0x10] sm:$0xf]
    %v9418 = vld [vmem:[%s9412 + $0x14] sm:$0xf]
    %v9419 = vld [vmem:[%s9412 + $0x18] sm:$0xf]
    %v9420 = vld [vmem:[%s9412 + $0x1c] sm:$0xf]
    %v9421 = vld [vmem:[%s9412 + $0x20] sm:$0xf]
    %v9422 = vld [vmem:[%s9412 + $0x24] sm:$0xf]
    %v9423 = vld [vmem:[%s9412 + $0x28] sm:$0xf]
    %v9424 = vld [vmem:[%s9412 + $0x2c] sm:$0xf]
    %v9425 = vld [vmem:[%s9412 + $0x30] sm:$0xf]
    %v9426 = vld [vmem:[%s9412 + $0x34] sm:$0xf]
    %v9427 = vld [vmem:[%s9412 + $0x38] sm:$0xf]
    %v9428 = vld [vmem:[%s9412 + $0x3c] sm:$0xf]
    %s9429 = scalar_lea.vmem %s7, 3
    %v9430 = vld [vmem:[%s9429] sm:$0x1]
    %v9432 = vlaneseq
    %v9433 = vshrl.u32 %v9432, 7
    %v9434 = vsub.s32 0, %v9433
    %v9435 = vrot.slane %v9430, %v9434
    %v9453 = vunpack.c.l.b16 %v9413
    %v9454 = vunpack.c.l.b16 %v9414
    %v9455 = vunpack.c.l.b16 %v9415
    %v9456 = vunpack.c.l.b16 %v9416
    %v9457 = vunpack.c.l.b16 %v9417
    %v9458 = vunpack.c.l.b16 %v9418
    %v9459 = vunpack.c.l.b16 %v9419
    %v9460 = vunpack.c.l.b16 %v9420
    %v9461 = vunpack.c.l.b16 %v9421
    %v9462 = vunpack.c.l.b16 %v9422
    %v9463 = vunpack.c.l.b16 %v9423
    %v9464 = vunpack.c.l.b16 %v9424
    %v9465 = vunpack.c.l.b16 %v9425
    %v9466 = vunpack.c.l.b16 %v9426
    %v9467 = vunpack.c.l.b16 %v9427
    %v9468 = vunpack.c.l.b16 %v9428
    %v9469 = vpack.c.b16 %v9454, %v9453
    %v9470 = vpack.c.b16 %v9456, %v9455
    %v9471 = vpack.c.b16 %v9458, %v9457
    %v9472 = vpack.c.b16 %v9460, %v9459
    %v9473 = vpack.c.b16 %v9462, %v9461
    %v9474 = vpack.c.b16 %v9464, %v9463
    %v9475 = vpack.c.b16 %v9466, %v9465
    %v9476 = vpack.c.b16 %v9468, %v9467
    %9485 = vmatprep.subr.bf16.mxu0 0
    %9486 = vmatpush1.bf16.msra.mxu0 %v9469
    %9487 = vmatprep.subr.bf16.mxu0 0
    %9488 = vmatpush1.bf16.msra.mxu0 %v9470
    %9489 = vmatprep.subr.bf16.mxu0 0
    %9490 = vmatpush1.bf16.msra.mxu0 %v9471
    %9491 = vmatprep.subr.bf16.mxu0 0
    %9492 = vmatpush1.bf16.msra.mxu0 %v9472
    %9493 = vmatprep.subr.bf16.mxu0 0
    %9494 = vmatpush1.bf16.msra.mxu0 %v9473
    %9495 = vmatprep.subr.bf16.mxu0 0
    %9496 = vmatpush1.bf16.msra.mxu0 %v9474
    %9497 = vmatprep.subr.bf16.mxu0 0
    %9498 = vmatpush1.bf16.msra.mxu0 %v9475
    %9499 = vmatprep.subr.bf16.mxu0 0
    %9500 = vmatpush1.bf16.msra.mxu0 %v9476
    %9501 = vmatprep.subr.bf16.mxu0 0
    %9502 = vmatpush1.bf16.msra.mxu0 0
    %9503 = vmatprep.subr.bf16.mxu0 0
    %9504 = vmatpush1.bf16.msra.mxu0 0
    %9505 = vmatprep.subr.bf16.mxu0 0
    %9506 = vmatpush1.bf16.msra.mxu0 0
    %9507 = vmatprep.subr.bf16.mxu0 0
    %9508 = vmatpush1.bf16.msra.mxu0 0
    %9509 = vmatprep.subr.bf16.mxu0 0
    %9510 = vmatpush1.bf16.msra.mxu0 0
    %9511 = vmatprep.subr.bf16.mxu0 0
    %9512 = vmatpush1.bf16.msra.mxu0 0
    %9513 = vmatprep.subr.bf16.mxu0 0
    %9514 = vmatpush1.bf16.msra.mxu0 0
    %9515 = vmatprep.subr.bf16.mxu0 0
    %9516 = vmatpush1.bf16.msra.mxu0 0
    %9517 = vmatprep.mubr.bf16.mxu0 0
    %9518 = vmatmul.mubr.bf16.gmra.mrb[0].mxu0 %v9410
    %v9519 = vpop.f32.mrb[0].mxu0
    %v9520 = vadd.f32 %v9435, %v9519
    %v9521 = vpop.f32.mrb[0].mxu0
    %v9522 = vpop.f32.mrb[0].mxu0
    %v9523 = vadd.f32 %v9435, %v9522
    %v9524 = vpop.f32.mrb[0].mxu0
    %9525 = vmatprep.mubr.bf16.mxu0 0
    %9526 = vmatmul.mubr.bf16.gmra.mrb[0].mxu0 %v9411
    %v9527 = vpop.f32.mrb[0].mxu0
    %v9528 = vadd.f32 %v9435, %v9527
    %v9529 = vpop.f32.mrb[0].mxu0
    %v9530 = vpop.f32.mrb[0].mxu0
    %v9531 = vadd.f32 %v9435, %v9530
    %v9532 = vpop.f32.mrb[0].mxu0
    %9533 = vdwg.mxu0
    %v9534 = vadd.f32 %v9520, %v7959
    %v9535 = vadd.f32 %v9523, %v7960
    %v9536 = vadd.f32 %v9528, %v7961
    %v9537 = vadd.f32 %v9531, %v7962
    %s9538 = scalar_lea.vmem [#allocation9], 3
    %v9539 = vld [vmem:[%s9538] sm:$0x1]
    %s9540 = scalar_lea.vmem [#allocation11], 3
    %v9541 = vld [vmem:[%s9540] sm:$0x1]
    %9542 = vadd.xlane.f32.xlu0 %v9534
    %v9543 = vpop.xlane.xlu0 %9542
    %9544 = vadd.xlane.f32.xlu0 %v9535
    %v9545 = vpop.xlane.xlu0 %9544
    %9546 = vadd.xlane.f32.xlu0 %v9536
    %v9547 = vpop.xlane.xlu0 %9546
    %9548 = vadd.xlane.f32.xlu0 %v9537
    %v9549 = vpop.xlane.xlu0 %9548
    %v9550 = vmul.f32 %v9543, %v236
    %v9551 = vmul.f32 %v9545, %v236
    %v9552 = vmul.f32 %v9547, %v236
    %v9553 = vmul.f32 %v9549, %v236
    %v9554 = vsub.f32 %v9534, %v9550
    %v9555 = vsub.f32 %v9535, %v9551
    %v9556 = vsub.f32 %v9536, %v9552
    %v9557 = vsub.f32 %v9537, %v9553
    %v9558 = vmul.f32 %v9554, %v9554
    %v9559 = vmul.f32 %v9555, %v9555
    %v9560 = vmul.f32 %v9556, %v9556
    %v9561 = vmul.f32 %v9557, %v9557
    %9562 = vadd.xlane.f32.xlu0 %v9558
    %v9563 = vpop.xlane.xlu0 %9562
    %9564 = vadd.xlane.f32.xlu0 %v9559
    %v9565 = vpop.xlane.xlu0 %9564
    %9566 = vadd.xlane.f32.xlu0 %v9560
    %v9567 = vpop.xlane.xlu0 %9566
    %9568 = vadd.xlane.f32.xlu0 %v9561
    %v9569 = vpop.xlane.xlu0 %9568
    %v9570 = vmul.f32 %v9563, %v236
    %v9571 = vmul.f32 %v9565, %v236
    %v9572 = vmul.f32 %v9567, %v236
    %v9573 = vmul.f32 %v9569, %v236
    %v9574 = vadd.f32 %v9570, 1e-12
    %v9575 = vadd.f32 %v9571, 1e-12
    %v9576 = vadd.f32 %v9572, 1e-12
    %v9577 = vadd.f32 %v9573, 1e-12
    %v9578 = vrsqrt.pop %v9574
    %v9579 = vrsqrt.pop %v9575
    %v9580 = vrsqrt.pop %v9576
    %v9581 = vrsqrt.pop %v9577
    %v9582 = vmul.f32 %v9554, %v9578
    %v9583 = vmul.f32 %v9555, %v9579
    %v9584 = vmul.f32 %v9556, %v9580
    %v9585 = vmul.f32 %v9557, %v9581
    %v9587 = vlaneseq
    %v9588 = vshrl.u32 %v9587, 7
    %v9589 = vsub.s32 0, %v9588
    %v9590 = vrot.slane %v9539, %v9589
    %v9592 = vmul.f32 %v9582, %v9590
    %v9593 = vmul.f32 %v9583, %v9590
    %v9594 = vmul.f32 %v9584, %v9590
    %v9595 = vmul.f32 %v9585, %v9590
    %v9597 = vlaneseq
    %v9598 = vshrl.u32 %v9597, 7
    %v9599 = vsub.s32 0, %v9598
    %v9600 = vrot.slane %v9541, %v9599
    %v9602 = vadd.f32 %v9592, %v9600
    %v9603 = vadd.f32 %v9593, %v9600
    %v9604 = vadd.f32 %v9594, %v9600
    %v9605 = vadd.f32 %v9595, %v9600
    %v9606 = vpack.c.bf16 %v9603, %v9602
    %v9607 = vpack.c.bf16 %v9605, %v9604
    %s9608 = scalar_lea.vmem [#allocation12], 768
    %v9609 = vld [vmem:[%s9608] sm:$0xff]
    %v9610 = vld [vmem:[%s9608 + $0x8] sm:$0xff]
    %v9611 = vld [vmem:[%s9608 + $0x10] sm:$0xff]
    %v9612 = vld [vmem:[%s9608 + $0x18] sm:$0xff]
    %v9613 = vld [vmem:[%s9608 + $0x20] sm:$0xff]
    %v9614 = vld [vmem:[%s9608 + $0x28] sm:$0xff]
    %v9615 = vld [vmem:[%s9608 + $0x30] sm:$0xff]
    %v9616 = vld [vmem:[%s9608 + $0x38] sm:$0xff]
    %v9617 = vld [vmem:[%s9608 + $0x40] sm:$0xff]
    %v9618 = vld [vmem:[%s9608 + $0x48] sm:$0xff]
    %v9619 = vld [vmem:[%s9608 + $0x50] sm:$0xff]
    %v9620 = vld [vmem:[%s9608 + $0x58] sm:$0xff]
    %v9621 = vld [vmem:[%s9608 + $0x60] sm:$0xff]
    %v9622 = vld [vmem:[%s9608 + $0x68] sm:$0xff]
    %v9623 = vld [vmem:[%s9608 + $0x70] sm:$0xff]
    %v9624 = vld [vmem:[%s9608 + $0x78] sm:$0xff]
    %v9625 = vld [vmem:[%s9608 + $0x80] sm:$0xff]
    %v9626 = vld [vmem:[%s9608 + $0x88] sm:$0xff]
    %v9627 = vld [vmem:[%s9608 + $0x90] sm:$0xff]
    %v9628 = vld [vmem:[%s9608 + $0x98] sm:$0xff]
    %v9629 = vld [vmem:[%s9608 + $0xa0] sm:$0xff]
    %v9630 = vld [vmem:[%s9608 + $0xa8] sm:$0xff]
    %v9631 = vld [vmem:[%s9608 + $0xb0] sm:$0xff]
    %v9632 = vld [vmem:[%s9608 + $0xb8] sm:$0xff]
    %v9633 = vld [vmem:[%s9608 + $0xc0] sm:$0xff]
    %v9634 = vld [vmem:[%s9608 + $0xc8] sm:$0xff]
    %v9635 = vld [vmem:[%s9608 + $0xd0] sm:$0xff]
    %v9636 = vld [vmem:[%s9608 + $0xd8] sm:$0xff]
    %v9637 = vld [vmem:[%s9608 + $0xe0] sm:$0xff]
    %v9638 = vld [vmem:[%s9608 + $0xe8] sm:$0xff]
    %v9639 = vld [vmem:[%s9608 + $0xf0] sm:$0xff]
    %v9640 = vld [vmem:[%s9608 + $0xf8] sm:$0xff]
    %s9641 = scalar_lea.vmem %s11, 12
    %v9642 = vld [vmem:[%s9641] sm:$0xf]
    %v9644 = vlaneseq
    %v9645 = vshrl.u32 %v9644, 7
    %v9646 = vsub.s32 0, %v9645
    %v9647 = vrot.slane %v9642, %v9646
    %v9648 = vlaneseq
    %v9649 = vshrl.u32 %v9648, 7
    %v9650 = vsub.s32 1, %v9649
    %v9651 = vrot.slane %v9642, %v9650
    %v9652 = vlaneseq
    %v9653 = vshrl.u32 %v9652, 7
    %v9654 = vsub.s32 2, %v9653
    %v9655 = vrot.slane %v9642, %v9654
    %v9656 = vlaneseq
    %v9657 = vshrl.u32 %v9656, 7
    %v9658 = vsub.s32 3, %v9657
    %v9659 = vrot.slane %v9642, %v9658
    %v9696 = vunpack.c.l.b16 %v9609
    %v9697 = vunpack.c.h.b16 %v9609
    %v9698 = vunpack.c.l.b16 %v9610
    %v9699 = vunpack.c.h.b16 %v9610
    %v9700 = vunpack.c.l.b16 %v9611
    %v9701 = vunpack.c.h.b16 %v9611
    %v9702 = vunpack.c.l.b16 %v9612
    %v9703 = vunpack.c.h.b16 %v9612
    %v9704 = vunpack.c.l.b16 %v9613
    %v9705 = vunpack.c.h.b16 %v9613
    %v9706 = vunpack.c.l.b16 %v9614
    %v9707 = vunpack.c.h.b16 %v9614
    %v9708 = vunpack.c.l.b16 %v9615
    %v9709 = vunpack.c.h.b16 %v9615
    %v9710 = vunpack.c.l.b16 %v9616
    %v9711 = vunpack.c.h.b16 %v9616
    %v9712 = vunpack.c.l.b16 %v9617
    %v9713 = vunpack.c.h.b16 %v9617
    %v9714 = vunpack.c.l.b16 %v9618
    %v9715 = vunpack.c.h.b16 %v9618
    %v9716 = vunpack.c.l.b16 %v9619
    %v9717 = vunpack.c.h.b16 %v9619
    %v9718 = vunpack.c.l.b16 %v9620
    %v9719 = vunpack.c.h.b16 %v9620
    %v9720 = vunpack.c.l.b16 %v9621
    %v9721 = vunpack.c.h.b16 %v9621
    %v9722 = vunpack.c.l.b16 %v9622
    %v9723 = vunpack.c.h.b16 %v9622
    %v9724 = vunpack.c.l.b16 %v9623
    %v9725 = vunpack.c.h.b16 %v9623
    %v9726 = vunpack.c.l.b16 %v9624
    %v9727 = vunpack.c.h.b16 %v9624
    %v9728 = vunpack.c.l.b16 %v9625
    %v9729 = vunpack.c.h.b16 %v9625
    %v9730 = vunpack.c.l.b16 %v9626
    %v9731 = vunpack.c.h.b16 %v9626
    %v9732 = vunpack.c.l.b16 %v9627
    %v9733 = vunpack.c.h.b16 %v9627
    %v9734 = vunpack.c.l.b16 %v9628
    %v9735 = vunpack.c.h.b16 %v9628
    %v9736 = vunpack.c.l.b16 %v9629
    %v9737 = vunpack.c.h.b16 %v9629
    %v9738 = vunpack.c.l.b16 %v9630
    %v9739 = vunpack.c.h.b16 %v9630
    %v9740 = vunpack.c.l.b16 %v9631
    %v9741 = vunpack.c.h.b16 %v9631
    %v9742 = vunpack.c.l.b16 %v9632
    %v9743 = vunpack.c.h.b16 %v9632
    %v9744 = vunpack.c.l.b16 %v9633
    %v9745 = vunpack.c.h.b16 %v9633
    %v9746 = vunpack.c.l.b16 %v9634
    %v9747 = vunpack.c.h.b16 %v9634
    %v9748 = vunpack.c.l.b16 %v9635
    %v9749 = vunpack.c.h.b16 %v9635
    %v9750 = vunpack.c.l.b16 %v9636
    %v9751 = vunpack.c.h.b16 %v9636
    %v9752 = vunpack.c.l.b16 %v9637
    %v9753 = vunpack.c.h.b16 %v9637
    %v9754 = vunpack.c.l.b16 %v9638
    %v9755 = vunpack.c.h.b16 %v9638
    %v9756 = vunpack.c.l.b16 %v9639
    %v9757 = vunpack.c.h.b16 %v9639
    %v9758 = vunpack.c.l.b16 %v9640
    %v9759 = vunpack.c.h.b16 %v9640
    %v9760 = vpack.c.b16 %v9700, %v9696
    %v9761 = vpack.c.b16 %v9701, %v9697
    %v9762 = vpack.c.b16 %v9702, %v9698
    %v9763 = vpack.c.b16 %v9703, %v9699
    %v9764 = vpack.c.b16 %v9708, %v9704
    %v9765 = vpack.c.b16 %v9709, %v9705
    %v9766 = vpack.c.b16 %v9710, %v9706
    %v9767 = vpack.c.b16 %v9711, %v9707
    %v9768 = vpack.c.b16 %v9716, %v9712
    %v9769 = vpack.c.b16 %v9717, %v9713
    %v9770 = vpack.c.b16 %v9718, %v9714
    %v9771 = vpack.c.b16 %v9719, %v9715
    %v9772 = vpack.c.b16 %v9724, %v9720
    %v9773 = vpack.c.b16 %v9725, %v9721
    %v9774 = vpack.c.b16 %v9726, %v9722
    %v9775 = vpack.c.b16 %v9727, %v9723
    %v9776 = vpack.c.b16 %v9732, %v9728
    %v9777 = vpack.c.b16 %v9733, %v9729
    %v9778 = vpack.c.b16 %v9734, %v9730
    %v9779 = vpack.c.b16 %v9735, %v9731
    %v9780 = vpack.c.b16 %v9740, %v9736
    %v9781 = vpack.c.b16 %v9741, %v9737
    %v9782 = vpack.c.b16 %v9742, %v9738
    %v9783 = vpack.c.b16 %v9743, %v9739
    %v9784 = vpack.c.b16 %v9748, %v9744
    %v9785 = vpack.c.b16 %v9749, %v9745
    %v9786 = vpack.c.b16 %v9750, %v9746
    %v9787 = vpack.c.b16 %v9751, %v9747
    %v9788 = vpack.c.b16 %v9756, %v9752
    %v9789 = vpack.c.b16 %v9757, %v9753
    %v9790 = vpack.c.b16 %v9758, %v9754
    %v9791 = vpack.c.b16 %v9759, %v9755
    %9824 = vmatprep.subr.bf16.mxu0 %v9761
    %9825 = vmatpush1.bf16.msra.mxu0 %v9760
    %9826 = vmatprep.subr.bf16.mxu0 %v9765
    %9827 = vmatpush1.bf16.msra.mxu0 %v9764
    %9828 = vmatprep.subr.bf16.mxu0 %v9769
    %9829 = vmatpush1.bf16.msra.mxu0 %v9768
    %9830 = vmatprep.subr.bf16.mxu0 %v9773
    %9831 = vmatpush1.bf16.msra.mxu0 %v9772
    %9832 = vmatprep.subr.bf16.mxu0 %v9777
    %9833 = vmatpush1.bf16.msra.mxu0 %v9776
    %9834 = vmatprep.subr.bf16.mxu0 %v9781
    %9835 = vmatpush1.bf16.msra.mxu0 %v9780
    %9836 = vmatprep.subr.bf16.mxu0 %v9785
    %9837 = vmatpush1.bf16.msra.mxu0 %v9784
    %9838 = vmatprep.subr.bf16.mxu0 %v9789
    %9839 = vmatpush1.bf16.msra.mxu0 %v9788
    %9840 = vmatprep.subr.bf16.mxu0 0
    %9841 = vmatpush1.bf16.msra.mxu0 0
    %9842 = vmatprep.subr.bf16.mxu0 0
    %9843 = vmatpush1.bf16.msra.mxu0 0
    %9844 = vmatprep.subr.bf16.mxu0 0
    %9845 = vmatpush1.bf16.msra.mxu0 0
    %9846 = vmatprep.subr.bf16.mxu0 0
    %9847 = vmatpush1.bf16.msra.mxu0 0
    %9848 = vmatprep.subr.bf16.mxu0 0
    %9849 = vmatpush1.bf16.msra.mxu0 0
    %9850 = vmatprep.subr.bf16.mxu0 0
    %9851 = vmatpush1.bf16.msra.mxu0 0
    %9852 = vmatprep.subr.bf16.mxu0 0
    %9853 = vmatpush1.bf16.msra.mxu0 0
    %9854 = vmatprep.subr.bf16.mxu0 0
    %9855 = vmatpush1.bf16.msra.mxu0 0
    %9856 = vmatprep.mubr.bf16.mxu0 0
    %9857 = vmatmul.mubr.bf16.gmra.mrb[0].mxu0 %v9606
    %v9858 = vpop.f32.mrb[0].mxu0
    %v9859 = vadd.f32 %v9647, %v9858
    %v9860 = vpop.f32.mrb[0].mxu0
    %v9861 = vadd.f32 %v9651, %v9860
    %v9862 = vpop.f32.mrb[0].mxu0
    %v9863 = vadd.f32 %v9647, %v9862
    %v9864 = vpop.f32.mrb[0].mxu0
    %v9865 = vadd.f32 %v9651, %v9864
    %9866 = vmatprep.mubr.bf16.mxu0 0
    %9867 = vmatmul.mubr.bf16.gmra.mrb[0].mxu0 %v9607
    %v9868 = vpop.f32.mrb[0].mxu0
    %v9869 = vadd.f32 %v9647, %v9868
    %v9870 = vpop.f32.mrb[0].mxu0
    %v9871 = vadd.f32 %v9651, %v9870
    %v9872 = vpop.f32.mrb[0].mxu0
    %v9873 = vadd.f32 %v9647, %v9872
    %v9874 = vpop.f32.mrb[0].mxu0
    %v9875 = vadd.f32 %v9651, %v9874
    %9876 = vdwg.mxu0
    %9877 = vmatprep.subr.bf16.mxu0 %v9763
    %9878 = vmatpush1.bf16.msra.mxu0 %v9762
    %9879 = vmatprep.subr.bf16.mxu0 %v9767
    %9880 = vmatpush1.bf16.msra.mxu0 %v9766
    %9881 = vmatprep.subr.bf16.mxu0 %v9771
    %9882 = vmatpush1.bf16.msra.mxu0 %v9770
    %9883 = vmatprep.subr.bf16.mxu0 %v9775
    %9884 = vmatpush1.bf16.msra.mxu0 %v9774
    %9885 = vmatprep.subr.bf16.mxu0 %v9779
    %9886 = vmatpush1.bf16.msra.mxu0 %v9778
    %9887 = vmatprep.subr.bf16.mxu0 %v9783
    %9888 = vmatpush1.bf16.msra.mxu0 %v9782
    %9889 = vmatprep.subr.bf16.mxu0 %v9787
    %9890 = vmatpush1.bf16.msra.mxu0 %v9786
    %9891 = vmatprep.subr.bf16.mxu0 %v9791
    %9892 = vmatpush1.bf16.msra.mxu0 %v9790
    %9893 = vmatprep.subr.bf16.mxu0 0
    %9894 = vmatpush1.bf16.msra.mxu0 0
    %9895 = vmatprep.subr.bf16.mxu0 0
    %9896 = vmatpush1.bf16.msra.mxu0 0
    %9897 = vmatprep.subr.bf16.mxu0 0
    %9898 = vmatpush1.bf16.msra.mxu0 0
    %9899 = vmatprep.subr.bf16.mxu0 0
    %9900 = vmatpush1.bf16.msra.mxu0 0
    %9901 = vmatprep.subr.bf16.mxu0 0
    %9902 = vmatpush1.bf16.msra.mxu0 0
    %9903 = vmatprep.subr.bf16.mxu0 0
    %9904 = vmatpush1.bf16.msra.mxu0 0
    %9905 = vmatprep.subr.bf16.mxu0 0
    %9906 = vmatpush1.bf16.msra.mxu0 0
    %9907 = vmatprep.subr.bf16.mxu0 0
    %9908 = vmatpush1.bf16.msra.mxu0 0
    %9909 = vmatprep.mubr.bf16.mxu0 0
    %9910 = vmatmul.mubr.bf16.gmra.mrb[0].mxu0 %v9606
    %v9911 = vpop.f32.mrb[0].mxu0
    %v9912 = vadd.f32 %v9655, %v9911
    %v9913 = vpop.f32.mrb[0].mxu0
    %v9914 = vadd.f32 %v9659, %v9913
    %v9915 = vpop.f32.mrb[0].mxu0
    %v9916 = vadd.f32 %v9655, %v9915
    %v9917 = vpop.f32.mrb[0].mxu0
    %v9918 = vadd.f32 %v9659, %v9917
    %9919 = vmatprep.mubr.bf16.mxu0 0
    %9920 = vmatmul.mubr.bf16.gmra.mrb[0].mxu0 %v9607
    %v9921 = vpop.f32.mrb[0].mxu0
    %v9922 = vadd.f32 %v9655, %v9921
    %v9923 = vpop.f32.mrb[0].mxu0
    %v9924 = vadd.f32 %v9659, %v9923
    %v9925 = vpop.f32.mrb[0].mxu0
    %v9926 = vadd.f32 %v9655, %v9925
    %v9927 = vpop.f32.mrb[0].mxu0
    %v9928 = vadd.f32 %v9659, %v9927
    %9929 = vdwg.mxu0
    %v9930 = vmul.f32 %v9859, %v9859
    %v9931 = vmul.f32 %v9861, %v9861
    %v9932 = vmul.f32 %v9912, %v9912
    %v9933 = vmul.f32 %v9914, %v9914
    %v9934 = vmul.f32 %v9863, %v9863
    %v9935 = vmul.f32 %v9865, %v9865
    %v9936 = vmul.f32 %v9916, %v9916
    %v9937 = vmul.f32 %v9918, %v9918
    %v9938 = vmul.f32 %v9869, %v9869
    %v9939 = vmul.f32 %v9871, %v9871
    %v9940 = vmul.f32 %v9922, %v9922
    %v9941 = vmul.f32 %v9924, %v9924
    %v9942 = vmul.f32 %v9873, %v9873
    %v9943 = vmul.f32 %v9875, %v9875
    %v9944 = vmul.f32 %v9926, %v9926
    %v9945 = vmul.f32 %v9928, %v9928
    %v9946 = vmul.f32 %v9859, %v9930
    %v9947 = vmul.f32 %v9861, %v9931
    %v9948 = vmul.f32 %v9912, %v9932
    %v9949 = vmul.f32 %v9914, %v9933
    %v9950 = vmul.f32 %v9863, %v9934
    %v9951 = vmul.f32 %v9865, %v9935
    %v9952 = vmul.f32 %v9916, %v9936
    %v9953 = vmul.f32 %v9918, %v9937
    %v9954 = vmul.f32 %v9869, %v9938
    %v9955 = vmul.f32 %v9871, %v9939
    %v9956 = vmul.f32 %v9922, %v9940
    %v9957 = vmul.f32 %v9924, %v9941
    %v9958 = vmul.f32 %v9873, %v9942
    %v9959 = vmul.f32 %v9875, %v9943
    %v9960 = vmul.f32 %v9926, %v9944
    %v9961 = vmul.f32 %v9928, %v9945
    %v9962 = vmul.f32 %v9946, 0.044715
    %v9963 = vmul.f32 %v9947, 0.044715
    %v9964 = vmul.f32 %v9948, 0.044715
    %v9965 = vmul.f32 %v9949, 0.044715
    %v9966 = vmul.f32 %v9950, 0.044715
    %v9967 = vmul.f32 %v9951, 0.044715
    %v9968 = vmul.f32 %v9952, 0.044715
    %v9969 = vmul.f32 %v9953, 0.044715
    %v9970 = vmul.f32 %v9954, 0.044715
    %v9971 = vmul.f32 %v9955, 0.044715
    %v9972 = vmul.f32 %v9956, 0.044715
    %v9973 = vmul.f32 %v9957, 0.044715
    %v9974 = vmul.f32 %v9958, 0.044715
    %v9975 = vmul.f32 %v9959, 0.044715
    %v9976 = vmul.f32 %v9960, 0.044715
    %v9977 = vmul.f32 %v9961, 0.044715
    %v9978 = vadd.f32 %v9859, %v9962
    %v9979 = vadd.f32 %v9861, %v9963
    %v9980 = vadd.f32 %v9912, %v9964
    %v9981 = vadd.f32 %v9914, %v9965
    %v9982 = vadd.f32 %v9863, %v9966
    %v9983 = vadd.f32 %v9865, %v9967
    %v9984 = vadd.f32 %v9916, %v9968
    %v9985 = vadd.f32 %v9918, %v9969
    %v9986 = vadd.f32 %v9869, %v9970
    %v9987 = vadd.f32 %v9871, %v9971
    %v9988 = vadd.f32 %v9922, %v9972
    %v9989 = vadd.f32 %v9924, %v9973
    %v9990 = vadd.f32 %v9873, %v9974
    %v9991 = vadd.f32 %v9875, %v9975
    %v9992 = vadd.f32 %v9926, %v9976
    %v9993 = vadd.f32 %v9928, %v9977
    %v9994 = vmul.f32 %v9978, 0.7978846
    %v9995 = vmul.f32 %v9979, 0.7978846
    %v9996 = vmul.f32 %v9980, 0.7978846
    %v9997 = vmul.f32 %v9981, 0.7978846
    %v9998 = vmul.f32 %v9982, 0.7978846
    %v9999 = vmul.f32 %v9983, 0.7978846
    %v10000 = vmul.f32 %v9984, 0.7978846
    %v10001 = vmul.f32 %v9985, 0.7978846
    %v10002 = vmul.f32 %v9986, 0.7978846
    %v10003 = vmul.f32 %v9987, 0.7978846
    %v10004 = vmul.f32 %v9988, 0.7978846
    %v10005 = vmul.f32 %v9989, 0.7978846
    %v10006 = vmul.f32 %v9990, 0.7978846
    %v10007 = vmul.f32 %v9991, 0.7978846
    %v10008 = vmul.f32 %v9992, 0.7978846
    %v10009 = vmul.f32 %v9993, 0.7978846
    %v10010 = vtanh.pop %v9994
    %v10011 = vtanh.pop %v9995
    %v10012 = vtanh.pop %v9996
    %v10013 = vtanh.pop %v9997
    %v10014 = vtanh.pop %v9998
    %v10015 = vtanh.pop %v9999
    %v10016 = vtanh.pop %v10000
    %v10017 = vtanh.pop %v10001
    %v10018 = vtanh.pop %v10002
    %v10019 = vtanh.pop %v10003
    %v10020 = vtanh.pop %v10004
    %v10021 = vtanh.pop %v10005
    %v10022 = vtanh.pop %v10006
    %v10023 = vtanh.pop %v10007
    %v10024 = vtanh.pop %v10008
    %v10025 = vtanh.pop %v10009
    %v10026 = vadd.f32 %v10010, 1.0
    %v10027 = vadd.f32 %v10011, 1.0
    %v10028 = vadd.f32 %v10012, 1.0
    %v10029 = vadd.f32 %v10013, 1.0
    %v10030 = vadd.f32 %v10014, 1.0
    %v10031 = vadd.f32 %v10015, 1.0
    %v10032 = vadd.f32 %v10016, 1.0
    %v10033 = vadd.f32 %v10017, 1.0
    %v10034 = vadd.f32 %v10018, 1.0
    %v10035 = vadd.f32 %v10019, 1.0
    %v10036 = vadd.f32 %v10020, 1.0
    %v10037 = vadd.f32 %v10021, 1.0
    %v10038 = vadd.f32 %v10022, 1.0
    %v10039 = vadd.f32 %v10023, 1.0
    %v10040 = vadd.f32 %v10024, 1.0
    %v10041 = vadd.f32 %v10025, 1.0
    %v10042 = vmul.f32 %v10026, 0.5
    %v10043 = vmul.f32 %v10027, 0.5
    %v10044 = vmul.f32 %v10028, 0.5
    %v10045 = vmul.f32 %v10029, 0.5
    %v10046 = vmul.f32 %v10030, 0.5
    %v10047 = vmul.f32 %v10031, 0.5
    %v10048 = vmul.f32 %v10032, 0.5
    %v10049 = vmul.f32 %v10033, 0.5
    %v10050 = vmul.f32 %v10034, 0.5
    %v10051 = vmul.f32 %v10035, 0.5
    %v10052 = vmul.f32 %v10036, 0.5
    %v10053 = vmul.f32 %v10037, 0.5
    %v10054 = vmul.f32 %v10038, 0.5
    %v10055 = vmul.f32 %v10039, 0.5
    %v10056 = vmul.f32 %v10040, 0.5
    %v10057 = vmul.f32 %v10041, 0.5
    %v10058 = vmul.f32 %v9859, %v10042
    %v10059 = vmul.f32 %v9861, %v10043
    %v10060 = vmul.f32 %v9912, %v10044
    %v10061 = vmul.f32 %v9914, %v10045
    %v10062 = vmul.f32 %v9863, %v10046
    %v10063 = vmul.f32 %v9865, %v10047
    %v10064 = vmul.f32 %v9916, %v10048
    %v10065 = vmul.f32 %v9918, %v10049
    %v10066 = vmul.f32 %v9869, %v10050
    %v10067 = vmul.f32 %v9871, %v10051
    %v10068 = vmul.f32 %v9922, %v10052
    %v10069 = vmul.f32 %v9924, %v10053
    %v10070 = vmul.f32 %v9873, %v10054
    %v10071 = vmul.f32 %v9875, %v10055
    %v10072 = vmul.f32 %v9926, %v10056
    %v10073 = vmul.f32 %v9928, %v10057
    %v10074 = vpack.c.bf16 %v10062, %v10058
    %v10075 = vpack.c.bf16 %v10063, %v10059
    %v10076 = vpack.c.bf16 %v10064, %v10060
    %v10077 = vpack.c.bf16 %v10065, %v10061
    %v10078 = vpack.c.bf16 %v10070, %v10066
    %v10079 = vpack.c.bf16 %v10071, %v10067
    %v10080 = vpack.c.bf16 %v10072, %v10068
    %v10081 = vpack.c.bf16 %v10073, %v10069
    %s10082 = scalar_lea.vmem [#allocation14], 768
    %v10083 = vld [vmem:[%s10082] sm:$0xf]
    %v10084 = vld [vmem:[%s10082 + $0x4] sm:$0xf]
    %v10085 = vld [vmem:[%s10082 + $0x8] sm:$0xf]
    %v10086 = vld [vmem:[%s10082 + $0xc] sm:$0xf]
    %v10087 = vld [vmem:[%s10082 + $0x10] sm:$0xf]
    %v10088 = vld [vmem:[%s10082 + $0x14] sm:$0xf]
    %v10089 = vld [vmem:[%s10082 + $0x18] sm:$0xf]
    %v10090 = vld [vmem:[%s10082 + $0x1c] sm:$0xf]
    %v10091 = vld [vmem:[%s10082 + $0x20] sm:$0xf]
    %v10092 = vld [vmem:[%s10082 + $0x24] sm:$0xf]
    %v10093 = vld [vmem:[%s10082 + $0x28] sm:$0xf]
    %v10094 = vld [vmem:[%s10082 + $0x2c] sm:$0xf]
    %v10095 = vld [vmem:[%s10082 + $0x30] sm:$0xf]
    %v10096 = vld [vmem:[%s10082 + $0x34] sm:$0xf]
    %v10097 = vld [vmem:[%s10082 + $0x38] sm:$0xf]
    %v10098 = vld [vmem:[%s10082 + $0x3c] sm:$0xf]
    %v10099 = vld [vmem:[%s10082 + $0x40] sm:$0xf]
    %v10100 = vld [vmem:[%s10082 + $0x44] sm:$0xf]
    %v10101 = vld [vmem:[%s10082 + $0x48] sm:$0xf]
    %v10102 = vld [vmem:[%s10082 + $0x4c] sm:$0xf]
    %v10103 = vld [vmem:[%s10082 + $0x50] sm:$0xf]
    %v10104 = vld [vmem:[%s10082 + $0x54] sm:$0xf]
    %v10105 = vld [vmem:[%s10082 + $0x58] sm:$0xf]
    %v10106 = vld [vmem:[%s10082 + $0x5c] sm:$0xf]
    %v10107 = vld [vmem:[%s10082 + $0x60] sm:$0xf]
    %v10108 = vld [vmem:[%s10082 + $0x64] sm:$0xf]
    %v10109 = vld [vmem:[%s10082 + $0x68] sm:$0xf]
    %v10110 = vld [vmem:[%s10082 + $0x6c] sm:$0xf]
    %v10111 = vld [vmem:[%s10082 + $0x70] sm:$0xf]
    %v10112 = vld [vmem:[%s10082 + $0x74] sm:$0xf]
    %v10113 = vld [vmem:[%s10082 + $0x78] sm:$0xf]
    %v10114 = vld [vmem:[%s10082 + $0x7c] sm:$0xf]
    %v10115 = vld [vmem:[%s10082 + $0x80] sm:$0xf]
    %v10116 = vld [vmem:[%s10082 + $0x84] sm:$0xf]
    %v10117 = vld [vmem:[%s10082 + $0x88] sm:$0xf]
    %v10118 = vld [vmem:[%s10082 + $0x8c] sm:$0xf]
    %v10119 = vld [vmem:[%s10082 + $0x90] sm:$0xf]
    %v10120 = vld [vmem:[%s10082 + $0x94] sm:$0xf]
    %v10121 = vld [vmem:[%s10082 + $0x98] sm:$0xf]
    %v10122 = vld [vmem:[%s10082 + $0x9c] sm:$0xf]
    %v10123 = vld [vmem:[%s10082 + $0xa0] sm:$0xf]
    %v10124 = vld [vmem:[%s10082 + $0xa4] sm:$0xf]
    %v10125 = vld [vmem:[%s10082 + $0xa8] sm:$0xf]
    %v10126 = vld [vmem:[%s10082 + $0xac] sm:$0xf]
    %v10127 = vld [vmem:[%s10082 + $0xb0] sm:$0xf]
    %v10128 = vld [vmem:[%s10082 + $0xb4] sm:$0xf]
    %v10129 = vld [vmem:[%s10082 + $0xb8] sm:$0xf]
    %v10130 = vld [vmem:[%s10082 + $0xbc] sm:$0xf]
    %v10131 = vld [vmem:[%s10082 + $0xc0] sm:$0xf]
    %v10132 = vld [vmem:[%s10082 + $0xc4] sm:$0xf]
    %v10133 = vld [vmem:[%s10082 + $0xc8] sm:$0xf]
    %v10134 = vld [vmem:[%s10082 + $0xcc] sm:$0xf]
    %v10135 = vld [vmem:[%s10082 + $0xd0] sm:$0xf]
    %v10136 = vld [vmem:[%s10082 + $0xd4] sm:$0xf]
    %v10137 = vld [vmem:[%s10082 + $0xd8] sm:$0xf]
    %v10138 = vld [vmem:[%s10082 + $0xdc] sm:$0xf]
    %v10139 = vld [vmem:[%s10082 + $0xe0] sm:$0xf]
    %v10140 = vld [vmem:[%s10082 + $0xe4] sm:$0xf]
    %v10141 = vld [vmem:[%s10082 + $0xe8] sm:$0xf]
    %v10142 = vld [vmem:[%s10082 + $0xec] sm:$0xf]
    %v10143 = vld [vmem:[%s10082 + $0xf0] sm:$0xf]
    %v10144 = vld [vmem:[%s10082 + $0xf4] sm:$0xf]
    %v10145 = vld [vmem:[%s10082 + $0xf8] sm:$0xf]
    %v10146 = vld [vmem:[%s10082 + $0xfc] sm:$0xf]
    %s10147 = scalar_lea.vmem %s13, 3
    %v10148 = vld [vmem:[%s10147] sm:$0x1]
    %v10150 = vlaneseq
    %v10151 = vshrl.u32 %v10150, 7
    %v10152 = vsub.s32 0, %v10151
    %v10153 = vrot.slane %v10148, %v10152
    %v10219 = vunpack.c.l.b16 %v10083
    %v10220 = vunpack.c.l.b16 %v10084
    %v10221 = vunpack.c.l.b16 %v10085
    %v10222 = vunpack.c.l.b16 %v10086
    %v10223 = vunpack.c.l.b16 %v10087
    %v10224 = vunpack.c.l.b16 %v10088
    %v10225 = vunpack.c.l.b16 %v10089
    %v10226 = vunpack.c.l.b16 %v10090
    %v10227 = vunpack.c.l.b16 %v10091
    %v10228 = vunpack.c.l.b16 %v10092
    %v10229 = vunpack.c.l.b16 %v10093
    %v10230 = vunpack.c.l.b16 %v10094
    %v10231 = vunpack.c.l.b16 %v10095
    %v10232 = vunpack.c.l.b16 %v10096
    %v10233 = vunpack.c.l.b16 %v10097
    %v10234 = vunpack.c.l.b16 %v10098
    %v10235 = vunpack.c.l.b16 %v10099
    %v10236 = vunpack.c.l.b16 %v10100
    %v10237 = vunpack.c.l.b16 %v10101
    %v10238 = vunpack.c.l.b16 %v10102
    %v10239 = vunpack.c.l.b16 %v10103
    %v10240 = vunpack.c.l.b16 %v10104
    %v10241 = vunpack.c.l.b16 %v10105
    %v10242 = vunpack.c.l.b16 %v10106
    %v10243 = vunpack.c.l.b16 %v10107
    %v10244 = vunpack.c.l.b16 %v10108
    %v10245 = vunpack.c.l.b16 %v10109
    %v10246 = vunpack.c.l.b16 %v10110
    %v10247 = vunpack.c.l.b16 %v10111
    %v10248 = vunpack.c.l.b16 %v10112
    %v10249 = vunpack.c.l.b16 %v10113
    %v10250 = vunpack.c.l.b16 %v10114
    %v10251 = vunpack.c.l.b16 %v10115
    %v10252 = vunpack.c.l.b16 %v10116
    %v10253 = vunpack.c.l.b16 %v10117
    %v10254 = vunpack.c.l.b16 %v10118
    %v10255 = vunpack.c.l.b16 %v10119
    %v10256 = vunpack.c.l.b16 %v10120
    %v10257 = vunpack.c.l.b16 %v10121
    %v10258 = vunpack.c.l.b16 %v10122
    %v10259 = vunpack.c.l.b16 %v10123
    %v10260 = vunpack.c.l.b16 %v10124
    %v10261 = vunpack.c.l.b16 %v10125
    %v10262 = vunpack.c.l.b16 %v10126
    %v10263 = vunpack.c.l.b16 %v10127
    %v10264 = vunpack.c.l.b16 %v10128
    %v10265 = vunpack.c.l.b16 %v10129
    %v10266 = vunpack.c.l.b16 %v10130
    %v10267 = vunpack.c.l.b16 %v10131
    %v10268 = vunpack.c.l.b16 %v10132
    %v10269 = vunpack.c.l.b16 %v10133
    %v10270 = vunpack.c.l.b16 %v10134
    %v10271 = vunpack.c.l.b16 %v10135
    %v10272 = vunpack.c.l.b16 %v10136
    %v10273 = vunpack.c.l.b16 %v10137
    %v10274 = vunpack.c.l.b16 %v10138
    %v10275 = vunpack.c.l.b16 %v10139
    %v10276 = vunpack.c.l.b16 %v10140
    %v10277 = vunpack.c.l.b16 %v10141
    %v10278 = vunpack.c.l.b16 %v10142
    %v10279 = vunpack.c.l.b16 %v10143
    %v10280 = vunpack.c.l.b16 %v10144
    %v10281 = vunpack.c.l.b16 %v10145
    %v10282 = vunpack.c.l.b16 %v10146
    %v10283 = vpack.c.b16 %v10220, %v10219
    %v10284 = vpack.c.b16 %v10222, %v10221
    %v10285 = vpack.c.b16 %v10224, %v10223
    %v10286 = vpack.c.b16 %v10226, %v10225
    %v10287 = vpack.c.b16 %v10228, %v10227
    %v10288 = vpack.c.b16 %v10230, %v10229
    %v10289 = vpack.c.b16 %v10232, %v10231
    %v10290 = vpack.c.b16 %v10234, %v10233
    %v10291 = vpack.c.b16 %v10236, %v10235
    %v10292 = vpack.c.b16 %v10238, %v10237
    %v10293 = vpack.c.b16 %v10240, %v10239
    %v10294 = vpack.c.b16 %v10242, %v10241
    %v10295 = vpack.c.b16 %v10244, %v10243
    %v10296 = vpack.c.b16 %v10246, %v10245
    %v10297 = vpack.c.b16 %v10248, %v10247
    %v10298 = vpack.c.b16 %v10250, %v10249
    %v10299 = vpack.c.b16 %v10252, %v10251
    %v10300 = vpack.c.b16 %v10254, %v10253
    %v10301 = vpack.c.b16 %v10256, %v10255
    %v10302 = vpack.c.b16 %v10258, %v10257
    %v10303 = vpack.c.b16 %v10260, %v10259
    %v10304 = vpack.c.b16 %v10262, %v10261
    %v10305 = vpack.c.b16 %v10264, %v10263
    %v10306 = vpack.c.b16 %v10266, %v10265
    %v10307 = vpack.c.b16 %v10268, %v10267
    %v10308 = vpack.c.b16 %v10270, %v10269
    %v10309 = vpack.c.b16 %v10272, %v10271
    %v10310 = vpack.c.b16 %v10274, %v10273
    %v10311 = vpack.c.b16 %v10276, %v10275
    %v10312 = vpack.c.b16 %v10278, %v10277
    %v10313 = vpack.c.b16 %v10280, %v10279
    %v10314 = vpack.c.b16 %v10282, %v10281
    %10347 = vmatprep.subr.bf16.mxu0 0
    %10348 = vmatpush1.bf16.msra.mxu0 %v10283
    %10349 = vmatprep.subr.bf16.mxu0 0
    %10350 = vmatpush1.bf16.msra.mxu0 %v10284
    %10351 = vmatprep.subr.bf16.mxu0 0
    %10352 = vmatpush1.bf16.msra.mxu0 %v10285
    %10353 = vmatprep.subr.bf16.mxu0 0
    %10354 = vmatpush1.bf16.msra.mxu0 %v10286
    %10355 = vmatprep.subr.bf16.mxu0 0
    %10356 = vmatpush1.bf16.msra.mxu0 %v10287
    %10357 = vmatprep.subr.bf16.mxu0 0
    %10358 = vmatpush1.bf16.msra.mxu0 %v10288
    %10359 = vmatprep.subr.bf16.mxu0 0
    %10360 = vmatpush1.bf16.msra.mxu0 %v10289
    %10361 = vmatprep.subr.bf16.mxu0 0
    %10362 = vmatpush1.bf16.msra.mxu0 %v10290
    %10363 = vmatprep.subr.bf16.mxu0 0
    %10364 = vmatpush1.bf16.msra.mxu0 %v10291
    %10365 = vmatprep.subr.bf16.mxu0 0
    %10366 = vmatpush1.bf16.msra.mxu0 %v10292
    %10367 = vmatprep.subr.bf16.mxu0 0
    %10368 = vmatpush1.bf16.msra.mxu0 %v10293
    %10369 = vmatprep.subr.bf16.mxu0 0
    %10370 = vmatpush1.bf16.msra.mxu0 %v10294
    %10371 = vmatprep.subr.bf16.mxu0 0
    %10372 = vmatpush1.bf16.msra.mxu0 %v10295
    %10373 = vmatprep.subr.bf16.mxu0 0
    %10374 = vmatpush1.bf16.msra.mxu0 %v10296
    %10375 = vmatprep.subr.bf16.mxu0 0
    %10376 = vmatpush1.bf16.msra.mxu0 %v10297
    %10377 = vmatprep.subr.bf16.mxu0 0
    %10378 = vmatpush1.bf16.msra.mxu0 %v10298
    %10379 = vmatprep.mubr.bf16.mxu0 %v10075
    %10380 = vmatmul.mubr.bf16.gmra.mrb[0].mxu0 %v10074
    %v10381 = vpop.f32.mrb[0].mxu0
    %v10382 = vadd.f32 %v10153, %v10381
    %v10383 = vpop.f32.mrb[0].mxu0
    %v10384 = vpop.f32.mrb[0].mxu0
    %v10385 = vadd.f32 %v10153, %v10384
    %v10386 = vpop.f32.mrb[0].mxu0
    %10387 = vmatprep.mubr.bf16.mxu0 %v10079
    %10388 = vmatmul.mubr.bf16.gmra.mrb[0].mxu0 %v10078
    %v10389 = vpop.f32.mrb[0].mxu0
    %v10390 = vadd.f32 %v10153, %v10389
    %v10391 = vpop.f32.mrb[0].mxu0
    %v10392 = vpop.f32.mrb[0].mxu0
    %v10393 = vadd.f32 %v10153, %v10392
    %v10394 = vpop.f32.mrb[0].mxu0
    %10395 = vdwg.mxu0
    %10396 = vmatprep.subr.bf16.mxu0 0
    %10397 = vmatpush1.bf16.msra.mxu0 %v10299
    %10398 = vmatprep.subr.bf16.mxu0 0
    %10399 = vmatpush1.bf16.msra.mxu0 %v10300
    %10400 = vmatprep.subr.bf16.mxu0 0
    %10401 = vmatpush1.bf16.msra.mxu0 %v10301
    %10402 = vmatprep.subr.bf16.mxu0 0
    %10403 = vmatpush1.bf16.msra.mxu0 %v10302
    %10404 = vmatprep.subr.bf16.mxu0 0
    %10405 = vmatpush1.bf16.msra.mxu0 %v10303
    %10406 = vmatprep.subr.bf16.mxu0 0
    %10407 = vmatpush1.bf16.msra.mxu0 %v10304
    %10408 = vmatprep.subr.bf16.mxu0 0
    %10409 = vmatpush1.bf16.msra.mxu0 %v10305
    %10410 = vmatprep.subr.bf16.mxu0 0
    %10411 = vmatpush1.bf16.msra.mxu0 %v10306
    %10412 = vmatprep.subr.bf16.mxu0 0
    %10413 = vmatpush1.bf16.msra.mxu0 %v10307
    %10414 = vmatprep.subr.bf16.mxu0 0
    %10415 = vmatpush1.bf16.msra.mxu0 %v10308
    %10416 = vmatprep.subr.bf16.mxu0 0
    %10417 = vmatpush1.bf16.msra.mxu0 %v10309
    %10418 = vmatprep.subr.bf16.mxu0 0
    %10419 = vmatpush1.bf16.msra.mxu0 %v10310
    %10420 = vmatprep.subr.bf16.mxu0 0
    %10421 = vmatpush1.bf16.msra.mxu0 %v10311
    %10422 = vmatprep.subr.bf16.mxu0 0
    %10423 = vmatpush1.bf16.msra.mxu0 %v10312
    %10424 = vmatprep.subr.bf16.mxu0 0
    %10425 = vmatpush1.bf16.msra.mxu0 %v10313
    %10426 = vmatprep.subr.bf16.mxu0 0
    %10427 = vmatpush1.bf16.msra.mxu0 %v10314
    %10428 = vmatprep.mubr.bf16.mxu0 %v10077
    %10429 = vmatmul.mubr.bf16.gmra.mrb[0].mxu0 %v10076
    %v10430 = vpop.f32.mrb[0].mxu0
    %v10431 = vadd.f32 %v10382, %v10430
    %v10432 = vpop.f32.mrb[0].mxu0
    %v10433 = vpop.f32.mrb[0].mxu0
    %v10434 = vadd.f32 %v10385, %v10433
    %v10435 = vpop.f32.mrb[0].mxu0
    %10436 = vmatprep.mubr.bf16.mxu0 %v10081
    %10437 = vmatmul.mubr.bf16.gmra.mrb[0].mxu0 %v10080
    %v10438 = vpop.f32.mrb[0].mxu0
    %v10439 = vadd.f32 %v10390, %v10438
    %v10440 = vpop.f32.mrb[0].mxu0
    %v10441 = vpop.f32.mrb[0].mxu0
    %v10442 = vadd.f32 %v10393, %v10441
    %v10443 = vpop.f32.mrb[0].mxu0
    %10444 = vdwg.mxu0
    %v10445 = vadd.f32 %v10431, %v9602
    %v10446 = vadd.f32 %v10434, %v9603
    %v10447 = vadd.f32 %v10439, %v9604
    %v10448 = vadd.f32 %v10442, %v9605
    %s10449 = scalar_lea.vmem [#allocation15], 3
    %v10450 = vld [vmem:[%s10449] sm:$0x1]
    %s10451 = scalar_lea.vmem [#allocation17], 3
    %v10452 = vld [vmem:[%s10451] sm:$0x1]
    %10453 = vadd.xlane.f32.xlu0 %v10445
    %v10454 = vpop.xlane.xlu0 %10453
    %10455 = vadd.xlane.f32.xlu0 %v10446
    %v10456 = vpop.xlane.xlu0 %10455
    %10457 = vadd.xlane.f32.xlu0 %v10447
    %v10458 = vpop.xlane.xlu0 %10457
    %10459 = vadd.xlane.f32.xlu0 %v10448
    %v10460 = vpop.xlane.xlu0 %10459
    %v10461 = vmul.f32 %v10454, %v236
    %v10462 = vmul.f32 %v10456, %v236
    %v10463 = vmul.f32 %v10458, %v236
    %v10464 = vmul.f32 %v10460, %v236
    %v10465 = vsub.f32 %v10445, %v10461
    %v10466 = vsub.f32 %v10446, %v10462
    %v10467 = vsub.f32 %v10447, %v10463
    %v10468 = vsub.f32 %v10448, %v10464
    %v10469 = vmul.f32 %v10465, %v10465
    %v10470 = vmul.f32 %v10466, %v10466
    %v10471 = vmul.f32 %v10467, %v10467
    %v10472 = vmul.f32 %v10468, %v10468
    %10473 = vadd.xlane.f32.xlu0 %v10469
    %v10474 = vpop.xlane.xlu0 %10473
    %10475 = vadd.xlane.f32.xlu0 %v10470
    %v10476 = vpop.xlane.xlu0 %10475
    %10477 = vadd.xlane.f32.xlu0 %v10471
    %v10478 = vpop.xlane.xlu0 %10477
    %10479 = vadd.xlane.f32.xlu0 %v10472
    %v10480 = vpop.xlane.xlu0 %10479
    %v10481 = vmul.f32 %v10474, %v236
    %v10482 = vmul.f32 %v10476, %v236
    %v10483 = vmul.f32 %v10478, %v236
    %v10484 = vmul.f32 %v10480, %v236
    %v10485 = vadd.f32 %v10481, 1e-12
    %v10486 = vadd.f32 %v10482, 1e-12
    %v10487 = vadd.f32 %v10483, 1e-12
    %v10488 = vadd.f32 %v10484, 1e-12
    %v10489 = vrsqrt.pop %v10485
    %v10490 = vrsqrt.pop %v10486
    %v10491 = vrsqrt.pop %v10487
    %v10492 = vrsqrt.pop %v10488
    %v10493 = vmul.f32 %v10465, %v10489
    %v10494 = vmul.f32 %v10466, %v10490
    %v10495 = vmul.f32 %v10467, %v10491
    %v10496 = vmul.f32 %v10468, %v10492
    %v10498 = vlaneseq
    %v10499 = vshrl.u32 %v10498, 7
    %v10500 = vsub.s32 0, %v10499
    %v10501 = vrot.slane %v10450, %v10500
    %v10503 = vmul.f32 %v10493, %v10501
    %v10504 = vmul.f32 %v10494, %v10501
    %v10505 = vmul.f32 %v10495, %v10501
    %v10506 = vmul.f32 %v10496, %v10501
    %v10508 = vlaneseq
    %v10509 = vshrl.u32 %v10508, 7
    %v10510 = vsub.s32 0, %v10509
    %v10511 = vrot.slane %v10452, %v10510
    %v10513 = vadd.f32 %v10503, %v10511
    %v10514 = vadd.f32 %v10504, %v10511
    %v10515 = vadd.f32 %v10505, %v10511
    %v10516 = vadd.f32 %v10506, %v10511
    %v10517 = vpack.c.bf16 %v10514, %v10513
    %v10518 = vpack.c.bf16 %v10516, %v10515
    %v10519 = vld [vmem:[#allocation18] sm:$0xf]
    %v10520 = vld [vmem:[#allocation18 + $0x4] sm:$0xf]
    %v10521 = vld [vmem:[#allocation18 + $0x8] sm:$0xf]
    %v10522 = vld [vmem:[#allocation18 + $0xc] sm:$0xf]
    %v10523 = vld [vmem:[#allocation18 + $0x10] sm:$0xf]
    %v10524 = vld [vmem:[#allocation18 + $0x14] sm:$0xf]
    %v10525 = vld [vmem:[#allocation18 + $0x18] sm:$0xf]
    %v10526 = vld [vmem:[#allocation18 + $0x1c] sm:$0xf]
    %v10527 = vld [vmem:[#allocation18 + $0x20] sm:$0xf]
    %v10528 = vld [vmem:[#allocation18 + $0x24] sm:$0xf]
    %v10529 = vld [vmem:[#allocation18 + $0x28] sm:$0xf]
    %v10530 = vld [vmem:[#allocation18 + $0x2c] sm:$0xf]
    %v10531 = vld [vmem:[#allocation18 + $0x30] sm:$0xf]
    %v10532 = vld [vmem:[#allocation18 + $0x34] sm:$0xf]
    %v10533 = vld [vmem:[#allocation18 + $0x38] sm:$0xf]
    %v10534 = vld [vmem:[#allocation18 + $0x3c] sm:$0xf]
    %v10535 = vld [vmem:[#allocation20] sm:$0x1]
    %v10537 = vlaneseq
    %v10538 = vshrl.u32 %v10537, 7
    %v10539 = vsub.s32 0, %v10538
    %v10540 = vrot.slane %v10535, %v10539
    %v10558 = vunpack.c.l.b16 %v10519
    %v10559 = vunpack.c.l.b16 %v10520
    %v10560 = vunpack.c.l.b16 %v10521
    %v10561 = vunpack.c.l.b16 %v10522
    %v10562 = vunpack.c.l.b16 %v10523
    %v10563 = vunpack.c.l.b16 %v10524
    %v10564 = vunpack.c.l.b16 %v10525
    %v10565 = vunpack.c.l.b16 %v10526
    %v10566 = vunpack.c.l.b16 %v10527
    %v10567 = vunpack.c.l.b16 %v10528
    %v10568 = vunpack.c.l.b16 %v10529
    %v10569 = vunpack.c.l.b16 %v10530
    %v10570 = vunpack.c.l.b16 %v10531
    %v10571 = vunpack.c.l.b16 %v10532
    %v10572 = vunpack.c.l.b16 %v10533
    %v10573 = vunpack.c.l.b16 %v10534
    %v10574 = vpack.c.b16 %v10559, %v10558
    %v10575 = vpack.c.b16 %v10561, %v10560
    %v10576 = vpack.c.b16 %v10563, %v10562
    %v10577 = vpack.c.b16 %v10565, %v10564
    %v10578 = vpack.c.b16 %v10567, %v10566
    %v10579 = vpack.c.b16 %v10569, %v10568
    %v10580 = vpack.c.b16 %v10571, %v10570
    %v10581 = vpack.c.b16 %v10573, %v10572
    %10590 = vmatprep.subr.bf16.mxu0 0
    %10591 = vmatpush1.bf16.msra.mxu0 %v10574
    %10592 = vmatprep.subr.bf16.mxu0 0
    %10593 = vmatpush1.bf16.msra.mxu0 %v10575
    %10594 = vmatprep.subr.bf16.mxu0 0
    %10595 = vmatpush1.bf16.msra.mxu0 %v10576
    %10596 = vmatprep.subr.bf16.mxu0 0
    %10597 = vmatpush1.bf16.msra.mxu0 %v10577
    %10598 = vmatprep.subr.bf16.mxu0 0
    %10599 = vmatpush1.bf16.msra.mxu0 %v10578
    %10600 = vmatprep.subr.bf16.mxu0 0
    %10601 = vmatpush1.bf16.msra.mxu0 %v10579
    %10602 = vmatprep.subr.bf16.mxu0 0
    %10603 = vmatpush1.bf16.msra.mxu0 %v10580
    %10604 = vmatprep.subr.bf16.mxu0 0
    %10605 = vmatpush1.bf16.msra.mxu0 %v10581
    %10606 = vmatprep.subr.bf16.mxu0 0
    %10607 = vmatpush1.bf16.msra.mxu0 0
    %10608 = vmatprep.subr.bf16.mxu0 0
    %10609 = vmatpush1.bf16.msra.mxu0 0
    %10610 = vmatprep.subr.bf16.mxu0 0
    %10611 = vmatpush1.bf16.msra.mxu0 0
    %10612 = vmatprep.subr.bf16.mxu0 0
    %10613 = vmatpush1.bf16.msra.mxu0 0
    %10614 = vmatprep.subr.bf16.mxu0 0
    %10615 = vmatpush1.bf16.msra.mxu0 0
    %10616 = vmatprep.subr.bf16.mxu0 0
    %10617 = vmatpush1.bf16.msra.mxu0 0
    %10618 = vmatprep.subr.bf16.mxu0 0
    %10619 = vmatpush1.bf16.msra.mxu0 0
    %10620 = vmatprep.subr.bf16.mxu0 0
    %10621 = vmatpush1.bf16.msra.mxu0 0
    %10622 = vmatprep.mubr.bf16.mxu0 0
    %10623 = vmatmul.mubr.bf16.gmra.mrb[0].mxu0 %v10517
    %v10624 = vpop.f32.mrb[0].mxu0
    %v10625 = vadd.f32 %v10540, %v10624
    %v10626 = vpop.f32.mrb[0].mxu0
    %v10627 = vpop.f32.mrb[0].mxu0
    %v10628 = vadd.f32 %v10540, %v10627
    %v10629 = vpop.f32.mrb[0].mxu0
    %10630 = vmatprep.mubr.bf16.mxu0 0
    %10631 = vmatmul.mubr.bf16.gmra.mrb[0].mxu0 %v10518
    %v10632 = vpop.f32.mrb[0].mxu0
    %v10633 = vadd.f32 %v10540, %v10632
    %v10634 = vpop.f32.mrb[0].mxu0
    %v10635 = vpop.f32.mrb[0].mxu0
    %v10636 = vadd.f32 %v10540, %v10635
    %v10637 = vpop.f32.mrb[0].mxu0
    %10638 = vdwg.mxu0
    %v10639 = vtanh.pop %v10625
    %v10640 = vtanh.pop %v10628
    %v10641 = vtanh.pop %v10633
    %v10642 = vtanh.pop %v10636
    %v10643 = vpack.c.bf16 %v10640, %v10639
    %v10644 = vpack.c.bf16 %v10642, %v10641
    %v10645 = vld [vmem:[%s18] sm:$0xf]
    %v10646 = vld [vmem:[%s18 + $0x4] sm:$0xf]
    %v10647 = vld [vmem:[%s18 + $0x8] sm:$0xf]
    %v10648 = vld [vmem:[%s18 + $0xc] sm:$0xf]
    %v10649 = vld [vmem:[%s18 + $0x10] sm:$0xf]
    %v10650 = vld [vmem:[%s18 + $0x14] sm:$0xf]
    %v10651 = vld [vmem:[%s18 + $0x18] sm:$0xf]
    %v10652 = vld [vmem:[%s18 + $0x1c] sm:$0xf]
    %v10653 = vld [vmem:[%s18 + $0x20] sm:$0xf]
    %v10654 = vld [vmem:[%s18 + $0x24] sm:$0xf]
    %v10655 = vld [vmem:[%s18 + $0x28] sm:$0xf]
    %v10656 = vld [vmem:[%s18 + $0x2c] sm:$0xf]
    %v10657 = vld [vmem:[%s18 + $0x30] sm:$0xf]
    %v10658 = vld [vmem:[%s18 + $0x34] sm:$0xf]
    %v10659 = vld [vmem:[%s18 + $0x38] sm:$0xf]
    %v10660 = vld [vmem:[%s18 + $0x3c] sm:$0xf]
    %v10661 = vld [vmem:[#allocation21] sm:$0x1]
    %v10663 = vlaneseq
    %v10664 = vshrl.u32 %v10663, 7
    %v10665 = vsub.s32 0, %v10664
    %v10666 = vrot.slane %v10661, %v10665
    %v10684 = vunpack.c.l.b16 %v10645
    %v10685 = vunpack.c.l.b16 %v10646
    %v10686 = vunpack.c.l.b16 %v10647
    %v10687 = vunpack.c.l.b16 %v10648
    %v10688 = vunpack.c.l.b16 %v10649
    %v10689 = vunpack.c.l.b16 %v10650
    %v10690 = vunpack.c.l.b16 %v10651
    %v10691 = vunpack.c.l.b16 %v10652
    %v10692 = vunpack.c.l.b16 %v10653
    %v10693 = vunpack.c.l.b16 %v10654
    %v10694 = vunpack.c.l.b16 %v10655
    %v10695 = vunpack.c.l.b16 %v10656
    %v10696 = vunpack.c.l.b16 %v10657
    %v10697 = vunpack.c.l.b16 %v10658
    %v10698 = vunpack.c.l.b16 %v10659
    %v10699 = vunpack.c.l.b16 %v10660
    %v10700 = vpack.c.b16 %v10685, %v10684
    %v10701 = vpack.c.b16 %v10687, %v10686
    %v10702 = vpack.c.b16 %v10689, %v10688
    %v10703 = vpack.c.b16 %v10691, %v10690
    %v10704 = vpack.c.b16 %v10693, %v10692
    %v10705 = vpack.c.b16 %v10695, %v10694
    %v10706 = vpack.c.b16 %v10697, %v10696
    %v10707 = vpack.c.b16 %v10699, %v10698
    %10716 = vmatprep.subr.bf16.mxu0 0
    %10717 = vmatpush1.bf16.msra.mxu0 %v10700
    %10718 = vmatprep.subr.bf16.mxu0 0
    %10719 = vmatpush1.bf16.msra.mxu0 %v10701
    %10720 = vmatprep.subr.bf16.mxu0 0
    %10721 = vmatpush1.bf16.msra.mxu0 %v10702
    %10722 = vmatprep.subr.bf16.mxu0 0
    %10723 = vmatpush1.bf16.msra.mxu0 %v10703
    %10724 = vmatprep.subr.bf16.mxu0 0
    %10725 = vmatpush1.bf16.msra.mxu0 %v10704
    %10726 = vmatprep.subr.bf16.mxu0 0
    %10727 = vmatpush1.bf16.msra.mxu0 %v10705
    %10728 = vmatprep.subr.bf16.mxu0 0
    %10729 = vmatpush1.bf16.msra.mxu0 %v10706
    %10730 = vmatprep.subr.bf16.mxu0 0
    %10731 = vmatpush1.bf16.msra.mxu0 %v10707
    %10732 = vmatprep.subr.bf16.mxu0 0
    %10733 = vmatpush1.bf16.msra.mxu0 0
    %10734 = vmatprep.subr.bf16.mxu0 0
    %10735 = vmatpush1.bf16.msra.mxu0 0
    %10736 = vmatprep.subr.bf16.mxu0 0
    %10737 = vmatpush1.bf16.msra.mxu0 0
    %10738 = vmatprep.subr.bf16.mxu0 0
    %10739 = vmatpush1.bf16.msra.mxu0 0
    %10740 = vmatprep.subr.bf16.mxu0 0
    %10741 = vmatpush1.bf16.msra.mxu0 0
    %10742 = vmatprep.subr.bf16.mxu0 0
    %10743 = vmatpush1.bf16.msra.mxu0 0
    %10744 = vmatprep.subr.bf16.mxu0 0
    %10745 = vmatpush1.bf16.msra.mxu0 0
    %10746 = vmatprep.subr.bf16.mxu0 0
    %10747 = vmatpush1.bf16.msra.mxu0 0
    %10748 = vmatprep.mubr.bf16.mxu0 0
    %10749 = vmatmul.mubr.bf16.gmra.mrb[0].mxu0 %v10643
    %v10750 = vpop.f32.mrb[0].mxu0
    %v10751 = vadd.f32 %v10666, %v10750
    %v10752 = vpop.f32.mrb[0].mxu0
    %v10753 = vpop.f32.mrb[0].mxu0
    %v10754 = vpop.f32.mrb[0].mxu0
    %10755 = vmatprep.mubr.bf16.mxu0 0
    %10756 = vmatmul.mubr.bf16.gmra.mrb[0].mxu0 %v10644
    %v10757 = vpop.f32.mrb[0].mxu0
    %v10758 = vadd.f32 %v10666, %v10757
    %v10759 = vpop.f32.mrb[0].mxu0
    %v10760 = vpop.f32.mrb[0].mxu0
    %v10761 = vpop.f32.mrb[0].mxu0
    %10762 = vdwg.mxu0
    %v10763 = vmax.f32 %v10751, 0.0
    %v10764 = vmax.f32 %v10758, 0.0
    %vm10765 = vcmask 90112
    %10766 = vst.msk [vmem:[#allocation23] sm:$0x1] %vm10765, %v10763
    %10767 = vst.msk [vmem:[#allocation23 + $0x1] sm:$0x1] %vm10765, %v10764
    // Predicated region
    $region130: #{bert_classifier_forward.1} parent=1 // pred_check
      _
    $region131: #{bert_classifier_forward.1} parent=1 // pred_check_branch
      %10769 = sbr.rel (0) target = $region133
    $region132: #{bert_classifier_forward.1} parent=1 // pred_region
      %s10771 = ssub.s32 32, 32
      %10772 = vsyncadd [#allocation5], %s10771
      %s10774 = sshll.u32 [#allocation23], 4
      %s10775 = int_to_ptr.vmem [resolvable:$true] %s10774
      %10777 = dma.vmem_to_hbm [thread:$0]  %s10775, 32, %s20, [#allocation5]
    $region133: #{bert_classifier_forward.1} parent=1 // pred_fallthru
      _
    // Predicated region
    $region134: #{bert_classifier_forward.1} parent=1 // pred_check
      _
    $region135: #{bert_classifier_forward.1} parent=1 // pred_check_branch
      %10779 = sbr.rel (0) target = $region137
    $region136: #{bert_classifier_forward.1} parent=1 // pred_region
      %10780 = dma.done [#allocation5], 32
    $region137: #{bert_classifier_forward.1} parent=1 // pred_fallthru
      _
    %10781 = vsyncpa [#allocation4], 1
    %10782 = vsyncpa [#allocation7], 1
    %10783 = vsyncpa [#allocation10], 1
    %10784 = vsyncpa [#allocation13], 1
    %10785 = vsyncpa [#allocation16], 1
    %10786 = vsyncpa [#allocation19], 1
    %10787 = vsyncpa [#allocation22], 1
    %10788 = vsyncpa [#allocation5], 1

</llo_original>
